<compile_context>
chip_gen: v7x
topology: tpu7x:2x2x1
jax: 0.10.0
libtpu: 0.0.40
codegen_flags: <defaults>
</compile_context>

<pallas_src>
import jax
import jax.numpy as jnp
from jax import lax
from jax.experimental import pallas as pl
from jax.experimental.pallas import tpu as pltpu

LN_EPS = 1e-6                  # LayerNorm3d default eps
D_LIST = (1, 2, 5, 7)          # dilations of the four grouped convs


def _vmem_limit_bytes():
    """Generation-aware scoped-VMEM limit (v5e/v6e: 128 MiB, v7x: 64 MiB per core)."""
    try:
        cap = int(pltpu.get_tpu_info().vmem_capacity_bytes)
    except Exception:
        cap = 64 * 1024 * 1024
    return max(32 * 1024 * 1024, min(cap - 16 * 1024 * 1024, 100 * 1024 * 1024))


# ---------------------------------------------------------------------------
# Fused kernel: pre_project + 4x(LN + dilated depthwise conv) + tail LN + tail conv
# ---------------------------------------------------------------------------
def _make_fused_kernel(Cg, Cout, S, shifts_per_group):
    n_groups = len(shifts_per_group)

    def kernel(xh_ref, xlm_ref, pwg_ref, pbg_ref, gg_ref, gb_ref, gcb_ref,
               wv_ref, cf_ref, tgg_ref, tbg_ref, twg_ref, tbias_ref, o_ref):
        xh = xh_ref[0]                                     # (Cxh, S), f32
        acc = jnp.zeros((Cout, S), jnp.float32)            # tail-conv accumulator

        for g in range(n_groups):
            # --- fused pre_project slice + channel concat (xh2_g | xl_g | mask) ---
            # pwg/pbg rows >= q are zero and xlm rows < q / the mask row are zero, so
            # the sum reproduces torch.cat((xh_chunk, xl_chunk, mask), dim=1).
            xg = (jnp.dot(pwg_ref[g], xh, preferred_element_type=jnp.float32)
                  + pbg_ref[g] + xlm_ref[0, g])            # (Cg, S)

            # --- group LayerNorm3d: per-channel stats over the volume (f32, 2-pass) ---
            mu = jnp.mean(xg, axis=1, keepdims=True)       # (Cg, 1)
            xc = xg - mu
            var = jnp.mean(xc * xc, axis=1, keepdims=True)
            a = gg_ref[g] * lax.rsqrt(var + LN_EPS)        # (Cg, 1)

            # --- dilated depthwise 3x3x3 conv: 27 lane-rolled FMAs (XLU + VPU) ---
            # wvalid folds the per-tap zero-padding validity mask into the weights, so
            # lanes wrapped by the roll contribute exactly zero.
            raw = jnp.zeros((Cg, S), jnp.float32)
            for t, sh in enumerate(shifts_per_group[g]):
                xs = xc if sh % S == 0 else pltpu.roll(xc, (-sh) % S, axis=1)
                raw = raw + wv_ref[g, t] * xs
            # conv(normalized, zero-padded) = bias + a*raw + beta*coeff
            go = gcb_ref[g] + a * raw + gb_ref[g] * cf_ref[g]   # (Cg, S)

            # --- tail LayerNorm3d on this group's channel slab (per-channel stats) ---
            mu_t = jnp.mean(go, axis=1, keepdims=True)
            gc = go - mu_t
            var_t = jnp.mean(gc * gc, axis=1, keepdims=True)
            xn = gc * (tgg_ref[g] * lax.rsqrt(var_t + LN_EPS)) + tbg_ref[g]

            # --- tail 1x1x1 conv: accumulate this slab's contribution (MXU) ---
            acc = acc + jnp.dot(twg_ref[g], xn, preferred_element_type=jnp.float32)

        o_ref[0] = (acc + tbias_ref[...]).astype(o_ref.dtype)

    return kernel


def _tap_fields(w_dw, dil, D, H, W):
    """Per-tap weight*validity fields for a zero-padded dilated 3x3x3 depthwise conv.

    w_dw: (Cg, 3, 3, 3).  Returns (wvalid (27, Cg, S), coeff (Cg, S), 27 static shifts).
    """
    Cg = w_dw.shape[0]
    S = D * H * W
    zi, yi, xi = jnp.meshgrid(jnp.arange(D), jnp.arange(H), jnp.arange(W), indexing="ij")
    wvalids, shifts = [], []
    for kd in range(3):
        for kh in range(3):
            for kw in range(3):
                oz, oy, ox = (kd - 1) * dil, (kh - 1) * dil, (kw - 1) * dil
                valid = ((zi + oz >= 0) & (zi + oz < D) &
                         (yi + oy >= 0) & (yi + oy < H) &
                         (xi + ox >= 0) & (xi + ox < W))
                valid = valid.reshape(1, S).astype(jnp.float32)
                wt = w_dw[:, kd, kh, kw].reshape(Cg, 1)
                wvalids.append(wt * valid)                      # (Cg, S)
                shifts.append(oz * H * W + oy * W + ox)         # static flat shift
    wvalid = jnp.stack(wvalids, axis=0)                         # (27, Cg, S)
    coeff = jnp.sum(wvalid, axis=0)                             # (Cg, S)
    return wvalid, coeff, shifts


# ---------------------------------------------------------------------------
# Trilinear (align_corners=True) resize -- XLA glue, shared by kernel & reference
# ---------------------------------------------------------------------------
def _linear_interp_matrix(n_in, n_out):
    if n_in == 1:
        return jnp.ones((n_out, 1), jnp.float32)
    if n_out == 1:
        return jnp.zeros((1, n_in), jnp.float32).at[0, 0].set(1.0)
    pos = jnp.arange(n_out, dtype=jnp.float32) * (float(n_in - 1) / float(n_out - 1))
    lo = jnp.clip(jnp.floor(pos), 0, n_in - 2).astype(jnp.int32)
    frac = pos - lo.astype(jnp.float32)
    return (jax.nn.one_hot(lo, n_in, dtype=jnp.float32) * (1.0 - frac)[:, None]
            + jax.nn.one_hot(lo + 1, n_in, dtype=jnp.float32) * frac[:, None])


def _trilinear_resize(x, out_dhw):
    """x: (N, C, d, h, w) -> (N, C, D, H, W), trilinear, align_corners=True."""
    D, H, W = out_dhw
    d, h, w = x.shape[2:]
    if (d, h, w) == (D, H, W):
        return x
    md = _linear_interp_matrix(d, D)
    mh = _linear_interp_matrix(h, H)
    mw = _linear_interp_matrix(w, W)
    y = jnp.einsum("ncdhw,Dd->ncDhw", x, md)
    y = jnp.einsum("ncDhw,Hh->ncDHw", y, mh)
    y = jnp.einsum("ncDHw,Ww->ncDHW", y, mw)
    return y


# ---------------------------------------------------------------------------
# GroupAggregationBridge3D forward (NCDHW, like PyTorch)
# ---------------------------------------------------------------------------
def gab3d_forward(xh, xl, params):
    """xh: (N, dim_xh, D, H, W); xl: (N, dim_xl, d, h, w) -> (N, dim_xl, D, H, W)."""
    N, Cxh, D, H, W = xh.shape
    dim_xl = params["pre_w"].shape[0]
    assert dim_xl % 4 == 0
    Cout = dim_xl
    q = dim_xl // 4
    Cg = dim_xl // 2 + 1
    S = D * H * W
    n_groups = len(D_LIST)
    f32 = jnp.float32

    # xl -> xh spatial size (the module's second interpolate is then the identity).
    xl_up = _trilinear_resize(xl.astype(f32), (D, H, W))

    xh_flat = xh.astype(f32).reshape(N, Cxh, S)
    # Per-group slabs holding the xl chunk in rows q:2q; rows 0:q (xh2 slot) and the
    # mask row stay zero, so the channel concat becomes a plain add inside the kernel.
    xlm = jnp.zeros((N, n_groups, Cg, S), f32)
    xlm = xlm.at[:, :, q:2 * q, :].set(xl_up.reshape(N, n_groups, q, S))

    # pre_project weights split per group and zero-padded to the group channel count.
    pwg = jnp.zeros((n_groups, Cg, Cxh), f32)
    pwg = pwg.at[:, :q, :].set(params["pre_w"].astype(f32).reshape(n_groups, q, Cxh))
    pbg = jnp.zeros((n_groups, Cg, 1), f32)
    pbg = pbg.at[:, :q, 0].set(params["pre_b"].astype(f32).reshape(n_groups, q))

    # Per-group LayerNorm / depthwise-conv-bias parameters.
    g_gamma = jnp.stack([params[f"g{g}_gamma"] for g in range(n_groups)]).astype(f32).reshape(n_groups, Cg, 1)
    g_beta = jnp.stack([params[f"g{g}_beta"] for g in range(n_groups)]).astype(f32).reshape(n_groups, Cg, 1)
    g_cb = jnp.stack([params[f"g{g}_b"] for g in range(n_groups)]).astype(f32).reshape(n_groups, Cg, 1)

    # Hoisted per-tap weight*validity fields, their sums, and the static flat shifts.
    wv_list, cf_list, shifts_per_group = [], [], []
    for g, dil in enumerate(D_LIST):
        wv, cf, sh = _tap_fields(params[f"g{g}_w"].astype(f32), dil, D, H, W)
        wv_list.append(wv)
        cf_list.append(cf)
        shifts_per_group.append(sh)
    wvalid = jnp.stack(wv_list, axis=0)           # (G, 27, Cg, S)
    coeff = jnp.stack(cf_list, axis=0)            # (G, Cg, S)

    # Tail LayerNorm / 1x1x1 conv parameters, split per group slab.
    t_gamma = params["tail_gamma"].astype(f32).reshape(n_groups, Cg, 1)
    t_beta = params["tail_beta"].astype(f32).reshape(n_groups, Cg, 1)
    twg = jnp.transpose(params["tail_w"].astype(f32).reshape(Cout, n_groups, Cg), (1, 0, 2))
    t_bias = params["tail_b"].astype(f32).reshape(Cout, 1)

    kernel = _make_fused_kernel(Cg, Cout, S, shifts_per_group)

    out_flat = pl.pallas_call(
        kernel,
        out_shape=jax.ShapeDtypeStruct((N, Cout, S), f32),
        grid_spec=pltpu.PrefetchScalarGridSpec(
            num_scalar_prefetch=0,
            grid=(N,),
            in_specs=[
                pl.BlockSpec((1, Cxh, S), lambda n: (n, 0, 0)),                 # xh
                pl.BlockSpec((1, n_groups, Cg, S), lambda n: (n, 0, 0, 0)),     # xl+mask slabs
                pl.BlockSpec((n_groups, Cg, Cxh), lambda n: (0, 0, 0)),         # pre_w (padded)
                pl.BlockSpec((n_groups, Cg, 1), lambda n: (0, 0, 0)),           # pre_b (padded)
                pl.BlockSpec((n_groups, Cg, 1), lambda n: (0, 0, 0)),           # group gamma
                pl.BlockSpec((n_groups, Cg, 1), lambda n: (0, 0, 0)),           # group beta
                pl.BlockSpec((n_groups, Cg, 1), lambda n: (0, 0, 0)),           # group conv bias
                pl.BlockSpec((n_groups, 27, Cg, S), lambda n: (0, 0, 0, 0)),    # wvalid
                pl.BlockSpec((n_groups, Cg, S), lambda n: (0, 0, 0)),           # coeff
                pl.BlockSpec((n_groups, Cg, 1), lambda n: (0, 0, 0)),           # tail gamma
                pl.BlockSpec((n_groups, Cg, 1), lambda n: (0, 0, 0)),           # tail beta
                pl.BlockSpec((n_groups, Cout, Cg), lambda n: (0, 0, 0)),        # tail W (split)
                pl.BlockSpec((Cout, 1), lambda n: (0, 0)),                      # tail bias
            ],
            out_specs=pl.BlockSpec((1, Cout, S), lambda n: (n, 0, 0)),
        ),
        compiler_params=pltpu.CompilerParams(
            dimension_semantics=("parallel",),
            vmem_limit_bytes=_vmem_limit_bytes()),
    )(xh_flat, xlm, pwg, pbg, g_gamma, g_beta, g_cb, wvalid, coeff,
      t_gamma, t_beta, twg, t_bias)

    return out_flat.reshape(N, Cout, D, H, W)


# ---------------------------------------------------------------------------
# Pure-JAX reference (matches the PyTorch module semantics, NCDHW)
# ---------------------------------------------------------------------------
def _reference(xh, xl, params):
    N, Cxh, D, H, W = xh.shape
    dim_xl = params["pre_w"].shape[0]
    q = dim_xl // 4

    xl_up = _trilinear_resize(xl, (D, H, W))
    xh2 = (jnp.einsum("ncdhw,oc->nodhw", xh, params["pre_w"])
           + params["pre_b"][None, :, None, None, None])
    xh2 = _trilinear_resize(xh2, (D, H, W))
    mask = jnp.zeros((N, 1, D, H, W), jnp.float32)

    def layer_norm(x, gamma, beta):
        mu = jnp.mean(x, axis=(2, 3, 4), keepdims=True)
        var = jnp.mean(jnp.square(x - mu), axis=(2, 3, 4), keepdims=True)
        return ((x - mu) / jnp.sqrt(var + LN_EPS) * gamma[None, :, None, None, None]
                + beta[None, :, None, None, None])

    def dw_conv(x, w, b, dil):
        C = x.shape[1]
        rhs = w.reshape(C, 1, 3, 3, 3)
        y = lax.conv_general_dilated(
            x, rhs, window_strides=(1, 1, 1),
            padding=[(dil, dil)] * 3, rhs_dilation=(dil, dil, dil),
            dimension_numbers=("NCDHW", "OIDHW", "NCDHW"),
            feature_group_count=C)
        return y + b[None, :, None, None, None]

    outs = []
    for g, dil in enumerate(D_LIST):
        gin = jnp.concatenate(
            [xh2[:, g * q:(g + 1) * q], xl_up[:, g * q:(g + 1) * q], mask], axis=1)
        h1 = layer_norm(gin, params[f"g{g}_gamma"], params[f"g{g}_beta"])
        outs.append(dw_conv(h1, params[f"g{g}_w"], params[f"g{g}_b"], dil))
    x = jnp.concatenate(outs, axis=1)
    xn = layer_norm(x, params["tail_gamma"], params["tail_beta"])
    return (jnp.einsum("ncdhw,oc->nodhw", xn, params["tail_w"])
            + params["tail_b"][None, :, None, None, None])


if __name__ == "__main__":
    key = jax.random.PRNGKey(0)
    N = 2
    dim_xh, dim_xl = 12, 16
    D = H = W = 8          # xh spatial size (bridge output size)
    d = h = w = 4          # xl spatial size (upsampled by the bridge)

    ks = jax.random.split(key, 16)
    xh = jax.random.normal(ks[0], (N, dim_xh, D, H, W), jnp.float32)
    xl = jax.random.normal(ks[1], (N, dim_xl, d, h, w), jnp.float32)

    Cg = dim_xl // 2 + 1
    params = {
        "pre_w": jax.random.normal(ks[2], (dim_xl, dim_xh), jnp.float32) * 0.2,
        "pre_b": jax.random.normal(ks[3], (dim_xl,), jnp.float32) * 0.1,
        "tail_gamma": 1.0 + 0.1 * jax.random.normal(ks[4], (4 * Cg,), jnp.float32),
        "tail_beta": 0.1 * jax.random.normal(ks[5], (4 * Cg,), jnp.float32),
        "tail_w": jax.random.normal(ks[6], (dim_xl, 4 * Cg), jnp.float32) * 0.15,
        "tail_b": jax.random.normal(ks[7], (dim_xl,), jnp.float32) * 0.1,
    }
    for g in range(4):
        params[f"g{g}_gamma"] = 1.0 + 0.1 * jax.random.normal(ks[8 + g], (Cg,), jnp.float32)
        params[f"g{g}_beta"] = 0.1 * jax.random.normal(ks[12 + g], (Cg,), jnp.float32)
        params[f"g{g}_w"] = jax.random.normal(
            jax.random.fold_in(key, 100 + g), (Cg, 3, 3, 3), jnp.float32) * 0.15
        params[f"g{g}_b"] = jax.random.normal(
            jax.random.fold_in(key, 200 + g), (Cg,), jnp.float32) * 0.1

    out = jax.jit(gab3d_forward)(xh, xl, params)
    out = jax.block_until_ready(out)
    assert out.shape == (N, dim_xl, D, H, W)

    ref = jax.jit(_reference)(xh, xl, params)
    ref = jax.block_until_ready(ref)
    err = float(jnp.max(jnp.abs(out - ref)))
    if err > 5e-2:
        raise AssertionError(f"mismatch vs reference: max abs err {err}")
    print("KERNEL_OK")
</pallas_src>

<mosaic_0001>
module attributes {stable_mosaic.version = 11 : i64} {
  func.func @kernel(%arg0: i32, %arg1: memref<1x12x512xf32, #tpu.memory_space<vmem>>, %arg2: memref<1x4x9x512xf32, #tpu.memory_space<vmem>>, %arg3: memref<4x9x12xf32, #tpu.memory_space<vmem>>, %arg4: memref<4x9x1xf32, #tpu.memory_space<vmem>>, %arg5: memref<4x9x1xf32, #tpu.memory_space<vmem>>, %arg6: memref<4x9x1xf32, #tpu.memory_space<vmem>>, %arg7: memref<4x9x1xf32, #tpu.memory_space<vmem>>, %arg8: memref<4x27x9x512xf32, #tpu.memory_space<vmem>>, %arg9: memref<4x9x512xf32, #tpu.memory_space<vmem>>, %arg10: memref<4x9x1xf32, #tpu.memory_space<vmem>>, %arg11: memref<4x9x1xf32, #tpu.memory_space<vmem>>, %arg12: memref<4x16x9xf32, #tpu.memory_space<vmem>>, %arg13: memref<16x1xf32, #tpu.memory_space<vmem>>, %arg14: memref<1x16x512xf32, #tpu.memory_space<vmem>>) attributes {dimension_semantics = [#tpu.dimension_semantics<parallel>], iteration_bounds = array<i64: 2>, scalar_prefetch = 0 : i64, scratch_operands = 0 : i64, tpu.core_type = #tpu.core_type<tc>, window_params = [{transform_indices = @transform_0, window_bounds = array<i64: 1, 12, 512>}, {transform_indices = @transform_1, window_bounds = array<i64: 1, 4, 9, 512>}, {pipeline_mode = #tpu.pipeline_mode<synchronous>, transform_indices = @transform_2, window_bounds = array<i64: 4, 9, 12>}, {pipeline_mode = #tpu.pipeline_mode<synchronous>, transform_indices = @transform_3, window_bounds = array<i64: 4, 9, 1>}, {pipeline_mode = #tpu.pipeline_mode<synchronous>, transform_indices = @transform_4, window_bounds = array<i64: 4, 9, 1>}, {pipeline_mode = #tpu.pipeline_mode<synchronous>, transform_indices = @transform_5, window_bounds = array<i64: 4, 9, 1>}, {pipeline_mode = #tpu.pipeline_mode<synchronous>, transform_indices = @transform_6, window_bounds = array<i64: 4, 9, 1>}, {pipeline_mode = #tpu.pipeline_mode<synchronous>, transform_indices = @transform_7, window_bounds = array<i64: 4, 27, 9, 512>}, {pipeline_mode = #tpu.pipeline_mode<synchronous>, transform_indices = @transform_8, window_bounds = array<i64: 4, 9, 512>}, {pipeline_mode = #tpu.pipeline_mode<synchronous>, transform_indices = @transform_9, window_bounds = array<i64: 4, 9, 1>}, {pipeline_mode = #tpu.pipeline_mode<synchronous>, transform_indices = @transform_10, window_bounds = array<i64: 4, 9, 1>}, {pipeline_mode = #tpu.pipeline_mode<synchronous>, transform_indices = @transform_11, window_bounds = array<i64: 4, 16, 9>}, {pipeline_mode = #tpu.pipeline_mode<synchronous>, transform_indices = @transform_12, window_bounds = array<i64: 16, 1>}, {transform_indices = @transform_13, window_bounds = array<i64: 1, 16, 512>}]} {
    %c0 = arith.constant 0 : index
    %c0_0 = arith.constant 0 : index
    %c0_1 = arith.constant 0 : index
    %0 = vector.load %arg1[%c0, %c0_0, %c0_1] : memref<1x12x512xf32, #tpu.memory_space<vmem>>, vector<1x12x512xf32>
    %1 = vector.shape_cast %0 : vector<1x12x512xf32> to vector<12x512xf32>
    %cst = arith.constant 0.000000e+00 : f32
    %2 = vector.broadcast %cst : f32 to vector<16x512xf32>
    %c0_2 = arith.constant 0 : index
    %c0_3 = arith.constant 0 : index
    %c0_4 = arith.constant 0 : index
    %3 = vector.load %arg3[%c0_2, %c0_3, %c0_4] : memref<4x9x12xf32, #tpu.memory_space<vmem>>, vector<1x9x12xf32>
    %4 = vector.shape_cast %3 : vector<1x9x12xf32> to vector<9x12xf32>
    %cst_5 = arith.constant dense<0.000000e+00> : vector<9x512xf32>
    %5 = tpu.matmul %4, %1, %cst_5 {dimension_numbers = #tpu.dot_dimension_numbers<[1], [0], [0], [1], [0, 0, 1, 1], [], []>} : vector<9x12xf32>, vector<12x512xf32>, vector<9x512xf32> -> vector<9x512xf32>
    %c0_6 = arith.constant 0 : index
    %c0_7 = arith.constant 0 : index
    %c0_8 = arith.constant 0 : index
    %6 = vector.load %arg4[%c0_6, %c0_7, %c0_8] : memref<4x9x1xf32, #tpu.memory_space<vmem>>, vector<1x9x1xf32>
    %7 = vector.shape_cast %6 : vector<1x9x1xf32> to vector<9x1xf32>
    %8 = vector.broadcast %7 : vector<9x1xf32> to vector<9x512xf32>
    %9 = arith.addf %5, %8 : vector<9x512xf32>
    %c0_9 = arith.constant 0 : index
    %c0_10 = arith.constant 0 : index
    %c0_11 = arith.constant 0 : index
    %c0_12 = arith.constant 0 : index
    %10 = vector.load %arg2[%c0_9, %c0_10, %c0_11, %c0_12] : memref<1x4x9x512xf32, #tpu.memory_space<vmem>>, vector<1x1x9x512xf32>
    %11 = vector.shape_cast %10 : vector<1x1x9x512xf32> to vector<9x512xf32>
    %12 = arith.addf %9, %11 : vector<9x512xf32>
    %cst_13 = arith.constant dense<0.000000e+00> : vector<9xf32>
    %13 = vector.multi_reduction <add>, %12, %cst_13 [1] : vector<9x512xf32> to vector<9xf32>
    %14 = vector.shape_cast %13 : vector<9xf32> to vector<9x1xf32>
    %cst_14 = arith.constant 5.120000e+02 : f32
    %15 = vector.broadcast %cst_14 : f32 to vector<9x1xf32>
    %16 = arith.divf %14, %15 : vector<9x1xf32>
    %17 = vector.broadcast %16 : vector<9x1xf32> to vector<9x512xf32>
    %18 = arith.subf %12, %17 : vector<9x512xf32>
    %19 = arith.mulf %18, %18 : vector<9x512xf32>
    %cst_15 = arith.constant dense<0.000000e+00> : vector<9xf32>
    %20 = vector.multi_reduction <add>, %19, %cst_15 [1] : vector<9x512xf32> to vector<9xf32>
    %21 = vector.shape_cast %20 : vector<9xf32> to vector<9x1xf32>
    %cst_16 = arith.constant 5.120000e+02 : f32
    %22 = vector.broadcast %cst_16 : f32 to vector<9x1xf32>
    %23 = arith.divf %21, %22 : vector<9x1xf32>
    %c0_17 = arith.constant 0 : index
    %c0_18 = arith.constant 0 : index
    %c0_19 = arith.constant 0 : index
    %24 = vector.load %arg5[%c0_17, %c0_18, %c0_19] : memref<4x9x1xf32, #tpu.memory_space<vmem>>, vector<1x9x1xf32>
    %25 = vector.shape_cast %24 : vector<1x9x1xf32> to vector<9x1xf32>
    %cst_20 = arith.constant 9.99999997E-7 : f32
    %26 = vector.broadcast %cst_20 : f32 to vector<9x1xf32>
    %27 = arith.addf %23, %26 : vector<9x1xf32>
    %28 = math.rsqrt %27 : vector<9x1xf32>
    %29 = arith.mulf %25, %28 : vector<9x1xf32>
    %cst_21 = arith.constant 0.000000e+00 : f32
    %30 = vector.broadcast %cst_21 : f32 to vector<9x512xf32>
    %c73_i32 = arith.constant 73 : i32
    %31 = tpu.dynamic_rotate %18 by %c73_i32 dim 1 : vector<9x512xf32>, i32 -> vector<9x512xf32>
    %c0_22 = arith.constant 0 : index
    %c0_23 = arith.constant 0 : index
    %c0_24 = arith.constant 0 : index
    %c0_25 = arith.constant 0 : index
    %32 = vector.load %arg8[%c0_22, %c0_23, %c0_24, %c0_25] : memref<4x27x9x512xf32, #tpu.memory_space<vmem>>, vector<1x1x9x512xf32>
    %33 = vector.shape_cast %32 : vector<1x1x9x512xf32> to vector<9x512xf32>
    %34 = arith.mulf %33, %31 : vector<9x512xf32>
    %35 = arith.addf %30, %34 : vector<9x512xf32>
    %c72_i32 = arith.constant 72 : i32
    %36 = tpu.dynamic_rotate %18 by %c72_i32 dim 1 : vector<9x512xf32>, i32 -> vector<9x512xf32>
    %c0_26 = arith.constant 0 : index
    %c1 = arith.constant 1 : index
    %c0_27 = arith.constant 0 : index
    %c0_28 = arith.constant 0 : index
    %37 = vector.load %arg8[%c0_26, %c1, %c0_27, %c0_28] : memref<4x27x9x512xf32, #tpu.memory_space<vmem>>, vector<1x1x9x512xf32>
    %38 = vector.shape_cast %37 : vector<1x1x9x512xf32> to vector<9x512xf32>
    %39 = arith.mulf %38, %36 : vector<9x512xf32>
    %40 = arith.addf %35, %39 : vector<9x512xf32>
    %c71_i32 = arith.constant 71 : i32
    %41 = tpu.dynamic_rotate %18 by %c71_i32 dim 1 : vector<9x512xf32>, i32 -> vector<9x512xf32>
    %c0_29 = arith.constant 0 : index
    %c2 = arith.constant 2 : index
    %c0_30 = arith.constant 0 : index
    %c0_31 = arith.constant 0 : index
    %42 = vector.load %arg8[%c0_29, %c2, %c0_30, %c0_31] : memref<4x27x9x512xf32, #tpu.memory_space<vmem>>, vector<1x1x9x512xf32>
    %43 = vector.shape_cast %42 : vector<1x1x9x512xf32> to vector<9x512xf32>
    %44 = arith.mulf %43, %41 : vector<9x512xf32>
    %45 = arith.addf %40, %44 : vector<9x512xf32>
    %c65_i32 = arith.constant 65 : i32
    %46 = tpu.dynamic_rotate %18 by %c65_i32 dim 1 : vector<9x512xf32>, i32 -> vector<9x512xf32>
    %c0_32 = arith.constant 0 : index
    %c3 = arith.constant 3 : index
    %c0_33 = arith.constant 0 : index
    %c0_34 = arith.constant 0 : index
    %47 = vector.load %arg8[%c0_32, %c3, %c0_33, %c0_34] : memref<4x27x9x512xf32, #tpu.memory_space<vmem>>, vector<1x1x9x512xf32>
    %48 = vector.shape_cast %47 : vector<1x1x9x512xf32> to vector<9x512xf32>
    %49 = arith.mulf %48, %46 : vector<9x512xf32>
    %50 = arith.addf %45, %49 : vector<9x512xf32>
    %c64_i32 = arith.constant 64 : i32
    %51 = tpu.dynamic_rotate %18 by %c64_i32 dim 1 : vector<9x512xf32>, i32 -> vector<9x512xf32>
    %c0_35 = arith.constant 0 : index
    %c4 = arith.constant 4 : index
    %c0_36 = arith.constant 0 : index
    %c0_37 = arith.constant 0 : index
    %52 = vector.load %arg8[%c0_35, %c4, %c0_36, %c0_37] : memref<4x27x9x512xf32, #tpu.memory_space<vmem>>, vector<1x1x9x512xf32>
    %53 = vector.shape_cast %52 : vector<1x1x9x512xf32> to vector<9x512xf32>
    %54 = arith.mulf %53, %51 : vector<9x512xf32>
    %55 = arith.addf %50, %54 : vector<9x512xf32>
    %c63_i32 = arith.constant 63 : i32
    %56 = tpu.dynamic_rotate %18 by %c63_i32 dim 1 : vector<9x512xf32>, i32 -> vector<9x512xf32>
    %c0_38 = arith.constant 0 : index
    %c5 = arith.constant 5 : index
    %c0_39 = arith.constant 0 : index
    %c0_40 = arith.constant 0 : index
    %57 = vector.load %arg8[%c0_38, %c5, %c0_39, %c0_40] : memref<4x27x9x512xf32, #tpu.memory_space<vmem>>, vector<1x1x9x512xf32>
    %58 = vector.shape_cast %57 : vector<1x1x9x512xf32> to vector<9x512xf32>
    %59 = arith.mulf %58, %56 : vector<9x512xf32>
    %60 = arith.addf %55, %59 : vector<9x512xf32>
    %c57_i32 = arith.constant 57 : i32
    %61 = tpu.dynamic_rotate %18 by %c57_i32 dim 1 : vector<9x512xf32>, i32 -> vector<9x512xf32>
    %c0_41 = arith.constant 0 : index
    %c6 = arith.constant 6 : index
    %c0_42 = arith.constant 0 : index
    %c0_43 = arith.constant 0 : index
    %62 = vector.load %arg8[%c0_41, %c6, %c0_42, %c0_43] : memref<4x27x9x512xf32, #tpu.memory_space<vmem>>, vector<1x1x9x512xf32>
    %63 = vector.shape_cast %62 : vector<1x1x9x512xf32> to vector<9x512xf32>
    %64 = arith.mulf %63, %61 : vector<9x512xf32>
    %65 = arith.addf %60, %64 : vector<9x512xf32>
    %c56_i32 = arith.constant 56 : i32
    %66 = tpu.dynamic_rotate %18 by %c56_i32 dim 1 : vector<9x512xf32>, i32 -> vector<9x512xf32>
    %c0_44 = arith.constant 0 : index
    %c7 = arith.constant 7 : index
    %c0_45 = arith.constant 0 : index
    %c0_46 = arith.constant 0 : index
    %67 = vector.load %arg8[%c0_44, %c7, %c0_45, %c0_46] : memref<4x27x9x512xf32, #tpu.memory_space<vmem>>, vector<1x1x9x512xf32>
    %68 = vector.shape_cast %67 : vector<1x1x9x512xf32> to vector<9x512xf32>
    %69 = arith.mulf %68, %66 : vector<9x512xf32>
    %70 = arith.addf %65, %69 : vector<9x512xf32>
    %c55_i32 = arith.constant 55 : i32
    %71 = tpu.dynamic_rotate %18 by %c55_i32 dim 1 : vector<9x512xf32>, i32 -> vector<9x512xf32>
    %c0_47 = arith.constant 0 : index
    %c8 = arith.constant 8 : index
    %c0_48 = arith.constant 0 : index
    %c0_49 = arith.constant 0 : index
    %72 = vector.load %arg8[%c0_47, %c8, %c0_48, %c0_49] : memref<4x27x9x512xf32, #tpu.memory_space<vmem>>, vector<1x1x9x512xf32>
    %73 = vector.shape_cast %72 : vector<1x1x9x512xf32> to vector<9x512xf32>
    %74 = arith.mulf %73, %71 : vector<9x512xf32>
    %75 = arith.addf %70, %74 : vector<9x512xf32>
    %c9_i32 = arith.constant 9 : i32
    %76 = tpu.dynamic_rotate %18 by %c9_i32 dim 1 : vector<9x512xf32>, i32 -> vector<9x512xf32>
    %c0_50 = arith.constant 0 : index
    %c9 = arith.constant 9 : index
    %c0_51 = arith.constant 0 : index
    %c0_52 = arith.constant 0 : index
    %77 = vector.load %arg8[%c0_50, %c9, %c0_51, %c0_52] : memref<4x27x9x512xf32, #tpu.memory_space<vmem>>, vector<1x1x9x512xf32>
    %78 = vector.shape_cast %77 : vector<1x1x9x512xf32> to vector<9x512xf32>
    %79 = arith.mulf %78, %76 : vector<9x512xf32>
    %80 = arith.addf %75, %79 : vector<9x512xf32>
    %c8_i32 = arith.constant 8 : i32
    %81 = tpu.dynamic_rotate %18 by %c8_i32 dim 1 : vector<9x512xf32>, i32 -> vector<9x512xf32>
    %c0_53 = arith.constant 0 : index
    %c10 = arith.constant 10 : index
    %c0_54 = arith.constant 0 : index
    %c0_55 = arith.constant 0 : index
    %82 = vector.load %arg8[%c0_53, %c10, %c0_54, %c0_55] : memref<4x27x9x512xf32, #tpu.memory_space<vmem>>, vector<1x1x9x512xf32>
    %83 = vector.shape_cast %82 : vector<1x1x9x512xf32> to vector<9x512xf32>
    %84 = arith.mulf %83, %81 : vector<9x512xf32>
    %85 = arith.addf %80, %84 : vector<9x512xf32>
    %c7_i32 = arith.constant 7 : i32
    %86 = tpu.dynamic_rotate %18 by %c7_i32 dim 1 : vector<9x512xf32>, i32 -> vector<9x512xf32>
    %c0_56 = arith.constant 0 : index
    %c11 = arith.constant 11 : index
    %c0_57 = arith.constant 0 : index
    %c0_58 = arith.constant 0 : index
    %87 = vector.load %arg8[%c0_56, %c11, %c0_57, %c0_58] : memref<4x27x9x512xf32, #tpu.memory_space<vmem>>, vector<1x1x9x512xf32>
    %88 = vector.shape_cast %87 : vector<1x1x9x512xf32> to vector<9x512xf32>
    %89 = arith.mulf %88, %86 : vector<9x512xf32>
    %90 = arith.addf %85, %89 : vector<9x512xf32>
    %c1_i32 = arith.constant 1 : i32
    %91 = tpu.dynamic_rotate %18 by %c1_i32 dim 1 : vector<9x512xf32>, i32 -> vector<9x512xf32>
    %c0_59 = arith.constant 0 : index
    %c12 = arith.constant 12 : index
    %c0_60 = arith.constant 0 : index
    %c0_61 = arith.constant 0 : index
    %92 = vector.load %arg8[%c0_59, %c12, %c0_60, %c0_61] : memref<4x27x9x512xf32, #tpu.memory_space<vmem>>, vector<1x1x9x512xf32>
    %93 = vector.shape_cast %92 : vector<1x1x9x512xf32> to vector<9x512xf32>
    %94 = arith.mulf %93, %91 : vector<9x512xf32>
    %95 = arith.addf %90, %94 : vector<9x512xf32>
    %c0_62 = arith.constant 0 : index
    %c13 = arith.constant 13 : index
    %c0_63 = arith.constant 0 : index
    %c0_64 = arith.constant 0 : index
    %96 = vector.load %arg8[%c0_62, %c13, %c0_63, %c0_64] : memref<4x27x9x512xf32, #tpu.memory_space<vmem>>, vector<1x1x9x512xf32>
    %97 = vector.shape_cast %96 : vector<1x1x9x512xf32> to vector<9x512xf32>
    %98 = arith.mulf %97, %18 : vector<9x512xf32>
    %99 = arith.addf %95, %98 : vector<9x512xf32>
    %c511_i32 = arith.constant 511 : i32
    %100 = tpu.dynamic_rotate %18 by %c511_i32 dim 1 : vector<9x512xf32>, i32 -> vector<9x512xf32>
    %c0_65 = arith.constant 0 : index
    %c14 = arith.constant 14 : index
    %c0_66 = arith.constant 0 : index
    %c0_67 = arith.constant 0 : index
    %101 = vector.load %arg8[%c0_65, %c14, %c0_66, %c0_67] : memref<4x27x9x512xf32, #tpu.memory_space<vmem>>, vector<1x1x9x512xf32>
    %102 = vector.shape_cast %101 : vector<1x1x9x512xf32> to vector<9x512xf32>
    %103 = arith.mulf %102, %100 : vector<9x512xf32>
    %104 = arith.addf %99, %103 : vector<9x512xf32>
    %c505_i32 = arith.constant 505 : i32
    %105 = tpu.dynamic_rotate %18 by %c505_i32 dim 1 : vector<9x512xf32>, i32 -> vector<9x512xf32>
    %c0_68 = arith.constant 0 : index
    %c15 = arith.constant 15 : index
    %c0_69 = arith.constant 0 : index
    %c0_70 = arith.constant 0 : index
    %106 = vector.load %arg8[%c0_68, %c15, %c0_69, %c0_70] : memref<4x27x9x512xf32, #tpu.memory_space<vmem>>, vector<1x1x9x512xf32>
    %107 = vector.shape_cast %106 : vector<1x1x9x512xf32> to vector<9x512xf32>
    %108 = arith.mulf %107, %105 : vector<9x512xf32>
    %109 = arith.addf %104, %108 : vector<9x512xf32>
    %c504_i32 = arith.constant 504 : i32
    %110 = tpu.dynamic_rotate %18 by %c504_i32 dim 1 : vector<9x512xf32>, i32 -> vector<9x512xf32>
    %c0_71 = arith.constant 0 : index
    %c16 = arith.constant 16 : index
    %c0_72 = arith.constant 0 : index
    %c0_73 = arith.constant 0 : index
    %111 = vector.load %arg8[%c0_71, %c16, %c0_72, %c0_73] : memref<4x27x9x512xf32, #tpu.memory_space<vmem>>, vector<1x1x9x512xf32>
    %112 = vector.shape_cast %111 : vector<1x1x9x512xf32> to vector<9x512xf32>
    %113 = arith.mulf %112, %110 : vector<9x512xf32>
    %114 = arith.addf %109, %113 : vector<9x512xf32>
    %c503_i32 = arith.constant 503 : i32
    %115 = tpu.dynamic_rotate %18 by %c503_i32 dim 1 : vector<9x512xf32>, i32 -> vector<9x512xf32>
    %c0_74 = arith.constant 0 : index
    %c17 = arith.constant 17 : index
    %c0_75 = arith.constant 0 : index
    %c0_76 = arith.constant 0 : index
    %116 = vector.load %arg8[%c0_74, %c17, %c0_75, %c0_76] : memref<4x27x9x512xf32, #tpu.memory_space<vmem>>, vector<1x1x9x512xf32>
    %117 = vector.shape_cast %116 : vector<1x1x9x512xf32> to vector<9x512xf32>
    %118 = arith.mulf %117, %115 : vector<9x512xf32>
    %119 = arith.addf %114, %118 : vector<9x512xf32>
    %c457_i32 = arith.constant 457 : i32
    %120 = tpu.dynamic_rotate %18 by %c457_i32 dim 1 : vector<9x512xf32>, i32 -> vector<9x512xf32>
    %c0_77 = arith.constant 0 : index
    %c18 = arith.constant 18 : index
    %c0_78 = arith.constant 0 : index
    %c0_79 = arith.constant 0 : index
    %121 = vector.load %arg8[%c0_77, %c18, %c0_78, %c0_79] : memref<4x27x9x512xf32, #tpu.memory_space<vmem>>, vector<1x1x9x512xf32>
    %122 = vector.shape_cast %121 : vector<1x1x9x512xf32> to vector<9x512xf32>
    %123 = arith.mulf %122, %120 : vector<9x512xf32>
    %124 = arith.addf %119, %123 : vector<9x512xf32>
    %c456_i32 = arith.constant 456 : i32
    %125 = tpu.dynamic_rotate %18 by %c456_i32 dim 1 : vector<9x512xf32>, i32 -> vector<9x512xf32>
    %c0_80 = arith.constant 0 : index
    %c19 = arith.constant 19 : index
    %c0_81 = arith.constant 0 : index
    %c0_82 = arith.constant 0 : index
    %126 = vector.load %arg8[%c0_80, %c19, %c0_81, %c0_82] : memref<4x27x9x512xf32, #tpu.memory_space<vmem>>, vector<1x1x9x512xf32>
    %127 = vector.shape_cast %126 : vector<1x1x9x512xf32> to vector<9x512xf32>
    %128 = arith.mulf %127, %125 : vector<9x512xf32>
    %129 = arith.addf %124, %128 : vector<9x512xf32>
    %c455_i32 = arith.constant 455 : i32
    %130 = tpu.dynamic_rotate %18 by %c455_i32 dim 1 : vector<9x512xf32>, i32 -> vector<9x512xf32>
    %c0_83 = arith.constant 0 : index
    %c20 = arith.constant 20 : index
    %c0_84 = arith.constant 0 : index
    %c0_85 = arith.constant 0 : index
    %131 = vector.load %arg8[%c0_83, %c20, %c0_84, %c0_85] : memref<4x27x9x512xf32, #tpu.memory_space<vmem>>, vector<1x1x9x512xf32>
    %132 = vector.shape_cast %131 : vector<1x1x9x512xf32> to vector<9x512xf32>
    %133 = arith.mulf %132, %130 : vector<9x512xf32>
    %134 = arith.addf %129, %133 : vector<9x512xf32>
    %c449_i32 = arith.constant 449 : i32
    %135 = tpu.dynamic_rotate %18 by %c449_i32 dim 1 : vector<9x512xf32>, i32 -> vector<9x512xf32>
    %c0_86 = arith.constant 0 : index
    %c21 = arith.constant 21 : index
    %c0_87 = arith.constant 0 : index
    %c0_88 = arith.constant 0 : index
    %136 = vector.load %arg8[%c0_86, %c21, %c0_87, %c0_88] : memref<4x27x9x512xf32, #tpu.memory_space<vmem>>, vector<1x1x9x512xf32>
    %137 = vector.shape_cast %136 : vector<1x1x9x512xf32> to vector<9x512xf32>
    %138 = arith.mulf %137, %135 : vector<9x512xf32>
    %139 = arith.addf %134, %138 : vector<9x512xf32>
    %c448_i32 = arith.constant 448 : i32
    %140 = tpu.dynamic_rotate %18 by %c448_i32 dim 1 : vector<9x512xf32>, i32 -> vector<9x512xf32>
    %c0_89 = arith.constant 0 : index
    %c22 = arith.constant 22 : index
    %c0_90 = arith.constant 0 : index
    %c0_91 = arith.constant 0 : index
    %141 = vector.load %arg8[%c0_89, %c22, %c0_90, %c0_91] : memref<4x27x9x512xf32, #tpu.memory_space<vmem>>, vector<1x1x9x512xf32>
    %142 = vector.shape_cast %141 : vector<1x1x9x512xf32> to vector<9x512xf32>
    %143 = arith.mulf %142, %140 : vector<9x512xf32>
    %144 = arith.addf %139, %143 : vector<9x512xf32>
    %c447_i32 = arith.constant 447 : i32
    %145 = tpu.dynamic_rotate %18 by %c447_i32 dim 1 : vector<9x512xf32>, i32 -> vector<9x512xf32>
    %c0_92 = arith.constant 0 : index
    %c23 = arith.constant 23 : index
    %c0_93 = arith.constant 0 : index
    %c0_94 = arith.constant 0 : index
    %146 = vector.load %arg8[%c0_92, %c23, %c0_93, %c0_94] : memref<4x27x9x512xf32, #tpu.memory_space<vmem>>, vector<1x1x9x512xf32>
    %147 = vector.shape_cast %146 : vector<1x1x9x512xf32> to vector<9x512xf32>
    %148 = arith.mulf %147, %145 : vector<9x512xf32>
    %149 = arith.addf %144, %148 : vector<9x512xf32>
    %c441_i32 = arith.constant 441 : i32
    %150 = tpu.dynamic_rotate %18 by %c441_i32 dim 1 : vector<9x512xf32>, i32 -> vector<9x512xf32>
    %c0_95 = arith.constant 0 : index
    %c24 = arith.constant 24 : index
    %c0_96 = arith.constant 0 : index
    %c0_97 = arith.constant 0 : index
    %151 = vector.load %arg8[%c0_95, %c24, %c0_96, %c0_97] : memref<4x27x9x512xf32, #tpu.memory_space<vmem>>, vector<1x1x9x512xf32>
    %152 = vector.shape_cast %151 : vector<1x1x9x512xf32> to vector<9x512xf32>
    %153 = arith.mulf %152, %150 : vector<9x512xf32>
    %154 = arith.addf %149, %153 : vector<9x512xf32>
    %c440_i32 = arith.constant 440 : i32
    %155 = tpu.dynamic_rotate %18 by %c440_i32 dim 1 : vector<9x512xf32>, i32 -> vector<9x512xf32>
    %c0_98 = arith.constant 0 : index
    %c25 = arith.constant 25 : index
    %c0_99 = arith.constant 0 : index
    %c0_100 = arith.constant 0 : index
    %156 = vector.load %arg8[%c0_98, %c25, %c0_99, %c0_100] : memref<4x27x9x512xf32, #tpu.memory_space<vmem>>, vector<1x1x9x512xf32>
    %157 = vector.shape_cast %156 : vector<1x1x9x512xf32> to vector<9x512xf32>
    %158 = arith.mulf %157, %155 : vector<9x512xf32>
    %159 = arith.addf %154, %158 : vector<9x512xf32>
    %c439_i32 = arith.constant 439 : i32
    %160 = tpu.dynamic_rotate %18 by %c439_i32 dim 1 : vector<9x512xf32>, i32 -> vector<9x512xf32>
    %c0_101 = arith.constant 0 : index
    %c26 = arith.constant 26 : index
    %c0_102 = arith.constant 0 : index
    %c0_103 = arith.constant 0 : index
    %161 = vector.load %arg8[%c0_101, %c26, %c0_102, %c0_103] : memref<4x27x9x512xf32, #tpu.memory_space<vmem>>, vector<1x1x9x512xf32>
    %162 = vector.shape_cast %161 : vector<1x1x9x512xf32> to vector<9x512xf32>
    %163 = arith.mulf %162, %160 : vector<9x512xf32>
    %164 = arith.addf %159, %163 : vector<9x512xf32>
    %c0_104 = arith.constant 0 : index
    %c0_105 = arith.constant 0 : index
    %c0_106 = arith.constant 0 : index
    %165 = vector.load %arg7[%c0_104, %c0_105, %c0_106] : memref<4x9x1xf32, #tpu.memory_space<vmem>>, vector<1x9x1xf32>
    %166 = vector.shape_cast %165 : vector<1x9x1xf32> to vector<9x1xf32>
    %167 = vector.broadcast %29 : vector<9x1xf32> to vector<9x512xf32>
    %168 = arith.mulf %167, %164 : vector<9x512xf32>
    %169 = vector.broadcast %166 : vector<9x1xf32> to vector<9x512xf32>
    %170 = arith.addf %169, %168 : vector<9x512xf32>
    %c0_107 = arith.constant 0 : index
    %c0_108 = arith.constant 0 : index
    %c0_109 = arith.constant 0 : index
    %171 = vector.load %arg6[%c0_107, %c0_108, %c0_109] : memref<4x9x1xf32, #tpu.memory_space<vmem>>, vector<1x9x1xf32>
    %172 = vector.shape_cast %171 : vector<1x9x1xf32> to vector<9x1xf32>
    %c0_110 = arith.constant 0 : index
    %c0_111 = arith.constant 0 : index
    %c0_112 = arith.constant 0 : index
    %173 = vector.load %arg9[%c0_110, %c0_111, %c0_112] : memref<4x9x512xf32, #tpu.memory_space<vmem>>, vector<1x9x512xf32>
    %174 = vector.shape_cast %173 : vector<1x9x512xf32> to vector<9x512xf32>
    %175 = vector.broadcast %172 : vector<9x1xf32> to vector<9x512xf32>
    %176 = arith.mulf %175, %174 : vector<9x512xf32>
    %177 = arith.addf %170, %176 : vector<9x512xf32>
    %cst_113 = arith.constant dense<0.000000e+00> : vector<9xf32>
    %178 = vector.multi_reduction <add>, %177, %cst_113 [1] : vector<9x512xf32> to vector<9xf32>
    %179 = vector.shape_cast %178 : vector<9xf32> to vector<9x1xf32>
    %cst_114 = arith.constant 5.120000e+02 : f32
    %180 = vector.broadcast %cst_114 : f32 to vector<9x1xf32>
    %181 = arith.divf %179, %180 : vector<9x1xf32>
    %182 = vector.broadcast %181 : vector<9x1xf32> to vector<9x512xf32>
    %183 = arith.subf %177, %182 : vector<9x512xf32>
    %184 = arith.mulf %183, %183 : vector<9x512xf32>
    %cst_115 = arith.constant dense<0.000000e+00> : vector<9xf32>
    %185 = vector.multi_reduction <add>, %184, %cst_115 [1] : vector<9x512xf32> to vector<9xf32>
    %186 = vector.shape_cast %185 : vector<9xf32> to vector<9x1xf32>
    %cst_116 = arith.constant 5.120000e+02 : f32
    %187 = vector.broadcast %cst_116 : f32 to vector<9x1xf32>
    %188 = arith.divf %186, %187 : vector<9x1xf32>
    %c0_117 = arith.constant 0 : index
    %c0_118 = arith.constant 0 : index
    %c0_119 = arith.constant 0 : index
    %189 = vector.load %arg10[%c0_117, %c0_118, %c0_119] : memref<4x9x1xf32, #tpu.memory_space<vmem>>, vector<1x9x1xf32>
    %190 = vector.shape_cast %189 : vector<1x9x1xf32> to vector<9x1xf32>
    %cst_120 = arith.constant 9.99999997E-7 : f32
    %191 = vector.broadcast %cst_120 : f32 to vector<9x1xf32>
    %192 = arith.addf %188, %191 : vector<9x1xf32>
    %193 = math.rsqrt %192 : vector<9x1xf32>
    %194 = arith.mulf %190, %193 : vector<9x1xf32>
    %195 = vector.broadcast %194 : vector<9x1xf32> to vector<9x512xf32>
    %196 = arith.mulf %183, %195 : vector<9x512xf32>
    %c0_121 = arith.constant 0 : index
    %c0_122 = arith.constant 0 : index
    %c0_123 = arith.constant 0 : index
    %197 = vector.load %arg11[%c0_121, %c0_122, %c0_123] : memref<4x9x1xf32, #tpu.memory_space<vmem>>, vector<1x9x1xf32>
    %198 = vector.shape_cast %197 : vector<1x9x1xf32> to vector<9x1xf32>
    %199 = vector.broadcast %198 : vector<9x1xf32> to vector<9x512xf32>
    %200 = arith.addf %196, %199 : vector<9x512xf32>
    %c0_124 = arith.constant 0 : index
    %c0_125 = arith.constant 0 : index
    %c0_126 = arith.constant 0 : index
    %201 = vector.load %arg12[%c0_124, %c0_125, %c0_126] : memref<4x16x9xf32, #tpu.memory_space<vmem>>, vector<1x16x9xf32>
    %202 = vector.shape_cast %201 : vector<1x16x9xf32> to vector<16x9xf32>
    %cst_127 = arith.constant dense<0.000000e+00> : vector<16x512xf32>
    %203 = tpu.matmul %202, %200, %cst_127 {dimension_numbers = #tpu.dot_dimension_numbers<[1], [0], [0], [1], [0, 0, 1, 1], [], []>} : vector<16x9xf32>, vector<9x512xf32>, vector<16x512xf32> -> vector<16x512xf32>
    %204 = arith.addf %2, %203 : vector<16x512xf32>
    %c1_128 = arith.constant 1 : index
    %c0_129 = arith.constant 0 : index
    %c0_130 = arith.constant 0 : index
    %205 = vector.load %arg3[%c1_128, %c0_129, %c0_130] : memref<4x9x12xf32, #tpu.memory_space<vmem>>, vector<1x9x12xf32>
    %206 = vector.shape_cast %205 : vector<1x9x12xf32> to vector<9x12xf32>
    %cst_131 = arith.constant dense<0.000000e+00> : vector<9x512xf32>
    %207 = tpu.matmul %206, %1, %cst_131 {dimension_numbers = #tpu.dot_dimension_numbers<[1], [0], [0], [1], [0, 0, 1, 1], [], []>} : vector<9x12xf32>, vector<12x512xf32>, vector<9x512xf32> -> vector<9x512xf32>
    %c1_132 = arith.constant 1 : index
    %c0_133 = arith.constant 0 : index
    %c0_134 = arith.constant 0 : index
    %208 = vector.load %arg4[%c1_132, %c0_133, %c0_134] : memref<4x9x1xf32, #tpu.memory_space<vmem>>, vector<1x9x1xf32>
    %209 = vector.shape_cast %208 : vector<1x9x1xf32> to vector<9x1xf32>
    %210 = vector.broadcast %209 : vector<9x1xf32> to vector<9x512xf32>
    %211 = arith.addf %207, %210 : vector<9x512xf32>
    %c0_135 = arith.constant 0 : index
    %c1_136 = arith.constant 1 : index
    %c0_137 = arith.constant 0 : index
    %c0_138 = arith.constant 0 : index
    %212 = vector.load %arg2[%c0_135, %c1_136, %c0_137, %c0_138] : memref<1x4x9x512xf32, #tpu.memory_space<vmem>>, vector<1x1x9x512xf32>
    %213 = vector.shape_cast %212 : vector<1x1x9x512xf32> to vector<9x512xf32>
    %214 = arith.addf %211, %213 : vector<9x512xf32>
    %cst_139 = arith.constant dense<0.000000e+00> : vector<9xf32>
    %215 = vector.multi_reduction <add>, %214, %cst_139 [1] : vector<9x512xf32> to vector<9xf32>
    %216 = vector.shape_cast %215 : vector<9xf32> to vector<9x1xf32>
    %cst_140 = arith.constant 5.120000e+02 : f32
    %217 = vector.broadcast %cst_140 : f32 to vector<9x1xf32>
    %218 = arith.divf %216, %217 : vector<9x1xf32>
    %219 = vector.broadcast %218 : vector<9x1xf32> to vector<9x512xf32>
    %220 = arith.subf %214, %219 : vector<9x512xf32>
    %221 = arith.mulf %220, %220 : vector<9x512xf32>
    %cst_141 = arith.constant dense<0.000000e+00> : vector<9xf32>
    %222 = vector.multi_reduction <add>, %221, %cst_141 [1] : vector<9x512xf32> to vector<9xf32>
    %223 = vector.shape_cast %222 : vector<9xf32> to vector<9x1xf32>
    %cst_142 = arith.constant 5.120000e+02 : f32
    %224 = vector.broadcast %cst_142 : f32 to vector<9x1xf32>
    %225 = arith.divf %223, %224 : vector<9x1xf32>
    %c1_143 = arith.constant 1 : index
    %c0_144 = arith.constant 0 : index
    %c0_145 = arith.constant 0 : index
    %226 = vector.load %arg5[%c1_143, %c0_144, %c0_145] : memref<4x9x1xf32, #tpu.memory_space<vmem>>, vector<1x9x1xf32>
    %227 = vector.shape_cast %226 : vector<1x9x1xf32> to vector<9x1xf32>
    %cst_146 = arith.constant 9.99999997E-7 : f32
    %228 = vector.broadcast %cst_146 : f32 to vector<9x1xf32>
    %229 = arith.addf %225, %228 : vector<9x1xf32>
    %230 = math.rsqrt %229 : vector<9x1xf32>
    %231 = arith.mulf %227, %230 : vector<9x1xf32>
    %cst_147 = arith.constant 0.000000e+00 : f32
    %232 = vector.broadcast %cst_147 : f32 to vector<9x512xf32>
    %c146_i32 = arith.constant 146 : i32
    %233 = tpu.dynamic_rotate %220 by %c146_i32 dim 1 : vector<9x512xf32>, i32 -> vector<9x512xf32>
    %c1_148 = arith.constant 1 : index
    %c0_149 = arith.constant 0 : index
    %c0_150 = arith.constant 0 : index
    %c0_151 = arith.constant 0 : index
    %234 = vector.load %arg8[%c1_148, %c0_149, %c0_150, %c0_151] : memref<4x27x9x512xf32, #tpu.memory_space<vmem>>, vector<1x1x9x512xf32>
    %235 = vector.shape_cast %234 : vector<1x1x9x512xf32> to vector<9x512xf32>
    %236 = arith.mulf %235, %233 : vector<9x512xf32>
    %237 = arith.addf %232, %236 : vector<9x512xf32>
    %c144_i32 = arith.constant 144 : i32
    %238 = tpu.dynamic_rotate %220 by %c144_i32 dim 1 : vector<9x512xf32>, i32 -> vector<9x512xf32>
    %c1_152 = arith.constant 1 : index
    %c1_153 = arith.constant 1 : index
    %c0_154 = arith.constant 0 : index
    %c0_155 = arith.constant 0 : index
    %239 = vector.load %arg8[%c1_152, %c1_153, %c0_154, %c0_155] : memref<4x27x9x512xf32, #tpu.memory_space<vmem>>, vector<1x1x9x512xf32>
    %240 = vector.shape_cast %239 : vector<1x1x9x512xf32> to vector<9x512xf32>
    %241 = arith.mulf %240, %238 : vector<9x512xf32>
    %242 = arith.addf %237, %241 : vector<9x512xf32>
    %c142_i32 = arith.constant 142 : i32
    %243 = tpu.dynamic_rotate %220 by %c142_i32 dim 1 : vector<9x512xf32>, i32 -> vector<9x512xf32>
    %c1_156 = arith.constant 1 : index
    %c2_157 = arith.constant 2 : index
    %c0_158 = arith.constant 0 : index
    %c0_159 = arith.constant 0 : index
    %244 = vector.load %arg8[%c1_156, %c2_157, %c0_158, %c0_159] : memref<4x27x9x512xf32, #tpu.memory_space<vmem>>, vector<1x1x9x512xf32>
    %245 = vector.shape_cast %244 : vector<1x1x9x512xf32> to vector<9x512xf32>
    %246 = arith.mulf %245, %243 : vector<9x512xf32>
    %247 = arith.addf %242, %246 : vector<9x512xf32>
    %c130_i32 = arith.constant 130 : i32
    %248 = tpu.dynamic_rotate %220 by %c130_i32 dim 1 : vector<9x512xf32>, i32 -> vector<9x512xf32>
    %c1_160 = arith.constant 1 : index
    %c3_161 = arith.constant 3 : index
    %c0_162 = arith.constant 0 : index
    %c0_163 = arith.constant 0 : index
    %249 = vector.load %arg8[%c1_160, %c3_161, %c0_162, %c0_163] : memref<4x27x9x512xf32, #tpu.memory_space<vmem>>, vector<1x1x9x512xf32>
    %250 = vector.shape_cast %249 : vector<1x1x9x512xf32> to vector<9x512xf32>
    %251 = arith.mulf %250, %248 : vector<9x512xf32>
    %252 = arith.addf %247, %251 : vector<9x512xf32>
    %c128_i32 = arith.constant 128 : i32
    %253 = tpu.dynamic_rotate %220 by %c128_i32 dim 1 : vector<9x512xf32>, i32 -> vector<9x512xf32>
    %c1_164 = arith.constant 1 : index
    %c4_165 = arith.constant 4 : index
    %c0_166 = arith.constant 0 : index
    %c0_167 = arith.constant 0 : index
    %254 = vector.load %arg8[%c1_164, %c4_165, %c0_166, %c0_167] : memref<4x27x9x512xf32, #tpu.memory_space<vmem>>, vector<1x1x9x512xf32>
    %255 = vector.shape_cast %254 : vector<1x1x9x512xf32> to vector<9x512xf32>
    %256 = arith.mulf %255, %253 : vector<9x512xf32>
    %257 = arith.addf %252, %256 : vector<9x512xf32>
    %c126_i32 = arith.constant 126 : i32
    %258 = tpu.dynamic_rotate %220 by %c126_i32 dim 1 : vector<9x512xf32>, i32 -> vector<9x512xf32>
    %c1_168 = arith.constant 1 : index
    %c5_169 = arith.constant 5 : index
    %c0_170 = arith.constant 0 : index
    %c0_171 = arith.constant 0 : index
    %259 = vector.load %arg8[%c1_168, %c5_169, %c0_170, %c0_171] : memref<4x27x9x512xf32, #tpu.memory_space<vmem>>, vector<1x1x9x512xf32>
    %260 = vector.shape_cast %259 : vector<1x1x9x512xf32> to vector<9x512xf32>
    %261 = arith.mulf %260, %258 : vector<9x512xf32>
    %262 = arith.addf %257, %261 : vector<9x512xf32>
    %c114_i32 = arith.constant 114 : i32
    %263 = tpu.dynamic_rotate %220 by %c114_i32 dim 1 : vector<9x512xf32>, i32 -> vector<9x512xf32>
    %c1_172 = arith.constant 1 : index
    %c6_173 = arith.constant 6 : index
    %c0_174 = arith.constant 0 : index
    %c0_175 = arith.constant 0 : index
    %264 = vector.load %arg8[%c1_172, %c6_173, %c0_174, %c0_175] : memref<4x27x9x512xf32, #tpu.memory_space<vmem>>, vector<1x1x9x512xf32>
    %265 = vector.shape_cast %264 : vector<1x1x9x512xf32> to vector<9x512xf32>
    %266 = arith.mulf %265, %263 : vector<9x512xf32>
    %267 = arith.addf %262, %266 : vector<9x512xf32>
    %c112_i32 = arith.constant 112 : i32
    %268 = tpu.dynamic_rotate %220 by %c112_i32 dim 1 : vector<9x512xf32>, i32 -> vector<9x512xf32>
    %c1_176 = arith.constant 1 : index
    %c7_177 = arith.constant 7 : index
    %c0_178 = arith.constant 0 : index
    %c0_179 = arith.constant 0 : index
    %269 = vector.load %arg8[%c1_176, %c7_177, %c0_178, %c0_179] : memref<4x27x9x512xf32, #tpu.memory_space<vmem>>, vector<1x1x9x512xf32>
    %270 = vector.shape_cast %269 : vector<1x1x9x512xf32> to vector<9x512xf32>
    %271 = arith.mulf %270, %268 : vector<9x512xf32>
    %272 = arith.addf %267, %271 : vector<9x512xf32>
    %c110_i32 = arith.constant 110 : i32
    %273 = tpu.dynamic_rotate %220 by %c110_i32 dim 1 : vector<9x512xf32>, i32 -> vector<9x512xf32>
    %c1_180 = arith.constant 1 : index
    %c8_181 = arith.constant 8 : index
    %c0_182 = arith.constant 0 : index
    %c0_183 = arith.constant 0 : index
    %274 = vector.load %arg8[%c1_180, %c8_181, %c0_182, %c0_183] : memref<4x27x9x512xf32, #tpu.memory_space<vmem>>, vector<1x1x9x512xf32>
    %275 = vector.shape_cast %274 : vector<1x1x9x512xf32> to vector<9x512xf32>
    %276 = arith.mulf %275, %273 : vector<9x512xf32>
    %277 = arith.addf %272, %276 : vector<9x512xf32>
    %c18_i32 = arith.constant 18 : i32
    %278 = tpu.dynamic_rotate %220 by %c18_i32 dim 1 : vector<9x512xf32>, i32 -> vector<9x512xf32>
    %c1_184 = arith.constant 1 : index
    %c9_185 = arith.constant 9 : index
    %c0_186 = arith.constant 0 : index
    %c0_187 = arith.constant 0 : index
    %279 = vector.load %arg8[%c1_184, %c9_185, %c0_186, %c0_187] : memref<4x27x9x512xf32, #tpu.memory_space<vmem>>, vector<1x1x9x512xf32>
    %280 = vector.shape_cast %279 : vector<1x1x9x512xf32> to vector<9x512xf32>
    %281 = arith.mulf %280, %278 : vector<9x512xf32>
    %282 = arith.addf %277, %281 : vector<9x512xf32>
    %c16_i32 = arith.constant 16 : i32
    %283 = tpu.dynamic_rotate %220 by %c16_i32 dim 1 : vector<9x512xf32>, i32 -> vector<9x512xf32>
    %c1_188 = arith.constant 1 : index
    %c10_189 = arith.constant 10 : index
    %c0_190 = arith.constant 0 : index
    %c0_191 = arith.constant 0 : index
    %284 = vector.load %arg8[%c1_188, %c10_189, %c0_190, %c0_191] : memref<4x27x9x512xf32, #tpu.memory_space<vmem>>, vector<1x1x9x512xf32>
    %285 = vector.shape_cast %284 : vector<1x1x9x512xf32> to vector<9x512xf32>
    %286 = arith.mulf %285, %283 : vector<9x512xf32>
    %287 = arith.addf %282, %286 : vector<9x512xf32>
    %c14_i32 = arith.constant 14 : i32
    %288 = tpu.dynamic_rotate %220 by %c14_i32 dim 1 : vector<9x512xf32>, i32 -> vector<9x512xf32>
    %c1_192 = arith.constant 1 : index
    %c11_193 = arith.constant 11 : index
    %c0_194 = arith.constant 0 : index
    %c0_195 = arith.constant 0 : index
    %289 = vector.load %arg8[%c1_192, %c11_193, %c0_194, %c0_195] : memref<4x27x9x512xf32, #tpu.memory_space<vmem>>, vector<1x1x9x512xf32>
    %290 = vector.shape_cast %289 : vector<1x1x9x512xf32> to vector<9x512xf32>
    %291 = arith.mulf %290, %288 : vector<9x512xf32>
    %292 = arith.addf %287, %291 : vector<9x512xf32>
    %c2_i32 = arith.constant 2 : i32
    %293 = tpu.dynamic_rotate %220 by %c2_i32 dim 1 : vector<9x512xf32>, i32 -> vector<9x512xf32>
    %c1_196 = arith.constant 1 : index
    %c12_197 = arith.constant 12 : index
    %c0_198 = arith.constant 0 : index
    %c0_199 = arith.constant 0 : index
    %294 = vector.load %arg8[%c1_196, %c12_197, %c0_198, %c0_199] : memref<4x27x9x512xf32, #tpu.memory_space<vmem>>, vector<1x1x9x512xf32>
    %295 = vector.shape_cast %294 : vector<1x1x9x512xf32> to vector<9x512xf32>
    %296 = arith.mulf %295, %293 : vector<9x512xf32>
    %297 = arith.addf %292, %296 : vector<9x512xf32>
    %c1_200 = arith.constant 1 : index
    %c13_201 = arith.constant 13 : index
    %c0_202 = arith.constant 0 : index
    %c0_203 = arith.constant 0 : index
    %298 = vector.load %arg8[%c1_200, %c13_201, %c0_202, %c0_203] : memref<4x27x9x512xf32, #tpu.memory_space<vmem>>, vector<1x1x9x512xf32>
    %299 = vector.shape_cast %298 : vector<1x1x9x512xf32> to vector<9x512xf32>
    %300 = arith.mulf %299, %220 : vector<9x512xf32>
    %301 = arith.addf %297, %300 : vector<9x512xf32>
    %c510_i32 = arith.constant 510 : i32
    %302 = tpu.dynamic_rotate %220 by %c510_i32 dim 1 : vector<9x512xf32>, i32 -> vector<9x512xf32>
    %c1_204 = arith.constant 1 : index
    %c14_205 = arith.constant 14 : index
    %c0_206 = arith.constant 0 : index
    %c0_207 = arith.constant 0 : index
    %303 = vector.load %arg8[%c1_204, %c14_205, %c0_206, %c0_207] : memref<4x27x9x512xf32, #tpu.memory_space<vmem>>, vector<1x1x9x512xf32>
    %304 = vector.shape_cast %303 : vector<1x1x9x512xf32> to vector<9x512xf32>
    %305 = arith.mulf %304, %302 : vector<9x512xf32>
    %306 = arith.addf %301, %305 : vector<9x512xf32>
    %c498_i32 = arith.constant 498 : i32
    %307 = tpu.dynamic_rotate %220 by %c498_i32 dim 1 : vector<9x512xf32>, i32 -> vector<9x512xf32>
    %c1_208 = arith.constant 1 : index
    %c15_209 = arith.constant 15 : index
    %c0_210 = arith.constant 0 : index
    %c0_211 = arith.constant 0 : index
    %308 = vector.load %arg8[%c1_208, %c15_209, %c0_210, %c0_211] : memref<4x27x9x512xf32, #tpu.memory_space<vmem>>, vector<1x1x9x512xf32>
    %309 = vector.shape_cast %308 : vector<1x1x9x512xf32> to vector<9x512xf32>
    %310 = arith.mulf %309, %307 : vector<9x512xf32>
    %311 = arith.addf %306, %310 : vector<9x512xf32>
    %c496_i32 = arith.constant 496 : i32
    %312 = tpu.dynamic_rotate %220 by %c496_i32 dim 1 : vector<9x512xf32>, i32 -> vector<9x512xf32>
    %c1_212 = arith.constant 1 : index
    %c16_213 = arith.constant 16 : index
    %c0_214 = arith.constant 0 : index
    %c0_215 = arith.constant 0 : index
    %313 = vector.load %arg8[%c1_212, %c16_213, %c0_214, %c0_215] : memref<4x27x9x512xf32, #tpu.memory_space<vmem>>, vector<1x1x9x512xf32>
    %314 = vector.shape_cast %313 : vector<1x1x9x512xf32> to vector<9x512xf32>
    %315 = arith.mulf %314, %312 : vector<9x512xf32>
    %316 = arith.addf %311, %315 : vector<9x512xf32>
    %c494_i32 = arith.constant 494 : i32
    %317 = tpu.dynamic_rotate %220 by %c494_i32 dim 1 : vector<9x512xf32>, i32 -> vector<9x512xf32>
    %c1_216 = arith.constant 1 : index
    %c17_217 = arith.constant 17 : index
    %c0_218 = arith.constant 0 : index
    %c0_219 = arith.constant 0 : index
    %318 = vector.load %arg8[%c1_216, %c17_217, %c0_218, %c0_219] : memref<4x27x9x512xf32, #tpu.memory_space<vmem>>, vector<1x1x9x512xf32>
    %319 = vector.shape_cast %318 : vector<1x1x9x512xf32> to vector<9x512xf32>
    %320 = arith.mulf %319, %317 : vector<9x512xf32>
    %321 = arith.addf %316, %320 : vector<9x512xf32>
    %c402_i32 = arith.constant 402 : i32
    %322 = tpu.dynamic_rotate %220 by %c402_i32 dim 1 : vector<9x512xf32>, i32 -> vector<9x512xf32>
    %c1_220 = arith.constant 1 : index
    %c18_221 = arith.constant 18 : index
    %c0_222 = arith.constant 0 : index
    %c0_223 = arith.constant 0 : index
    %323 = vector.load %arg8[%c1_220, %c18_221, %c0_222, %c0_223] : memref<4x27x9x512xf32, #tpu.memory_space<vmem>>, vector<1x1x9x512xf32>
    %324 = vector.shape_cast %323 : vector<1x1x9x512xf32> to vector<9x512xf32>
    %325 = arith.mulf %324, %322 : vector<9x512xf32>
    %326 = arith.addf %321, %325 : vector<9x512xf32>
    %c400_i32 = arith.constant 400 : i32
    %327 = tpu.dynamic_rotate %220 by %c400_i32 dim 1 : vector<9x512xf32>, i32 -> vector<9x512xf32>
    %c1_224 = arith.constant 1 : index
    %c19_225 = arith.constant 19 : index
    %c0_226 = arith.constant 0 : index
    %c0_227 = arith.constant 0 : index
    %328 = vector.load %arg8[%c1_224, %c19_225, %c0_226, %c0_227] : memref<4x27x9x512xf32, #tpu.memory_space<vmem>>, vector<1x1x9x512xf32>
    %329 = vector.shape_cast %328 : vector<1x1x9x512xf32> to vector<9x512xf32>
    %330 = arith.mulf %329, %327 : vector<9x512xf32>
    %331 = arith.addf %326, %330 : vector<9x512xf32>
    %c398_i32 = arith.constant 398 : i32
    %332 = tpu.dynamic_rotate %220 by %c398_i32 dim 1 : vector<9x512xf32>, i32 -> vector<9x512xf32>
    %c1_228 = arith.constant 1 : index
    %c20_229 = arith.constant 20 : index
    %c0_230 = arith.constant 0 : index
    %c0_231 = arith.constant 0 : index
    %333 = vector.load %arg8[%c1_228, %c20_229, %c0_230, %c0_231] : memref<4x27x9x512xf32, #tpu.memory_space<vmem>>, vector<1x1x9x512xf32>
    %334 = vector.shape_cast %333 : vector<1x1x9x512xf32> to vector<9x512xf32>
    %335 = arith.mulf %334, %332 : vector<9x512xf32>
    %336 = arith.addf %331, %335 : vector<9x512xf32>
    %c386_i32 = arith.constant 386 : i32
    %337 = tpu.dynamic_rotate %220 by %c386_i32 dim 1 : vector<9x512xf32>, i32 -> vector<9x512xf32>
    %c1_232 = arith.constant 1 : index
    %c21_233 = arith.constant 21 : index
    %c0_234 = arith.constant 0 : index
    %c0_235 = arith.constant 0 : index
    %338 = vector.load %arg8[%c1_232, %c21_233, %c0_234, %c0_235] : memref<4x27x9x512xf32, #tpu.memory_space<vmem>>, vector<1x1x9x512xf32>
    %339 = vector.shape_cast %338 : vector<1x1x9x512xf32> to vector<9x512xf32>
    %340 = arith.mulf %339, %337 : vector<9x512xf32>
    %341 = arith.addf %336, %340 : vector<9x512xf32>
    %c384_i32 = arith.constant 384 : i32
    %342 = tpu.dynamic_rotate %220 by %c384_i32 dim 1 : vector<9x512xf32>, i32 -> vector<9x512xf32>
    %c1_236 = arith.constant 1 : index
    %c22_237 = arith.constant 22 : index
    %c0_238 = arith.constant 0 : index
    %c0_239 = arith.constant 0 : index
    %343 = vector.load %arg8[%c1_236, %c22_237, %c0_238, %c0_239] : memref<4x27x9x512xf32, #tpu.memory_space<vmem>>, vector<1x1x9x512xf32>
    %344 = vector.shape_cast %343 : vector<1x1x9x512xf32> to vector<9x512xf32>
    %345 = arith.mulf %344, %342 : vector<9x512xf32>
    %346 = arith.addf %341, %345 : vector<9x512xf32>
    %c382_i32 = arith.constant 382 : i32
    %347 = tpu.dynamic_rotate %220 by %c382_i32 dim 1 : vector<9x512xf32>, i32 -> vector<9x512xf32>
    %c1_240 = arith.constant 1 : index
    %c23_241 = arith.constant 23 : index
    %c0_242 = arith.constant 0 : index
    %c0_243 = arith.constant 0 : index
    %348 = vector.load %arg8[%c1_240, %c23_241, %c0_242, %c0_243] : memref<4x27x9x512xf32, #tpu.memory_space<vmem>>, vector<1x1x9x512xf32>
    %349 = vector.shape_cast %348 : vector<1x1x9x512xf32> to vector<9x512xf32>
    %350 = arith.mulf %349, %347 : vector<9x512xf32>
    %351 = arith.addf %346, %350 : vector<9x512xf32>
    %c370_i32 = arith.constant 370 : i32
    %352 = tpu.dynamic_rotate %220 by %c370_i32 dim 1 : vector<9x512xf32>, i32 -> vector<9x512xf32>
    %c1_244 = arith.constant 1 : index
    %c24_245 = arith.constant 24 : index
    %c0_246 = arith.constant 0 : index
    %c0_247 = arith.constant 0 : index
    %353 = vector.load %arg8[%c1_244, %c24_245, %c0_246, %c0_247] : memref<4x27x9x512xf32, #tpu.memory_space<vmem>>, vector<1x1x9x512xf32>
    %354 = vector.shape_cast %353 : vector<1x1x9x512xf32> to vector<9x512xf32>
    %355 = arith.mulf %354, %352 : vector<9x512xf32>
    %356 = arith.addf %351, %355 : vector<9x512xf32>
    %c368_i32 = arith.constant 368 : i32
    %357 = tpu.dynamic_rotate %220 by %c368_i32 dim 1 : vector<9x512xf32>, i32 -> vector<9x512xf32>
    %c1_248 = arith.constant 1 : index
    %c25_249 = arith.constant 25 : index
    %c0_250 = arith.constant 0 : index
    %c0_251 = arith.constant 0 : index
    %358 = vector.load %arg8[%c1_248, %c25_249, %c0_250, %c0_251] : memref<4x27x9x512xf32, #tpu.memory_space<vmem>>, vector<1x1x9x512xf32>
    %359 = vector.shape_cast %358 : vector<1x1x9x512xf32> to vector<9x512xf32>
    %360 = arith.mulf %359, %357 : vector<9x512xf32>
    %361 = arith.addf %356, %360 : vector<9x512xf32>
    %c366_i32 = arith.constant 366 : i32
    %362 = tpu.dynamic_rotate %220 by %c366_i32 dim 1 : vector<9x512xf32>, i32 -> vector<9x512xf32>
    %c1_252 = arith.constant 1 : index
    %c26_253 = arith.constant 26 : index
    %c0_254 = arith.constant 0 : index
    %c0_255 = arith.constant 0 : index
    %363 = vector.load %arg8[%c1_252, %c26_253, %c0_254, %c0_255] : memref<4x27x9x512xf32, #tpu.memory_space<vmem>>, vector<1x1x9x512xf32>
    %364 = vector.shape_cast %363 : vector<1x1x9x512xf32> to vector<9x512xf32>
    %365 = arith.mulf %364, %362 : vector<9x512xf32>
    %366 = arith.addf %361, %365 : vector<9x512xf32>
    %c1_256 = arith.constant 1 : index
    %c0_257 = arith.constant 0 : index
    %c0_258 = arith.constant 0 : index
    %367 = vector.load %arg7[%c1_256, %c0_257, %c0_258] : memref<4x9x1xf32, #tpu.memory_space<vmem>>, vector<1x9x1xf32>
    %368 = vector.shape_cast %367 : vector<1x9x1xf32> to vector<9x1xf32>
    %369 = vector.broadcast %231 : vector<9x1xf32> to vector<9x512xf32>
    %370 = arith.mulf %369, %366 : vector<9x512xf32>
    %371 = vector.broadcast %368 : vector<9x1xf32> to vector<9x512xf32>
    %372 = arith.addf %371, %370 : vector<9x512xf32>
    %c1_259 = arith.constant 1 : index
    %c0_260 = arith.constant 0 : index
    %c0_261 = arith.constant 0 : index
    %373 = vector.load %arg6[%c1_259, %c0_260, %c0_261] : memref<4x9x1xf32, #tpu.memory_space<vmem>>, vector<1x9x1xf32>
    %374 = vector.shape_cast %373 : vector<1x9x1xf32> to vector<9x1xf32>
    %c1_262 = arith.constant 1 : index
    %c0_263 = arith.constant 0 : index
    %c0_264 = arith.constant 0 : index
    %375 = vector.load %arg9[%c1_262, %c0_263, %c0_264] : memref<4x9x512xf32, #tpu.memory_space<vmem>>, vector<1x9x512xf32>
    %376 = vector.shape_cast %375 : vector<1x9x512xf32> to vector<9x512xf32>
    %377 = vector.broadcast %374 : vector<9x1xf32> to vector<9x512xf32>
    %378 = arith.mulf %377, %376 : vector<9x512xf32>
    %379 = arith.addf %372, %378 : vector<9x512xf32>
    %cst_265 = arith.constant dense<0.000000e+00> : vector<9xf32>
    %380 = vector.multi_reduction <add>, %379, %cst_265 [1] : vector<9x512xf32> to vector<9xf32>
    %381 = vector.shape_cast %380 : vector<9xf32> to vector<9x1xf32>
    %cst_266 = arith.constant 5.120000e+02 : f32
    %382 = vector.broadcast %cst_266 : f32 to vector<9x1xf32>
    %383 = arith.divf %381, %382 : vector<9x1xf32>
    %384 = vector.broadcast %383 : vector<9x1xf32> to vector<9x512xf32>
    %385 = arith.subf %379, %384 : vector<9x512xf32>
    %386 = arith.mulf %385, %385 : vector<9x512xf32>
    %cst_267 = arith.constant dense<0.000000e+00> : vector<9xf32>
    %387 = vector.multi_reduction <add>, %386, %cst_267 [1] : vector<9x512xf32> to vector<9xf32>
    %388 = vector.shape_cast %387 : vector<9xf32> to vector<9x1xf32>
    %cst_268 = arith.constant 5.120000e+02 : f32
    %389 = vector.broadcast %cst_268 : f32 to vector<9x1xf32>
    %390 = arith.divf %388, %389 : vector<9x1xf32>
    %c1_269 = arith.constant 1 : index
    %c0_270 = arith.constant 0 : index
    %c0_271 = arith.constant 0 : index
    %391 = vector.load %arg10[%c1_269, %c0_270, %c0_271] : memref<4x9x1xf32, #tpu.memory_space<vmem>>, vector<1x9x1xf32>
    %392 = vector.shape_cast %391 : vector<1x9x1xf32> to vector<9x1xf32>
    %cst_272 = arith.constant 9.99999997E-7 : f32
    %393 = vector.broadcast %cst_272 : f32 to vector<9x1xf32>
    %394 = arith.addf %390, %393 : vector<9x1xf32>
    %395 = math.rsqrt %394 : vector<9x1xf32>
    %396 = arith.mulf %392, %395 : vector<9x1xf32>
    %397 = vector.broadcast %396 : vector<9x1xf32> to vector<9x512xf32>
    %398 = arith.mulf %385, %397 : vector<9x512xf32>
    %c1_273 = arith.constant 1 : index
    %c0_274 = arith.constant 0 : index
    %c0_275 = arith.constant 0 : index
    %399 = vector.load %arg11[%c1_273, %c0_274, %c0_275] : memref<4x9x1xf32, #tpu.memory_space<vmem>>, vector<1x9x1xf32>
    %400 = vector.shape_cast %399 : vector<1x9x1xf32> to vector<9x1xf32>
    %401 = vector.broadcast %400 : vector<9x1xf32> to vector<9x512xf32>
    %402 = arith.addf %398, %401 : vector<9x512xf32>
    %c1_276 = arith.constant 1 : index
    %c0_277 = arith.constant 0 : index
    %c0_278 = arith.constant 0 : index
    %403 = vector.load %arg12[%c1_276, %c0_277, %c0_278] : memref<4x16x9xf32, #tpu.memory_space<vmem>>, vector<1x16x9xf32>
    %404 = vector.shape_cast %403 : vector<1x16x9xf32> to vector<16x9xf32>
    %cst_279 = arith.constant dense<0.000000e+00> : vector<16x512xf32>
    %405 = tpu.matmul %404, %402, %cst_279 {dimension_numbers = #tpu.dot_dimension_numbers<[1], [0], [0], [1], [0, 0, 1, 1], [], []>} : vector<16x9xf32>, vector<9x512xf32>, vector<16x512xf32> -> vector<16x512xf32>
    %406 = arith.addf %204, %405 : vector<16x512xf32>
    %c2_280 = arith.constant 2 : index
    %c0_281 = arith.constant 0 : index
    %c0_282 = arith.constant 0 : index
    %407 = vector.load %arg3[%c2_280, %c0_281, %c0_282] : memref<4x9x12xf32, #tpu.memory_space<vmem>>, vector<1x9x12xf32>
    %408 = vector.shape_cast %407 : vector<1x9x12xf32> to vector<9x12xf32>
    %cst_283 = arith.constant dense<0.000000e+00> : vector<9x512xf32>
    %409 = tpu.matmul %408, %1, %cst_283 {dimension_numbers = #tpu.dot_dimension_numbers<[1], [0], [0], [1], [0, 0, 1, 1], [], []>} : vector<9x12xf32>, vector<12x512xf32>, vector<9x512xf32> -> vector<9x512xf32>
    %c2_284 = arith.constant 2 : index
    %c0_285 = arith.constant 0 : index
    %c0_286 = arith.constant 0 : index
    %410 = vector.load %arg4[%c2_284, %c0_285, %c0_286] : memref<4x9x1xf32, #tpu.memory_space<vmem>>, vector<1x9x1xf32>
    %411 = vector.shape_cast %410 : vector<1x9x1xf32> to vector<9x1xf32>
    %412 = vector.broadcast %411 : vector<9x1xf32> to vector<9x512xf32>
    %413 = arith.addf %409, %412 : vector<9x512xf32>
    %c0_287 = arith.constant 0 : index
    %c2_288 = arith.constant 2 : index
    %c0_289 = arith.constant 0 : index
    %c0_290 = arith.constant 0 : index
    %414 = vector.load %arg2[%c0_287, %c2_288, %c0_289, %c0_290] : memref<1x4x9x512xf32, #tpu.memory_space<vmem>>, vector<1x1x9x512xf32>
    %415 = vector.shape_cast %414 : vector<1x1x9x512xf32> to vector<9x512xf32>
    %416 = arith.addf %413, %415 : vector<9x512xf32>
    %cst_291 = arith.constant dense<0.000000e+00> : vector<9xf32>
    %417 = vector.multi_reduction <add>, %416, %cst_291 [1] : vector<9x512xf32> to vector<9xf32>
    %418 = vector.shape_cast %417 : vector<9xf32> to vector<9x1xf32>
    %cst_292 = arith.constant 5.120000e+02 : f32
    %419 = vector.broadcast %cst_292 : f32 to vector<9x1xf32>
    %420 = arith.divf %418, %419 : vector<9x1xf32>
    %421 = vector.broadcast %420 : vector<9x1xf32> to vector<9x512xf32>
    %422 = arith.subf %416, %421 : vector<9x512xf32>
    %423 = arith.mulf %422, %422 : vector<9x512xf32>
    %cst_293 = arith.constant dense<0.000000e+00> : vector<9xf32>
    %424 = vector.multi_reduction <add>, %423, %cst_293 [1] : vector<9x512xf32> to vector<9xf32>
    %425 = vector.shape_cast %424 : vector<9xf32> to vector<9x1xf32>
    %cst_294 = arith.constant 5.120000e+02 : f32
    %426 = vector.broadcast %cst_294 : f32 to vector<9x1xf32>
    %427 = arith.divf %425, %426 : vector<9x1xf32>
    %c2_295 = arith.constant 2 : index
    %c0_296 = arith.constant 0 : index
    %c0_297 = arith.constant 0 : index
    %428 = vector.load %arg5[%c2_295, %c0_296, %c0_297] : memref<4x9x1xf32, #tpu.memory_space<vmem>>, vector<1x9x1xf32>
    %429 = vector.shape_cast %428 : vector<1x9x1xf32> to vector<9x1xf32>
    %cst_298 = arith.constant 9.99999997E-7 : f32
    %430 = vector.broadcast %cst_298 : f32 to vector<9x1xf32>
    %431 = arith.addf %427, %430 : vector<9x1xf32>
    %432 = math.rsqrt %431 : vector<9x1xf32>
    %433 = arith.mulf %429, %432 : vector<9x1xf32>
    %cst_299 = arith.constant 0.000000e+00 : f32
    %434 = vector.broadcast %cst_299 : f32 to vector<9x512xf32>
    %c365_i32 = arith.constant 365 : i32
    %435 = tpu.dynamic_rotate %422 by %c365_i32 dim 1 : vector<9x512xf32>, i32 -> vector<9x512xf32>
    %c2_300 = arith.constant 2 : index
    %c0_301 = arith.constant 0 : index
    %c0_302 = arith.constant 0 : index
    %c0_303 = arith.constant 0 : index
    %436 = vector.load %arg8[%c2_300, %c0_301, %c0_302, %c0_303] : memref<4x27x9x512xf32, #tpu.memory_space<vmem>>, vector<1x1x9x512xf32>
    %437 = vector.shape_cast %436 : vector<1x1x9x512xf32> to vector<9x512xf32>
    %438 = arith.mulf %437, %435 : vector<9x512xf32>
    %439 = arith.addf %434, %438 : vector<9x512xf32>
    %c360_i32 = arith.constant 360 : i32
    %440 = tpu.dynamic_rotate %422 by %c360_i32 dim 1 : vector<9x512xf32>, i32 -> vector<9x512xf32>
    %c2_304 = arith.constant 2 : index
    %c1_305 = arith.constant 1 : index
    %c0_306 = arith.constant 0 : index
    %c0_307 = arith.constant 0 : index
    %441 = vector.load %arg8[%c2_304, %c1_305, %c0_306, %c0_307] : memref<4x27x9x512xf32, #tpu.memory_space<vmem>>, vector<1x1x9x512xf32>
    %442 = vector.shape_cast %441 : vector<1x1x9x512xf32> to vector<9x512xf32>
    %443 = arith.mulf %442, %440 : vector<9x512xf32>
    %444 = arith.addf %439, %443 : vector<9x512xf32>
    %c355_i32 = arith.constant 355 : i32
    %445 = tpu.dynamic_rotate %422 by %c355_i32 dim 1 : vector<9x512xf32>, i32 -> vector<9x512xf32>
    %c2_308 = arith.constant 2 : index
    %c2_309 = arith.constant 2 : index
    %c0_310 = arith.constant 0 : index
    %c0_311 = arith.constant 0 : index
    %446 = vector.load %arg8[%c2_308, %c2_309, %c0_310, %c0_311] : memref<4x27x9x512xf32, #tpu.memory_space<vmem>>, vector<1x1x9x512xf32>
    %447 = vector.shape_cast %446 : vector<1x1x9x512xf32> to vector<9x512xf32>
    %448 = arith.mulf %447, %445 : vector<9x512xf32>
    %449 = arith.addf %444, %448 : vector<9x512xf32>
    %c325_i32 = arith.constant 325 : i32
    %450 = tpu.dynamic_rotate %422 by %c325_i32 dim 1 : vector<9x512xf32>, i32 -> vector<9x512xf32>
    %c2_312 = arith.constant 2 : index
    %c3_313 = arith.constant 3 : index
    %c0_314 = arith.constant 0 : index
    %c0_315 = arith.constant 0 : index
    %451 = vector.load %arg8[%c2_312, %c3_313, %c0_314, %c0_315] : memref<4x27x9x512xf32, #tpu.memory_space<vmem>>, vector<1x1x9x512xf32>
    %452 = vector.shape_cast %451 : vector<1x1x9x512xf32> to vector<9x512xf32>
    %453 = arith.mulf %452, %450 : vector<9x512xf32>
    %454 = arith.addf %449, %453 : vector<9x512xf32>
    %c320_i32 = arith.constant 320 : i32
    %455 = tpu.dynamic_rotate %422 by %c320_i32 dim 1 : vector<9x512xf32>, i32 -> vector<9x512xf32>
    %c2_316 = arith.constant 2 : index
    %c4_317 = arith.constant 4 : index
    %c0_318 = arith.constant 0 : index
    %c0_319 = arith.constant 0 : index
    %456 = vector.load %arg8[%c2_316, %c4_317, %c0_318, %c0_319] : memref<4x27x9x512xf32, #tpu.memory_space<vmem>>, vector<1x1x9x512xf32>
    %457 = vector.shape_cast %456 : vector<1x1x9x512xf32> to vector<9x512xf32>
    %458 = arith.mulf %457, %455 : vector<9x512xf32>
    %459 = arith.addf %454, %458 : vector<9x512xf32>
    %c315_i32 = arith.constant 315 : i32
    %460 = tpu.dynamic_rotate %422 by %c315_i32 dim 1 : vector<9x512xf32>, i32 -> vector<9x512xf32>
    %c2_320 = arith.constant 2 : index
    %c5_321 = arith.constant 5 : index
    %c0_322 = arith.constant 0 : index
    %c0_323 = arith.constant 0 : index
    %461 = vector.load %arg8[%c2_320, %c5_321, %c0_322, %c0_323] : memref<4x27x9x512xf32, #tpu.memory_space<vmem>>, vector<1x1x9x512xf32>
    %462 = vector.shape_cast %461 : vector<1x1x9x512xf32> to vector<9x512xf32>
    %463 = arith.mulf %462, %460 : vector<9x512xf32>
    %464 = arith.addf %459, %463 : vector<9x512xf32>
    %c285_i32 = arith.constant 285 : i32
    %465 = tpu.dynamic_rotate %422 by %c285_i32 dim 1 : vector<9x512xf32>, i32 -> vector<9x512xf32>
    %c2_324 = arith.constant 2 : index
    %c6_325 = arith.constant 6 : index
    %c0_326 = arith.constant 0 : index
    %c0_327 = arith.constant 0 : index
    %466 = vector.load %arg8[%c2_324, %c6_325, %c0_326, %c0_327] : memref<4x27x9x512xf32, #tpu.memory_space<vmem>>, vector<1x1x9x512xf32>
    %467 = vector.shape_cast %466 : vector<1x1x9x512xf32> to vector<9x512xf32>
    %468 = arith.mulf %467, %465 : vector<9x512xf32>
    %469 = arith.addf %464, %468 : vector<9x512xf32>
    %c280_i32 = arith.constant 280 : i32
    %470 = tpu.dynamic_rotate %422 by %c280_i32 dim 1 : vector<9x512xf32>, i32 -> vector<9x512xf32>
    %c2_328 = arith.constant 2 : index
    %c7_329 = arith.constant 7 : index
    %c0_330 = arith.constant 0 : index
    %c0_331 = arith.constant 0 : index
    %471 = vector.load %arg8[%c2_328, %c7_329, %c0_330, %c0_331] : memref<4x27x9x512xf32, #tpu.memory_space<vmem>>, vector<1x1x9x512xf32>
    %472 = vector.shape_cast %471 : vector<1x1x9x512xf32> to vector<9x512xf32>
    %473 = arith.mulf %472, %470 : vector<9x512xf32>
    %474 = arith.addf %469, %473 : vector<9x512xf32>
    %c275_i32 = arith.constant 275 : i32
    %475 = tpu.dynamic_rotate %422 by %c275_i32 dim 1 : vector<9x512xf32>, i32 -> vector<9x512xf32>
    %c2_332 = arith.constant 2 : index
    %c8_333 = arith.constant 8 : index
    %c0_334 = arith.constant 0 : index
    %c0_335 = arith.constant 0 : index
    %476 = vector.load %arg8[%c2_332, %c8_333, %c0_334, %c0_335] : memref<4x27x9x512xf32, #tpu.memory_space<vmem>>, vector<1x1x9x512xf32>
    %477 = vector.shape_cast %476 : vector<1x1x9x512xf32> to vector<9x512xf32>
    %478 = arith.mulf %477, %475 : vector<9x512xf32>
    %479 = arith.addf %474, %478 : vector<9x512xf32>
    %c45_i32 = arith.constant 45 : i32
    %480 = tpu.dynamic_rotate %422 by %c45_i32 dim 1 : vector<9x512xf32>, i32 -> vector<9x512xf32>
    %c2_336 = arith.constant 2 : index
    %c9_337 = arith.constant 9 : index
    %c0_338 = arith.constant 0 : index
    %c0_339 = arith.constant 0 : index
    %481 = vector.load %arg8[%c2_336, %c9_337, %c0_338, %c0_339] : memref<4x27x9x512xf32, #tpu.memory_space<vmem>>, vector<1x1x9x512xf32>
    %482 = vector.shape_cast %481 : vector<1x1x9x512xf32> to vector<9x512xf32>
    %483 = arith.mulf %482, %480 : vector<9x512xf32>
    %484 = arith.addf %479, %483 : vector<9x512xf32>
    %c40_i32 = arith.constant 40 : i32
    %485 = tpu.dynamic_rotate %422 by %c40_i32 dim 1 : vector<9x512xf32>, i32 -> vector<9x512xf32>
    %c2_340 = arith.constant 2 : index
    %c10_341 = arith.constant 10 : index
    %c0_342 = arith.constant 0 : index
    %c0_343 = arith.constant 0 : index
    %486 = vector.load %arg8[%c2_340, %c10_341, %c0_342, %c0_343] : memref<4x27x9x512xf32, #tpu.memory_space<vmem>>, vector<1x1x9x512xf32>
    %487 = vector.shape_cast %486 : vector<1x1x9x512xf32> to vector<9x512xf32>
    %488 = arith.mulf %487, %485 : vector<9x512xf32>
    %489 = arith.addf %484, %488 : vector<9x512xf32>
    %c35_i32 = arith.constant 35 : i32
    %490 = tpu.dynamic_rotate %422 by %c35_i32 dim 1 : vector<9x512xf32>, i32 -> vector<9x512xf32>
    %c2_344 = arith.constant 2 : index
    %c11_345 = arith.constant 11 : index
    %c0_346 = arith.constant 0 : index
    %c0_347 = arith.constant 0 : index
    %491 = vector.load %arg8[%c2_344, %c11_345, %c0_346, %c0_347] : memref<4x27x9x512xf32, #tpu.memory_space<vmem>>, vector<1x1x9x512xf32>
    %492 = vector.shape_cast %491 : vector<1x1x9x512xf32> to vector<9x512xf32>
    %493 = arith.mulf %492, %490 : vector<9x512xf32>
    %494 = arith.addf %489, %493 : vector<9x512xf32>
    %c5_i32 = arith.constant 5 : i32
    %495 = tpu.dynamic_rotate %422 by %c5_i32 dim 1 : vector<9x512xf32>, i32 -> vector<9x512xf32>
    %c2_348 = arith.constant 2 : index
    %c12_349 = arith.constant 12 : index
    %c0_350 = arith.constant 0 : index
    %c0_351 = arith.constant 0 : index
    %496 = vector.load %arg8[%c2_348, %c12_349, %c0_350, %c0_351] : memref<4x27x9x512xf32, #tpu.memory_space<vmem>>, vector<1x1x9x512xf32>
    %497 = vector.shape_cast %496 : vector<1x1x9x512xf32> to vector<9x512xf32>
    %498 = arith.mulf %497, %495 : vector<9x512xf32>
    %499 = arith.addf %494, %498 : vector<9x512xf32>
    %c2_352 = arith.constant 2 : index
    %c13_353 = arith.constant 13 : index
    %c0_354 = arith.constant 0 : index
    %c0_355 = arith.constant 0 : index
    %500 = vector.load %arg8[%c2_352, %c13_353, %c0_354, %c0_355] : memref<4x27x9x512xf32, #tpu.memory_space<vmem>>, vector<1x1x9x512xf32>
    %501 = vector.shape_cast %500 : vector<1x1x9x512xf32> to vector<9x512xf32>
    %502 = arith.mulf %501, %422 : vector<9x512xf32>
    %503 = arith.addf %499, %502 : vector<9x512xf32>
    %c507_i32 = arith.constant 507 : i32
    %504 = tpu.dynamic_rotate %422 by %c507_i32 dim 1 : vector<9x512xf32>, i32 -> vector<9x512xf32>
    %c2_356 = arith.constant 2 : index
    %c14_357 = arith.constant 14 : index
    %c0_358 = arith.constant 0 : index
    %c0_359 = arith.constant 0 : index
    %505 = vector.load %arg8[%c2_356, %c14_357, %c0_358, %c0_359] : memref<4x27x9x512xf32, #tpu.memory_space<vmem>>, vector<1x1x9x512xf32>
    %506 = vector.shape_cast %505 : vector<1x1x9x512xf32> to vector<9x512xf32>
    %507 = arith.mulf %506, %504 : vector<9x512xf32>
    %508 = arith.addf %503, %507 : vector<9x512xf32>
    %c477_i32 = arith.constant 477 : i32
    %509 = tpu.dynamic_rotate %422 by %c477_i32 dim 1 : vector<9x512xf32>, i32 -> vector<9x512xf32>
    %c2_360 = arith.constant 2 : index
    %c15_361 = arith.constant 15 : index
    %c0_362 = arith.constant 0 : index
    %c0_363 = arith.constant 0 : index
    %510 = vector.load %arg8[%c2_360, %c15_361, %c0_362, %c0_363] : memref<4x27x9x512xf32, #tpu.memory_space<vmem>>, vector<1x1x9x512xf32>
    %511 = vector.shape_cast %510 : vector<1x1x9x512xf32> to vector<9x512xf32>
    %512 = arith.mulf %511, %509 : vector<9x512xf32>
    %513 = arith.addf %508, %512 : vector<9x512xf32>
    %c472_i32 = arith.constant 472 : i32
    %514 = tpu.dynamic_rotate %422 by %c472_i32 dim 1 : vector<9x512xf32>, i32 -> vector<9x512xf32>
    %c2_364 = arith.constant 2 : index
    %c16_365 = arith.constant 16 : index
    %c0_366 = arith.constant 0 : index
    %c0_367 = arith.constant 0 : index
    %515 = vector.load %arg8[%c2_364, %c16_365, %c0_366, %c0_367] : memref<4x27x9x512xf32, #tpu.memory_space<vmem>>, vector<1x1x9x512xf32>
    %516 = vector.shape_cast %515 : vector<1x1x9x512xf32> to vector<9x512xf32>
    %517 = arith.mulf %516, %514 : vector<9x512xf32>
    %518 = arith.addf %513, %517 : vector<9x512xf32>
    %c467_i32 = arith.constant 467 : i32
    %519 = tpu.dynamic_rotate %422 by %c467_i32 dim 1 : vector<9x512xf32>, i32 -> vector<9x512xf32>
    %c2_368 = arith.constant 2 : index
    %c17_369 = arith.constant 17 : index
    %c0_370 = arith.constant 0 : index
    %c0_371 = arith.constant 0 : index
    %520 = vector.load %arg8[%c2_368, %c17_369, %c0_370, %c0_371] : memref<4x27x9x512xf32, #tpu.memory_space<vmem>>, vector<1x1x9x512xf32>
    %521 = vector.shape_cast %520 : vector<1x1x9x512xf32> to vector<9x512xf32>
    %522 = arith.mulf %521, %519 : vector<9x512xf32>
    %523 = arith.addf %518, %522 : vector<9x512xf32>
    %c237_i32 = arith.constant 237 : i32
    %524 = tpu.dynamic_rotate %422 by %c237_i32 dim 1 : vector<9x512xf32>, i32 -> vector<9x512xf32>
    %c2_372 = arith.constant 2 : index
    %c18_373 = arith.constant 18 : index
    %c0_374 = arith.constant 0 : index
    %c0_375 = arith.constant 0 : index
    %525 = vector.load %arg8[%c2_372, %c18_373, %c0_374, %c0_375] : memref<4x27x9x512xf32, #tpu.memory_space<vmem>>, vector<1x1x9x512xf32>
    %526 = vector.shape_cast %525 : vector<1x1x9x512xf32> to vector<9x512xf32>
    %527 = arith.mulf %526, %524 : vector<9x512xf32>
    %528 = arith.addf %523, %527 : vector<9x512xf32>
    %c232_i32 = arith.constant 232 : i32
    %529 = tpu.dynamic_rotate %422 by %c232_i32 dim 1 : vector<9x512xf32>, i32 -> vector<9x512xf32>
    %c2_376 = arith.constant 2 : index
    %c19_377 = arith.constant 19 : index
    %c0_378 = arith.constant 0 : index
    %c0_379 = arith.constant 0 : index
    %530 = vector.load %arg8[%c2_376, %c19_377, %c0_378, %c0_379] : memref<4x27x9x512xf32, #tpu.memory_space<vmem>>, vector<1x1x9x512xf32>
    %531 = vector.shape_cast %530 : vector<1x1x9x512xf32> to vector<9x512xf32>
    %532 = arith.mulf %531, %529 : vector<9x512xf32>
    %533 = arith.addf %528, %532 : vector<9x512xf32>
    %c227_i32 = arith.constant 227 : i32
    %534 = tpu.dynamic_rotate %422 by %c227_i32 dim 1 : vector<9x512xf32>, i32 -> vector<9x512xf32>
    %c2_380 = arith.constant 2 : index
    %c20_381 = arith.constant 20 : index
    %c0_382 = arith.constant 0 : index
    %c0_383 = arith.constant 0 : index
    %535 = vector.load %arg8[%c2_380, %c20_381, %c0_382, %c0_383] : memref<4x27x9x512xf32, #tpu.memory_space<vmem>>, vector<1x1x9x512xf32>
    %536 = vector.shape_cast %535 : vector<1x1x9x512xf32> to vector<9x512xf32>
    %537 = arith.mulf %536, %534 : vector<9x512xf32>
    %538 = arith.addf %533, %537 : vector<9x512xf32>
    %c197_i32 = arith.constant 197 : i32
    %539 = tpu.dynamic_rotate %422 by %c197_i32 dim 1 : vector<9x512xf32>, i32 -> vector<9x512xf32>
    %c2_384 = arith.constant 2 : index
    %c21_385 = arith.constant 21 : index
    %c0_386 = arith.constant 0 : index
    %c0_387 = arith.constant 0 : index
    %540 = vector.load %arg8[%c2_384, %c21_385, %c0_386, %c0_387] : memref<4x27x9x512xf32, #tpu.memory_space<vmem>>, vector<1x1x9x512xf32>
    %541 = vector.shape_cast %540 : vector<1x1x9x512xf32> to vector<9x512xf32>
    %542 = arith.mulf %541, %539 : vector<9x512xf32>
    %543 = arith.addf %538, %542 : vector<9x512xf32>
    %c192_i32 = arith.constant 192 : i32
    %544 = tpu.dynamic_rotate %422 by %c192_i32 dim 1 : vector<9x512xf32>, i32 -> vector<9x512xf32>
    %c2_388 = arith.constant 2 : index
    %c22_389 = arith.constant 22 : index
    %c0_390 = arith.constant 0 : index
    %c0_391 = arith.constant 0 : index
    %545 = vector.load %arg8[%c2_388, %c22_389, %c0_390, %c0_391] : memref<4x27x9x512xf32, #tpu.memory_space<vmem>>, vector<1x1x9x512xf32>
    %546 = vector.shape_cast %545 : vector<1x1x9x512xf32> to vector<9x512xf32>
    %547 = arith.mulf %546, %544 : vector<9x512xf32>
    %548 = arith.addf %543, %547 : vector<9x512xf32>
    %c187_i32 = arith.constant 187 : i32
    %549 = tpu.dynamic_rotate %422 by %c187_i32 dim 1 : vector<9x512xf32>, i32 -> vector<9x512xf32>
    %c2_392 = arith.constant 2 : index
    %c23_393 = arith.constant 23 : index
    %c0_394 = arith.constant 0 : index
    %c0_395 = arith.constant 0 : index
    %550 = vector.load %arg8[%c2_392, %c23_393, %c0_394, %c0_395] : memref<4x27x9x512xf32, #tpu.memory_space<vmem>>, vector<1x1x9x512xf32>
    %551 = vector.shape_cast %550 : vector<1x1x9x512xf32> to vector<9x512xf32>
    %552 = arith.mulf %551, %549 : vector<9x512xf32>
    %553 = arith.addf %548, %552 : vector<9x512xf32>
    %c157_i32 = arith.constant 157 : i32
    %554 = tpu.dynamic_rotate %422 by %c157_i32 dim 1 : vector<9x512xf32>, i32 -> vector<9x512xf32>
    %c2_396 = arith.constant 2 : index
    %c24_397 = arith.constant 24 : index
    %c0_398 = arith.constant 0 : index
    %c0_399 = arith.constant 0 : index
    %555 = vector.load %arg8[%c2_396, %c24_397, %c0_398, %c0_399] : memref<4x27x9x512xf32, #tpu.memory_space<vmem>>, vector<1x1x9x512xf32>
    %556 = vector.shape_cast %555 : vector<1x1x9x512xf32> to vector<9x512xf32>
    %557 = arith.mulf %556, %554 : vector<9x512xf32>
    %558 = arith.addf %553, %557 : vector<9x512xf32>
    %c152_i32 = arith.constant 152 : i32
    %559 = tpu.dynamic_rotate %422 by %c152_i32 dim 1 : vector<9x512xf32>, i32 -> vector<9x512xf32>
    %c2_400 = arith.constant 2 : index
    %c25_401 = arith.constant 25 : index
    %c0_402 = arith.constant 0 : index
    %c0_403 = arith.constant 0 : index
    %560 = vector.load %arg8[%c2_400, %c25_401, %c0_402, %c0_403] : memref<4x27x9x512xf32, #tpu.memory_space<vmem>>, vector<1x1x9x512xf32>
    %561 = vector.shape_cast %560 : vector<1x1x9x512xf32> to vector<9x512xf32>
    %562 = arith.mulf %561, %559 : vector<9x512xf32>
    %563 = arith.addf %558, %562 : vector<9x512xf32>
    %c147_i32 = arith.constant 147 : i32
    %564 = tpu.dynamic_rotate %422 by %c147_i32 dim 1 : vector<9x512xf32>, i32 -> vector<9x512xf32>
    %c2_404 = arith.constant 2 : index
    %c26_405 = arith.constant 26 : index
    %c0_406 = arith.constant 0 : index
    %c0_407 = arith.constant 0 : index
    %565 = vector.load %arg8[%c2_404, %c26_405, %c0_406, %c0_407] : memref<4x27x9x512xf32, #tpu.memory_space<vmem>>, vector<1x1x9x512xf32>
    %566 = vector.shape_cast %565 : vector<1x1x9x512xf32> to vector<9x512xf32>
    %567 = arith.mulf %566, %564 : vector<9x512xf32>
    %568 = arith.addf %563, %567 : vector<9x512xf32>
    %c2_408 = arith.constant 2 : index
    %c0_409 = arith.constant 0 : index
    %c0_410 = arith.constant 0 : index
    %569 = vector.load %arg7[%c2_408, %c0_409, %c0_410] : memref<4x9x1xf32, #tpu.memory_space<vmem>>, vector<1x9x1xf32>
    %570 = vector.shape_cast %569 : vector<1x9x1xf32> to vector<9x1xf32>
    %571 = vector.broadcast %433 : vector<9x1xf32> to vector<9x512xf32>
    %572 = arith.mulf %571, %568 : vector<9x512xf32>
    %573 = vector.broadcast %570 : vector<9x1xf32> to vector<9x512xf32>
    %574 = arith.addf %573, %572 : vector<9x512xf32>
    %c2_411 = arith.constant 2 : index
    %c0_412 = arith.constant 0 : index
    %c0_413 = arith.constant 0 : index
    %575 = vector.load %arg6[%c2_411, %c0_412, %c0_413] : memref<4x9x1xf32, #tpu.memory_space<vmem>>, vector<1x9x1xf32>
    %576 = vector.shape_cast %575 : vector<1x9x1xf32> to vector<9x1xf32>
    %c2_414 = arith.constant 2 : index
    %c0_415 = arith.constant 0 : index
    %c0_416 = arith.constant 0 : index
    %577 = vector.load %arg9[%c2_414, %c0_415, %c0_416] : memref<4x9x512xf32, #tpu.memory_space<vmem>>, vector<1x9x512xf32>
    %578 = vector.shape_cast %577 : vector<1x9x512xf32> to vector<9x512xf32>
    %579 = vector.broadcast %576 : vector<9x1xf32> to vector<9x512xf32>
    %580 = arith.mulf %579, %578 : vector<9x512xf32>
    %581 = arith.addf %574, %580 : vector<9x512xf32>
    %cst_417 = arith.constant dense<0.000000e+00> : vector<9xf32>
    %582 = vector.multi_reduction <add>, %581, %cst_417 [1] : vector<9x512xf32> to vector<9xf32>
    %583 = vector.shape_cast %582 : vector<9xf32> to vector<9x1xf32>
    %cst_418 = arith.constant 5.120000e+02 : f32
    %584 = vector.broadcast %cst_418 : f32 to vector<9x1xf32>
    %585 = arith.divf %583, %584 : vector<9x1xf32>
    %586 = vector.broadcast %585 : vector<9x1xf32> to vector<9x512xf32>
    %587 = arith.subf %581, %586 : vector<9x512xf32>
    %588 = arith.mulf %587, %587 : vector<9x512xf32>
    %cst_419 = arith.constant dense<0.000000e+00> : vector<9xf32>
    %589 = vector.multi_reduction <add>, %588, %cst_419 [1] : vector<9x512xf32> to vector<9xf32>
    %590 = vector.shape_cast %589 : vector<9xf32> to vector<9x1xf32>
    %cst_420 = arith.constant 5.120000e+02 : f32
    %591 = vector.broadcast %cst_420 : f32 to vector<9x1xf32>
    %592 = arith.divf %590, %591 : vector<9x1xf32>
    %c2_421 = arith.constant 2 : index
    %c0_422 = arith.constant 0 : index
    %c0_423 = arith.constant 0 : index
    %593 = vector.load %arg10[%c2_421, %c0_422, %c0_423] : memref<4x9x1xf32, #tpu.memory_space<vmem>>, vector<1x9x1xf32>
    %594 = vector.shape_cast %593 : vector<1x9x1xf32> to vector<9x1xf32>
    %cst_424 = arith.constant 9.99999997E-7 : f32
    %595 = vector.broadcast %cst_424 : f32 to vector<9x1xf32>
    %596 = arith.addf %592, %595 : vector<9x1xf32>
    %597 = math.rsqrt %596 : vector<9x1xf32>
    %598 = arith.mulf %594, %597 : vector<9x1xf32>
    %599 = vector.broadcast %598 : vector<9x1xf32> to vector<9x512xf32>
    %600 = arith.mulf %587, %599 : vector<9x512xf32>
    %c2_425 = arith.constant 2 : index
    %c0_426 = arith.constant 0 : index
    %c0_427 = arith.constant 0 : index
    %601 = vector.load %arg11[%c2_425, %c0_426, %c0_427] : memref<4x9x1xf32, #tpu.memory_space<vmem>>, vector<1x9x1xf32>
    %602 = vector.shape_cast %601 : vector<1x9x1xf32> to vector<9x1xf32>
    %603 = vector.broadcast %602 : vector<9x1xf32> to vector<9x512xf32>
    %604 = arith.addf %600, %603 : vector<9x512xf32>
    %c2_428 = arith.constant 2 : index
    %c0_429 = arith.constant 0 : index
    %c0_430 = arith.constant 0 : index
    %605 = vector.load %arg12[%c2_428, %c0_429, %c0_430] : memref<4x16x9xf32, #tpu.memory_space<vmem>>, vector<1x16x9xf32>
    %606 = vector.shape_cast %605 : vector<1x16x9xf32> to vector<16x9xf32>
    %cst_431 = arith.constant dense<0.000000e+00> : vector<16x512xf32>
    %607 = tpu.matmul %606, %604, %cst_431 {dimension_numbers = #tpu.dot_dimension_numbers<[1], [0], [0], [1], [0, 0, 1, 1], [], []>} : vector<16x9xf32>, vector<9x512xf32>, vector<16x512xf32> -> vector<16x512xf32>
    %608 = arith.addf %406, %607 : vector<16x512xf32>
    %c3_432 = arith.constant 3 : index
    %c0_433 = arith.constant 0 : index
    %c0_434 = arith.constant 0 : index
    %609 = vector.load %arg3[%c3_432, %c0_433, %c0_434] : memref<4x9x12xf32, #tpu.memory_space<vmem>>, vector<1x9x12xf32>
    %610 = vector.shape_cast %609 : vector<1x9x12xf32> to vector<9x12xf32>
    %cst_435 = arith.constant dense<0.000000e+00> : vector<9x512xf32>
    %611 = tpu.matmul %610, %1, %cst_435 {dimension_numbers = #tpu.dot_dimension_numbers<[1], [0], [0], [1], [0, 0, 1, 1], [], []>} : vector<9x12xf32>, vector<12x512xf32>, vector<9x512xf32> -> vector<9x512xf32>
    %c3_436 = arith.constant 3 : index
    %c0_437 = arith.constant 0 : index
    %c0_438 = arith.constant 0 : index
    %612 = vector.load %arg4[%c3_436, %c0_437, %c0_438] : memref<4x9x1xf32, #tpu.memory_space<vmem>>, vector<1x9x1xf32>
    %613 = vector.shape_cast %612 : vector<1x9x1xf32> to vector<9x1xf32>
    %614 = vector.broadcast %613 : vector<9x1xf32> to vector<9x512xf32>
    %615 = arith.addf %611, %614 : vector<9x512xf32>
    %c0_439 = arith.constant 0 : index
    %c3_440 = arith.constant 3 : index
    %c0_441 = arith.constant 0 : index
    %c0_442 = arith.constant 0 : index
    %616 = vector.load %arg2[%c0_439, %c3_440, %c0_441, %c0_442] : memref<1x4x9x512xf32, #tpu.memory_space<vmem>>, vector<1x1x9x512xf32>
    %617 = vector.shape_cast %616 : vector<1x1x9x512xf32> to vector<9x512xf32>
    %618 = arith.addf %615, %617 : vector<9x512xf32>
    %cst_443 = arith.constant dense<0.000000e+00> : vector<9xf32>
    %619 = vector.multi_reduction <add>, %618, %cst_443 [1] : vector<9x512xf32> to vector<9xf32>
    %620 = vector.shape_cast %619 : vector<9xf32> to vector<9x1xf32>
    %cst_444 = arith.constant 5.120000e+02 : f32
    %621 = vector.broadcast %cst_444 : f32 to vector<9x1xf32>
    %622 = arith.divf %620, %621 : vector<9x1xf32>
    %623 = vector.broadcast %622 : vector<9x1xf32> to vector<9x512xf32>
    %624 = arith.subf %618, %623 : vector<9x512xf32>
    %625 = arith.mulf %624, %624 : vector<9x512xf32>
    %cst_445 = arith.constant dense<0.000000e+00> : vector<9xf32>
    %626 = vector.multi_reduction <add>, %625, %cst_445 [1] : vector<9x512xf32> to vector<9xf32>
    %627 = vector.shape_cast %626 : vector<9xf32> to vector<9x1xf32>
    %cst_446 = arith.constant 5.120000e+02 : f32
    %628 = vector.broadcast %cst_446 : f32 to vector<9x1xf32>
    %629 = arith.divf %627, %628 : vector<9x1xf32>
    %c3_447 = arith.constant 3 : index
    %c0_448 = arith.constant 0 : index
    %c0_449 = arith.constant 0 : index
    %630 = vector.load %arg5[%c3_447, %c0_448, %c0_449] : memref<4x9x1xf32, #tpu.memory_space<vmem>>, vector<1x9x1xf32>
    %631 = vector.shape_cast %630 : vector<1x9x1xf32> to vector<9x1xf32>
    %cst_450 = arith.constant 9.99999997E-7 : f32
    %632 = vector.broadcast %cst_450 : f32 to vector<9x1xf32>
    %633 = arith.addf %629, %632 : vector<9x1xf32>
    %634 = math.rsqrt %633 : vector<9x1xf32>
    %635 = arith.mulf %631, %634 : vector<9x1xf32>
    %cst_451 = arith.constant 0.000000e+00 : f32
    %636 = vector.broadcast %cst_451 : f32 to vector<9x512xf32>
    %c511_i32_452 = arith.constant 511 : i32
    %637 = tpu.dynamic_rotate %624 by %c511_i32_452 dim 1 : vector<9x512xf32>, i32 -> vector<9x512xf32>
    %c3_453 = arith.constant 3 : index
    %c0_454 = arith.constant 0 : index
    %c0_455 = arith.constant 0 : index
    %c0_456 = arith.constant 0 : index
    %638 = vector.load %arg8[%c3_453, %c0_454, %c0_455, %c0_456] : memref<4x27x9x512xf32, #tpu.memory_space<vmem>>, vector<1x1x9x512xf32>
    %639 = vector.shape_cast %638 : vector<1x1x9x512xf32> to vector<9x512xf32>
    %640 = arith.mulf %639, %637 : vector<9x512xf32>
    %641 = arith.addf %636, %640 : vector<9x512xf32>
    %c504_i32_457 = arith.constant 504 : i32
    %642 = tpu.dynamic_rotate %624 by %c504_i32_457 dim 1 : vector<9x512xf32>, i32 -> vector<9x512xf32>
    %c3_458 = arith.constant 3 : index
    %c1_459 = arith.constant 1 : index
    %c0_460 = arith.constant 0 : index
    %c0_461 = arith.constant 0 : index
    %643 = vector.load %arg8[%c3_458, %c1_459, %c0_460, %c0_461] : memref<4x27x9x512xf32, #tpu.memory_space<vmem>>, vector<1x1x9x512xf32>
    %644 = vector.shape_cast %643 : vector<1x1x9x512xf32> to vector<9x512xf32>
    %645 = arith.mulf %644, %642 : vector<9x512xf32>
    %646 = arith.addf %641, %645 : vector<9x512xf32>
    %c497_i32 = arith.constant 497 : i32
    %647 = tpu.dynamic_rotate %624 by %c497_i32 dim 1 : vector<9x512xf32>, i32 -> vector<9x512xf32>
    %c3_462 = arith.constant 3 : index
    %c2_463 = arith.constant 2 : index
    %c0_464 = arith.constant 0 : index
    %c0_465 = arith.constant 0 : index
    %648 = vector.load %arg8[%c3_462, %c2_463, %c0_464, %c0_465] : memref<4x27x9x512xf32, #tpu.memory_space<vmem>>, vector<1x1x9x512xf32>
    %649 = vector.shape_cast %648 : vector<1x1x9x512xf32> to vector<9x512xf32>
    %650 = arith.mulf %649, %647 : vector<9x512xf32>
    %651 = arith.addf %646, %650 : vector<9x512xf32>
    %c455_i32_466 = arith.constant 455 : i32
    %652 = tpu.dynamic_rotate %624 by %c455_i32_466 dim 1 : vector<9x512xf32>, i32 -> vector<9x512xf32>
    %c3_467 = arith.constant 3 : index
    %c3_468 = arith.constant 3 : index
    %c0_469 = arith.constant 0 : index
    %c0_470 = arith.constant 0 : index
    %653 = vector.load %arg8[%c3_467, %c3_468, %c0_469, %c0_470] : memref<4x27x9x512xf32, #tpu.memory_space<vmem>>, vector<1x1x9x512xf32>
    %654 = vector.shape_cast %653 : vector<1x1x9x512xf32> to vector<9x512xf32>
    %655 = arith.mulf %654, %652 : vector<9x512xf32>
    %656 = arith.addf %651, %655 : vector<9x512xf32>
    %c448_i32_471 = arith.constant 448 : i32
    %657 = tpu.dynamic_rotate %624 by %c448_i32_471 dim 1 : vector<9x512xf32>, i32 -> vector<9x512xf32>
    %c3_472 = arith.constant 3 : index
    %c4_473 = arith.constant 4 : index
    %c0_474 = arith.constant 0 : index
    %c0_475 = arith.constant 0 : index
    %658 = vector.load %arg8[%c3_472, %c4_473, %c0_474, %c0_475] : memref<4x27x9x512xf32, #tpu.memory_space<vmem>>, vector<1x1x9x512xf32>
    %659 = vector.shape_cast %658 : vector<1x1x9x512xf32> to vector<9x512xf32>
    %660 = arith.mulf %659, %657 : vector<9x512xf32>
    %661 = arith.addf %656, %660 : vector<9x512xf32>
    %c441_i32_476 = arith.constant 441 : i32
    %662 = tpu.dynamic_rotate %624 by %c441_i32_476 dim 1 : vector<9x512xf32>, i32 -> vector<9x512xf32>
    %c3_477 = arith.constant 3 : index
    %c5_478 = arith.constant 5 : index
    %c0_479 = arith.constant 0 : index
    %c0_480 = arith.constant 0 : index
    %663 = vector.load %arg8[%c3_477, %c5_478, %c0_479, %c0_480] : memref<4x27x9x512xf32, #tpu.memory_space<vmem>>, vector<1x1x9x512xf32>
    %664 = vector.shape_cast %663 : vector<1x1x9x512xf32> to vector<9x512xf32>
    %665 = arith.mulf %664, %662 : vector<9x512xf32>
    %666 = arith.addf %661, %665 : vector<9x512xf32>
    %c399_i32 = arith.constant 399 : i32
    %667 = tpu.dynamic_rotate %624 by %c399_i32 dim 1 : vector<9x512xf32>, i32 -> vector<9x512xf32>
    %c3_481 = arith.constant 3 : index
    %c6_482 = arith.constant 6 : index
    %c0_483 = arith.constant 0 : index
    %c0_484 = arith.constant 0 : index
    %668 = vector.load %arg8[%c3_481, %c6_482, %c0_483, %c0_484] : memref<4x27x9x512xf32, #tpu.memory_space<vmem>>, vector<1x1x9x512xf32>
    %669 = vector.shape_cast %668 : vector<1x1x9x512xf32> to vector<9x512xf32>
    %670 = arith.mulf %669, %667 : vector<9x512xf32>
    %671 = arith.addf %666, %670 : vector<9x512xf32>
    %c392_i32 = arith.constant 392 : i32
    %672 = tpu.dynamic_rotate %624 by %c392_i32 dim 1 : vector<9x512xf32>, i32 -> vector<9x512xf32>
    %c3_485 = arith.constant 3 : index
    %c7_486 = arith.constant 7 : index
    %c0_487 = arith.constant 0 : index
    %c0_488 = arith.constant 0 : index
    %673 = vector.load %arg8[%c3_485, %c7_486, %c0_487, %c0_488] : memref<4x27x9x512xf32, #tpu.memory_space<vmem>>, vector<1x1x9x512xf32>
    %674 = vector.shape_cast %673 : vector<1x1x9x512xf32> to vector<9x512xf32>
    %675 = arith.mulf %674, %672 : vector<9x512xf32>
    %676 = arith.addf %671, %675 : vector<9x512xf32>
    %c385_i32 = arith.constant 385 : i32
    %677 = tpu.dynamic_rotate %624 by %c385_i32 dim 1 : vector<9x512xf32>, i32 -> vector<9x512xf32>
    %c3_489 = arith.constant 3 : index
    %c8_490 = arith.constant 8 : index
    %c0_491 = arith.constant 0 : index
    %c0_492 = arith.constant 0 : index
    %678 = vector.load %arg8[%c3_489, %c8_490, %c0_491, %c0_492] : memref<4x27x9x512xf32, #tpu.memory_space<vmem>>, vector<1x1x9x512xf32>
    %679 = vector.shape_cast %678 : vector<1x1x9x512xf32> to vector<9x512xf32>
    %680 = arith.mulf %679, %677 : vector<9x512xf32>
    %681 = arith.addf %676, %680 : vector<9x512xf32>
    %c63_i32_493 = arith.constant 63 : i32
    %682 = tpu.dynamic_rotate %624 by %c63_i32_493 dim 1 : vector<9x512xf32>, i32 -> vector<9x512xf32>
    %c3_494 = arith.constant 3 : index
    %c9_495 = arith.constant 9 : index
    %c0_496 = arith.constant 0 : index
    %c0_497 = arith.constant 0 : index
    %683 = vector.load %arg8[%c3_494, %c9_495, %c0_496, %c0_497] : memref<4x27x9x512xf32, #tpu.memory_space<vmem>>, vector<1x1x9x512xf32>
    %684 = vector.shape_cast %683 : vector<1x1x9x512xf32> to vector<9x512xf32>
    %685 = arith.mulf %684, %682 : vector<9x512xf32>
    %686 = arith.addf %681, %685 : vector<9x512xf32>
    %c56_i32_498 = arith.constant 56 : i32
    %687 = tpu.dynamic_rotate %624 by %c56_i32_498 dim 1 : vector<9x512xf32>, i32 -> vector<9x512xf32>
    %c3_499 = arith.constant 3 : index
    %c10_500 = arith.constant 10 : index
    %c0_501 = arith.constant 0 : index
    %c0_502 = arith.constant 0 : index
    %688 = vector.load %arg8[%c3_499, %c10_500, %c0_501, %c0_502] : memref<4x27x9x512xf32, #tpu.memory_space<vmem>>, vector<1x1x9x512xf32>
    %689 = vector.shape_cast %688 : vector<1x1x9x512xf32> to vector<9x512xf32>
    %690 = arith.mulf %689, %687 : vector<9x512xf32>
    %691 = arith.addf %686, %690 : vector<9x512xf32>
    %c49_i32 = arith.constant 49 : i32
    %692 = tpu.dynamic_rotate %624 by %c49_i32 dim 1 : vector<9x512xf32>, i32 -> vector<9x512xf32>
    %c3_503 = arith.constant 3 : index
    %c11_504 = arith.constant 11 : index
    %c0_505 = arith.constant 0 : index
    %c0_506 = arith.constant 0 : index
    %693 = vector.load %arg8[%c3_503, %c11_504, %c0_505, %c0_506] : memref<4x27x9x512xf32, #tpu.memory_space<vmem>>, vector<1x1x9x512xf32>
    %694 = vector.shape_cast %693 : vector<1x1x9x512xf32> to vector<9x512xf32>
    %695 = arith.mulf %694, %692 : vector<9x512xf32>
    %696 = arith.addf %691, %695 : vector<9x512xf32>
    %c7_i32_507 = arith.constant 7 : i32
    %697 = tpu.dynamic_rotate %624 by %c7_i32_507 dim 1 : vector<9x512xf32>, i32 -> vector<9x512xf32>
    %c3_508 = arith.constant 3 : index
    %c12_509 = arith.constant 12 : index
    %c0_510 = arith.constant 0 : index
    %c0_511 = arith.constant 0 : index
    %698 = vector.load %arg8[%c3_508, %c12_509, %c0_510, %c0_511] : memref<4x27x9x512xf32, #tpu.memory_space<vmem>>, vector<1x1x9x512xf32>
    %699 = vector.shape_cast %698 : vector<1x1x9x512xf32> to vector<9x512xf32>
    %700 = arith.mulf %699, %697 : vector<9x512xf32>
    %701 = arith.addf %696, %700 : vector<9x512xf32>
    %c3_512 = arith.constant 3 : index
    %c13_513 = arith.constant 13 : index
    %c0_514 = arith.constant 0 : index
    %c0_515 = arith.constant 0 : index
    %702 = vector.load %arg8[%c3_512, %c13_513, %c0_514, %c0_515] : memref<4x27x9x512xf32, #tpu.memory_space<vmem>>, vector<1x1x9x512xf32>
    %703 = vector.shape_cast %702 : vector<1x1x9x512xf32> to vector<9x512xf32>
    %704 = arith.mulf %703, %624 : vector<9x512xf32>
    %705 = arith.addf %701, %704 : vector<9x512xf32>
    %c505_i32_516 = arith.constant 505 : i32
    %706 = tpu.dynamic_rotate %624 by %c505_i32_516 dim 1 : vector<9x512xf32>, i32 -> vector<9x512xf32>
    %c3_517 = arith.constant 3 : index
    %c14_518 = arith.constant 14 : index
    %c0_519 = arith.constant 0 : index
    %c0_520 = arith.constant 0 : index
    %707 = vector.load %arg8[%c3_517, %c14_518, %c0_519, %c0_520] : memref<4x27x9x512xf32, #tpu.memory_space<vmem>>, vector<1x1x9x512xf32>
    %708 = vector.shape_cast %707 : vector<1x1x9x512xf32> to vector<9x512xf32>
    %709 = arith.mulf %708, %706 : vector<9x512xf32>
    %710 = arith.addf %705, %709 : vector<9x512xf32>
    %c463_i32 = arith.constant 463 : i32
    %711 = tpu.dynamic_rotate %624 by %c463_i32 dim 1 : vector<9x512xf32>, i32 -> vector<9x512xf32>
    %c3_521 = arith.constant 3 : index
    %c15_522 = arith.constant 15 : index
    %c0_523 = arith.constant 0 : index
    %c0_524 = arith.constant 0 : index
    %712 = vector.load %arg8[%c3_521, %c15_522, %c0_523, %c0_524] : memref<4x27x9x512xf32, #tpu.memory_space<vmem>>, vector<1x1x9x512xf32>
    %713 = vector.shape_cast %712 : vector<1x1x9x512xf32> to vector<9x512xf32>
    %714 = arith.mulf %713, %711 : vector<9x512xf32>
    %715 = arith.addf %710, %714 : vector<9x512xf32>
    %c456_i32_525 = arith.constant 456 : i32
    %716 = tpu.dynamic_rotate %624 by %c456_i32_525 dim 1 : vector<9x512xf32>, i32 -> vector<9x512xf32>
    %c3_526 = arith.constant 3 : index
    %c16_527 = arith.constant 16 : index
    %c0_528 = arith.constant 0 : index
    %c0_529 = arith.constant 0 : index
    %717 = vector.load %arg8[%c3_526, %c16_527, %c0_528, %c0_529] : memref<4x27x9x512xf32, #tpu.memory_space<vmem>>, vector<1x1x9x512xf32>
    %718 = vector.shape_cast %717 : vector<1x1x9x512xf32> to vector<9x512xf32>
    %719 = arith.mulf %718, %716 : vector<9x512xf32>
    %720 = arith.addf %715, %719 : vector<9x512xf32>
    %c449_i32_530 = arith.constant 449 : i32
    %721 = tpu.dynamic_rotate %624 by %c449_i32_530 dim 1 : vector<9x512xf32>, i32 -> vector<9x512xf32>
    %c3_531 = arith.constant 3 : index
    %c17_532 = arith.constant 17 : index
    %c0_533 = arith.constant 0 : index
    %c0_534 = arith.constant 0 : index
    %722 = vector.load %arg8[%c3_531, %c17_532, %c0_533, %c0_534] : memref<4x27x9x512xf32, #tpu.memory_space<vmem>>, vector<1x1x9x512xf32>
    %723 = vector.shape_cast %722 : vector<1x1x9x512xf32> to vector<9x512xf32>
    %724 = arith.mulf %723, %721 : vector<9x512xf32>
    %725 = arith.addf %720, %724 : vector<9x512xf32>
    %c127_i32 = arith.constant 127 : i32
    %726 = tpu.dynamic_rotate %624 by %c127_i32 dim 1 : vector<9x512xf32>, i32 -> vector<9x512xf32>
    %c3_535 = arith.constant 3 : index
    %c18_536 = arith.constant 18 : index
    %c0_537 = arith.constant 0 : index
    %c0_538 = arith.constant 0 : index
    %727 = vector.load %arg8[%c3_535, %c18_536, %c0_537, %c0_538] : memref<4x27x9x512xf32, #tpu.memory_space<vmem>>, vector<1x1x9x512xf32>
    %728 = vector.shape_cast %727 : vector<1x1x9x512xf32> to vector<9x512xf32>
    %729 = arith.mulf %728, %726 : vector<9x512xf32>
    %730 = arith.addf %725, %729 : vector<9x512xf32>
    %c120_i32 = arith.constant 120 : i32
    %731 = tpu.dynamic_rotate %624 by %c120_i32 dim 1 : vector<9x512xf32>, i32 -> vector<9x512xf32>
    %c3_539 = arith.constant 3 : index
    %c19_540 = arith.constant 19 : index
    %c0_541 = arith.constant 0 : index
    %c0_542 = arith.constant 0 : index
    %732 = vector.load %arg8[%c3_539, %c19_540, %c0_541, %c0_542] : memref<4x27x9x512xf32, #tpu.memory_space<vmem>>, vector<1x1x9x512xf32>
    %733 = vector.shape_cast %732 : vector<1x1x9x512xf32> to vector<9x512xf32>
    %734 = arith.mulf %733, %731 : vector<9x512xf32>
    %735 = arith.addf %730, %734 : vector<9x512xf32>
    %c113_i32 = arith.constant 113 : i32
    %736 = tpu.dynamic_rotate %624 by %c113_i32 dim 1 : vector<9x512xf32>, i32 -> vector<9x512xf32>
    %c3_543 = arith.constant 3 : index
    %c20_544 = arith.constant 20 : index
    %c0_545 = arith.constant 0 : index
    %c0_546 = arith.constant 0 : index
    %737 = vector.load %arg8[%c3_543, %c20_544, %c0_545, %c0_546] : memref<4x27x9x512xf32, #tpu.memory_space<vmem>>, vector<1x1x9x512xf32>
    %738 = vector.shape_cast %737 : vector<1x1x9x512xf32> to vector<9x512xf32>
    %739 = arith.mulf %738, %736 : vector<9x512xf32>
    %740 = arith.addf %735, %739 : vector<9x512xf32>
    %c71_i32_547 = arith.constant 71 : i32
    %741 = tpu.dynamic_rotate %624 by %c71_i32_547 dim 1 : vector<9x512xf32>, i32 -> vector<9x512xf32>
    %c3_548 = arith.constant 3 : index
    %c21_549 = arith.constant 21 : index
    %c0_550 = arith.constant 0 : index
    %c0_551 = arith.constant 0 : index
    %742 = vector.load %arg8[%c3_548, %c21_549, %c0_550, %c0_551] : memref<4x27x9x512xf32, #tpu.memory_space<vmem>>, vector<1x1x9x512xf32>
    %743 = vector.shape_cast %742 : vector<1x1x9x512xf32> to vector<9x512xf32>
    %744 = arith.mulf %743, %741 : vector<9x512xf32>
    %745 = arith.addf %740, %744 : vector<9x512xf32>
    %c64_i32_552 = arith.constant 64 : i32
    %746 = tpu.dynamic_rotate %624 by %c64_i32_552 dim 1 : vector<9x512xf32>, i32 -> vector<9x512xf32>
    %c3_553 = arith.constant 3 : index
    %c22_554 = arith.constant 22 : index
    %c0_555 = arith.constant 0 : index
    %c0_556 = arith.constant 0 : index
    %747 = vector.load %arg8[%c3_553, %c22_554, %c0_555, %c0_556] : memref<4x27x9x512xf32, #tpu.memory_space<vmem>>, vector<1x1x9x512xf32>
    %748 = vector.shape_cast %747 : vector<1x1x9x512xf32> to vector<9x512xf32>
    %749 = arith.mulf %748, %746 : vector<9x512xf32>
    %750 = arith.addf %745, %749 : vector<9x512xf32>
    %c57_i32_557 = arith.constant 57 : i32
    %751 = tpu.dynamic_rotate %624 by %c57_i32_557 dim 1 : vector<9x512xf32>, i32 -> vector<9x512xf32>
    %c3_558 = arith.constant 3 : index
    %c23_559 = arith.constant 23 : index
    %c0_560 = arith.constant 0 : index
    %c0_561 = arith.constant 0 : index
    %752 = vector.load %arg8[%c3_558, %c23_559, %c0_560, %c0_561] : memref<4x27x9x512xf32, #tpu.memory_space<vmem>>, vector<1x1x9x512xf32>
    %753 = vector.shape_cast %752 : vector<1x1x9x512xf32> to vector<9x512xf32>
    %754 = arith.mulf %753, %751 : vector<9x512xf32>
    %755 = arith.addf %750, %754 : vector<9x512xf32>
    %c15_i32 = arith.constant 15 : i32
    %756 = tpu.dynamic_rotate %624 by %c15_i32 dim 1 : vector<9x512xf32>, i32 -> vector<9x512xf32>
    %c3_562 = arith.constant 3 : index
    %c24_563 = arith.constant 24 : index
    %c0_564 = arith.constant 0 : index
    %c0_565 = arith.constant 0 : index
    %757 = vector.load %arg8[%c3_562, %c24_563, %c0_564, %c0_565] : memref<4x27x9x512xf32, #tpu.memory_space<vmem>>, vector<1x1x9x512xf32>
    %758 = vector.shape_cast %757 : vector<1x1x9x512xf32> to vector<9x512xf32>
    %759 = arith.mulf %758, %756 : vector<9x512xf32>
    %760 = arith.addf %755, %759 : vector<9x512xf32>
    %c8_i32_566 = arith.constant 8 : i32
    %761 = tpu.dynamic_rotate %624 by %c8_i32_566 dim 1 : vector<9x512xf32>, i32 -> vector<9x512xf32>
    %c3_567 = arith.constant 3 : index
    %c25_568 = arith.constant 25 : index
    %c0_569 = arith.constant 0 : index
    %c0_570 = arith.constant 0 : index
    %762 = vector.load %arg8[%c3_567, %c25_568, %c0_569, %c0_570] : memref<4x27x9x512xf32, #tpu.memory_space<vmem>>, vector<1x1x9x512xf32>
    %763 = vector.shape_cast %762 : vector<1x1x9x512xf32> to vector<9x512xf32>
    %764 = arith.mulf %763, %761 : vector<9x512xf32>
    %765 = arith.addf %760, %764 : vector<9x512xf32>
    %c1_i32_571 = arith.constant 1 : i32
    %766 = tpu.dynamic_rotate %624 by %c1_i32_571 dim 1 : vector<9x512xf32>, i32 -> vector<9x512xf32>
    %c3_572 = arith.constant 3 : index
    %c26_573 = arith.constant 26 : index
    %c0_574 = arith.constant 0 : index
    %c0_575 = arith.constant 0 : index
    %767 = vector.load %arg8[%c3_572, %c26_573, %c0_574, %c0_575] : memref<4x27x9x512xf32, #tpu.memory_space<vmem>>, vector<1x1x9x512xf32>
    %768 = vector.shape_cast %767 : vector<1x1x9x512xf32> to vector<9x512xf32>
    %769 = arith.mulf %768, %766 : vector<9x512xf32>
    %770 = arith.addf %765, %769 : vector<9x512xf32>
    %c3_576 = arith.constant 3 : index
    %c0_577 = arith.constant 0 : index
    %c0_578 = arith.constant 0 : index
    %771 = vector.load %arg7[%c3_576, %c0_577, %c0_578] : memref<4x9x1xf32, #tpu.memory_space<vmem>>, vector<1x9x1xf32>
    %772 = vector.shape_cast %771 : vector<1x9x1xf32> to vector<9x1xf32>
    %773 = vector.broadcast %635 : vector<9x1xf32> to vector<9x512xf32>
    %774 = arith.mulf %773, %770 : vector<9x512xf32>
    %775 = vector.broadcast %772 : vector<9x1xf32> to vector<9x512xf32>
    %776 = arith.addf %775, %774 : vector<9x512xf32>
    %c3_579 = arith.constant 3 : index
    %c0_580 = arith.constant 0 : index
    %c0_581 = arith.constant 0 : index
    %777 = vector.load %arg6[%c3_579, %c0_580, %c0_581] : memref<4x9x1xf32, #tpu.memory_space<vmem>>, vector<1x9x1xf32>
    %778 = vector.shape_cast %777 : vector<1x9x1xf32> to vector<9x1xf32>
    %c3_582 = arith.constant 3 : index
    %c0_583 = arith.constant 0 : index
    %c0_584 = arith.constant 0 : index
    %779 = vector.load %arg9[%c3_582, %c0_583, %c0_584] : memref<4x9x512xf32, #tpu.memory_space<vmem>>, vector<1x9x512xf32>
    %780 = vector.shape_cast %779 : vector<1x9x512xf32> to vector<9x512xf32>
    %781 = vector.broadcast %778 : vector<9x1xf32> to vector<9x512xf32>
    %782 = arith.mulf %781, %780 : vector<9x512xf32>
    %783 = arith.addf %776, %782 : vector<9x512xf32>
    %cst_585 = arith.constant dense<0.000000e+00> : vector<9xf32>
    %784 = vector.multi_reduction <add>, %783, %cst_585 [1] : vector<9x512xf32> to vector<9xf32>
    %785 = vector.shape_cast %784 : vector<9xf32> to vector<9x1xf32>
    %cst_586 = arith.constant 5.120000e+02 : f32
    %786 = vector.broadcast %cst_586 : f32 to vector<9x1xf32>
    %787 = arith.divf %785, %786 : vector<9x1xf32>
    %788 = vector.broadcast %787 : vector<9x1xf32> to vector<9x512xf32>
    %789 = arith.subf %783, %788 : vector<9x512xf32>
    %790 = arith.mulf %789, %789 : vector<9x512xf32>
    %cst_587 = arith.constant dense<0.000000e+00> : vector<9xf32>
    %791 = vector.multi_reduction <add>, %790, %cst_587 [1] : vector<9x512xf32> to vector<9xf32>
    %792 = vector.shape_cast %791 : vector<9xf32> to vector<9x1xf32>
    %cst_588 = arith.constant 5.120000e+02 : f32
    %793 = vector.broadcast %cst_588 : f32 to vector<9x1xf32>
    %794 = arith.divf %792, %793 : vector<9x1xf32>
    %c3_589 = arith.constant 3 : index
    %c0_590 = arith.constant 0 : index
    %c0_591 = arith.constant 0 : index
    %795 = vector.load %arg10[%c3_589, %c0_590, %c0_591] : memref<4x9x1xf32, #tpu.memory_space<vmem>>, vector<1x9x1xf32>
    %796 = vector.shape_cast %795 : vector<1x9x1xf32> to vector<9x1xf32>
    %cst_592 = arith.constant 9.99999997E-7 : f32
    %797 = vector.broadcast %cst_592 : f32 to vector<9x1xf32>
    %798 = arith.addf %794, %797 : vector<9x1xf32>
    %799 = math.rsqrt %798 : vector<9x1xf32>
    %800 = arith.mulf %796, %799 : vector<9x1xf32>
    %801 = vector.broadcast %800 : vector<9x1xf32> to vector<9x512xf32>
    %802 = arith.mulf %789, %801 : vector<9x512xf32>
    %c3_593 = arith.constant 3 : index
    %c0_594 = arith.constant 0 : index
    %c0_595 = arith.constant 0 : index
    %803 = vector.load %arg11[%c3_593, %c0_594, %c0_595] : memref<4x9x1xf32, #tpu.memory_space<vmem>>, vector<1x9x1xf32>
    %804 = vector.shape_cast %803 : vector<1x9x1xf32> to vector<9x1xf32>
    %805 = vector.broadcast %804 : vector<9x1xf32> to vector<9x512xf32>
    %806 = arith.addf %802, %805 : vector<9x512xf32>
    %c3_596 = arith.constant 3 : index
    %c0_597 = arith.constant 0 : index
    %c0_598 = arith.constant 0 : index
    %807 = vector.load %arg12[%c3_596, %c0_597, %c0_598] : memref<4x16x9xf32, #tpu.memory_space<vmem>>, vector<1x16x9xf32>
    %808 = vector.shape_cast %807 : vector<1x16x9xf32> to vector<16x9xf32>
    %cst_599 = arith.constant dense<0.000000e+00> : vector<16x512xf32>
    %809 = tpu.matmul %808, %806, %cst_599 {dimension_numbers = #tpu.dot_dimension_numbers<[1], [0], [0], [1], [0, 0, 1, 1], [], []>} : vector<16x9xf32>, vector<9x512xf32>, vector<16x512xf32> -> vector<16x512xf32>
    %810 = arith.addf %608, %809 : vector<16x512xf32>
    %c0_600 = arith.constant 0 : index
    %c0_601 = arith.constant 0 : index
    %811 = vector.load %arg13[%c0_600, %c0_601] : memref<16x1xf32, #tpu.memory_space<vmem>>, vector<16x1xf32>
    %812 = vector.broadcast %811 : vector<16x1xf32> to vector<16x512xf32>
    %813 = arith.addf %810, %812 : vector<16x512xf32>
    %c0_602 = arith.constant 0 : index
    %c0_603 = arith.constant 0 : index
    %c0_604 = arith.constant 0 : index
    %814 = vector.load %arg14[%c0_602, %c0_603, %c0_604] : memref<1x16x512xf32, #tpu.memory_space<vmem>>, vector<1x16x512xf32>
    %815 = vector.shape_cast %814 : vector<1x16x512xf32> to vector<16x512xf32>
    %816 = vector.shape_cast %813 : vector<16x512xf32> to vector<1x16x512xf32>
    tpu.vector_store %arg14[%c0_602, %c0_603, %c0_604], %816 {strides = array<i32>} : memref<1x16x512xf32, #tpu.memory_space<vmem>>, vector<1x16x512xf32>,
    return
  }
  func.func @transform_0(%arg0: i32) -> (i32, i32, i32) {
    %c0_i32 = arith.constant 0 : i32
    %c0_i32_0 = arith.constant 0 : i32
    %c0_i32_1 = arith.constant 0 : i32
    return %arg0, %c0_i32, %c0_i32_0 : i32, i32, i32
  }
  func.func @transform_1(%arg0: i32) -> (i32, i32, i32, i32) {
    %c0_i32 = arith.constant 0 : i32
    %c0_i32_0 = arith.constant 0 : i32
    %c0_i32_1 = arith.constant 0 : i32
    %c0_i32_2 = arith.constant 0 : i32
    return %arg0, %c0_i32, %c0_i32_0, %c0_i32_1 : i32, i32, i32, i32
  }
  func.func @transform_2(%arg0: i32) -> (i32, i32, i32) {
    %c0_i32 = arith.constant 0 : i32
    %c0_i32_0 = arith.constant 0 : i32
    %c0_i32_1 = arith.constant 0 : i32
    %c0_i32_2 = arith.constant 0 : i32
    return %c0_i32, %c0_i32_0, %c0_i32_1 : i32, i32, i32
  }
  func.func @transform_3(%arg0: i32) -> (i32, i32, i32) {
    %c0_i32 = arith.constant 0 : i32
    %c0_i32_0 = arith.constant 0 : i32
    %c0_i32_1 = arith.constant 0 : i32
    %c0_i32_2 = arith.constant 0 : i32
    return %c0_i32, %c0_i32_0, %c0_i32_1 : i32, i32, i32
  }
  func.func @transform_4(%arg0: i32) -> (i32, i32, i32) {
    %c0_i32 = arith.constant 0 : i32
    %c0_i32_0 = arith.constant 0 : i32
    %c0_i32_1 = arith.constant 0 : i32
    %c0_i32_2 = arith.constant 0 : i32
    return %c0_i32, %c0_i32_0, %c0_i32_1 : i32, i32, i32
  }
  func.func @transform_5(%arg0: i32) -> (i32, i32, i32) {
    %c0_i32 = arith.constant 0 : i32
    %c0_i32_0 = arith.constant 0 : i32
    %c0_i32_1 = arith.constant 0 : i32
    %c0_i32_2 = arith.constant 0 : i32
    return %c0_i32, %c0_i32_0, %c0_i32_1 : i32, i32, i32
  }
  func.func @transform_6(%arg0: i32) -> (i32, i32, i32) {
    %c0_i32 = arith.constant 0 : i32
    %c0_i32_0 = arith.constant 0 : i32
    %c0_i32_1 = arith.constant 0 : i32
    %c0_i32_2 = arith.constant 0 : i32
    return %c0_i32, %c0_i32_0, %c0_i32_1 : i32, i32, i32
  }
  func.func @transform_7(%arg0: i32) -> (i32, i32, i32, i32) {
    %c0_i32 = arith.constant 0 : i32
    %c0_i32_0 = arith.constant 0 : i32
    %c0_i32_1 = arith.constant 0 : i32
    %c0_i32_2 = arith.constant 0 : i32
    %c0_i32_3 = arith.constant 0 : i32
    return %c0_i32, %c0_i32_0, %c0_i32_1, %c0_i32_2 : i32, i32, i32, i32
  }
  func.func @transform_8(%arg0: i32) -> (i32, i32, i32) {
    %c0_i32 = arith.constant 0 : i32
    %c0_i32_0 = arith.constant 0 : i32
    %c0_i32_1 = arith.constant 0 : i32
    %c0_i32_2 = arith.constant 0 : i32
    return %c0_i32, %c0_i32_0, %c0_i32_1 : i32, i32, i32
  }
  func.func @transform_9(%arg0: i32) -> (i32, i32, i32) {
    %c0_i32 = arith.constant 0 : i32
    %c0_i32_0 = arith.constant 0 : i32
    %c0_i32_1 = arith.constant 0 : i32
    %c0_i32_2 = arith.constant 0 : i32
    return %c0_i32, %c0_i32_0, %c0_i32_1 : i32, i32, i32
  }
  func.func @transform_10(%arg0: i32) -> (i32, i32, i32) {
    %c0_i32 = arith.constant 0 : i32
    %c0_i32_0 = arith.constant 0 : i32
    %c0_i32_1 = arith.constant 0 : i32
    %c0_i32_2 = arith.constant 0 : i32
    return %c0_i32, %c0_i32_0, %c0_i32_1 : i32, i32, i32
  }
  func.func @transform_11(%arg0: i32) -> (i32, i32, i32) {
    %c0_i32 = arith.constant 0 : i32
    %c0_i32_0 = arith.constant 0 : i32
    %c0_i32_1 = arith.constant 0 : i32
    %c0_i32_2 = arith.constant 0 : i32
    return %c0_i32, %c0_i32_0, %c0_i32_1 : i32, i32, i32
  }
  func.func @transform_12(%arg0: i32) -> (i32, i32) {
    %c0_i32 = arith.constant 0 : i32
    %c0_i32_0 = arith.constant 0 : i32
    %c0_i32_1 = arith.constant 0 : i32
    return %c0_i32, %c0_i32_0 : i32, i32
  }
  func.func @transform_13(%arg0: i32) -> (i32, i32, i32) {
    %c0_i32 = arith.constant 0 : i32
    %c0_i32_0 = arith.constant 0 : i32
    %c0_i32_1 = arith.constant 0 : i32
    return %arg0, %c0_i32, %c0_i32_0 : i32, i32, i32
  }
}

</mosaic_0001>

<llo_original>
// kernel: gab3d_forward.1
$region0: #{gab3d_forward.1}
  #allocation0 [shape = 'u32[]', space=smem, size = 0x4, offset = 0x4, fixed_abs, tag = 'smem constant byte address 0x4 - core index']
  #allocation1 [shape = 'u32[144,128]{1,0:T(1,128)}', space=vmem, size = 0x12000, scoped, tag = 'internal scratch']
  %s0 = inlined_call_operand.vmem [shape: f32[2,12,512], index: 0, kind: input, shape index: {}]
  %s1 = inlined_call_operand.vmem [shape: f32[2,4,9,512], index: 1, kind: input, shape index: {}]
  %s2 = inlined_call_operand.vmem [shape: f32[4,9,12], index: 2, kind: input, shape index: {}]
  %s3 = inlined_call_operand.vmem [shape: f32[4,9,1], index: 3, kind: input, shape index: {}]
  %s4 = inlined_call_operand.vmem [shape: f32[4,9,1], index: 4, kind: input, shape index: {}]
  %s5 = inlined_call_operand.vmem [shape: f32[4,9,1], index: 5, kind: input, shape index: {}]
  %s6 = inlined_call_operand.vmem [shape: f32[4,9,1], index: 6, kind: input, shape index: {}]
  %s7 = inlined_call_operand.vmem [shape: f32[4,27,9,512], index: 7, kind: input, shape index: {}]
  %s8 = inlined_call_operand.vmem [shape: f32[4,9,512], index: 8, kind: input, shape index: {}]
  %s9 = inlined_call_operand.vmem [shape: f32[4,9,1], index: 9, kind: input, shape index: {}]
  %s10 = inlined_call_operand.vmem [shape: f32[4,9,1], index: 10, kind: input, shape index: {}]
  %s11 = inlined_call_operand.vmem [shape: f32[4,16,9], index: 11, kind: input, shape index: {}]
  %s12 = inlined_call_operand.vmem [shape: f32[16,1], index: 12, kind: input, shape index: {}]
  %s13 = inlined_call_operand.vmem [shape: f32[2,16,512], index: 13, kind: output, shape index: {}]
  %s14 = sld [smem:[#allocation0]]
  $region85: #{gab3d_forward.1} parent=0
    _
  %s16 = ssub.s32 1, %s14
  %s17 = scalar_select 0, %s16, %s14
  loop: start=0, step=1, limit=4
  $region2: #{gab3d_forward.1} parent=0 // loop_pre_header
    _
  $region3: #{gab3d_forward.1} parent=0 // loop_header
    %s19 = sphi 0, %s23
    %p20 = scmp.ge.s32.totalorder %s19, 4
    %s29 = sphi 0, %s31
    %s32 = sphi 0, %s29
    %s33 = sphi 0, %s32
    %s49 = sphi 0, %s33
    %s55 = sphi 0, %s57
    %s58 = sphi 0, %s55
    %s59 = sphi 0, %s58
    %s75 = sphi 0, %s59
    %s79 = sphi 0, %s79
    %s81 = sphi 0, %s79
    %s82 = sphi 0, %s81
    %s96 = sphi 0, %s82
    %s100 = sphi 0, %s100
    %s102 = sphi 0, %s100
    %s103 = sphi 0, %s102
    %s117 = sphi 0, %s103
    %s121 = sphi 0, %s121
    %s123 = sphi 0, %s121
    %s124 = sphi 0, %s123
    %s138 = sphi 0, %s124
    %s142 = sphi 0, %s142
    %s144 = sphi 0, %s142
    %s145 = sphi 0, %s144
    %s159 = sphi 0, %s145
    %s163 = sphi 0, %s163
    %s165 = sphi 0, %s163
    %s166 = sphi 0, %s165
    %s180 = sphi 0, %s166
    %s184 = sphi 0, %s184
    %s186 = sphi 0, %s184
    %s187 = sphi 0, %s186
    %s201 = sphi 0, %s187
    %s205 = sphi 0, %s205
    %s207 = sphi 0, %s205
    %s208 = sphi 0, %s207
    %s222 = sphi 0, %s208
    %s226 = sphi 0, %s226
    %s228 = sphi 0, %s226
    %s229 = sphi 0, %s228
    %s243 = sphi 0, %s229
    %s247 = sphi 0, %s247
    %s249 = sphi 0, %s247
    %s250 = sphi 0, %s249
    %s264 = sphi 0, %s250
    %s268 = sphi 0, %s268
    %s270 = sphi 0, %s268
    %s271 = sphi 0, %s270
    %s285 = sphi 0, %s271
    %s289 = sphi 0, %s289
    %s291 = sphi 0, %s289
    %s292 = sphi 0, %s291
    %s306 = sphi 0, %s292
    %s312 = sphi 0, %s314
    %s315 = sphi 0, %s312
    %s316 = sphi 0, %s315
    %s332 = sphi 0, %s316
  $region4: #{gab3d_forward.1} parent=0 // loop_header_branch
    %22 = sbr.rel (%p20) target = $region8
  $region5: #{gab3d_forward.1} parent=0 // loop_body
    %s24 = ssub.s32 %s19, 1
    %s25 = ssub.s32 %s19, 2
    %s26 = sadd.s32 %s19, 1
    %s27 = ssub.s32 %s19, %s26
    %p28 = scmp.eq.s32.totalorder %s27, 0
    %s30 = sadd.s32 %s29, 1
    %s31 = scalar_select %p28, %s29, %s30
    %p34 = pneg %p28
    %p35 = scmp.eq.s32.totalorder %s19, 1
    %p36 = por %p34, %p35
    %p37 = scmp.ne.s32.totalorder %s29, %s32
    %p38 = scmp.eq.s32.totalorder %s19, 0
    %p39 = por %p37, %p38
    %p40 = scmp.ne.s32.totalorder %s29, %s32
    %p41 = scmp.eq.s32.totalorder %s24, 1
    %p42 = por %p40, %p41
    %p43 = scmp.ne.s32.totalorder %s32, %s33
    %p44 = scmp.eq.s32.totalorder %s24, 0
    %p45 = por %p43, %p44
    %p46 = scmp.ne.s32.totalorder %s32, %s33
    %p47 = scmp.eq.s32.totalorder %s25, 1
    %p48 = por %p46, %p47
    %p50 = scmp.ne.s32.totalorder %s33, %s49
    %p51 = scmp.eq.s32.totalorder %s25, 0
    %p52 = por %p50, %p51
    %s53 = ssub.s32 %s19, %s26
    %p54 = scmp.eq.s32.totalorder %s53, 0
    %s56 = sadd.s32 %s55, 1
    %s57 = scalar_select %p54, %s55, %s56
    %p60 = pneg %p54
    %p61 = scmp.eq.s32.totalorder %s19, 1
    %p62 = por %p60, %p61
    %p63 = scmp.ne.s32.totalorder %s55, %s58
    %p64 = scmp.eq.s32.totalorder %s19, 0
    %p65 = por %p63, %p64
    %p66 = scmp.ne.s32.totalorder %s55, %s58
    %p67 = scmp.eq.s32.totalorder %s24, 1
    %p68 = por %p66, %p67
    %p69 = scmp.ne.s32.totalorder %s58, %s59
    %p70 = scmp.eq.s32.totalorder %s24, 0
    %p71 = por %p69, %p70
    %p72 = scmp.ne.s32.totalorder %s58, %s59
    %p73 = scmp.eq.s32.totalorder %s25, 1
    %p74 = por %p72, %p73
    %p76 = scmp.ne.s32.totalorder %s59, %s75
    %p77 = scmp.eq.s32.totalorder %s25, 0
    %p78 = por %p76, %p77
    %s80 = sadd.s32 %s79, 1
    %p83 = scmp.eq.s32.totalorder %s19, 1
    %p84 = scmp.ne.s32.totalorder %s79, %s81
    %p85 = scmp.eq.s32.totalorder %s19, 0
    %p86 = por %p84, %p85
    %p87 = scmp.ne.s32.totalorder %s79, %s81
    %p88 = scmp.eq.s32.totalorder %s24, 1
    %p89 = por %p87, %p88
    %p90 = scmp.ne.s32.totalorder %s81, %s82
    %p91 = scmp.eq.s32.totalorder %s24, 0
    %p92 = por %p90, %p91
    %p93 = scmp.ne.s32.totalorder %s81, %s82
    %p94 = scmp.eq.s32.totalorder %s25, 1
    %p95 = por %p93, %p94
    %p97 = scmp.ne.s32.totalorder %s82, %s96
    %p98 = scmp.eq.s32.totalorder %s25, 0
    %p99 = por %p97, %p98
    %s101 = sadd.s32 %s100, 1
    %p104 = scmp.eq.s32.totalorder %s19, 1
    %p105 = scmp.ne.s32.totalorder %s100, %s102
    %p106 = scmp.eq.s32.totalorder %s19, 0
    %p107 = por %p105, %p106
    %p108 = scmp.ne.s32.totalorder %s100, %s102
    %p109 = scmp.eq.s32.totalorder %s24, 1
    %p110 = por %p108, %p109
    %p111 = scmp.ne.s32.totalorder %s102, %s103
    %p112 = scmp.eq.s32.totalorder %s24, 0
    %p113 = por %p111, %p112
    %p114 = scmp.ne.s32.totalorder %s102, %s103
    %p115 = scmp.eq.s32.totalorder %s25, 1
    %p116 = por %p114, %p115
    %p118 = scmp.ne.s32.totalorder %s103, %s117
    %p119 = scmp.eq.s32.totalorder %s25, 0
    %p120 = por %p118, %p119
    %s122 = sadd.s32 %s121, 1
    %p125 = scmp.eq.s32.totalorder %s19, 1
    %p126 = scmp.ne.s32.totalorder %s121, %s123
    %p127 = scmp.eq.s32.totalorder %s19, 0
    %p128 = por %p126, %p127
    %p129 = scmp.ne.s32.totalorder %s121, %s123
    %p130 = scmp.eq.s32.totalorder %s24, 1
    %p131 = por %p129, %p130
    %p132 = scmp.ne.s32.totalorder %s123, %s124
    %p133 = scmp.eq.s32.totalorder %s24, 0
    %p134 = por %p132, %p133
    %p135 = scmp.ne.s32.totalorder %s123, %s124
    %p136 = scmp.eq.s32.totalorder %s25, 1
    %p137 = por %p135, %p136
    %p139 = scmp.ne.s32.totalorder %s124, %s138
    %p140 = scmp.eq.s32.totalorder %s25, 0
    %p141 = por %p139, %p140
    %s143 = sadd.s32 %s142, 1
    %p146 = scmp.eq.s32.totalorder %s19, 1
    %p147 = scmp.ne.s32.totalorder %s142, %s144
    %p148 = scmp.eq.s32.totalorder %s19, 0
    %p149 = por %p147, %p148
    %p150 = scmp.ne.s32.totalorder %s142, %s144
    %p151 = scmp.eq.s32.totalorder %s24, 1
    %p152 = por %p150, %p151
    %p153 = scmp.ne.s32.totalorder %s144, %s145
    %p154 = scmp.eq.s32.totalorder %s24, 0
    %p155 = por %p153, %p154
    %p156 = scmp.ne.s32.totalorder %s144, %s145
    %p157 = scmp.eq.s32.totalorder %s25, 1
    %p158 = por %p156, %p157
    %p160 = scmp.ne.s32.totalorder %s145, %s159
    %p161 = scmp.eq.s32.totalorder %s25, 0
    %p162 = por %p160, %p161
    %s164 = sadd.s32 %s163, 1
    %p167 = scmp.eq.s32.totalorder %s19, 1
    %p168 = scmp.ne.s32.totalorder %s163, %s165
    %p169 = scmp.eq.s32.totalorder %s19, 0
    %p170 = por %p168, %p169
    %p171 = scmp.ne.s32.totalorder %s163, %s165
    %p172 = scmp.eq.s32.totalorder %s24, 1
    %p173 = por %p171, %p172
    %p174 = scmp.ne.s32.totalorder %s165, %s166
    %p175 = scmp.eq.s32.totalorder %s24, 0
    %p176 = por %p174, %p175
    %p177 = scmp.ne.s32.totalorder %s165, %s166
    %p178 = scmp.eq.s32.totalorder %s25, 1
    %p179 = por %p177, %p178
    %p181 = scmp.ne.s32.totalorder %s166, %s180
    %p182 = scmp.eq.s32.totalorder %s25, 0
    %p183 = por %p181, %p182
    %s185 = sadd.s32 %s184, 1
    %p188 = scmp.eq.s32.totalorder %s19, 1
    %p189 = scmp.ne.s32.totalorder %s184, %s186
    %p190 = scmp.eq.s32.totalorder %s19, 0
    %p191 = por %p189, %p190
    %p192 = scmp.ne.s32.totalorder %s184, %s186
    %p193 = scmp.eq.s32.totalorder %s24, 1
    %p194 = por %p192, %p193
    %p195 = scmp.ne.s32.totalorder %s186, %s187
    %p196 = scmp.eq.s32.totalorder %s24, 0
    %p197 = por %p195, %p196
    %p198 = scmp.ne.s32.totalorder %s186, %s187
    %p199 = scmp.eq.s32.totalorder %s25, 1
    %p200 = por %p198, %p199
    %p202 = scmp.ne.s32.totalorder %s187, %s201
    %p203 = scmp.eq.s32.totalorder %s25, 0
    %p204 = por %p202, %p203
    %s206 = sadd.s32 %s205, 1
    %p209 = scmp.eq.s32.totalorder %s19, 1
    %p210 = scmp.ne.s32.totalorder %s205, %s207
    %p211 = scmp.eq.s32.totalorder %s19, 0
    %p212 = por %p210, %p211
    %p213 = scmp.ne.s32.totalorder %s205, %s207
    %p214 = scmp.eq.s32.totalorder %s24, 1
    %p215 = por %p213, %p214
    %p216 = scmp.ne.s32.totalorder %s207, %s208
    %p217 = scmp.eq.s32.totalorder %s24, 0
    %p218 = por %p216, %p217
    %p219 = scmp.ne.s32.totalorder %s207, %s208
    %p220 = scmp.eq.s32.totalorder %s25, 1
    %p221 = por %p219, %p220
    %p223 = scmp.ne.s32.totalorder %s208, %s222
    %p224 = scmp.eq.s32.totalorder %s25, 0
    %p225 = por %p223, %p224
    %s227 = sadd.s32 %s226, 1
    %p230 = scmp.eq.s32.totalorder %s19, 1
    %p231 = scmp.ne.s32.totalorder %s226, %s228
    %p232 = scmp.eq.s32.totalorder %s19, 0
    %p233 = por %p231, %p232
    %p234 = scmp.ne.s32.totalorder %s226, %s228
    %p235 = scmp.eq.s32.totalorder %s24, 1
    %p236 = por %p234, %p235
    %p237 = scmp.ne.s32.totalorder %s228, %s229
    %p238 = scmp.eq.s32.totalorder %s24, 0
    %p239 = por %p237, %p238
    %p240 = scmp.ne.s32.totalorder %s228, %s229
    %p241 = scmp.eq.s32.totalorder %s25, 1
    %p242 = por %p240, %p241
    %p244 = scmp.ne.s32.totalorder %s229, %s243
    %p245 = scmp.eq.s32.totalorder %s25, 0
    %p246 = por %p244, %p245
    %s248 = sadd.s32 %s247, 1
    %p251 = scmp.eq.s32.totalorder %s19, 1
    %p252 = scmp.ne.s32.totalorder %s247, %s249
    %p253 = scmp.eq.s32.totalorder %s19, 0
    %p254 = por %p252, %p253
    %p255 = scmp.ne.s32.totalorder %s247, %s249
    %p256 = scmp.eq.s32.totalorder %s24, 1
    %p257 = por %p255, %p256
    %p258 = scmp.ne.s32.totalorder %s249, %s250
    %p259 = scmp.eq.s32.totalorder %s24, 0
    %p260 = por %p258, %p259
    %p261 = scmp.ne.s32.totalorder %s249, %s250
    %p262 = scmp.eq.s32.totalorder %s25, 1
    %p263 = por %p261, %p262
    %p265 = scmp.ne.s32.totalorder %s250, %s264
    %p266 = scmp.eq.s32.totalorder %s25, 0
    %p267 = por %p265, %p266
    %s269 = sadd.s32 %s268, 1
    %p272 = scmp.eq.s32.totalorder %s19, 1
    %p273 = scmp.ne.s32.totalorder %s268, %s270
    %p274 = scmp.eq.s32.totalorder %s19, 0
    %p275 = por %p273, %p274
    %p276 = scmp.ne.s32.totalorder %s268, %s270
    %p277 = scmp.eq.s32.totalorder %s24, 1
    %p278 = por %p276, %p277
    %p279 = scmp.ne.s32.totalorder %s270, %s271
    %p280 = scmp.eq.s32.totalorder %s24, 0
    %p281 = por %p279, %p280
    %p282 = scmp.ne.s32.totalorder %s270, %s271
    %p283 = scmp.eq.s32.totalorder %s25, 1
    %p284 = por %p282, %p283
    %p286 = scmp.ne.s32.totalorder %s271, %s285
    %p287 = scmp.eq.s32.totalorder %s25, 0
    %p288 = por %p286, %p287
    %s290 = sadd.s32 %s289, 1
    %p293 = scmp.eq.s32.totalorder %s19, 1
    %p294 = scmp.ne.s32.totalorder %s289, %s291
    %p295 = scmp.eq.s32.totalorder %s19, 0
    %p296 = por %p294, %p295
    %p297 = scmp.ne.s32.totalorder %s289, %s291
    %p298 = scmp.eq.s32.totalorder %s24, 1
    %p299 = por %p297, %p298
    %p300 = scmp.ne.s32.totalorder %s291, %s292
    %p301 = scmp.eq.s32.totalorder %s24, 0
    %p302 = por %p300, %p301
    %p303 = scmp.ne.s32.totalorder %s291, %s292
    %p304 = scmp.eq.s32.totalorder %s25, 1
    %p305 = por %p303, %p304
    %p307 = scmp.ne.s32.totalorder %s292, %s306
    %p308 = scmp.eq.s32.totalorder %s25, 0
    %p309 = por %p307, %p308
    %s310 = ssub.s32 %s19, %s26
    %p311 = scmp.eq.s32.totalorder %s310, 0
    %s313 = sadd.s32 %s312, 1
    %s314 = scalar_select %p311, %s312, %s313
    %p317 = pneg %p311
    %p318 = scmp.eq.s32.totalorder %s19, 1
    %p319 = por %p317, %p318
    %p320 = scmp.ne.s32.totalorder %s312, %s315
    %p321 = scmp.eq.s32.totalorder %s19, 0
    %p322 = por %p320, %p321
    %p323 = scmp.ne.s32.totalorder %s312, %s315
    %p324 = scmp.eq.s32.totalorder %s24, 1
    %p325 = por %p323, %p324
    %p326 = scmp.ne.s32.totalorder %s315, %s316
    %p327 = scmp.eq.s32.totalorder %s24, 0
    %p328 = por %p326, %p327
    %p329 = scmp.ne.s32.totalorder %s315, %s316
    %p330 = scmp.eq.s32.totalorder %s25, 1
    %p331 = por %p329, %p330
    %p333 = scmp.ne.s32.totalorder %s316, %s332
    %p334 = scmp.eq.s32.totalorder %s25, 0
    %p335 = por %p333, %p334
    %p336 = scmp.le.s32.totalorder 1, %s19
    %p337 = scmp.lt.s32.totalorder %s19, 3
    %p338 = pnand %p336, %p337
    %p339 = pneg %p338
    // Predicated region
    $region9: #{gab3d_forward.1} parent=5 // pred_check
      _
    $region10: #{gab3d_forward.1} parent=5 // pred_check_branch
      %341 = sbr.rel (%p338) target = $region12
    $region11: #{gab3d_forward.1} parent=5 // pred_region
      %s342 = ssub.s32 %s19, 1
      // Predicated region
      $region13: #{gab3d_forward.1} parent=11 // pred_check
        %p343 = pneg %p92
      $region14: #{gab3d_forward.1} parent=11 // pred_check_branch
        %345 = sbr.rel (%p343) target = $region16
      $region15: #{gab3d_forward.1} parent=11 // pred_region
        _
      $region16: #{gab3d_forward.1} parent=11 // pred_fallthru
        _
      // Predicated region
      $region17: #{gab3d_forward.1} parent=11 // pred_check
        %p346 = pneg %p113
      $region18: #{gab3d_forward.1} parent=11 // pred_check_branch
        %348 = sbr.rel (%p346) target = $region20
      $region19: #{gab3d_forward.1} parent=11 // pred_region
        _
      $region20: #{gab3d_forward.1} parent=11 // pred_fallthru
        _
      // Predicated region
      $region21: #{gab3d_forward.1} parent=11 // pred_check
        %p349 = pneg %p134
      $region22: #{gab3d_forward.1} parent=11 // pred_check_branch
        %351 = sbr.rel (%p349) target = $region24
      $region23: #{gab3d_forward.1} parent=11 // pred_region
        _
      $region24: #{gab3d_forward.1} parent=11 // pred_fallthru
        _
      // Predicated region
      $region25: #{gab3d_forward.1} parent=11 // pred_check
        %p352 = pneg %p155
      $region26: #{gab3d_forward.1} parent=11 // pred_check_branch
        %354 = sbr.rel (%p352) target = $region28
      $region27: #{gab3d_forward.1} parent=11 // pred_region
        _
      $region28: #{gab3d_forward.1} parent=11 // pred_fallthru
        _
      // Predicated region
      $region29: #{gab3d_forward.1} parent=11 // pred_check
        %p355 = pneg %p176
      $region30: #{gab3d_forward.1} parent=11 // pred_check_branch
        %357 = sbr.rel (%p355) target = $region32
      $region31: #{gab3d_forward.1} parent=11 // pred_region
        _
      $region32: #{gab3d_forward.1} parent=11 // pred_fallthru
        _
      // Predicated region
      $region33: #{gab3d_forward.1} parent=11 // pred_check
        %p358 = pneg %p197
      $region34: #{gab3d_forward.1} parent=11 // pred_check_branch
        %360 = sbr.rel (%p358) target = $region36
      $region35: #{gab3d_forward.1} parent=11 // pred_region
        _
      $region36: #{gab3d_forward.1} parent=11 // pred_fallthru
        _
      // Predicated region
      $region37: #{gab3d_forward.1} parent=11 // pred_check
        %p361 = pneg %p218
      $region38: #{gab3d_forward.1} parent=11 // pred_check_branch
        %363 = sbr.rel (%p361) target = $region40
      $region39: #{gab3d_forward.1} parent=11 // pred_region
        _
      $region40: #{gab3d_forward.1} parent=11 // pred_fallthru
        _
      // Predicated region
      $region41: #{gab3d_forward.1} parent=11 // pred_check
        %p364 = pneg %p239
      $region42: #{gab3d_forward.1} parent=11 // pred_check_branch
        %366 = sbr.rel (%p364) target = $region44
      $region43: #{gab3d_forward.1} parent=11 // pred_region
        _
      $region44: #{gab3d_forward.1} parent=11 // pred_fallthru
        _
      // Predicated region
      $region45: #{gab3d_forward.1} parent=11 // pred_check
        %p367 = pneg %p260
      $region46: #{gab3d_forward.1} parent=11 // pred_check_branch
        %369 = sbr.rel (%p367) target = $region48
      $region47: #{gab3d_forward.1} parent=11 // pred_region
        _
      $region48: #{gab3d_forward.1} parent=11 // pred_fallthru
        _
      // Predicated region
      $region49: #{gab3d_forward.1} parent=11 // pred_check
        %p370 = pneg %p281
      $region50: #{gab3d_forward.1} parent=11 // pred_check_branch
        %372 = sbr.rel (%p370) target = $region52
      $region51: #{gab3d_forward.1} parent=11 // pred_region
        _
      $region52: #{gab3d_forward.1} parent=11 // pred_fallthru
        _
      // Predicated region
      $region53: #{gab3d_forward.1} parent=11 // pred_check
        %p373 = pneg %p302
      $region54: #{gab3d_forward.1} parent=11 // pred_check_branch
        %375 = sbr.rel (%p373) target = $region56
      $region55: #{gab3d_forward.1} parent=11 // pred_region
        _
      $region56: #{gab3d_forward.1} parent=11 // pred_fallthru
        _
    $region12: #{gab3d_forward.1} parent=5 // pred_fallthru
      _
    %p376 = scmp.lt.s32.totalorder %s19, 2
    // Predicated region
    $region57: #{gab3d_forward.1} parent=5 // pred_check
      %p377 = pneg %p376
    $region58: #{gab3d_forward.1} parent=5 // pred_check_branch
      %379 = sbr.rel (%p377) target = $region60
    $region59: #{gab3d_forward.1} parent=5 // pred_region
      // Predicated region
      $region61: #{gab3d_forward.1} parent=59 // pred_check
        %p380 = pneg %p39
      $region62: #{gab3d_forward.1} parent=59 // pred_check_branch
        %382 = sbr.rel (%p380) target = $region64
      $region63: #{gab3d_forward.1} parent=59 // pred_region
        %p383 = scmp.lt.s32.totalorder %s19, 1
        %s384 = scalar_select %p383, %s19, 1
        %s385 = smul.addr %s384, 8
        %s386 = smul.addr %s385, 8
        %s387 = scalar_lea.vmem %s0, %s386
      $region64: #{gab3d_forward.1} parent=59 // pred_fallthru
        _
      // Predicated region
      $region65: #{gab3d_forward.1} parent=59 // pred_check
        %p388 = pneg %p65
      $region66: #{gab3d_forward.1} parent=59 // pred_check_branch
        %390 = sbr.rel (%p388) target = $region68
      $region67: #{gab3d_forward.1} parent=59 // pred_region
        %p391 = scmp.lt.s32.totalorder %s19, 1
        %s392 = scalar_select %p391, %s19, 1
        %s393 = smul.addr %s392, 32
        %s394 = smul.addr %s393, 8
        %s395 = scalar_lea.vmem %s1, %s394
      $region68: #{gab3d_forward.1} parent=59 // pred_fallthru
        _
    $region60: #{gab3d_forward.1} parent=5 // pred_fallthru
      _
    %p396 = scmp.le.s32.totalorder 1, %s19
    %p397 = scmp.lt.s32.totalorder %s19, 3
    %p398 = pnand %p396, %p397
    %p399 = pneg %p398
    // Predicated region
    $region69: #{gab3d_forward.1} parent=5 // pred_check
      _
    $region70: #{gab3d_forward.1} parent=5 // pred_check_branch
      %401 = sbr.rel (%p398) target = $region72
    $region71: #{gab3d_forward.1} parent=5 // pred_region
      %s402 = ssub.s32 %s19, 1
      %p403 = scmp.lt.s32.totalorder %s24, 1
      %s404 = scalar_select %p403, %s24, 1
      %s405 = smul.addr %s404, 8
      %s406 = smul.addr %s405, 8
      %s407 = scalar_lea.vmem %s0, %s406
      %p408 = pneg %p45
      %p409 = pneg %p42
      %p410 = scmp.lt.s32.totalorder %s24, 1
      %s411 = scalar_select %p410, %s24, 1
      %s412 = smul.addr %s411, 32
      %s413 = smul.addr %s412, 8
      %s414 = scalar_lea.vmem %s1, %s413
      %p415 = pneg %p71
      %p416 = pneg %p68
      %p417 = pneg %p92
      %p418 = pneg %p89
      %p419 = pneg %p113
      %p420 = pneg %p110
      %p421 = pneg %p134
      %p422 = pneg %p131
      %p423 = pneg %p155
      %p424 = pneg %p152
      %p425 = pneg %p176
      %p426 = pneg %p173
      %p427 = pneg %p197
      %p428 = pneg %p194
      %p429 = pneg %p218
      %p430 = pneg %p215
      %p431 = pneg %p239
      %p432 = pneg %p236
      %p433 = pneg %p260
      %p434 = pneg %p257
      %p435 = pneg %p281
      %p436 = pneg %p278
      %p437 = pneg %p302
      %p438 = pneg %p299
      %p439 = pneg %p328
      %p440 = pneg %p325
      %p441 = scmp.lt.s32.totalorder %s24, 1
      %s442 = scalar_select %p441, %s24, 1
      %s443 = smul.addr %s442, 8
      %s444 = smul.addr %s443, 8
      %s445 = scalar_lea.vmem %s13, %s444
      %p446 = scmp.lt.s32.totalorder %s24, 1
      %s447 = scalar_select %p446, %s24, 1
      %s448 = smul.addr %s447, 8
      %s449 = smul.addr %s448, 8
      %s450 = scalar_lea.vmem %s0, %s449
      %p451 = scmp.lt.s32.totalorder %s24, 1
      %s452 = scalar_select %p451, %s24, 1
      %s453 = smul.addr %s452, 32
      %s454 = smul.addr %s453, 8
      %s455 = scalar_lea.vmem %s1, %s454
      %p456 = scmp.lt.s32.totalorder %s24, 1
      %s457 = scalar_select %p456, %s24, 1
      %s458 = smul.addr %s457, 8
      %s459 = smul.addr %s458, 8
      %s460 = scalar_lea.vmem %s13, %s459
      %v461 = vld [vmem:[%s450] sm:$0xff]
      %v462 = vld [vmem:[%s450 + $0x8] sm:$0xff]
      %v463 = vld [vmem:[%s450 + $0x10] sm:$0xff]
      %v464 = vld [vmem:[%s450 + $0x18] sm:$0xff]
      %v465 = vld [vmem:[%s450 + $0x20] sm:$0xf]
      %v466 = vld [vmem:[%s450 + $0x28] sm:$0xf]
      %v467 = vld [vmem:[%s450 + $0x30] sm:$0xf]
      %v468 = vld [vmem:[%s450 + $0x38] sm:$0xf]
      %v469 = vld [vmem:[%s2] sm:$0xff]
      %v470 = vld [vmem:[%s2 + $0x8] sm:$0x1]
      %v471 = vld [vmem:[%s3] sm:$0xff]
      %v472 = vld [vmem:[%s3 + $0x8] sm:$0x1]
      %474 = vset.pattern.permute.xlu0 0
      %475 = vperm.xlu0 %474, %v471
      %v476 = vpop.permute.xlu0 %475
      %479 = vset.pattern.permute.xlu0 0
      %480 = vperm.xlu0 %479, %v472
      %v481 = vpop.permute.xlu0 %480
      %vm483 = vcmask 97280
      %v485 = vsel %vm483, %v469, 0
      %v488 = vsel %vm483, %v470, 0
      %vm490 = vcmask 1043456
      %v492 = vsel %vm490, %v465, 0
      %v495 = vsel %vm490, %v466, 0
      %v498 = vsel %vm490, %v467, 0
      %v501 = vsel %vm490, %v468, 0
      %503 = vmatprep.subr.mxu0 %v462
      %504 = vmatpush1.msra.mxu0 %v461
      %505 = vmatprep.subr.mxu0 %v495
      %506 = vmatpush1.msra.mxu0 %v492
      %507 = vmatprep.subr.mxu0 0.0
      %508 = vmatpush1.msra.mxu0 0.0
      %509 = vmatprep.subr.mxu0 0.0
      %510 = vmatpush1.msra.mxu0 0.0
      %511 = vmatprep.subr.mxu0 0.0
      %512 = vmatpush1.msra.mxu0 0.0
      %513 = vmatprep.subr.mxu0 0.0
      %514 = vmatpush1.msra.mxu0 0.0
      %515 = vmatprep.subr.mxu0 0.0
      %516 = vmatpush1.msra.mxu0 0.0
      %517 = vmatprep.subr.mxu0 0.0
      %518 = vmatpush1.msra.mxu0 0.0
      %519 = vmatprep.subr.mxu0 0.0
      %520 = vmatpush1.msra.mxu0 0.0
      %521 = vmatprep.subr.mxu0 0.0
      %522 = vmatpush1.msra.mxu0 0.0
      %523 = vmatprep.subr.mxu0 0.0
      %524 = vmatpush1.msra.mxu0 0.0
      %525 = vmatprep.subr.mxu0 0.0
      %526 = vmatpush1.msra.mxu0 0.0
      %527 = vmatprep.subr.mxu0 0.0
      %528 = vmatpush1.msra.mxu0 0.0
      %529 = vmatprep.subr.mxu0 0.0
      %530 = vmatpush1.msra.mxu0 0.0
      %531 = vmatprep.subr.mxu0 0.0
      %532 = vmatpush1.msra.mxu0 0.0
      %533 = vmatprep.subr.mxu0 0.0
      %534 = vmatpush1.msra.mxu0 0.0
      %535 = vmatprep.subr.mxu0 0.0
      %536 = vmatpush1.msra.mxu0 0.0
      %537 = vmatprep.subr.mxu0 0.0
      %538 = vmatpush1.msra.mxu0 0.0
      %539 = vmatprep.subr.mxu0 0.0
      %540 = vmatpush1.msra.mxu0 0.0
      %541 = vmatprep.subr.mxu0 0.0
      %542 = vmatpush1.msra.mxu0 0.0
      %543 = vmatprep.subr.mxu0 0.0
      %544 = vmatpush1.msra.mxu0 0.0
      %545 = vmatprep.subr.mxu0 0.0
      %546 = vmatpush1.msra.mxu0 0.0
      %547 = vmatprep.subr.mxu0 0.0
      %548 = vmatpush1.msra.mxu0 0.0
      %549 = vmatprep.subr.mxu0 0.0
      %550 = vmatpush1.msra.mxu0 0.0
      %551 = vmatprep.subr.mxu0 0.0
      %552 = vmatpush1.msra.mxu0 0.0
      %553 = vmatprep.subr.mxu0 0.0
      %554 = vmatpush1.msra.mxu0 0.0
      %555 = vmatprep.subr.mxu0 0.0
      %556 = vmatpush1.msra.mxu0 0.0
      %557 = vmatprep.subr.mxu0 0.0
      %558 = vmatpush1.msra.mxu0 0.0
      %559 = vmatprep.subr.mxu0 0.0
      %560 = vmatpush1.msra.mxu0 0.0
      %561 = vmatprep.subr.mxu0 0.0
      %562 = vmatpush1.msra.mxu0 0.0
      %563 = vmatprep.subr.mxu0 0.0
      %564 = vmatpush1.msra.mxu0 0.0
      %565 = vmatprep.subr.mxu0 0.0
      %566 = vmatpush1.msra.mxu0 0.0
      %567 = vmatprep.mubr.f32.mxu0 0.0
      %568 = vmatmul.mubr.f32.gmra.mrb[0].mxu0 %v485
      %v569 = vpop.f32.mrb[0].mxu0
      %v570 = vadd.f32 %v476, %v569
      %v571 = vpop.f32.mrb[0].mxu0
      %v572 = vadd.f32 %v476, %v571
      %573 = vmatprep.mubr.f32.mxu0 0.0
      %574 = vmatmul.mubr.f32.gmra.mrb[0].mxu0 %v488
      %v575 = vpop.f32.mrb[0].mxu0
      %v576 = vadd.f32 %v481, %v575
      %v577 = vpop.f32.mrb[0].mxu0
      %v578 = vadd.f32 %v481, %v577
      %579 = vdwg.mxu0
      %580 = vmatprep.subr.mxu0 %v464
      %581 = vmatpush1.msra.mxu0 %v463
      %582 = vmatprep.subr.mxu0 %v501
      %583 = vmatpush1.msra.mxu0 %v498
      %584 = vmatprep.subr.mxu0 0.0
      %585 = vmatpush1.msra.mxu0 0.0
      %586 = vmatprep.subr.mxu0 0.0
      %587 = vmatpush1.msra.mxu0 0.0
      %588 = vmatprep.subr.mxu0 0.0
      %589 = vmatpush1.msra.mxu0 0.0
      %590 = vmatprep.subr.mxu0 0.0
      %591 = vmatpush1.msra.mxu0 0.0
      %592 = vmatprep.subr.mxu0 0.0
      %593 = vmatpush1.msra.mxu0 0.0
      %594 = vmatprep.subr.mxu0 0.0
      %595 = vmatpush1.msra.mxu0 0.0
      %596 = vmatprep.subr.mxu0 0.0
      %597 = vmatpush1.msra.mxu0 0.0
      %598 = vmatprep.subr.mxu0 0.0
      %599 = vmatpush1.msra.mxu0 0.0
      %600 = vmatprep.subr.mxu0 0.0
      %601 = vmatpush1.msra.mxu0 0.0
      %602 = vmatprep.subr.mxu0 0.0
      %603 = vmatpush1.msra.mxu0 0.0
      %604 = vmatprep.subr.mxu0 0.0
      %605 = vmatpush1.msra.mxu0 0.0
      %606 = vmatprep.subr.mxu0 0.0
      %607 = vmatpush1.msra.mxu0 0.0
      %608 = vmatprep.subr.mxu0 0.0
      %609 = vmatpush1.msra.mxu0 0.0
      %610 = vmatprep.subr.mxu0 0.0
      %611 = vmatpush1.msra.mxu0 0.0
      %612 = vmatprep.subr.mxu0 0.0
      %613 = vmatpush1.msra.mxu0 0.0
      %614 = vmatprep.subr.mxu0 0.0
      %615 = vmatpush1.msra.mxu0 0.0
      %616 = vmatprep.subr.mxu0 0.0
      %617 = vmatpush1.msra.mxu0 0.0
      %618 = vmatprep.subr.mxu0 0.0
      %619 = vmatpush1.msra.mxu0 0.0
      %620 = vmatprep.subr.mxu0 0.0
      %621 = vmatpush1.msra.mxu0 0.0
      %622 = vmatprep.subr.mxu0 0.0
      %623 = vmatpush1.msra.mxu0 0.0
      %624 = vmatprep.subr.mxu0 0.0
      %625 = vmatpush1.msra.mxu0 0.0
      %626 = vmatprep.subr.mxu0 0.0
      %627 = vmatpush1.msra.mxu0 0.0
      %628 = vmatprep.subr.mxu0 0.0
      %629 = vmatpush1.msra.mxu0 0.0
      %630 = vmatprep.subr.mxu0 0.0
      %631 = vmatpush1.msra.mxu0 0.0
      %632 = vmatprep.subr.mxu0 0.0
      %633 = vmatpush1.msra.mxu0 0.0
      %634 = vmatprep.subr.mxu0 0.0
      %635 = vmatpush1.msra.mxu0 0.0
      %636 = vmatprep.subr.mxu0 0.0
      %637 = vmatpush1.msra.mxu0 0.0
      %638 = vmatprep.subr.mxu0 0.0
      %639 = vmatpush1.msra.mxu0 0.0
      %640 = vmatprep.subr.mxu0 0.0
      %641 = vmatpush1.msra.mxu0 0.0
      %642 = vmatprep.subr.mxu0 0.0
      %643 = vmatpush1.msra.mxu0 0.0
      %644 = vmatprep.mubr.f32.mxu0 0.0
      %645 = vmatmul.mubr.f32.gmra.mrb[0].mxu0 %v485
      %v646 = vpop.f32.mrb[0].mxu0
      %v647 = vadd.f32 %v476, %v646
      %v648 = vpop.f32.mrb[0].mxu0
      %v649 = vadd.f32 %v476, %v648
      %650 = vmatprep.mubr.f32.mxu0 0.0
      %651 = vmatmul.mubr.f32.gmra.mrb[0].mxu0 %v488
      %v652 = vpop.f32.mrb[0].mxu0
      %v653 = vadd.f32 %v481, %v652
      %v654 = vpop.f32.mrb[0].mxu0
      %v655 = vadd.f32 %v481, %v654
      %656 = vdwg.mxu0
      %v657 = vld [vmem:[%s455] sm:$0xff]
      %v658 = vld [vmem:[%s455 + $0x8] sm:$0xff]
      %v659 = vld [vmem:[%s455 + $0x10] sm:$0xff]
      %v660 = vld [vmem:[%s455 + $0x18] sm:$0xff]
      %v661 = vld [vmem:[%s455 + $0x20] sm:$0x1]
      %v662 = vld [vmem:[%s455 + $0x28] sm:$0x1]
      %v663 = vld [vmem:[%s455 + $0x30] sm:$0x1]
      %v664 = vld [vmem:[%s455 + $0x38] sm:$0x1]
      %v665 = vadd.f32 %v570, %v657
      %v666 = vadd.f32 %v572, %v658
      %v667 = vadd.f32 %v647, %v659
      %v668 = vadd.f32 %v649, %v660
      %v669 = vadd.f32 %v576, %v661
      %v670 = vadd.f32 %v578, %v662
      %v671 = vadd.f32 %v653, %v663
      %v672 = vadd.f32 %v655, %v664
      %v673 = vadd.f32 %v665, %v666
      %v674 = vadd.f32 %v673, %v667
      %v675 = vadd.f32 %v674, %v668
      %676 = vadd.xlane.f32.xlu0 %v675
      %v677 = vpop.xlane.xlu0 %676
      %vm678 = vcmask 1040384
      %v679 = vsel %vm678, %v669, 0.0
      %v680 = vsel %vm678, %v670, 0.0
      %v681 = vadd.f32 %v679, %v680
      %v682 = vsel %vm678, %v671, 0.0
      %v683 = vadd.f32 %v681, %v682
      %v684 = vsel %vm678, %v672, 0.0
      %v685 = vadd.f32 %v683, %v684
      %686 = vadd.xlane.f32.xlu0 %v685
      %v687 = vpop.xlane.xlu0 %686
      %v688 = vrcp.pop 512.0
      %v689 = vmul.f32 %v677, %v688
      %v690 = vmul.f32 %v687, %v688
      %v691 = vsub.f32 %v665, %v689
      %v692 = vsub.f32 %v666, %v689
      %v693 = vsub.f32 %v667, %v689
      %v694 = vsub.f32 %v668, %v689
      %v695 = vsub.f32 %v669, %v690
      %v696 = vsub.f32 %v670, %v690
      %v697 = vsub.f32 %v671, %v690
      %v698 = vsub.f32 %v672, %v690
      %v699 = vmul.f32 %v691, %v691
      %v700 = vmul.f32 %v692, %v692
      %v701 = vmul.f32 %v693, %v693
      %v702 = vmul.f32 %v694, %v694
      %v703 = vmul.f32 %v695, %v695
      %v704 = vmul.f32 %v696, %v696
      %v705 = vmul.f32 %v697, %v697
      %v706 = vmul.f32 %v698, %v698
      %v707 = vadd.f32 %v699, %v700
      %v708 = vadd.f32 %v707, %v701
      %v709 = vadd.f32 %v708, %v702
      %710 = vadd.xlane.f32.xlu0 %v709
      %v711 = vpop.xlane.xlu0 %710
      %v712 = vsel %vm678, %v703, 0.0
      %v713 = vsel %vm678, %v704, 0.0
      %v714 = vadd.f32 %v712, %v713
      %v715 = vsel %vm678, %v705, 0.0
      %v716 = vadd.f32 %v714, %v715
      %v717 = vsel %vm678, %v706, 0.0
      %v718 = vadd.f32 %v716, %v717
      %719 = vadd.xlane.f32.xlu0 %v718
      %v720 = vpop.xlane.xlu0 %719
      %v721 = vmul.f32 %v711, %v688
      %v722 = vmul.f32 %v720, %v688
      %v723 = vld [vmem:[%s4] sm:$0xff]
      %v724 = vld [vmem:[%s4 + $0x8] sm:$0x1]
      %v725 = vadd.f32 %v721, 1e-06
      %v726 = vadd.f32 %v722, 1e-06
      %v727 = vrsqrt.pop %v725
      %v728 = vrsqrt.pop %v726
      %v729 = vmul.f32 %v723, %v727
      %v730 = vmul.f32 %v724, %v728
      %731 = vrot.lane.b32.xlu0 %v691, 73
      %v732 = vpop.permute.xlu0 %731
      %733 = vrot.lane.b32.xlu0 %v695, 73
      %v734 = vpop.permute.xlu0 %733
      %735 = vrot.lane.b32.xlu0 %v692, 73
      %v736 = vpop.permute.xlu0 %735
      %737 = vrot.lane.b32.xlu0 %v696, 73
      %v738 = vpop.permute.xlu0 %737
      %739 = vrot.lane.b32.xlu0 %v693, 73
      %v740 = vpop.permute.xlu0 %739
      %741 = vrot.lane.b32.xlu0 %v697, 73
      %v742 = vpop.permute.xlu0 %741
      %743 = vrot.lane.b32.xlu0 %v694, 73
      %v744 = vpop.permute.xlu0 %743
      %745 = vrot.lane.b32.xlu0 %v698, 73
      %v746 = vpop.permute.xlu0 %745
      %v747 = vlaneseq
      %v748 = vand.u32 %v747, 127
      %vm749 = vcmp.lt.s32.totalorder %v748, 73
      %v750 = vsel %vm749, %v740, %v744
      %v751 = vsel %vm749, %v742, %v746
      %v752 = vsel %vm749, %v736, %v740
      %v753 = vsel %vm749, %v738, %v742
      %v754 = vsel %vm749, %v732, %v736
      %v755 = vsel %vm749, %v734, %v738
      %v756 = vsel %vm749, %v744, %v732
      %v757 = vsel %vm749, %v746, %v734
      %v758 = vld [vmem:[%s7] sm:$0xff]
      %v759 = vld [vmem:[%s7 + $0x8] sm:$0xff]
      %v760 = vld [vmem:[%s7 + $0x10] sm:$0xff]
      %v761 = vld [vmem:[%s7 + $0x18] sm:$0xff]
      %v762 = vld [vmem:[%s7 + $0x20] sm:$0x1]
      %v763 = vld [vmem:[%s7 + $0x28] sm:$0x1]
      %v764 = vld [vmem:[%s7 + $0x30] sm:$0x1]
      %v765 = vld [vmem:[%s7 + $0x38] sm:$0x1]
      %v766 = vmul.f32 %v758, %v756
      %v767 = vmul.f32 %v759, %v754
      %v768 = vmul.f32 %v760, %v752
      %v769 = vmul.f32 %v761, %v750
      %v770 = vmul.f32 %v762, %v757
      %v771 = vmul.f32 %v763, %v755
      %v772 = vmul.f32 %v764, %v753
      %v773 = vmul.f32 %v765, %v751
      %v774 = vadd.f32 %v766, 0.0
      %v775 = vadd.f32 %v767, 0.0
      %v776 = vadd.f32 %v768, 0.0
      %v777 = vadd.f32 %v769, 0.0
      %v778 = vadd.f32 %v770, 0.0
      %v779 = vadd.f32 %v771, 0.0
      %v780 = vadd.f32 %v772, 0.0
      %v781 = vadd.f32 %v773, 0.0
      %782 = vrot.lane.b32.xlu0 %v691, 72
      %v783 = vpop.permute.xlu0 %782
      %784 = vrot.lane.b32.xlu0 %v695, 72
      %v785 = vpop.permute.xlu0 %784
      %786 = vrot.lane.b32.xlu0 %v692, 72
      %v787 = vpop.permute.xlu0 %786
      %788 = vrot.lane.b32.xlu0 %v696, 72
      %v789 = vpop.permute.xlu0 %788
      %790 = vrot.lane.b32.xlu0 %v693, 72
      %v791 = vpop.permute.xlu0 %790
      %792 = vrot.lane.b32.xlu0 %v697, 72
      %v793 = vpop.permute.xlu0 %792
      %794 = vrot.lane.b32.xlu0 %v694, 72
      %v795 = vpop.permute.xlu0 %794
      %796 = vrot.lane.b32.xlu0 %v698, 72
      %v797 = vpop.permute.xlu0 %796
      %vm798 = vcmp.lt.s32.totalorder %v748, 72
      %v799 = vsel %vm798, %v791, %v795
      %v800 = vsel %vm798, %v793, %v797
      %v801 = vsel %vm798, %v787, %v791
      %v802 = vsel %vm798, %v789, %v793
      %v803 = vsel %vm798, %v783, %v787
      %v804 = vsel %vm798, %v785, %v789
      %v805 = vsel %vm798, %v795, %v783
      %v806 = vsel %vm798, %v797, %v785
      %s807 = scalar_lea.vmem %s7, 64
      %v808 = vld [vmem:[%s807] sm:$0xff]
      %v809 = vld [vmem:[%s807 + $0x8] sm:$0xff]
      %v810 = vld [vmem:[%s807 + $0x10] sm:$0xff]
      %v811 = vld [vmem:[%s807 + $0x18] sm:$0xff]
      %v812 = vld [vmem:[%s807 + $0x20] sm:$0x1]
      %v813 = vld [vmem:[%s807 + $0x28] sm:$0x1]
      %v814 = vld [vmem:[%s807 + $0x30] sm:$0x1]
      %v815 = vld [vmem:[%s807 + $0x38] sm:$0x1]
      %v816 = vmul.f32 %v808, %v805
      %v817 = vmul.f32 %v809, %v803
      %v818 = vmul.f32 %v810, %v801
      %v819 = vmul.f32 %v811, %v799
      %v820 = vmul.f32 %v812, %v806
      %v821 = vmul.f32 %v813, %v804
      %v822 = vmul.f32 %v814, %v802
      %v823 = vmul.f32 %v815, %v800
      %v824 = vadd.f32 %v774, %v816
      %v825 = vadd.f32 %v775, %v817
      %v826 = vadd.f32 %v776, %v818
      %v827 = vadd.f32 %v777, %v819
      %v828 = vadd.f32 %v778, %v820
      %v829 = vadd.f32 %v779, %v821
      %v830 = vadd.f32 %v780, %v822
      %v831 = vadd.f32 %v781, %v823
      %832 = vrot.lane.b32.xlu0 %v691, 71
      %v833 = vpop.permute.xlu0 %832
      %834 = vrot.lane.b32.xlu0 %v695, 71
      %v835 = vpop.permute.xlu0 %834
      %836 = vrot.lane.b32.xlu0 %v692, 71
      %v837 = vpop.permute.xlu0 %836
      %838 = vrot.lane.b32.xlu0 %v696, 71
      %v839 = vpop.permute.xlu0 %838
      %840 = vrot.lane.b32.xlu0 %v693, 71
      %v841 = vpop.permute.xlu0 %840
      %842 = vrot.lane.b32.xlu0 %v697, 71
      %v843 = vpop.permute.xlu0 %842
      %844 = vrot.lane.b32.xlu0 %v694, 71
      %v845 = vpop.permute.xlu0 %844
      %846 = vrot.lane.b32.xlu0 %v698, 71
      %v847 = vpop.permute.xlu0 %846
      %vm848 = vcmp.lt.s32.totalorder %v748, 71
      %v849 = vsel %vm848, %v841, %v845
      %v850 = vsel %vm848, %v843, %v847
      %v851 = vsel %vm848, %v837, %v841
      %v852 = vsel %vm848, %v839, %v843
      %v853 = vsel %vm848, %v833, %v837
      %v854 = vsel %vm848, %v835, %v839
      %v855 = vsel %vm848, %v845, %v833
      %v856 = vsel %vm848, %v847, %v835
      %s857 = scalar_lea.vmem %s7, 128
      %v858 = vld [vmem:[%s857] sm:$0xff]
      %v859 = vld [vmem:[%s857 + $0x8] sm:$0xff]
      %v860 = vld [vmem:[%s857 + $0x10] sm:$0xff]
      %v861 = vld [vmem:[%s857 + $0x18] sm:$0xff]
      %v862 = vld [vmem:[%s857 + $0x20] sm:$0x1]
      %v863 = vld [vmem:[%s857 + $0x28] sm:$0x1]
      %v864 = vld [vmem:[%s857 + $0x30] sm:$0x1]
      %v865 = vld [vmem:[%s857 + $0x38] sm:$0x1]
      %v866 = vmul.f32 %v858, %v855
      %v867 = vmul.f32 %v859, %v853
      %v868 = vmul.f32 %v860, %v851
      %v869 = vmul.f32 %v861, %v849
      %v870 = vmul.f32 %v862, %v856
      %v871 = vmul.f32 %v863, %v854
      %v872 = vmul.f32 %v864, %v852
      %v873 = vmul.f32 %v865, %v850
      %v874 = vadd.f32 %v824, %v866
      %v875 = vadd.f32 %v825, %v867
      %v876 = vadd.f32 %v826, %v868
      %v877 = vadd.f32 %v827, %v869
      %v878 = vadd.f32 %v828, %v870
      %v879 = vadd.f32 %v829, %v871
      %v880 = vadd.f32 %v830, %v872
      %v881 = vadd.f32 %v831, %v873
      %882 = vrot.lane.b32.xlu0 %v691, 65
      %v883 = vpop.permute.xlu0 %882
      %884 = vrot.lane.b32.xlu0 %v695, 65
      %v885 = vpop.permute.xlu0 %884
      %886 = vrot.lane.b32.xlu0 %v692, 65
      %v887 = vpop.permute.xlu0 %886
      %888 = vrot.lane.b32.xlu0 %v696, 65
      %v889 = vpop.permute.xlu0 %888
      %890 = vrot.lane.b32.xlu0 %v693, 65
      %v891 = vpop.permute.xlu0 %890
      %892 = vrot.lane.b32.xlu0 %v697, 65
      %v893 = vpop.permute.xlu0 %892
      %894 = vrot.lane.b32.xlu0 %v694, 65
      %v895 = vpop.permute.xlu0 %894
      %896 = vrot.lane.b32.xlu0 %v698, 65
      %v897 = vpop.permute.xlu0 %896
      %vm898 = vcmp.lt.s32.totalorder %v748, 65
      %v899 = vsel %vm898, %v891, %v895
      %v900 = vsel %vm898, %v893, %v897
      %v901 = vsel %vm898, %v887, %v891
      %v902 = vsel %vm898, %v889, %v893
      %v903 = vsel %vm898, %v883, %v887
      %v904 = vsel %vm898, %v885, %v889
      %v905 = vsel %vm898, %v895, %v883
      %v906 = vsel %vm898, %v897, %v885
      %s907 = scalar_lea.vmem %s7, 192
      %v908 = vld [vmem:[%s907] sm:$0xff]
      %v909 = vld [vmem:[%s907 + $0x8] sm:$0xff]
      %v910 = vld [vmem:[%s907 + $0x10] sm:$0xff]
      %v911 = vld [vmem:[%s907 + $0x18] sm:$0xff]
      %v912 = vld [vmem:[%s907 + $0x20] sm:$0x1]
      %v913 = vld [vmem:[%s907 + $0x28] sm:$0x1]
      %v914 = vld [vmem:[%s907 + $0x30] sm:$0x1]
      %v915 = vld [vmem:[%s907 + $0x38] sm:$0x1]
      %v916 = vmul.f32 %v908, %v905
      %v917 = vmul.f32 %v909, %v903
      %v918 = vmul.f32 %v910, %v901
      %v919 = vmul.f32 %v911, %v899
      %v920 = vmul.f32 %v912, %v906
      %v921 = vmul.f32 %v913, %v904
      %v922 = vmul.f32 %v914, %v902
      %v923 = vmul.f32 %v915, %v900
      %v924 = vadd.f32 %v874, %v916
      %v925 = vadd.f32 %v875, %v917
      %v926 = vadd.f32 %v876, %v918
      %v927 = vadd.f32 %v877, %v919
      %v928 = vadd.f32 %v878, %v920
      %v929 = vadd.f32 %v879, %v921
      %v930 = vadd.f32 %v880, %v922
      %v931 = vadd.f32 %v881, %v923
      %932 = vrot.lane.b32.xlu0 %v691, 64
      %v933 = vpop.permute.xlu0 %932
      %934 = vrot.lane.b32.xlu0 %v695, 64
      %v935 = vpop.permute.xlu0 %934
      %936 = vrot.lane.b32.xlu0 %v692, 64
      %v937 = vpop.permute.xlu0 %936
      %938 = vrot.lane.b32.xlu0 %v696, 64
      %v939 = vpop.permute.xlu0 %938
      %940 = vrot.lane.b32.xlu0 %v693, 64
      %v941 = vpop.permute.xlu0 %940
      %942 = vrot.lane.b32.xlu0 %v697, 64
      %v943 = vpop.permute.xlu0 %942
      %944 = vrot.lane.b32.xlu0 %v694, 64
      %v945 = vpop.permute.xlu0 %944
      %946 = vrot.lane.b32.xlu0 %v698, 64
      %v947 = vpop.permute.xlu0 %946
      %vm948 = vcmp.lt.s32.totalorder %v748, 64
      %v949 = vsel %vm948, %v941, %v945
      %v950 = vsel %vm948, %v943, %v947
      %v951 = vsel %vm948, %v937, %v941
      %v952 = vsel %vm948, %v939, %v943
      %v953 = vsel %vm948, %v933, %v937
      %v954 = vsel %vm948, %v935, %v939
      %v955 = vsel %vm948, %v945, %v933
      %v956 = vsel %vm948, %v947, %v935
      %s957 = scalar_lea.vmem %s7, 256
      %v958 = vld [vmem:[%s957] sm:$0xff]
      %v959 = vld [vmem:[%s957 + $0x8] sm:$0xff]
      %v960 = vld [vmem:[%s957 + $0x10] sm:$0xff]
      %v961 = vld [vmem:[%s957 + $0x18] sm:$0xff]
      %v962 = vld [vmem:[%s957 + $0x20] sm:$0x1]
      %v963 = vld [vmem:[%s957 + $0x28] sm:$0x1]
      %v964 = vld [vmem:[%s957 + $0x30] sm:$0x1]
      %v965 = vld [vmem:[%s957 + $0x38] sm:$0x1]
      %v966 = vmul.f32 %v958, %v955
      %v967 = vmul.f32 %v959, %v953
      %v968 = vmul.f32 %v960, %v951
      %v969 = vmul.f32 %v961, %v949
      %v970 = vmul.f32 %v962, %v956
      %v971 = vmul.f32 %v963, %v954
      %v972 = vmul.f32 %v964, %v952
      %v973 = vmul.f32 %v965, %v950
      %v974 = vadd.f32 %v924, %v966
      %v975 = vadd.f32 %v925, %v967
      %v976 = vadd.f32 %v926, %v968
      %v977 = vadd.f32 %v927, %v969
      %v978 = vadd.f32 %v928, %v970
      %v979 = vadd.f32 %v929, %v971
      %v980 = vadd.f32 %v930, %v972
      %v981 = vadd.f32 %v931, %v973
      %982 = vrot.lane.b32.xlu0 %v691, 63
      %v983 = vpop.permute.xlu0 %982
      %984 = vrot.lane.b32.xlu0 %v695, 63
      %v985 = vpop.permute.xlu0 %984
      %986 = vrot.lane.b32.xlu0 %v692, 63
      %v987 = vpop.permute.xlu0 %986
      %988 = vrot.lane.b32.xlu0 %v696, 63
      %v989 = vpop.permute.xlu0 %988
      %990 = vrot.lane.b32.xlu0 %v693, 63
      %v991 = vpop.permute.xlu0 %990
      %992 = vrot.lane.b32.xlu0 %v697, 63
      %v993 = vpop.permute.xlu0 %992
      %994 = vrot.lane.b32.xlu0 %v694, 63
      %v995 = vpop.permute.xlu0 %994
      %996 = vrot.lane.b32.xlu0 %v698, 63
      %v997 = vpop.permute.xlu0 %996
      %vm998 = vcmp.lt.s32.totalorder %v748, 63
      %v999 = vsel %vm998, %v991, %v995
      %v1000 = vsel %vm998, %v993, %v997
      %v1001 = vsel %vm998, %v987, %v991
      %v1002 = vsel %vm998, %v989, %v993
      %v1003 = vsel %vm998, %v983, %v987
      %v1004 = vsel %vm998, %v985, %v989
      %v1005 = vsel %vm998, %v995, %v983
      %v1006 = vsel %vm998, %v997, %v985
      %s1007 = scalar_lea.vmem %s7, 320
      %v1008 = vld [vmem:[%s1007] sm:$0xff]
      %v1009 = vld [vmem:[%s1007 + $0x8] sm:$0xff]
      %v1010 = vld [vmem:[%s1007 + $0x10] sm:$0xff]
      %v1011 = vld [vmem:[%s1007 + $0x18] sm:$0xff]
      %v1012 = vld [vmem:[%s1007 + $0x20] sm:$0x1]
      %v1013 = vld [vmem:[%s1007 + $0x28] sm:$0x1]
      %v1014 = vld [vmem:[%s1007 + $0x30] sm:$0x1]
      %v1015 = vld [vmem:[%s1007 + $0x38] sm:$0x1]
      %v1016 = vmul.f32 %v1008, %v1005
      %v1017 = vmul.f32 %v1009, %v1003
      %v1018 = vmul.f32 %v1010, %v1001
      %v1019 = vmul.f32 %v1011, %v999
      %v1020 = vmul.f32 %v1012, %v1006
      %v1021 = vmul.f32 %v1013, %v1004
      %v1022 = vmul.f32 %v1014, %v1002
      %v1023 = vmul.f32 %v1015, %v1000
      %v1024 = vadd.f32 %v974, %v1016
      %v1025 = vadd.f32 %v975, %v1017
      %v1026 = vadd.f32 %v976, %v1018
      %v1027 = vadd.f32 %v977, %v1019
      %v1028 = vadd.f32 %v978, %v1020
      %v1029 = vadd.f32 %v979, %v1021
      %v1030 = vadd.f32 %v980, %v1022
      %v1031 = vadd.f32 %v981, %v1023
      %1032 = vrot.lane.b32.xlu0 %v691, 57
      %v1033 = vpop.permute.xlu0 %1032
      %1034 = vrot.lane.b32.xlu0 %v695, 57
      %v1035 = vpop.permute.xlu0 %1034
      %1036 = vrot.lane.b32.xlu0 %v692, 57
      %v1037 = vpop.permute.xlu0 %1036
      %1038 = vrot.lane.b32.xlu0 %v696, 57
      %v1039 = vpop.permute.xlu0 %1038
      %1040 = vrot.lane.b32.xlu0 %v693, 57
      %v1041 = vpop.permute.xlu0 %1040
      %1042 = vrot.lane.b32.xlu0 %v697, 57
      %v1043 = vpop.permute.xlu0 %1042
      %1044 = vrot.lane.b32.xlu0 %v694, 57
      %v1045 = vpop.permute.xlu0 %1044
      %1046 = vrot.lane.b32.xlu0 %v698, 57
      %v1047 = vpop.permute.xlu0 %1046
      %vm1048 = vcmp.lt.s32.totalorder %v748, 57
      %v1049 = vsel %vm1048, %v1041, %v1045
      %v1050 = vsel %vm1048, %v1043, %v1047
      %v1051 = vsel %vm1048, %v1037, %v1041
      %v1052 = vsel %vm1048, %v1039, %v1043
      %v1053 = vsel %vm1048, %v1033, %v1037
      %v1054 = vsel %vm1048, %v1035, %v1039
      %v1055 = vsel %vm1048, %v1045, %v1033
      %v1056 = vsel %vm1048, %v1047, %v1035
      %s1057 = scalar_lea.vmem %s7, 384
      %v1058 = vld [vmem:[%s1057] sm:$0xff]
      %v1059 = vld [vmem:[%s1057 + $0x8] sm:$0xff]
      %v1060 = vld [vmem:[%s1057 + $0x10] sm:$0xff]
      %v1061 = vld [vmem:[%s1057 + $0x18] sm:$0xff]
      %v1062 = vld [vmem:[%s1057 + $0x20] sm:$0x1]
      %v1063 = vld [vmem:[%s1057 + $0x28] sm:$0x1]
      %v1064 = vld [vmem:[%s1057 + $0x30] sm:$0x1]
      %v1065 = vld [vmem:[%s1057 + $0x38] sm:$0x1]
      %v1066 = vmul.f32 %v1058, %v1055
      %v1067 = vmul.f32 %v1059, %v1053
      %v1068 = vmul.f32 %v1060, %v1051
      %v1069 = vmul.f32 %v1061, %v1049
      %v1070 = vmul.f32 %v1062, %v1056
      %v1071 = vmul.f32 %v1063, %v1054
      %v1072 = vmul.f32 %v1064, %v1052
      %v1073 = vmul.f32 %v1065, %v1050
      %v1074 = vadd.f32 %v1024, %v1066
      %v1075 = vadd.f32 %v1025, %v1067
      %v1076 = vadd.f32 %v1026, %v1068
      %v1077 = vadd.f32 %v1027, %v1069
      %v1078 = vadd.f32 %v1028, %v1070
      %v1079 = vadd.f32 %v1029, %v1071
      %v1080 = vadd.f32 %v1030, %v1072
      %v1081 = vadd.f32 %v1031, %v1073
      %1082 = vrot.lane.b32.xlu0 %v691, 56
      %v1083 = vpop.permute.xlu0 %1082
      %1084 = vrot.lane.b32.xlu0 %v695, 56
      %v1085 = vpop.permute.xlu0 %1084
      %1086 = vrot.lane.b32.xlu0 %v692, 56
      %v1087 = vpop.permute.xlu0 %1086
      %1088 = vrot.lane.b32.xlu0 %v696, 56
      %v1089 = vpop.permute.xlu0 %1088
      %1090 = vrot.lane.b32.xlu0 %v693, 56
      %v1091 = vpop.permute.xlu0 %1090
      %1092 = vrot.lane.b32.xlu0 %v697, 56
      %v1093 = vpop.permute.xlu0 %1092
      %1094 = vrot.lane.b32.xlu0 %v694, 56
      %v1095 = vpop.permute.xlu0 %1094
      %1096 = vrot.lane.b32.xlu0 %v698, 56
      %v1097 = vpop.permute.xlu0 %1096
      %vm1098 = vcmp.lt.s32.totalorder %v748, 56
      %v1099 = vsel %vm1098, %v1091, %v1095
      %v1100 = vsel %vm1098, %v1093, %v1097
      %v1101 = vsel %vm1098, %v1087, %v1091
      %v1102 = vsel %vm1098, %v1089, %v1093
      %v1103 = vsel %vm1098, %v1083, %v1087
      %v1104 = vsel %vm1098, %v1085, %v1089
      %v1105 = vsel %vm1098, %v1095, %v1083
      %v1106 = vsel %vm1098, %v1097, %v1085
      %s1107 = scalar_lea.vmem %s7, 448
      %v1108 = vld [vmem:[%s1107] sm:$0xff]
      %v1109 = vld [vmem:[%s1107 + $0x8] sm:$0xff]
      %v1110 = vld [vmem:[%s1107 + $0x10] sm:$0xff]
      %v1111 = vld [vmem:[%s1107 + $0x18] sm:$0xff]
      %v1112 = vld [vmem:[%s1107 + $0x20] sm:$0x1]
      %v1113 = vld [vmem:[%s1107 + $0x28] sm:$0x1]
      %v1114 = vld [vmem:[%s1107 + $0x30] sm:$0x1]
      %v1115 = vld [vmem:[%s1107 + $0x38] sm:$0x1]
      %v1116 = vmul.f32 %v1108, %v1105
      %v1117 = vmul.f32 %v1109, %v1103
      %v1118 = vmul.f32 %v1110, %v1101
      %v1119 = vmul.f32 %v1111, %v1099
      %v1120 = vmul.f32 %v1112, %v1106
      %v1121 = vmul.f32 %v1113, %v1104
      %v1122 = vmul.f32 %v1114, %v1102
      %v1123 = vmul.f32 %v1115, %v1100
      %v1124 = vadd.f32 %v1074, %v1116
      %v1125 = vadd.f32 %v1075, %v1117
      %v1126 = vadd.f32 %v1076, %v1118
      %v1127 = vadd.f32 %v1077, %v1119
      %v1128 = vadd.f32 %v1078, %v1120
      %v1129 = vadd.f32 %v1079, %v1121
      %v1130 = vadd.f32 %v1080, %v1122
      %v1131 = vadd.f32 %v1081, %v1123
      %1132 = vrot.lane.b32.xlu0 %v691, 55
      %v1133 = vpop.permute.xlu0 %1132
      %1134 = vrot.lane.b32.xlu0 %v695, 55
      %v1135 = vpop.permute.xlu0 %1134
      %1136 = vrot.lane.b32.xlu0 %v692, 55
      %v1137 = vpop.permute.xlu0 %1136
      %1138 = vrot.lane.b32.xlu0 %v696, 55
      %v1139 = vpop.permute.xlu0 %1138
      %1140 = vrot.lane.b32.xlu0 %v693, 55
      %v1141 = vpop.permute.xlu0 %1140
      %1142 = vrot.lane.b32.xlu0 %v697, 55
      %v1143 = vpop.permute.xlu0 %1142
      %1144 = vrot.lane.b32.xlu0 %v694, 55
      %v1145 = vpop.permute.xlu0 %1144
      %1146 = vrot.lane.b32.xlu0 %v698, 55
      %v1147 = vpop.permute.xlu0 %1146
      %vm1148 = vcmp.lt.s32.totalorder %v748, 55
      %v1149 = vsel %vm1148, %v1141, %v1145
      %v1150 = vsel %vm1148, %v1143, %v1147
      %v1151 = vsel %vm1148, %v1137, %v1141
      %v1152 = vsel %vm1148, %v1139, %v1143
      %v1153 = vsel %vm1148, %v1133, %v1137
      %v1154 = vsel %vm1148, %v1135, %v1139
      %v1155 = vsel %vm1148, %v1145, %v1133
      %v1156 = vsel %vm1148, %v1147, %v1135
      %s1157 = scalar_lea.vmem %s7, 512
      %v1158 = vld [vmem:[%s1157] sm:$0xff]
      %v1159 = vld [vmem:[%s1157 + $0x8] sm:$0xff]
      %v1160 = vld [vmem:[%s1157 + $0x10] sm:$0xff]
      %v1161 = vld [vmem:[%s1157 + $0x18] sm:$0xff]
      %v1162 = vld [vmem:[%s1157 + $0x20] sm:$0x1]
      %v1163 = vld [vmem:[%s1157 + $0x28] sm:$0x1]
      %v1164 = vld [vmem:[%s1157 + $0x30] sm:$0x1]
      %v1165 = vld [vmem:[%s1157 + $0x38] sm:$0x1]
      %v1166 = vmul.f32 %v1158, %v1155
      %v1167 = vmul.f32 %v1159, %v1153
      %v1168 = vmul.f32 %v1160, %v1151
      %v1169 = vmul.f32 %v1161, %v1149
      %v1170 = vmul.f32 %v1162, %v1156
      %v1171 = vmul.f32 %v1163, %v1154
      %v1172 = vmul.f32 %v1164, %v1152
      %v1173 = vmul.f32 %v1165, %v1150
      %v1174 = vadd.f32 %v1124, %v1166
      %v1175 = vadd.f32 %v1125, %v1167
      %v1176 = vadd.f32 %v1126, %v1168
      %v1177 = vadd.f32 %v1127, %v1169
      %v1178 = vadd.f32 %v1128, %v1170
      %v1179 = vadd.f32 %v1129, %v1171
      %v1180 = vadd.f32 %v1130, %v1172
      %v1181 = vadd.f32 %v1131, %v1173
      %1182 = vrot.lane.b32.xlu0 %v691, 9
      %v1183 = vpop.permute.xlu0 %1182
      %1184 = vrot.lane.b32.xlu0 %v695, 9
      %v1185 = vpop.permute.xlu0 %1184
      %1186 = vrot.lane.b32.xlu0 %v692, 9
      %v1187 = vpop.permute.xlu0 %1186
      %1188 = vrot.lane.b32.xlu0 %v696, 9
      %v1189 = vpop.permute.xlu0 %1188
      %1190 = vrot.lane.b32.xlu0 %v693, 9
      %v1191 = vpop.permute.xlu0 %1190
      %1192 = vrot.lane.b32.xlu0 %v697, 9
      %v1193 = vpop.permute.xlu0 %1192
      %1194 = vrot.lane.b32.xlu0 %v694, 9
      %v1195 = vpop.permute.xlu0 %1194
      %1196 = vrot.lane.b32.xlu0 %v698, 9
      %v1197 = vpop.permute.xlu0 %1196
      %vm1198 = vcmp.lt.s32.totalorder %v748, 9
      %v1199 = vsel %vm1198, %v1191, %v1195
      %v1200 = vsel %vm1198, %v1193, %v1197
      %v1201 = vsel %vm1198, %v1187, %v1191
      %v1202 = vsel %vm1198, %v1189, %v1193
      %v1203 = vsel %vm1198, %v1183, %v1187
      %v1204 = vsel %vm1198, %v1185, %v1189
      %v1205 = vsel %vm1198, %v1195, %v1183
      %v1206 = vsel %vm1198, %v1197, %v1185
      %s1207 = scalar_lea.vmem %s7, 576
      %v1208 = vld [vmem:[%s1207] sm:$0xff]
      %v1209 = vld [vmem:[%s1207 + $0x8] sm:$0xff]
      %v1210 = vld [vmem:[%s1207 + $0x10] sm:$0xff]
      %v1211 = vld [vmem:[%s1207 + $0x18] sm:$0xff]
      %v1212 = vld [vmem:[%s1207 + $0x20] sm:$0x1]
      %v1213 = vld [vmem:[%s1207 + $0x28] sm:$0x1]
      %v1214 = vld [vmem:[%s1207 + $0x30] sm:$0x1]
      %v1215 = vld [vmem:[%s1207 + $0x38] sm:$0x1]
      %v1216 = vmul.f32 %v1208, %v1205
      %v1217 = vmul.f32 %v1209, %v1203
      %v1218 = vmul.f32 %v1210, %v1201
      %v1219 = vmul.f32 %v1211, %v1199
      %v1220 = vmul.f32 %v1212, %v1206
      %v1221 = vmul.f32 %v1213, %v1204
      %v1222 = vmul.f32 %v1214, %v1202
      %v1223 = vmul.f32 %v1215, %v1200
      %v1224 = vadd.f32 %v1174, %v1216
      %v1225 = vadd.f32 %v1175, %v1217
      %v1226 = vadd.f32 %v1176, %v1218
      %v1227 = vadd.f32 %v1177, %v1219
      %v1228 = vadd.f32 %v1178, %v1220
      %v1229 = vadd.f32 %v1179, %v1221
      %v1230 = vadd.f32 %v1180, %v1222
      %v1231 = vadd.f32 %v1181, %v1223
      %1232 = vrot.lane.b32.xlu0 %v691, 8
      %v1233 = vpop.permute.xlu0 %1232
      %1234 = vrot.lane.b32.xlu0 %v695, 8
      %v1235 = vpop.permute.xlu0 %1234
      %1236 = vrot.lane.b32.xlu0 %v692, 8
      %v1237 = vpop.permute.xlu0 %1236
      %1238 = vrot.lane.b32.xlu0 %v696, 8
      %v1239 = vpop.permute.xlu0 %1238
      %1240 = vrot.lane.b32.xlu0 %v693, 8
      %v1241 = vpop.permute.xlu0 %1240
      %1242 = vrot.lane.b32.xlu0 %v697, 8
      %v1243 = vpop.permute.xlu0 %1242
      %1244 = vrot.lane.b32.xlu0 %v694, 8
      %v1245 = vpop.permute.xlu0 %1244
      %1246 = vrot.lane.b32.xlu0 %v698, 8
      %v1247 = vpop.permute.xlu0 %1246
      %vm1248 = vcmp.lt.s32.totalorder %v748, 8
      %v1249 = vsel %vm1248, %v1241, %v1245
      %v1250 = vsel %vm1248, %v1243, %v1247
      %v1251 = vsel %vm1248, %v1237, %v1241
      %v1252 = vsel %vm1248, %v1239, %v1243
      %v1253 = vsel %vm1248, %v1233, %v1237
      %v1254 = vsel %vm1248, %v1235, %v1239
      %v1255 = vsel %vm1248, %v1245, %v1233
      %v1256 = vsel %vm1248, %v1247, %v1235
      %s1257 = scalar_lea.vmem %s7, 640
      %v1258 = vld [vmem:[%s1257] sm:$0xff]
      %v1259 = vld [vmem:[%s1257 + $0x8] sm:$0xff]
      %v1260 = vld [vmem:[%s1257 + $0x10] sm:$0xff]
      %v1261 = vld [vmem:[%s1257 + $0x18] sm:$0xff]
      %v1262 = vld [vmem:[%s1257 + $0x20] sm:$0x1]
      %v1263 = vld [vmem:[%s1257 + $0x28] sm:$0x1]
      %v1264 = vld [vmem:[%s1257 + $0x30] sm:$0x1]
      %v1265 = vld [vmem:[%s1257 + $0x38] sm:$0x1]
      %v1266 = vmul.f32 %v1258, %v1255
      %v1267 = vmul.f32 %v1259, %v1253
      %v1268 = vmul.f32 %v1260, %v1251
      %v1269 = vmul.f32 %v1261, %v1249
      %v1270 = vmul.f32 %v1262, %v1256
      %v1271 = vmul.f32 %v1263, %v1254
      %v1272 = vmul.f32 %v1264, %v1252
      %v1273 = vmul.f32 %v1265, %v1250
      %v1274 = vadd.f32 %v1224, %v1266
      %v1275 = vadd.f32 %v1225, %v1267
      %v1276 = vadd.f32 %v1226, %v1268
      %v1277 = vadd.f32 %v1227, %v1269
      %v1278 = vadd.f32 %v1228, %v1270
      %v1279 = vadd.f32 %v1229, %v1271
      %v1280 = vadd.f32 %v1230, %v1272
      %v1281 = vadd.f32 %v1231, %v1273
      %1282 = vrot.lane.b32.xlu0 %v691, 7
      %v1283 = vpop.permute.xlu0 %1282
      %1284 = vrot.lane.b32.xlu0 %v695, 7
      %v1285 = vpop.permute.xlu0 %1284
      %1286 = vrot.lane.b32.xlu0 %v692, 7
      %v1287 = vpop.permute.xlu0 %1286
      %1288 = vrot.lane.b32.xlu0 %v696, 7
      %v1289 = vpop.permute.xlu0 %1288
      %1290 = vrot.lane.b32.xlu0 %v693, 7
      %v1291 = vpop.permute.xlu0 %1290
      %1292 = vrot.lane.b32.xlu0 %v697, 7
      %v1293 = vpop.permute.xlu0 %1292
      %1294 = vrot.lane.b32.xlu0 %v694, 7
      %v1295 = vpop.permute.xlu0 %1294
      %1296 = vrot.lane.b32.xlu0 %v698, 7
      %v1297 = vpop.permute.xlu0 %1296
      %vm1298 = vcmp.lt.s32.totalorder %v748, 7
      %v1299 = vsel %vm1298, %v1291, %v1295
      %v1300 = vsel %vm1298, %v1293, %v1297
      %v1301 = vsel %vm1298, %v1287, %v1291
      %v1302 = vsel %vm1298, %v1289, %v1293
      %v1303 = vsel %vm1298, %v1283, %v1287
      %v1304 = vsel %vm1298, %v1285, %v1289
      %v1305 = vsel %vm1298, %v1295, %v1283
      %v1306 = vsel %vm1298, %v1297, %v1285
      %s1307 = scalar_lea.vmem %s7, 704
      %v1308 = vld [vmem:[%s1307] sm:$0xff]
      %v1309 = vld [vmem:[%s1307 + $0x8] sm:$0xff]
      %v1310 = vld [vmem:[%s1307 + $0x10] sm:$0xff]
      %v1311 = vld [vmem:[%s1307 + $0x18] sm:$0xff]
      %v1312 = vld [vmem:[%s1307 + $0x20] sm:$0x1]
      %v1313 = vld [vmem:[%s1307 + $0x28] sm:$0x1]
      %v1314 = vld [vmem:[%s1307 + $0x30] sm:$0x1]
      %v1315 = vld [vmem:[%s1307 + $0x38] sm:$0x1]
      %v1316 = vmul.f32 %v1308, %v1305
      %v1317 = vmul.f32 %v1309, %v1303
      %v1318 = vmul.f32 %v1310, %v1301
      %v1319 = vmul.f32 %v1311, %v1299
      %v1320 = vmul.f32 %v1312, %v1306
      %v1321 = vmul.f32 %v1313, %v1304
      %v1322 = vmul.f32 %v1314, %v1302
      %v1323 = vmul.f32 %v1315, %v1300
      %v1324 = vadd.f32 %v1274, %v1316
      %v1325 = vadd.f32 %v1275, %v1317
      %v1326 = vadd.f32 %v1276, %v1318
      %v1327 = vadd.f32 %v1277, %v1319
      %v1328 = vadd.f32 %v1278, %v1320
      %v1329 = vadd.f32 %v1279, %v1321
      %v1330 = vadd.f32 %v1280, %v1322
      %v1331 = vadd.f32 %v1281, %v1323
      %1332 = vrot.lane.b32.xlu0 %v691, 1
      %v1333 = vpop.permute.xlu0 %1332
      %1334 = vrot.lane.b32.xlu0 %v695, 1
      %v1335 = vpop.permute.xlu0 %1334
      %1336 = vrot.lane.b32.xlu0 %v692, 1
      %v1337 = vpop.permute.xlu0 %1336
      %1338 = vrot.lane.b32.xlu0 %v696, 1
      %v1339 = vpop.permute.xlu0 %1338
      %1340 = vrot.lane.b32.xlu0 %v693, 1
      %v1341 = vpop.permute.xlu0 %1340
      %1342 = vrot.lane.b32.xlu0 %v697, 1
      %v1343 = vpop.permute.xlu0 %1342
      %1344 = vrot.lane.b32.xlu0 %v694, 1
      %v1345 = vpop.permute.xlu0 %1344
      %1346 = vrot.lane.b32.xlu0 %v698, 1
      %v1347 = vpop.permute.xlu0 %1346
      %vm1348 = vcmp.lt.s32.totalorder %v748, 1
      %v1349 = vsel %vm1348, %v1341, %v1345
      %v1350 = vsel %vm1348, %v1343, %v1347
      %v1351 = vsel %vm1348, %v1337, %v1341
      %v1352 = vsel %vm1348, %v1339, %v1343
      %v1353 = vsel %vm1348, %v1333, %v1337
      %v1354 = vsel %vm1348, %v1335, %v1339
      %v1355 = vsel %vm1348, %v1345, %v1333
      %v1356 = vsel %vm1348, %v1347, %v1335
      %s1357 = scalar_lea.vmem %s7, 768
      %v1358 = vld [vmem:[%s1357] sm:$0xff]
      %v1359 = vld [vmem:[%s1357 + $0x8] sm:$0xff]
      %v1360 = vld [vmem:[%s1357 + $0x10] sm:$0xff]
      %v1361 = vld [vmem:[%s1357 + $0x18] sm:$0xff]
      %v1362 = vld [vmem:[%s1357 + $0x20] sm:$0x1]
      %v1363 = vld [vmem:[%s1357 + $0x28] sm:$0x1]
      %v1364 = vld [vmem:[%s1357 + $0x30] sm:$0x1]
      %v1365 = vld [vmem:[%s1357 + $0x38] sm:$0x1]
      %v1366 = vmul.f32 %v1358, %v1355
      %v1367 = vmul.f32 %v1359, %v1353
      %v1368 = vmul.f32 %v1360, %v1351
      %v1369 = vmul.f32 %v1361, %v1349
      %v1370 = vmul.f32 %v1362, %v1356
      %v1371 = vmul.f32 %v1363, %v1354
      %v1372 = vmul.f32 %v1364, %v1352
      %v1373 = vmul.f32 %v1365, %v1350
      %v1374 = vadd.f32 %v1324, %v1366
      %v1375 = vadd.f32 %v1325, %v1367
      %v1376 = vadd.f32 %v1326, %v1368
      %v1377 = vadd.f32 %v1327, %v1369
      %v1378 = vadd.f32 %v1328, %v1370
      %v1379 = vadd.f32 %v1329, %v1371
      %v1380 = vadd.f32 %v1330, %v1372
      %v1381 = vadd.f32 %v1331, %v1373
      %s1382 = scalar_lea.vmem %s7, 832
      %v1383 = vld [vmem:[%s1382] sm:$0xff]
      %v1384 = vld [vmem:[%s1382 + $0x8] sm:$0xff]
      %v1385 = vld [vmem:[%s1382 + $0x10] sm:$0xff]
      %v1386 = vld [vmem:[%s1382 + $0x18] sm:$0xff]
      %v1387 = vld [vmem:[%s1382 + $0x20] sm:$0x1]
      %v1388 = vld [vmem:[%s1382 + $0x28] sm:$0x1]
      %v1389 = vld [vmem:[%s1382 + $0x30] sm:$0x1]
      %v1390 = vld [vmem:[%s1382 + $0x38] sm:$0x1]
      %v1391 = vmul.f32 %v1383, %v691
      %v1392 = vmul.f32 %v1384, %v692
      %v1393 = vmul.f32 %v1385, %v693
      %v1394 = vmul.f32 %v1386, %v694
      %v1395 = vmul.f32 %v1387, %v695
      %v1396 = vmul.f32 %v1388, %v696
      %v1397 = vmul.f32 %v1389, %v697
      %v1398 = vmul.f32 %v1390, %v698
      %v1399 = vadd.f32 %v1374, %v1391
      %v1400 = vadd.f32 %v1375, %v1392
      %v1401 = vadd.f32 %v1376, %v1393
      %v1402 = vadd.f32 %v1377, %v1394
      %v1403 = vadd.f32 %v1378, %v1395
      %v1404 = vadd.f32 %v1379, %v1396
      %v1405 = vadd.f32 %v1380, %v1397
      %v1406 = vadd.f32 %v1381, %v1398
      %1407 = vrot.lane.b32.xlu0 %v691, 127
      %v1408 = vpop.permute.xlu0 %1407
      %1409 = vrot.lane.b32.xlu0 %v695, 127
      %v1410 = vpop.permute.xlu0 %1409
      %1411 = vrot.lane.b32.xlu0 %v692, 127
      %v1412 = vpop.permute.xlu0 %1411
      %1413 = vrot.lane.b32.xlu0 %v696, 127
      %v1414 = vpop.permute.xlu0 %1413
      %1415 = vrot.lane.b32.xlu0 %v693, 127
      %v1416 = vpop.permute.xlu0 %1415
      %1417 = vrot.lane.b32.xlu0 %v697, 127
      %v1418 = vpop.permute.xlu0 %1417
      %1419 = vrot.lane.b32.xlu0 %v694, 127
      %v1420 = vpop.permute.xlu0 %1419
      %1421 = vrot.lane.b32.xlu0 %v698, 127
      %v1422 = vpop.permute.xlu0 %1421
      %vm1423 = vcmp.lt.s32.totalorder %v748, 127
      %v1424 = vsel %vm1423, %v1416, %v1420
      %v1425 = vsel %vm1423, %v1418, %v1422
      %v1426 = vsel %vm1423, %v1412, %v1416
      %v1427 = vsel %vm1423, %v1414, %v1418
      %v1428 = vsel %vm1423, %v1408, %v1412
      %v1429 = vsel %vm1423, %v1410, %v1414
      %v1430 = vsel %vm1423, %v1420, %v1408
      %v1431 = vsel %vm1423, %v1422, %v1410
      %s1432 = scalar_lea.vmem %s7, 896
      %v1433 = vld [vmem:[%s1432] sm:$0xff]
      %v1434 = vld [vmem:[%s1432 + $0x8] sm:$0xff]
      %v1435 = vld [vmem:[%s1432 + $0x10] sm:$0xff]
      %v1436 = vld [vmem:[%s1432 + $0x18] sm:$0xff]
      %v1437 = vld [vmem:[%s1432 + $0x20] sm:$0x1]
      %v1438 = vld [vmem:[%s1432 + $0x28] sm:$0x1]
      %v1439 = vld [vmem:[%s1432 + $0x30] sm:$0x1]
      %v1440 = vld [vmem:[%s1432 + $0x38] sm:$0x1]
      %v1441 = vmul.f32 %v1433, %v1428
      %v1442 = vmul.f32 %v1434, %v1426
      %v1443 = vmul.f32 %v1435, %v1424
      %v1444 = vmul.f32 %v1436, %v1430
      %v1445 = vmul.f32 %v1437, %v1429
      %v1446 = vmul.f32 %v1438, %v1427
      %v1447 = vmul.f32 %v1439, %v1425
      %v1448 = vmul.f32 %v1440, %v1431
      %v1449 = vadd.f32 %v1399, %v1441
      %v1450 = vadd.f32 %v1400, %v1442
      %v1451 = vadd.f32 %v1401, %v1443
      %v1452 = vadd.f32 %v1402, %v1444
      %v1453 = vadd.f32 %v1403, %v1445
      %v1454 = vadd.f32 %v1404, %v1446
      %v1455 = vadd.f32 %v1405, %v1447
      %v1456 = vadd.f32 %v1406, %v1448
      %1457 = vrot.lane.b32.xlu0 %v691, 121
      %v1458 = vpop.permute.xlu0 %1457
      %1459 = vrot.lane.b32.xlu0 %v695, 121
      %v1460 = vpop.permute.xlu0 %1459
      %1461 = vrot.lane.b32.xlu0 %v692, 121
      %v1462 = vpop.permute.xlu0 %1461
      %1463 = vrot.lane.b32.xlu0 %v696, 121
      %v1464 = vpop.permute.xlu0 %1463
      %1465 = vrot.lane.b32.xlu0 %v693, 121
      %v1466 = vpop.permute.xlu0 %1465
      %1467 = vrot.lane.b32.xlu0 %v697, 121
      %v1468 = vpop.permute.xlu0 %1467
      %1469 = vrot.lane.b32.xlu0 %v694, 121
      %v1470 = vpop.permute.xlu0 %1469
      %1471 = vrot.lane.b32.xlu0 %v698, 121
      %v1472 = vpop.permute.xlu0 %1471
      %vm1473 = vcmp.lt.s32.totalorder %v748, 121
      %v1474 = vsel %vm1473, %v1466, %v1470
      %v1475 = vsel %vm1473, %v1468, %v1472
      %v1476 = vsel %vm1473, %v1462, %v1466
      %v1477 = vsel %vm1473, %v1464, %v1468
      %v1478 = vsel %vm1473, %v1458, %v1462
      %v1479 = vsel %vm1473, %v1460, %v1464
      %v1480 = vsel %vm1473, %v1470, %v1458
      %v1481 = vsel %vm1473, %v1472, %v1460
      %s1482 = scalar_lea.vmem %s7, 960
      %v1483 = vld [vmem:[%s1482] sm:$0xff]
      %v1484 = vld [vmem:[%s1482 + $0x8] sm:$0xff]
      %v1485 = vld [vmem:[%s1482 + $0x10] sm:$0xff]
      %v1486 = vld [vmem:[%s1482 + $0x18] sm:$0xff]
      %v1487 = vld [vmem:[%s1482 + $0x20] sm:$0x1]
      %v1488 = vld [vmem:[%s1482 + $0x28] sm:$0x1]
      %v1489 = vld [vmem:[%s1482 + $0x30] sm:$0x1]
      %v1490 = vld [vmem:[%s1482 + $0x38] sm:$0x1]
      %v1491 = vmul.f32 %v1483, %v1478
      %v1492 = vmul.f32 %v1484, %v1476
      %v1493 = vmul.f32 %v1485, %v1474
      %v1494 = vmul.f32 %v1486, %v1480
      %v1495 = vmul.f32 %v1487, %v1479
      %v1496 = vmul.f32 %v1488, %v1477
      %v1497 = vmul.f32 %v1489, %v1475
      %v1498 = vmul.f32 %v1490, %v1481
      %v1499 = vadd.f32 %v1449, %v1491
      %v1500 = vadd.f32 %v1450, %v1492
      %v1501 = vadd.f32 %v1451, %v1493
      %v1502 = vadd.f32 %v1452, %v1494
      %v1503 = vadd.f32 %v1453, %v1495
      %v1504 = vadd.f32 %v1454, %v1496
      %v1505 = vadd.f32 %v1455, %v1497
      %v1506 = vadd.f32 %v1456, %v1498
      %1507 = vrot.lane.b32.xlu0 %v691, 120
      %v1508 = vpop.permute.xlu0 %1507
      %1509 = vrot.lane.b32.xlu0 %v695, 120
      %v1510 = vpop.permute.xlu0 %1509
      %1511 = vrot.lane.b32.xlu0 %v692, 120
      %v1512 = vpop.permute.xlu0 %1511
      %1513 = vrot.lane.b32.xlu0 %v696, 120
      %v1514 = vpop.permute.xlu0 %1513
      %1515 = vrot.lane.b32.xlu0 %v693, 120
      %v1516 = vpop.permute.xlu0 %1515
      %1517 = vrot.lane.b32.xlu0 %v697, 120
      %v1518 = vpop.permute.xlu0 %1517
      %1519 = vrot.lane.b32.xlu0 %v694, 120
      %v1520 = vpop.permute.xlu0 %1519
      %1521 = vrot.lane.b32.xlu0 %v698, 120
      %v1522 = vpop.permute.xlu0 %1521
      %vm1523 = vcmp.lt.s32.totalorder %v748, 120
      %v1524 = vsel %vm1523, %v1516, %v1520
      %v1525 = vsel %vm1523, %v1518, %v1522
      %v1526 = vsel %vm1523, %v1512, %v1516
      %v1527 = vsel %vm1523, %v1514, %v1518
      %v1528 = vsel %vm1523, %v1508, %v1512
      %v1529 = vsel %vm1523, %v1510, %v1514
      %v1530 = vsel %vm1523, %v1520, %v1508
      %v1531 = vsel %vm1523, %v1522, %v1510
      %s1532 = scalar_lea.vmem %s7, 1024
      %v1533 = vld [vmem:[%s1532] sm:$0xff]
      %v1534 = vld [vmem:[%s1532 + $0x8] sm:$0xff]
      %v1535 = vld [vmem:[%s1532 + $0x10] sm:$0xff]
      %v1536 = vld [vmem:[%s1532 + $0x18] sm:$0xff]
      %v1537 = vld [vmem:[%s1532 + $0x20] sm:$0x1]
      %v1538 = vld [vmem:[%s1532 + $0x28] sm:$0x1]
      %v1539 = vld [vmem:[%s1532 + $0x30] sm:$0x1]
      %v1540 = vld [vmem:[%s1532 + $0x38] sm:$0x1]
      %v1541 = vmul.f32 %v1533, %v1528
      %v1542 = vmul.f32 %v1534, %v1526
      %v1543 = vmul.f32 %v1535, %v1524
      %v1544 = vmul.f32 %v1536, %v1530
      %v1545 = vmul.f32 %v1537, %v1529
      %v1546 = vmul.f32 %v1538, %v1527
      %v1547 = vmul.f32 %v1539, %v1525
      %v1548 = vmul.f32 %v1540, %v1531
      %v1549 = vadd.f32 %v1499, %v1541
      %v1550 = vadd.f32 %v1500, %v1542
      %v1551 = vadd.f32 %v1501, %v1543
      %v1552 = vadd.f32 %v1502, %v1544
      %v1553 = vadd.f32 %v1503, %v1545
      %v1554 = vadd.f32 %v1504, %v1546
      %v1555 = vadd.f32 %v1505, %v1547
      %v1556 = vadd.f32 %v1506, %v1548
      %1557 = vrot.lane.b32.xlu0 %v691, 119
      %v1558 = vpop.permute.xlu0 %1557
      %1559 = vrot.lane.b32.xlu0 %v695, 119
      %v1560 = vpop.permute.xlu0 %1559
      %1561 = vrot.lane.b32.xlu0 %v692, 119
      %v1562 = vpop.permute.xlu0 %1561
      %1563 = vrot.lane.b32.xlu0 %v696, 119
      %v1564 = vpop.permute.xlu0 %1563
      %1565 = vrot.lane.b32.xlu0 %v693, 119
      %v1566 = vpop.permute.xlu0 %1565
      %1567 = vrot.lane.b32.xlu0 %v697, 119
      %v1568 = vpop.permute.xlu0 %1567
      %1569 = vrot.lane.b32.xlu0 %v694, 119
      %v1570 = vpop.permute.xlu0 %1569
      %1571 = vrot.lane.b32.xlu0 %v698, 119
      %v1572 = vpop.permute.xlu0 %1571
      %vm1573 = vcmp.lt.s32.totalorder %v748, 119
      %v1574 = vsel %vm1573, %v1566, %v1570
      %v1575 = vsel %vm1573, %v1568, %v1572
      %v1576 = vsel %vm1573, %v1562, %v1566
      %v1577 = vsel %vm1573, %v1564, %v1568
      %v1578 = vsel %vm1573, %v1558, %v1562
      %v1579 = vsel %vm1573, %v1560, %v1564
      %v1580 = vsel %vm1573, %v1570, %v1558
      %v1581 = vsel %vm1573, %v1572, %v1560
      %s1582 = scalar_lea.vmem %s7, 1088
      %v1583 = vld [vmem:[%s1582] sm:$0xff]
      %v1584 = vld [vmem:[%s1582 + $0x8] sm:$0xff]
      %v1585 = vld [vmem:[%s1582 + $0x10] sm:$0xff]
      %v1586 = vld [vmem:[%s1582 + $0x18] sm:$0xff]
      %v1587 = vld [vmem:[%s1582 + $0x20] sm:$0x1]
      %v1588 = vld [vmem:[%s1582 + $0x28] sm:$0x1]
      %v1589 = vld [vmem:[%s1582 + $0x30] sm:$0x1]
      %v1590 = vld [vmem:[%s1582 + $0x38] sm:$0x1]
      %v1591 = vmul.f32 %v1583, %v1578
      %v1592 = vmul.f32 %v1584, %v1576
      %v1593 = vmul.f32 %v1585, %v1574
      %v1594 = vmul.f32 %v1586, %v1580
      %v1595 = vmul.f32 %v1587, %v1579
      %v1596 = vmul.f32 %v1588, %v1577
      %v1597 = vmul.f32 %v1589, %v1575
      %v1598 = vmul.f32 %v1590, %v1581
      %v1599 = vadd.f32 %v1549, %v1591
      %v1600 = vadd.f32 %v1550, %v1592
      %v1601 = vadd.f32 %v1551, %v1593
      %v1602 = vadd.f32 %v1552, %v1594
      %v1603 = vadd.f32 %v1553, %v1595
      %v1604 = vadd.f32 %v1554, %v1596
      %v1605 = vadd.f32 %v1555, %v1597
      %v1606 = vadd.f32 %v1556, %v1598
      %s1607 = scalar_lea.vmem %s7, 1152
      %v1608 = vld [vmem:[%s1607] sm:$0xff]
      %v1609 = vld [vmem:[%s1607 + $0x8] sm:$0xff]
      %v1610 = vld [vmem:[%s1607 + $0x10] sm:$0xff]
      %v1611 = vld [vmem:[%s1607 + $0x18] sm:$0xff]
      %v1612 = vld [vmem:[%s1607 + $0x20] sm:$0x1]
      %v1613 = vld [vmem:[%s1607 + $0x28] sm:$0x1]
      %v1614 = vld [vmem:[%s1607 + $0x30] sm:$0x1]
      %v1615 = vld [vmem:[%s1607 + $0x38] sm:$0x1]
      %v1616 = vmul.f32 %v1608, %v754
      %v1617 = vmul.f32 %v1609, %v752
      %v1618 = vmul.f32 %v1610, %v750
      %v1619 = vmul.f32 %v1611, %v756
      %v1620 = vmul.f32 %v1612, %v755
      %v1621 = vmul.f32 %v1613, %v753
      %v1622 = vmul.f32 %v1614, %v751
      %v1623 = vmul.f32 %v1615, %v757
      %v1624 = vadd.f32 %v1599, %v1616
      %v1625 = vadd.f32 %v1600, %v1617
      %v1626 = vadd.f32 %v1601, %v1618
      %v1627 = vadd.f32 %v1602, %v1619
      %v1628 = vadd.f32 %v1603, %v1620
      %v1629 = vadd.f32 %v1604, %v1621
      %v1630 = vadd.f32 %v1605, %v1622
      %v1631 = vadd.f32 %v1606, %v1623
      %s1632 = scalar_lea.vmem %s7, 1216
      %v1633 = vld [vmem:[%s1632] sm:$0xff]
      %v1634 = vld [vmem:[%s1632 + $0x8] sm:$0xff]
      %v1635 = vld [vmem:[%s1632 + $0x10] sm:$0xff]
      %v1636 = vld [vmem:[%s1632 + $0x18] sm:$0xff]
      %v1637 = vld [vmem:[%s1632 + $0x20] sm:$0x1]
      %v1638 = vld [vmem:[%s1632 + $0x28] sm:$0x1]
      %v1639 = vld [vmem:[%s1632 + $0x30] sm:$0x1]
      %v1640 = vld [vmem:[%s1632 + $0x38] sm:$0x1]
      %v1641 = vmul.f32 %v1633, %v803
      %v1642 = vmul.f32 %v1634, %v801
      %v1643 = vmul.f32 %v1635, %v799
      %v1644 = vmul.f32 %v1636, %v805
      %v1645 = vmul.f32 %v1637, %v804
      %v1646 = vmul.f32 %v1638, %v802
      %v1647 = vmul.f32 %v1639, %v800
      %v1648 = vmul.f32 %v1640, %v806
      %v1649 = vadd.f32 %v1624, %v1641
      %v1650 = vadd.f32 %v1625, %v1642
      %v1651 = vadd.f32 %v1626, %v1643
      %v1652 = vadd.f32 %v1627, %v1644
      %v1653 = vadd.f32 %v1628, %v1645
      %v1654 = vadd.f32 %v1629, %v1646
      %v1655 = vadd.f32 %v1630, %v1647
      %v1656 = vadd.f32 %v1631, %v1648
      %s1657 = scalar_lea.vmem %s7, 1280
      %v1658 = vld [vmem:[%s1657] sm:$0xff]
      %v1659 = vld [vmem:[%s1657 + $0x8] sm:$0xff]
      %v1660 = vld [vmem:[%s1657 + $0x10] sm:$0xff]
      %v1661 = vld [vmem:[%s1657 + $0x18] sm:$0xff]
      %v1662 = vld [vmem:[%s1657 + $0x20] sm:$0x1]
      %v1663 = vld [vmem:[%s1657 + $0x28] sm:$0x1]
      %v1664 = vld [vmem:[%s1657 + $0x30] sm:$0x1]
      %v1665 = vld [vmem:[%s1657 + $0x38] sm:$0x1]
      %v1666 = vmul.f32 %v1658, %v853
      %v1667 = vmul.f32 %v1659, %v851
      %v1668 = vmul.f32 %v1660, %v849
      %v1669 = vmul.f32 %v1661, %v855
      %v1670 = vmul.f32 %v1662, %v854
      %v1671 = vmul.f32 %v1663, %v852
      %v1672 = vmul.f32 %v1664, %v850
      %v1673 = vmul.f32 %v1665, %v856
      %v1674 = vadd.f32 %v1649, %v1666
      %v1675 = vadd.f32 %v1650, %v1667
      %v1676 = vadd.f32 %v1651, %v1668
      %v1677 = vadd.f32 %v1652, %v1669
      %v1678 = vadd.f32 %v1653, %v1670
      %v1679 = vadd.f32 %v1654, %v1671
      %v1680 = vadd.f32 %v1655, %v1672
      %v1681 = vadd.f32 %v1656, %v1673
      %s1682 = scalar_lea.vmem %s7, 1344
      %v1683 = vld [vmem:[%s1682] sm:$0xff]
      %v1684 = vld [vmem:[%s1682 + $0x8] sm:$0xff]
      %v1685 = vld [vmem:[%s1682 + $0x10] sm:$0xff]
      %v1686 = vld [vmem:[%s1682 + $0x18] sm:$0xff]
      %v1687 = vld [vmem:[%s1682 + $0x20] sm:$0x1]
      %v1688 = vld [vmem:[%s1682 + $0x28] sm:$0x1]
      %v1689 = vld [vmem:[%s1682 + $0x30] sm:$0x1]
      %v1690 = vld [vmem:[%s1682 + $0x38] sm:$0x1]
      %v1691 = vmul.f32 %v1683, %v903
      %v1692 = vmul.f32 %v1684, %v901
      %v1693 = vmul.f32 %v1685, %v899
      %v1694 = vmul.f32 %v1686, %v905
      %v1695 = vmul.f32 %v1687, %v904
      %v1696 = vmul.f32 %v1688, %v902
      %v1697 = vmul.f32 %v1689, %v900
      %v1698 = vmul.f32 %v1690, %v906
      %v1699 = vadd.f32 %v1674, %v1691
      %v1700 = vadd.f32 %v1675, %v1692
      %v1701 = vadd.f32 %v1676, %v1693
      %v1702 = vadd.f32 %v1677, %v1694
      %v1703 = vadd.f32 %v1678, %v1695
      %v1704 = vadd.f32 %v1679, %v1696
      %v1705 = vadd.f32 %v1680, %v1697
      %v1706 = vadd.f32 %v1681, %v1698
      %s1707 = scalar_lea.vmem %s7, 1408
      %v1708 = vld [vmem:[%s1707] sm:$0xff]
      %v1709 = vld [vmem:[%s1707 + $0x8] sm:$0xff]
      %v1710 = vld [vmem:[%s1707 + $0x10] sm:$0xff]
      %v1711 = vld [vmem:[%s1707 + $0x18] sm:$0xff]
      %v1712 = vld [vmem:[%s1707 + $0x20] sm:$0x1]
      %v1713 = vld [vmem:[%s1707 + $0x28] sm:$0x1]
      %v1714 = vld [vmem:[%s1707 + $0x30] sm:$0x1]
      %v1715 = vld [vmem:[%s1707 + $0x38] sm:$0x1]
      %v1716 = vmul.f32 %v1708, %v953
      %v1717 = vmul.f32 %v1709, %v951
      %v1718 = vmul.f32 %v1710, %v949
      %v1719 = vmul.f32 %v1711, %v955
      %v1720 = vmul.f32 %v1712, %v954
      %v1721 = vmul.f32 %v1713, %v952
      %v1722 = vmul.f32 %v1714, %v950
      %v1723 = vmul.f32 %v1715, %v956
      %v1724 = vadd.f32 %v1699, %v1716
      %v1725 = vadd.f32 %v1700, %v1717
      %v1726 = vadd.f32 %v1701, %v1718
      %v1727 = vadd.f32 %v1702, %v1719
      %v1728 = vadd.f32 %v1703, %v1720
      %v1729 = vadd.f32 %v1704, %v1721
      %v1730 = vadd.f32 %v1705, %v1722
      %v1731 = vadd.f32 %v1706, %v1723
      %s1732 = scalar_lea.vmem %s7, 1472
      %v1733 = vld [vmem:[%s1732] sm:$0xff]
      %v1734 = vld [vmem:[%s1732 + $0x8] sm:$0xff]
      %v1735 = vld [vmem:[%s1732 + $0x10] sm:$0xff]
      %v1736 = vld [vmem:[%s1732 + $0x18] sm:$0xff]
      %v1737 = vld [vmem:[%s1732 + $0x20] sm:$0x1]
      %v1738 = vld [vmem:[%s1732 + $0x28] sm:$0x1]
      %v1739 = vld [vmem:[%s1732 + $0x30] sm:$0x1]
      %v1740 = vld [vmem:[%s1732 + $0x38] sm:$0x1]
      %v1741 = vmul.f32 %v1733, %v1003
      %v1742 = vmul.f32 %v1734, %v1001
      %v1743 = vmul.f32 %v1735, %v999
      %v1744 = vmul.f32 %v1736, %v1005
      %v1745 = vmul.f32 %v1737, %v1004
      %v1746 = vmul.f32 %v1738, %v1002
      %v1747 = vmul.f32 %v1739, %v1000
      %v1748 = vmul.f32 %v1740, %v1006
      %v1749 = vadd.f32 %v1724, %v1741
      %v1750 = vadd.f32 %v1725, %v1742
      %v1751 = vadd.f32 %v1726, %v1743
      %v1752 = vadd.f32 %v1727, %v1744
      %v1753 = vadd.f32 %v1728, %v1745
      %v1754 = vadd.f32 %v1729, %v1746
      %v1755 = vadd.f32 %v1730, %v1747
      %v1756 = vadd.f32 %v1731, %v1748
      %s1757 = scalar_lea.vmem %s7, 1536
      %v1758 = vld [vmem:[%s1757] sm:$0xff]
      %v1759 = vld [vmem:[%s1757 + $0x8] sm:$0xff]
      %v1760 = vld [vmem:[%s1757 + $0x10] sm:$0xff]
      %v1761 = vld [vmem:[%s1757 + $0x18] sm:$0xff]
      %v1762 = vld [vmem:[%s1757 + $0x20] sm:$0x1]
      %v1763 = vld [vmem:[%s1757 + $0x28] sm:$0x1]
      %v1764 = vld [vmem:[%s1757 + $0x30] sm:$0x1]
      %v1765 = vld [vmem:[%s1757 + $0x38] sm:$0x1]
      %v1766 = vmul.f32 %v1758, %v1053
      %v1767 = vmul.f32 %v1759, %v1051
      %v1768 = vmul.f32 %v1760, %v1049
      %v1769 = vmul.f32 %v1761, %v1055
      %v1770 = vmul.f32 %v1762, %v1054
      %v1771 = vmul.f32 %v1763, %v1052
      %v1772 = vmul.f32 %v1764, %v1050
      %v1773 = vmul.f32 %v1765, %v1056
      %v1774 = vadd.f32 %v1749, %v1766
      %v1775 = vadd.f32 %v1750, %v1767
      %v1776 = vadd.f32 %v1751, %v1768
      %v1777 = vadd.f32 %v1752, %v1769
      %v1778 = vadd.f32 %v1753, %v1770
      %v1779 = vadd.f32 %v1754, %v1771
      %v1780 = vadd.f32 %v1755, %v1772
      %v1781 = vadd.f32 %v1756, %v1773
      %s1782 = scalar_lea.vmem %s7, 1600
      %v1783 = vld [vmem:[%s1782] sm:$0xff]
      %v1784 = vld [vmem:[%s1782 + $0x8] sm:$0xff]
      %v1785 = vld [vmem:[%s1782 + $0x10] sm:$0xff]
      %v1786 = vld [vmem:[%s1782 + $0x18] sm:$0xff]
      %v1787 = vld [vmem:[%s1782 + $0x20] sm:$0x1]
      %v1788 = vld [vmem:[%s1782 + $0x28] sm:$0x1]
      %v1789 = vld [vmem:[%s1782 + $0x30] sm:$0x1]
      %v1790 = vld [vmem:[%s1782 + $0x38] sm:$0x1]
      %v1791 = vmul.f32 %v1783, %v1103
      %v1792 = vmul.f32 %v1784, %v1101
      %v1793 = vmul.f32 %v1785, %v1099
      %v1794 = vmul.f32 %v1786, %v1105
      %v1795 = vmul.f32 %v1787, %v1104
      %v1796 = vmul.f32 %v1788, %v1102
      %v1797 = vmul.f32 %v1789, %v1100
      %v1798 = vmul.f32 %v1790, %v1106
      %v1799 = vadd.f32 %v1774, %v1791
      %v1800 = vadd.f32 %v1775, %v1792
      %v1801 = vadd.f32 %v1776, %v1793
      %v1802 = vadd.f32 %v1777, %v1794
      %v1803 = vadd.f32 %v1778, %v1795
      %v1804 = vadd.f32 %v1779, %v1796
      %v1805 = vadd.f32 %v1780, %v1797
      %v1806 = vadd.f32 %v1781, %v1798
      %s1807 = scalar_lea.vmem %s7, 1664
      %v1808 = vld [vmem:[%s1807] sm:$0xff]
      %v1809 = vld [vmem:[%s1807 + $0x8] sm:$0xff]
      %v1810 = vld [vmem:[%s1807 + $0x10] sm:$0xff]
      %v1811 = vld [vmem:[%s1807 + $0x18] sm:$0xff]
      %v1812 = vld [vmem:[%s1807 + $0x20] sm:$0x1]
      %v1813 = vld [vmem:[%s1807 + $0x28] sm:$0x1]
      %v1814 = vld [vmem:[%s1807 + $0x30] sm:$0x1]
      %v1815 = vld [vmem:[%s1807 + $0x38] sm:$0x1]
      %v1816 = vmul.f32 %v1808, %v1153
      %v1817 = vmul.f32 %v1809, %v1151
      %v1818 = vmul.f32 %v1810, %v1149
      %v1819 = vmul.f32 %v1811, %v1155
      %v1820 = vmul.f32 %v1812, %v1154
      %v1821 = vmul.f32 %v1813, %v1152
      %v1822 = vmul.f32 %v1814, %v1150
      %v1823 = vmul.f32 %v1815, %v1156
      %v1824 = vadd.f32 %v1799, %v1816
      %v1825 = vadd.f32 %v1800, %v1817
      %v1826 = vadd.f32 %v1801, %v1818
      %v1827 = vadd.f32 %v1802, %v1819
      %v1828 = vadd.f32 %v1803, %v1820
      %v1829 = vadd.f32 %v1804, %v1821
      %v1830 = vadd.f32 %v1805, %v1822
      %v1831 = vadd.f32 %v1806, %v1823
      %v1832 = vld [vmem:[%s6] sm:$0xff]
      %v1833 = vld [vmem:[%s6 + $0x8] sm:$0x1]
      %1835 = vset.pattern.permute.xlu0 0
      %1836 = vperm.xlu0 %1835, %v729
      %v1837 = vpop.permute.xlu0 %1836
      %1840 = vset.pattern.permute.xlu0 0
      %1841 = vperm.xlu0 %1840, %v730
      %v1842 = vpop.permute.xlu0 %1841
      %v1844 = vmul.f32 %v1837, %v1824
      %v1845 = vmul.f32 %v1837, %v1825
      %v1846 = vmul.f32 %v1837, %v1826
      %v1847 = vmul.f32 %v1837, %v1827
      %v1848 = vmul.f32 %v1842, %v1828
      %v1849 = vmul.f32 %v1842, %v1829
      %v1850 = vmul.f32 %v1842, %v1830
      %v1851 = vmul.f32 %v1842, %v1831
      %1853 = vset.pattern.permute.xlu0 0
      %1854 = vperm.xlu0 %1853, %v1832
      %v1855 = vpop.permute.xlu0 %1854
      %1858 = vset.pattern.permute.xlu0 0
      %1859 = vperm.xlu0 %1858, %v1833
      %v1860 = vpop.permute.xlu0 %1859
      %v1862 = vadd.f32 %v1855, %v1844
      %v1863 = vadd.f32 %v1855, %v1845
      %v1864 = vadd.f32 %v1855, %v1846
      %v1865 = vadd.f32 %v1855, %v1847
      %v1866 = vadd.f32 %v1860, %v1848
      %v1867 = vadd.f32 %v1860, %v1849
      %v1868 = vadd.f32 %v1860, %v1850
      %v1869 = vadd.f32 %v1860, %v1851
      %v1870 = vld [vmem:[%s5] sm:$0xff]
      %v1871 = vld [vmem:[%s5 + $0x8] sm:$0x1]
      %v1872 = vld [vmem:[%s8] sm:$0xff]
      %v1873 = vld [vmem:[%s8 + $0x8] sm:$0xff]
      %v1874 = vld [vmem:[%s8 + $0x10] sm:$0xff]
      %v1875 = vld [vmem:[%s8 + $0x18] sm:$0xff]
      %v1876 = vld [vmem:[%s8 + $0x20] sm:$0x1]
      %v1877 = vld [vmem:[%s8 + $0x28] sm:$0x1]
      %v1878 = vld [vmem:[%s8 + $0x30] sm:$0x1]
      %v1879 = vld [vmem:[%s8 + $0x38] sm:$0x1]
      %1881 = vset.pattern.permute.xlu0 0
      %1882 = vperm.xlu0 %1881, %v1870
      %v1883 = vpop.permute.xlu0 %1882
      %1886 = vset.pattern.permute.xlu0 0
      %1887 = vperm.xlu0 %1886, %v1871
      %v1888 = vpop.permute.xlu0 %1887
      %v1890 = vmul.f32 %v1883, %v1872
      %v1891 = vmul.f32 %v1883, %v1873
      %v1892 = vmul.f32 %v1883, %v1874
      %v1893 = vmul.f32 %v1883, %v1875
      %v1894 = vmul.f32 %v1888, %v1876
      %v1895 = vmul.f32 %v1888, %v1877
      %v1896 = vmul.f32 %v1888, %v1878
      %v1897 = vmul.f32 %v1888, %v1879
      %v1898 = vadd.f32 %v1862, %v1890
      %v1899 = vadd.f32 %v1863, %v1891
      %v1900 = vadd.f32 %v1864, %v1892
      %v1901 = vadd.f32 %v1865, %v1893
      %v1902 = vadd.f32 %v1866, %v1894
      %v1903 = vadd.f32 %v1867, %v1895
      %v1904 = vadd.f32 %v1868, %v1896
      %v1905 = vadd.f32 %v1869, %v1897
      %v1906 = vadd.f32 %v1898, %v1899
      %v1907 = vadd.f32 %v1906, %v1900
      %v1908 = vadd.f32 %v1907, %v1901
      %1909 = vadd.xlane.f32.xlu0 %v1908
      %v1910 = vpop.xlane.xlu0 %1909
      %v1911 = vsel %vm678, %v1902, 0.0
      %v1912 = vsel %vm678, %v1903, 0.0
      %v1913 = vadd.f32 %v1911, %v1912
      %v1914 = vsel %vm678, %v1904, 0.0
      %v1915 = vadd.f32 %v1913, %v1914
      %v1916 = vsel %vm678, %v1905, 0.0
      %v1917 = vadd.f32 %v1915, %v1916
      %1918 = vadd.xlane.f32.xlu0 %v1917
      %v1919 = vpop.xlane.xlu0 %1918
      %v1920 = vmul.f32 %v1910, %v688
      %v1921 = vmul.f32 %v1919, %v688
      %v1922 = vsub.f32 %v1898, %v1920
      %v1923 = vsub.f32 %v1899, %v1920
      %v1924 = vsub.f32 %v1900, %v1920
      %v1925 = vsub.f32 %v1901, %v1920
      %v1926 = vsub.f32 %v1902, %v1921
      %v1927 = vsub.f32 %v1903, %v1921
      %v1928 = vsub.f32 %v1904, %v1921
      %v1929 = vsub.f32 %v1905, %v1921
      %v1930 = vmul.f32 %v1922, %v1922
      %v1931 = vmul.f32 %v1923, %v1923
      %v1932 = vmul.f32 %v1924, %v1924
      %v1933 = vmul.f32 %v1925, %v1925
      %v1934 = vmul.f32 %v1926, %v1926
      %v1935 = vmul.f32 %v1927, %v1927
      %v1936 = vmul.f32 %v1928, %v1928
      %v1937 = vmul.f32 %v1929, %v1929
      %v1938 = vadd.f32 %v1930, %v1931
      %v1939 = vadd.f32 %v1938, %v1932
      %v1940 = vadd.f32 %v1939, %v1933
      %1941 = vadd.xlane.f32.xlu0 %v1940
      %v1942 = vpop.xlane.xlu0 %1941
      %v1943 = vsel %vm678, %v1934, 0.0
      %v1944 = vsel %vm678, %v1935, 0.0
      %v1945 = vadd.f32 %v1943, %v1944
      %v1946 = vsel %vm678, %v1936, 0.0
      %v1947 = vadd.f32 %v1945, %v1946
      %v1948 = vsel %vm678, %v1937, 0.0
      %v1949 = vadd.f32 %v1947, %v1948
      %1950 = vadd.xlane.f32.xlu0 %v1949
      %v1951 = vpop.xlane.xlu0 %1950
      %v1952 = vmul.f32 %v1942, %v688
      %v1953 = vmul.f32 %v1951, %v688
      %v1954 = vld [vmem:[%s9] sm:$0xff]
      %v1955 = vld [vmem:[%s9 + $0x8] sm:$0x1]
      %v1956 = vadd.f32 %v1952, 1e-06
      %v1957 = vadd.f32 %v1953, 1e-06
      %v1958 = vrsqrt.pop %v1956
      %v1959 = vrsqrt.pop %v1957
      %v1960 = vmul.f32 %v1954, %v1958
      %v1961 = vmul.f32 %v1955, %v1959
      %1963 = vset.pattern.permute.xlu0 0
      %1964 = vperm.xlu0 %1963, %v1960
      %v1965 = vpop.permute.xlu0 %1964
      %1968 = vset.pattern.permute.xlu0 0
      %1969 = vperm.xlu0 %1968, %v1961
      %v1970 = vpop.permute.xlu0 %1969
      %v1972 = vmul.f32 %v1922, %v1965
      %v1973 = vmul.f32 %v1923, %v1965
      %v1974 = vmul.f32 %v1924, %v1965
      %v1975 = vmul.f32 %v1925, %v1965
      %v1976 = vmul.f32 %v1926, %v1970
      %v1977 = vmul.f32 %v1927, %v1970
      %v1978 = vmul.f32 %v1928, %v1970
      %v1979 = vmul.f32 %v1929, %v1970
      %v1980 = vld [vmem:[%s10] sm:$0xff]
      %v1981 = vld [vmem:[%s10 + $0x8] sm:$0x1]
      %1983 = vset.pattern.permute.xlu0 0
      %1984 = vperm.xlu0 %1983, %v1980
      %v1985 = vpop.permute.xlu0 %1984
      %1988 = vset.pattern.permute.xlu0 0
      %1989 = vperm.xlu0 %1988, %v1981
      %v1990 = vpop.permute.xlu0 %1989
      %v1992 = vadd.f32 %v1972, %v1985
      %v1993 = vadd.f32 %v1973, %v1985
      %v1994 = vadd.f32 %v1974, %v1985
      %v1995 = vadd.f32 %v1975, %v1985
      %v1996 = vadd.f32 %v1976, %v1990
      %v1997 = vadd.f32 %v1977, %v1990
      %v1998 = vadd.f32 %v1978, %v1990
      %v1999 = vadd.f32 %v1979, %v1990
      %v2000 = vld [vmem:[%s11] sm:$0xff]
      %v2001 = vld [vmem:[%s11 + $0x8] sm:$0xff]
      %s2002 = scalar_lea.vmem %s2, 16
      %v2003 = vld [vmem:[%s2002] sm:$0xff]
      %v2004 = vld [vmem:[%s2002 + $0x8] sm:$0x1]
      %s2005 = scalar_lea.vmem %s3, 16
      %v2006 = vld [vmem:[%s2005] sm:$0xff]
      %v2007 = vld [vmem:[%s2005 + $0x8] sm:$0x1]
      %2009 = vset.pattern.permute.xlu0 0
      %2010 = vperm.xlu0 %2009, %v2006
      %v2011 = vpop.permute.xlu0 %2010
      %2014 = vset.pattern.permute.xlu0 0
      %2015 = vperm.xlu0 %2014, %v2007
      %v2016 = vpop.permute.xlu0 %2015
      %v2019 = vsel %vm483, %v2003, 0
      %v2022 = vsel %vm483, %v2004, 0
      %2024 = vmatprep.subr.mxu0 %v462
      %2025 = vmatpush1.msra.mxu0 %v461
      %2026 = vmatprep.subr.mxu0 %v495
      %2027 = vmatpush1.msra.mxu0 %v492
      %2028 = vmatprep.subr.mxu0 0.0
      %2029 = vmatpush1.msra.mxu0 0.0
      %2030 = vmatprep.subr.mxu0 0.0
      %2031 = vmatpush1.msra.mxu0 0.0
      %2032 = vmatprep.subr.mxu0 0.0
      %2033 = vmatpush1.msra.mxu0 0.0
      %2034 = vmatprep.subr.mxu0 0.0
      %2035 = vmatpush1.msra.mxu0 0.0
      %2036 = vmatprep.subr.mxu0 0.0
      %2037 = vmatpush1.msra.mxu0 0.0
      %2038 = vmatprep.subr.mxu0 0.0
      %2039 = vmatpush1.msra.mxu0 0.0
      %2040 = vmatprep.subr.mxu0 0.0
      %2041 = vmatpush1.msra.mxu0 0.0
      %2042 = vmatprep.subr.mxu0 0.0
      %2043 = vmatpush1.msra.mxu0 0.0
      %2044 = vmatprep.subr.mxu0 0.0
      %2045 = vmatpush1.msra.mxu0 0.0
      %2046 = vmatprep.subr.mxu0 0.0
      %2047 = vmatpush1.msra.mxu0 0.0
      %2048 = vmatprep.subr.mxu0 0.0
      %2049 = vmatpush1.msra.mxu0 0.0
      %2050 = vmatprep.subr.mxu0 0.0
      %2051 = vmatpush1.msra.mxu0 0.0
      %2052 = vmatprep.subr.mxu0 0.0
      %2053 = vmatpush1.msra.mxu0 0.0
      %2054 = vmatprep.subr.mxu0 0.0
      %2055 = vmatpush1.msra.mxu0 0.0
      %2056 = vmatprep.subr.mxu0 0.0
      %2057 = vmatpush1.msra.mxu0 0.0
      %2058 = vmatprep.subr.mxu0 0.0
      %2059 = vmatpush1.msra.mxu0 0.0
      %2060 = vmatprep.subr.mxu0 0.0
      %2061 = vmatpush1.msra.mxu0 0.0
      %2062 = vmatprep.subr.mxu0 0.0
      %2063 = vmatpush1.msra.mxu0 0.0
      %2064 = vmatprep.subr.mxu0 0.0
      %2065 = vmatpush1.msra.mxu0 0.0
      %2066 = vmatprep.subr.mxu0 0.0
      %2067 = vmatpush1.msra.mxu0 0.0
      %2068 = vmatprep.subr.mxu0 0.0
      %2069 = vmatpush1.msra.mxu0 0.0
      %2070 = vmatprep.subr.mxu0 0.0
      %2071 = vmatpush1.msra.mxu0 0.0
      %2072 = vmatprep.subr.mxu0 0.0
      %2073 = vmatpush1.msra.mxu0 0.0
      %2074 = vmatprep.subr.mxu0 0.0
      %2075 = vmatpush1.msra.mxu0 0.0
      %2076 = vmatprep.subr.mxu0 0.0
      %2077 = vmatpush1.msra.mxu0 0.0
      %2078 = vmatprep.subr.mxu0 0.0
      %2079 = vmatpush1.msra.mxu0 0.0
      %2080 = vmatprep.subr.mxu0 0.0
      %2081 = vmatpush1.msra.mxu0 0.0
      %2082 = vmatprep.subr.mxu0 0.0
      %2083 = vmatpush1.msra.mxu0 0.0
      %2084 = vmatprep.subr.mxu0 0.0
      %2085 = vmatpush1.msra.mxu0 0.0
      %2086 = vmatprep.subr.mxu0 0.0
      %2087 = vmatpush1.msra.mxu0 0.0
      %2088 = vmatprep.mubr.f32.mxu0 0.0
      %2089 = vmatmul.mubr.f32.gmra.mrb[0].mxu0 %v2019
      %v2090 = vpop.f32.mrb[0].mxu0
      %v2091 = vadd.f32 %v2011, %v2090
      %v2092 = vpop.f32.mrb[0].mxu0
      %v2093 = vadd.f32 %v2011, %v2092
      %2094 = vmatprep.mubr.f32.mxu0 0.0
      %2095 = vmatmul.mubr.f32.gmra.mrb[0].mxu0 %v2022
      %v2096 = vpop.f32.mrb[0].mxu0
      %v2097 = vadd.f32 %v2016, %v2096
      %v2098 = vpop.f32.mrb[0].mxu0
      %v2099 = vadd.f32 %v2016, %v2098
      %2100 = vdwg.mxu0
      %2101 = vmatprep.subr.mxu0 %v464
      %2102 = vmatpush1.msra.mxu0 %v463
      %2103 = vmatprep.subr.mxu0 %v501
      %2104 = vmatpush1.msra.mxu0 %v498
      %2105 = vmatprep.subr.mxu0 0.0
      %2106 = vmatpush1.msra.mxu0 0.0
      %2107 = vmatprep.subr.mxu0 0.0
      %2108 = vmatpush1.msra.mxu0 0.0
      %2109 = vmatprep.subr.mxu0 0.0
      %2110 = vmatpush1.msra.mxu0 0.0
      %2111 = vmatprep.subr.mxu0 0.0
      %2112 = vmatpush1.msra.mxu0 0.0
      %2113 = vmatprep.subr.mxu0 0.0
      %2114 = vmatpush1.msra.mxu0 0.0
      %2115 = vmatprep.subr.mxu0 0.0
      %2116 = vmatpush1.msra.mxu0 0.0
      %2117 = vmatprep.subr.mxu0 0.0
      %2118 = vmatpush1.msra.mxu0 0.0
      %2119 = vmatprep.subr.mxu0 0.0
      %2120 = vmatpush1.msra.mxu0 0.0
      %2121 = vmatprep.subr.mxu0 0.0
      %2122 = vmatpush1.msra.mxu0 0.0
      %2123 = vmatprep.subr.mxu0 0.0
      %2124 = vmatpush1.msra.mxu0 0.0
      %2125 = vmatprep.subr.mxu0 0.0
      %2126 = vmatpush1.msra.mxu0 0.0
      %2127 = vmatprep.subr.mxu0 0.0
      %2128 = vmatpush1.msra.mxu0 0.0
      %2129 = vmatprep.subr.mxu0 0.0
      %2130 = vmatpush1.msra.mxu0 0.0
      %2131 = vmatprep.subr.mxu0 0.0
      %2132 = vmatpush1.msra.mxu0 0.0
      %2133 = vmatprep.subr.mxu0 0.0
      %2134 = vmatpush1.msra.mxu0 0.0
      %2135 = vmatprep.subr.mxu0 0.0
      %2136 = vmatpush1.msra.mxu0 0.0
      %2137 = vmatprep.subr.mxu0 0.0
      %2138 = vmatpush1.msra.mxu0 0.0
      %2139 = vmatprep.subr.mxu0 0.0
      %2140 = vmatpush1.msra.mxu0 0.0
      %2141 = vmatprep.subr.mxu0 0.0
      %2142 = vmatpush1.msra.mxu0 0.0
      %2143 = vmatprep.subr.mxu0 0.0
      %2144 = vmatpush1.msra.mxu0 0.0
      %2145 = vmatprep.subr.mxu0 0.0
      %2146 = vmatpush1.msra.mxu0 0.0
      %2147 = vmatprep.subr.mxu0 0.0
      %2148 = vmatpush1.msra.mxu0 0.0
      %2149 = vmatprep.subr.mxu0 0.0
      %2150 = vmatpush1.msra.mxu0 0.0
      %2151 = vmatprep.subr.mxu0 0.0
      %2152 = vmatpush1.msra.mxu0 0.0
      %2153 = vmatprep.subr.mxu0 0.0
      %2154 = vmatpush1.msra.mxu0 0.0
      %2155 = vmatprep.subr.mxu0 0.0
      %2156 = vmatpush1.msra.mxu0 0.0
      %2157 = vmatprep.subr.mxu0 0.0
      %2158 = vmatpush1.msra.mxu0 0.0
      %2159 = vmatprep.subr.mxu0 0.0
      %2160 = vmatpush1.msra.mxu0 0.0
      %2161 = vmatprep.subr.mxu0 0.0
      %2162 = vmatpush1.msra.mxu0 0.0
      %2163 = vmatprep.subr.mxu0 0.0
      %2164 = vmatpush1.msra.mxu0 0.0
      %2165 = vmatprep.mubr.f32.mxu0 0.0
      %2166 = vmatmul.mubr.f32.gmra.mrb[0].mxu0 %v2019
      %v2167 = vpop.f32.mrb[0].mxu0
      %v2168 = vadd.f32 %v2011, %v2167
      %v2169 = vpop.f32.mrb[0].mxu0
      %v2170 = vadd.f32 %v2011, %v2169
      %2171 = vmatprep.mubr.f32.mxu0 0.0
      %2172 = vmatmul.mubr.f32.gmra.mrb[0].mxu0 %v2022
      %v2173 = vpop.f32.mrb[0].mxu0
      %v2174 = vadd.f32 %v2016, %v2173
      %v2175 = vpop.f32.mrb[0].mxu0
      %v2176 = vadd.f32 %v2016, %v2175
      %2177 = vdwg.mxu0
      %s2178 = scalar_lea.vmem %s455, 64
      %v2179 = vld [vmem:[%s2178] sm:$0xff]
      %v2180 = vld [vmem:[%s2178 + $0x8] sm:$0xff]
      %v2181 = vld [vmem:[%s2178 + $0x10] sm:$0xff]
      %v2182 = vld [vmem:[%s2178 + $0x18] sm:$0xff]
      %v2183 = vld [vmem:[%s2178 + $0x20] sm:$0x1]
      %v2184 = vld [vmem:[%s2178 + $0x28] sm:$0x1]
      %v2185 = vld [vmem:[%s2178 + $0x30] sm:$0x1]
      %v2186 = vld [vmem:[%s2178 + $0x38] sm:$0x1]
      %v2187 = vadd.f32 %v2091, %v2179
      %v2188 = vadd.f32 %v2093, %v2180
      %v2189 = vadd.f32 %v2168, %v2181
      %v2190 = vadd.f32 %v2170, %v2182
      %v2191 = vadd.f32 %v2097, %v2183
      %v2192 = vadd.f32 %v2099, %v2184
      %v2193 = vadd.f32 %v2174, %v2185
      %v2194 = vadd.f32 %v2176, %v2186
      %v2195 = vadd.f32 %v2187, %v2188
      %v2196 = vadd.f32 %v2195, %v2189
      %v2197 = vadd.f32 %v2196, %v2190
      %2198 = vadd.xlane.f32.xlu0 %v2197
      %v2199 = vpop.xlane.xlu0 %2198
      %v2200 = vsel %vm678, %v2191, 0.0
      %v2201 = vsel %vm678, %v2192, 0.0
      %v2202 = vadd.f32 %v2200, %v2201
      %v2203 = vsel %vm678, %v2193, 0.0
      %v2204 = vadd.f32 %v2202, %v2203
      %v2205 = vsel %vm678, %v2194, 0.0
      %v2206 = vadd.f32 %v2204, %v2205
      %2207 = vadd.xlane.f32.xlu0 %v2206
      %v2208 = vpop.xlane.xlu0 %2207
      %v2209 = vmul.f32 %v2199, %v688
      %v2210 = vmul.f32 %v2208, %v688
      %v2211 = vsub.f32 %v2187, %v2209
      %v2212 = vsub.f32 %v2188, %v2209
      %v2213 = vsub.f32 %v2189, %v2209
      %v2214 = vsub.f32 %v2190, %v2209
      %v2215 = vsub.f32 %v2191, %v2210
      %v2216 = vsub.f32 %v2192, %v2210
      %v2217 = vsub.f32 %v2193, %v2210
      %v2218 = vsub.f32 %v2194, %v2210
      %v2219 = vmul.f32 %v2211, %v2211
      %v2220 = vmul.f32 %v2212, %v2212
      %v2221 = vmul.f32 %v2213, %v2213
      %v2222 = vmul.f32 %v2214, %v2214
      %v2223 = vmul.f32 %v2215, %v2215
      %v2224 = vmul.f32 %v2216, %v2216
      %v2225 = vmul.f32 %v2217, %v2217
      %v2226 = vmul.f32 %v2218, %v2218
      %v2227 = vadd.f32 %v2219, %v2220
      %v2228 = vadd.f32 %v2227, %v2221
      %v2229 = vadd.f32 %v2228, %v2222
      %2230 = vadd.xlane.f32.xlu0 %v2229
      %v2231 = vpop.xlane.xlu0 %2230
      %v2232 = vsel %vm678, %v2223, 0.0
      %v2233 = vsel %vm678, %v2224, 0.0
      %v2234 = vadd.f32 %v2232, %v2233
      %v2235 = vsel %vm678, %v2225, 0.0
      %v2236 = vadd.f32 %v2234, %v2235
      %v2237 = vsel %vm678, %v2226, 0.0
      %v2238 = vadd.f32 %v2236, %v2237
      %2239 = vadd.xlane.f32.xlu0 %v2238
      %v2240 = vpop.xlane.xlu0 %2239
      %v2241 = vmul.f32 %v2231, %v688
      %v2242 = vmul.f32 %v2240, %v688
      %s2243 = scalar_lea.vmem %s4, 16
      %v2244 = vld [vmem:[%s2243] sm:$0xff]
      %v2245 = vld [vmem:[%s2243 + $0x8] sm:$0x1]
      %v2246 = vadd.f32 %v2241, 1e-06
      %v2247 = vadd.f32 %v2242, 1e-06
      %v2248 = vrsqrt.pop %v2246
      %v2249 = vrsqrt.pop %v2247
      %v2250 = vmul.f32 %v2244, %v2248
      %v2251 = vmul.f32 %v2245, %v2249
      %2252 = vrot.lane.b32.xlu0 %v2211, 18
      %v2253 = vpop.permute.xlu0 %2252
      %2254 = vrot.lane.b32.xlu0 %v2215, 18
      %v2255 = vpop.permute.xlu0 %2254
      %2256 = vrot.lane.b32.xlu0 %v2212, 18
      %v2257 = vpop.permute.xlu0 %2256
      %2258 = vrot.lane.b32.xlu0 %v2216, 18
      %v2259 = vpop.permute.xlu0 %2258
      %2260 = vrot.lane.b32.xlu0 %v2213, 18
      %v2261 = vpop.permute.xlu0 %2260
      %2262 = vrot.lane.b32.xlu0 %v2217, 18
      %v2263 = vpop.permute.xlu0 %2262
      %2264 = vrot.lane.b32.xlu0 %v2214, 18
      %v2265 = vpop.permute.xlu0 %2264
      %2266 = vrot.lane.b32.xlu0 %v2218, 18
      %v2267 = vpop.permute.xlu0 %2266
      %vm2268 = vcmp.lt.s32.totalorder %v748, 18
      %v2269 = vsel %vm2268, %v2261, %v2265
      %v2270 = vsel %vm2268, %v2263, %v2267
      %v2271 = vsel %vm2268, %v2257, %v2261
      %v2272 = vsel %vm2268, %v2259, %v2263
      %v2273 = vsel %vm2268, %v2253, %v2257
      %v2274 = vsel %vm2268, %v2255, %v2259
      %v2275 = vsel %vm2268, %v2265, %v2253
      %v2276 = vsel %vm2268, %v2267, %v2255
      %s2277 = scalar_lea.vmem %s7, 1728
      %v2278 = vld [vmem:[%s2277] sm:$0xff]
      %v2279 = vld [vmem:[%s2277 + $0x8] sm:$0xff]
      %v2280 = vld [vmem:[%s2277 + $0x10] sm:$0xff]
      %v2281 = vld [vmem:[%s2277 + $0x18] sm:$0xff]
      %v2282 = vld [vmem:[%s2277 + $0x20] sm:$0x1]
      %v2283 = vld [vmem:[%s2277 + $0x28] sm:$0x1]
      %v2284 = vld [vmem:[%s2277 + $0x30] sm:$0x1]
      %v2285 = vld [vmem:[%s2277 + $0x38] sm:$0x1]
      %v2286 = vmul.f32 %v2278, %v2269
      %v2287 = vmul.f32 %v2279, %v2275
      %v2288 = vmul.f32 %v2280, %v2273
      %v2289 = vmul.f32 %v2281, %v2271
      %v2290 = vmul.f32 %v2282, %v2270
      %v2291 = vmul.f32 %v2283, %v2276
      %v2292 = vmul.f32 %v2284, %v2274
      %v2293 = vmul.f32 %v2285, %v2272
      %v2294 = vadd.f32 %v2286, 0.0
      %v2295 = vadd.f32 %v2287, 0.0
      %v2296 = vadd.f32 %v2288, 0.0
      %v2297 = vadd.f32 %v2289, 0.0
      %v2298 = vadd.f32 %v2290, 0.0
      %v2299 = vadd.f32 %v2291, 0.0
      %v2300 = vadd.f32 %v2292, 0.0
      %v2301 = vadd.f32 %v2293, 0.0
      %2302 = vrot.lane.b32.xlu0 %v2211, 16
      %v2303 = vpop.permute.xlu0 %2302
      %2304 = vrot.lane.b32.xlu0 %v2215, 16
      %v2305 = vpop.permute.xlu0 %2304
      %2306 = vrot.lane.b32.xlu0 %v2212, 16
      %v2307 = vpop.permute.xlu0 %2306
      %2308 = vrot.lane.b32.xlu0 %v2216, 16
      %v2309 = vpop.permute.xlu0 %2308
      %2310 = vrot.lane.b32.xlu0 %v2213, 16
      %v2311 = vpop.permute.xlu0 %2310
      %2312 = vrot.lane.b32.xlu0 %v2217, 16
      %v2313 = vpop.permute.xlu0 %2312
      %2314 = vrot.lane.b32.xlu0 %v2214, 16
      %v2315 = vpop.permute.xlu0 %2314
      %2316 = vrot.lane.b32.xlu0 %v2218, 16
      %v2317 = vpop.permute.xlu0 %2316
      %vm2318 = vcmp.lt.s32.totalorder %v748, 16
      %v2319 = vsel %vm2318, %v2311, %v2315
      %v2320 = vsel %vm2318, %v2313, %v2317
      %v2321 = vsel %vm2318, %v2307, %v2311
      %v2322 = vsel %vm2318, %v2309, %v2313
      %v2323 = vsel %vm2318, %v2303, %v2307
      %v2324 = vsel %vm2318, %v2305, %v2309
      %v2325 = vsel %vm2318, %v2315, %v2303
      %v2326 = vsel %vm2318, %v2317, %v2305
      %s2327 = scalar_lea.vmem %s7, 1792
      %v2328 = vld [vmem:[%s2327] sm:$0xff]
      %v2329 = vld [vmem:[%s2327 + $0x8] sm:$0xff]
      %v2330 = vld [vmem:[%s2327 + $0x10] sm:$0xff]
      %v2331 = vld [vmem:[%s2327 + $0x18] sm:$0xff]
      %v2332 = vld [vmem:[%s2327 + $0x20] sm:$0x1]
      %v2333 = vld [vmem:[%s2327 + $0x28] sm:$0x1]
      %v2334 = vld [vmem:[%s2327 + $0x30] sm:$0x1]
      %v2335 = vld [vmem:[%s2327 + $0x38] sm:$0x1]
      %v2336 = vmul.f32 %v2328, %v2319
      %v2337 = vmul.f32 %v2329, %v2325
      %v2338 = vmul.f32 %v2330, %v2323
      %v2339 = vmul.f32 %v2331, %v2321
      %v2340 = vmul.f32 %v2332, %v2320
      %v2341 = vmul.f32 %v2333, %v2326
      %v2342 = vmul.f32 %v2334, %v2324
      %v2343 = vmul.f32 %v2335, %v2322
      %v2344 = vadd.f32 %v2294, %v2336
      %v2345 = vadd.f32 %v2295, %v2337
      %v2346 = vadd.f32 %v2296, %v2338
      %v2347 = vadd.f32 %v2297, %v2339
      %v2348 = vadd.f32 %v2298, %v2340
      %v2349 = vadd.f32 %v2299, %v2341
      %v2350 = vadd.f32 %v2300, %v2342
      %v2351 = vadd.f32 %v2301, %v2343
      %2352 = vrot.lane.b32.xlu0 %v2211, 14
      %v2353 = vpop.permute.xlu0 %2352
      %2354 = vrot.lane.b32.xlu0 %v2215, 14
      %v2355 = vpop.permute.xlu0 %2354
      %2356 = vrot.lane.b32.xlu0 %v2212, 14
      %v2357 = vpop.permute.xlu0 %2356
      %2358 = vrot.lane.b32.xlu0 %v2216, 14
      %v2359 = vpop.permute.xlu0 %2358
      %2360 = vrot.lane.b32.xlu0 %v2213, 14
      %v2361 = vpop.permute.xlu0 %2360
      %2362 = vrot.lane.b32.xlu0 %v2217, 14
      %v2363 = vpop.permute.xlu0 %2362
      %2364 = vrot.lane.b32.xlu0 %v2214, 14
      %v2365 = vpop.permute.xlu0 %2364
      %2366 = vrot.lane.b32.xlu0 %v2218, 14
      %v2367 = vpop.permute.xlu0 %2366
      %vm2368 = vcmp.lt.s32.totalorder %v748, 14
      %v2369 = vsel %vm2368, %v2361, %v2365
      %v2370 = vsel %vm2368, %v2363, %v2367
      %v2371 = vsel %vm2368, %v2357, %v2361
      %v2372 = vsel %vm2368, %v2359, %v2363
      %v2373 = vsel %vm2368, %v2353, %v2357
      %v2374 = vsel %vm2368, %v2355, %v2359
      %v2375 = vsel %vm2368, %v2365, %v2353
      %v2376 = vsel %vm2368, %v2367, %v2355
      %s2377 = scalar_lea.vmem %s7, 1856
      %v2378 = vld [vmem:[%s2377] sm:$0xff]
      %v2379 = vld [vmem:[%s2377 + $0x8] sm:$0xff]
      %v2380 = vld [vmem:[%s2377 + $0x10] sm:$0xff]
      %v2381 = vld [vmem:[%s2377 + $0x18] sm:$0xff]
      %v2382 = vld [vmem:[%s2377 + $0x20] sm:$0x1]
      %v2383 = vld [vmem:[%s2377 + $0x28] sm:$0x1]
      %v2384 = vld [vmem:[%s2377 + $0x30] sm:$0x1]
      %v2385 = vld [vmem:[%s2377 + $0x38] sm:$0x1]
      %v2386 = vmul.f32 %v2378, %v2369
      %v2387 = vmul.f32 %v2379, %v2375
      %v2388 = vmul.f32 %v2380, %v2373
      %v2389 = vmul.f32 %v2381, %v2371
      %v2390 = vmul.f32 %v2382, %v2370
      %v2391 = vmul.f32 %v2383, %v2376
      %v2392 = vmul.f32 %v2384, %v2374
      %v2393 = vmul.f32 %v2385, %v2372
      %v2394 = vadd.f32 %v2344, %v2386
      %v2395 = vadd.f32 %v2345, %v2387
      %v2396 = vadd.f32 %v2346, %v2388
      %v2397 = vadd.f32 %v2347, %v2389
      %v2398 = vadd.f32 %v2348, %v2390
      %v2399 = vadd.f32 %v2349, %v2391
      %v2400 = vadd.f32 %v2350, %v2392
      %v2401 = vadd.f32 %v2351, %v2393
      %2402 = vrot.lane.b32.xlu0 %v2211, 2
      %v2403 = vpop.permute.xlu0 %2402
      %2404 = vrot.lane.b32.xlu0 %v2215, 2
      %v2405 = vpop.permute.xlu0 %2404
      %2406 = vrot.lane.b32.xlu0 %v2212, 2
      %v2407 = vpop.permute.xlu0 %2406
      %2408 = vrot.lane.b32.xlu0 %v2216, 2
      %v2409 = vpop.permute.xlu0 %2408
      %2410 = vrot.lane.b32.xlu0 %v2213, 2
      %v2411 = vpop.permute.xlu0 %2410
      %2412 = vrot.lane.b32.xlu0 %v2217, 2
      %v2413 = vpop.permute.xlu0 %2412
      %2414 = vrot.lane.b32.xlu0 %v2214, 2
      %v2415 = vpop.permute.xlu0 %2414
      %2416 = vrot.lane.b32.xlu0 %v2218, 2
      %v2417 = vpop.permute.xlu0 %2416
      %vm2418 = vcmp.lt.s32.totalorder %v748, 2
      %v2419 = vsel %vm2418, %v2411, %v2415
      %v2420 = vsel %vm2418, %v2413, %v2417
      %v2421 = vsel %vm2418, %v2407, %v2411
      %v2422 = vsel %vm2418, %v2409, %v2413
      %v2423 = vsel %vm2418, %v2403, %v2407
      %v2424 = vsel %vm2418, %v2405, %v2409
      %v2425 = vsel %vm2418, %v2415, %v2403
      %v2426 = vsel %vm2418, %v2417, %v2405
      %s2427 = scalar_lea.vmem %s7, 1920
      %v2428 = vld [vmem:[%s2427] sm:$0xff]
      %v2429 = vld [vmem:[%s2427 + $0x8] sm:$0xff]
      %v2430 = vld [vmem:[%s2427 + $0x10] sm:$0xff]
      %v2431 = vld [vmem:[%s2427 + $0x18] sm:$0xff]
      %v2432 = vld [vmem:[%s2427 + $0x20] sm:$0x1]
      %v2433 = vld [vmem:[%s2427 + $0x28] sm:$0x1]
      %v2434 = vld [vmem:[%s2427 + $0x30] sm:$0x1]
      %v2435 = vld [vmem:[%s2427 + $0x38] sm:$0x1]
      %v2436 = vmul.f32 %v2428, %v2419
      %v2437 = vmul.f32 %v2429, %v2425
      %v2438 = vmul.f32 %v2430, %v2423
      %v2439 = vmul.f32 %v2431, %v2421
      %v2440 = vmul.f32 %v2432, %v2420
      %v2441 = vmul.f32 %v2433, %v2426
      %v2442 = vmul.f32 %v2434, %v2424
      %v2443 = vmul.f32 %v2435, %v2422
      %v2444 = vadd.f32 %v2394, %v2436
      %v2445 = vadd.f32 %v2395, %v2437
      %v2446 = vadd.f32 %v2396, %v2438
      %v2447 = vadd.f32 %v2397, %v2439
      %v2448 = vadd.f32 %v2398, %v2440
      %v2449 = vadd.f32 %v2399, %v2441
      %v2450 = vadd.f32 %v2400, %v2442
      %v2451 = vadd.f32 %v2401, %v2443
      %s2452 = scalar_lea.vmem %s7, 1984
      %v2453 = vld [vmem:[%s2452] sm:$0xff]
      %v2454 = vld [vmem:[%s2452 + $0x8] sm:$0xff]
      %v2455 = vld [vmem:[%s2452 + $0x10] sm:$0xff]
      %v2456 = vld [vmem:[%s2452 + $0x18] sm:$0xff]
      %v2457 = vld [vmem:[%s2452 + $0x20] sm:$0x1]
      %v2458 = vld [vmem:[%s2452 + $0x28] sm:$0x1]
      %v2459 = vld [vmem:[%s2452 + $0x30] sm:$0x1]
      %v2460 = vld [vmem:[%s2452 + $0x38] sm:$0x1]
      %v2461 = vmul.f32 %v2453, %v2214
      %v2462 = vmul.f32 %v2454, %v2211
      %v2463 = vmul.f32 %v2455, %v2212
      %v2464 = vmul.f32 %v2456, %v2213
      %v2465 = vmul.f32 %v2457, %v2218
      %v2466 = vmul.f32 %v2458, %v2215
      %v2467 = vmul.f32 %v2459, %v2216
      %v2468 = vmul.f32 %v2460, %v2217
      %v2469 = vadd.f32 %v2444, %v2461
      %v2470 = vadd.f32 %v2445, %v2462
      %v2471 = vadd.f32 %v2446, %v2463
      %v2472 = vadd.f32 %v2447, %v2464
      %v2473 = vadd.f32 %v2448, %v2465
      %v2474 = vadd.f32 %v2449, %v2466
      %v2475 = vadd.f32 %v2450, %v2467
      %v2476 = vadd.f32 %v2451, %v2468
      %2477 = vrot.lane.b32.xlu0 %v2211, 126
      %v2478 = vpop.permute.xlu0 %2477
      %2479 = vrot.lane.b32.xlu0 %v2215, 126
      %v2480 = vpop.permute.xlu0 %2479
      %2481 = vrot.lane.b32.xlu0 %v2212, 126
      %v2482 = vpop.permute.xlu0 %2481
      %2483 = vrot.lane.b32.xlu0 %v2216, 126
      %v2484 = vpop.permute.xlu0 %2483
      %2485 = vrot.lane.b32.xlu0 %v2213, 126
      %v2486 = vpop.permute.xlu0 %2485
      %2487 = vrot.lane.b32.xlu0 %v2217, 126
      %v2488 = vpop.permute.xlu0 %2487
      %2489 = vrot.lane.b32.xlu0 %v2214, 126
      %v2490 = vpop.permute.xlu0 %2489
      %2491 = vrot.lane.b32.xlu0 %v2218, 126
      %v2492 = vpop.permute.xlu0 %2491
      %vm2493 = vcmp.lt.s32.totalorder %v748, 126
      %v2494 = vsel %vm2493, %v2486, %v2490
      %v2495 = vsel %vm2493, %v2488, %v2492
      %v2496 = vsel %vm2493, %v2482, %v2486
      %v2497 = vsel %vm2493, %v2484, %v2488
      %v2498 = vsel %vm2493, %v2478, %v2482
      %v2499 = vsel %vm2493, %v2480, %v2484
      %v2500 = vsel %vm2493, %v2490, %v2478
      %v2501 = vsel %vm2493, %v2492, %v2480
      %s2502 = scalar_lea.vmem %s7, 2048
      %v2503 = vld [vmem:[%s2502] sm:$0xff]
      %v2504 = vld [vmem:[%s2502 + $0x8] sm:$0xff]
      %v2505 = vld [vmem:[%s2502 + $0x10] sm:$0xff]
      %v2506 = vld [vmem:[%s2502 + $0x18] sm:$0xff]
      %v2507 = vld [vmem:[%s2502 + $0x20] sm:$0x1]
      %v2508 = vld [vmem:[%s2502 + $0x28] sm:$0x1]
      %v2509 = vld [vmem:[%s2502 + $0x30] sm:$0x1]
      %v2510 = vld [vmem:[%s2502 + $0x38] sm:$0x1]
      %v2511 = vmul.f32 %v2503, %v2500
      %v2512 = vmul.f32 %v2504, %v2498
      %v2513 = vmul.f32 %v2505, %v2496
      %v2514 = vmul.f32 %v2506, %v2494
      %v2515 = vmul.f32 %v2507, %v2501
      %v2516 = vmul.f32 %v2508, %v2499
      %v2517 = vmul.f32 %v2509, %v2497
      %v2518 = vmul.f32 %v2510, %v2495
      %v2519 = vadd.f32 %v2469, %v2511
      %v2520 = vadd.f32 %v2470, %v2512
      %v2521 = vadd.f32 %v2471, %v2513
      %v2522 = vadd.f32 %v2472, %v2514
      %v2523 = vadd.f32 %v2473, %v2515
      %v2524 = vadd.f32 %v2474, %v2516
      %v2525 = vadd.f32 %v2475, %v2517
      %v2526 = vadd.f32 %v2476, %v2518
      %2527 = vrot.lane.b32.xlu0 %v2211, 114
      %v2528 = vpop.permute.xlu0 %2527
      %2529 = vrot.lane.b32.xlu0 %v2215, 114
      %v2530 = vpop.permute.xlu0 %2529
      %2531 = vrot.lane.b32.xlu0 %v2212, 114
      %v2532 = vpop.permute.xlu0 %2531
      %2533 = vrot.lane.b32.xlu0 %v2216, 114
      %v2534 = vpop.permute.xlu0 %2533
      %2535 = vrot.lane.b32.xlu0 %v2213, 114
      %v2536 = vpop.permute.xlu0 %2535
      %2537 = vrot.lane.b32.xlu0 %v2217, 114
      %v2538 = vpop.permute.xlu0 %2537
      %2539 = vrot.lane.b32.xlu0 %v2214, 114
      %v2540 = vpop.permute.xlu0 %2539
      %2541 = vrot.lane.b32.xlu0 %v2218, 114
      %v2542 = vpop.permute.xlu0 %2541
      %vm2543 = vcmp.lt.s32.totalorder %v748, 114
      %v2544 = vsel %vm2543, %v2536, %v2540
      %v2545 = vsel %vm2543, %v2538, %v2542
      %v2546 = vsel %vm2543, %v2532, %v2536
      %v2547 = vsel %vm2543, %v2534, %v2538
      %v2548 = vsel %vm2543, %v2528, %v2532
      %v2549 = vsel %vm2543, %v2530, %v2534
      %v2550 = vsel %vm2543, %v2540, %v2528
      %v2551 = vsel %vm2543, %v2542, %v2530
      %s2552 = scalar_lea.vmem %s7, 2112
      %v2553 = vld [vmem:[%s2552] sm:$0xff]
      %v2554 = vld [vmem:[%s2552 + $0x8] sm:$0xff]
      %v2555 = vld [vmem:[%s2552 + $0x10] sm:$0xff]
      %v2556 = vld [vmem:[%s2552 + $0x18] sm:$0xff]
      %v2557 = vld [vmem:[%s2552 + $0x20] sm:$0x1]
      %v2558 = vld [vmem:[%s2552 + $0x28] sm:$0x1]
      %v2559 = vld [vmem:[%s2552 + $0x30] sm:$0x1]
      %v2560 = vld [vmem:[%s2552 + $0x38] sm:$0x1]
      %v2561 = vmul.f32 %v2553, %v2550
      %v2562 = vmul.f32 %v2554, %v2548
      %v2563 = vmul.f32 %v2555, %v2546
      %v2564 = vmul.f32 %v2556, %v2544
      %v2565 = vmul.f32 %v2557, %v2551
      %v2566 = vmul.f32 %v2558, %v2549
      %v2567 = vmul.f32 %v2559, %v2547
      %v2568 = vmul.f32 %v2560, %v2545
      %v2569 = vadd.f32 %v2519, %v2561
      %v2570 = vadd.f32 %v2520, %v2562
      %v2571 = vadd.f32 %v2521, %v2563
      %v2572 = vadd.f32 %v2522, %v2564
      %v2573 = vadd.f32 %v2523, %v2565
      %v2574 = vadd.f32 %v2524, %v2566
      %v2575 = vadd.f32 %v2525, %v2567
      %v2576 = vadd.f32 %v2526, %v2568
      %2577 = vrot.lane.b32.xlu0 %v2211, 112
      %v2578 = vpop.permute.xlu0 %2577
      %2579 = vrot.lane.b32.xlu0 %v2215, 112
      %v2580 = vpop.permute.xlu0 %2579
      %2581 = vrot.lane.b32.xlu0 %v2212, 112
      %v2582 = vpop.permute.xlu0 %2581
      %2583 = vrot.lane.b32.xlu0 %v2216, 112
      %v2584 = vpop.permute.xlu0 %2583
      %2585 = vrot.lane.b32.xlu0 %v2213, 112
      %v2586 = vpop.permute.xlu0 %2585
      %2587 = vrot.lane.b32.xlu0 %v2217, 112
      %v2588 = vpop.permute.xlu0 %2587
      %2589 = vrot.lane.b32.xlu0 %v2214, 112
      %v2590 = vpop.permute.xlu0 %2589
      %2591 = vrot.lane.b32.xlu0 %v2218, 112
      %v2592 = vpop.permute.xlu0 %2591
      %vm2593 = vcmp.lt.s32.totalorder %v748, 112
      %v2594 = vsel %vm2593, %v2586, %v2590
      %v2595 = vsel %vm2593, %v2588, %v2592
      %v2596 = vsel %vm2593, %v2582, %v2586
      %v2597 = vsel %vm2593, %v2584, %v2588
      %v2598 = vsel %vm2593, %v2578, %v2582
      %v2599 = vsel %vm2593, %v2580, %v2584
      %v2600 = vsel %vm2593, %v2590, %v2578
      %v2601 = vsel %vm2593, %v2592, %v2580
      %s2602 = scalar_lea.vmem %s7, 2176
      %v2603 = vld [vmem:[%s2602] sm:$0xff]
      %v2604 = vld [vmem:[%s2602 + $0x8] sm:$0xff]
      %v2605 = vld [vmem:[%s2602 + $0x10] sm:$0xff]
      %v2606 = vld [vmem:[%s2602 + $0x18] sm:$0xff]
      %v2607 = vld [vmem:[%s2602 + $0x20] sm:$0x1]
      %v2608 = vld [vmem:[%s2602 + $0x28] sm:$0x1]
      %v2609 = vld [vmem:[%s2602 + $0x30] sm:$0x1]
      %v2610 = vld [vmem:[%s2602 + $0x38] sm:$0x1]
      %v2611 = vmul.f32 %v2603, %v2600
      %v2612 = vmul.f32 %v2604, %v2598
      %v2613 = vmul.f32 %v2605, %v2596
      %v2614 = vmul.f32 %v2606, %v2594
      %v2615 = vmul.f32 %v2607, %v2601
      %v2616 = vmul.f32 %v2608, %v2599
      %v2617 = vmul.f32 %v2609, %v2597
      %v2618 = vmul.f32 %v2610, %v2595
      %v2619 = vadd.f32 %v2569, %v2611
      %v2620 = vadd.f32 %v2570, %v2612
      %v2621 = vadd.f32 %v2571, %v2613
      %v2622 = vadd.f32 %v2572, %v2614
      %v2623 = vadd.f32 %v2573, %v2615
      %v2624 = vadd.f32 %v2574, %v2616
      %v2625 = vadd.f32 %v2575, %v2617
      %v2626 = vadd.f32 %v2576, %v2618
      %2627 = vrot.lane.b32.xlu0 %v2211, 110
      %v2628 = vpop.permute.xlu0 %2627
      %2629 = vrot.lane.b32.xlu0 %v2215, 110
      %v2630 = vpop.permute.xlu0 %2629
      %2631 = vrot.lane.b32.xlu0 %v2212, 110
      %v2632 = vpop.permute.xlu0 %2631
      %2633 = vrot.lane.b32.xlu0 %v2216, 110
      %v2634 = vpop.permute.xlu0 %2633
      %2635 = vrot.lane.b32.xlu0 %v2213, 110
      %v2636 = vpop.permute.xlu0 %2635
      %2637 = vrot.lane.b32.xlu0 %v2217, 110
      %v2638 = vpop.permute.xlu0 %2637
      %2639 = vrot.lane.b32.xlu0 %v2214, 110
      %v2640 = vpop.permute.xlu0 %2639
      %2641 = vrot.lane.b32.xlu0 %v2218, 110
      %v2642 = vpop.permute.xlu0 %2641
      %vm2643 = vcmp.lt.s32.totalorder %v748, 110
      %v2644 = vsel %vm2643, %v2636, %v2640
      %v2645 = vsel %vm2643, %v2638, %v2642
      %v2646 = vsel %vm2643, %v2632, %v2636
      %v2647 = vsel %vm2643, %v2634, %v2638
      %v2648 = vsel %vm2643, %v2628, %v2632
      %v2649 = vsel %vm2643, %v2630, %v2634
      %v2650 = vsel %vm2643, %v2640, %v2628
      %v2651 = vsel %vm2643, %v2642, %v2630
      %s2652 = scalar_lea.vmem %s7, 2240
      %v2653 = vld [vmem:[%s2652] sm:$0xff]
      %v2654 = vld [vmem:[%s2652 + $0x8] sm:$0xff]
      %v2655 = vld [vmem:[%s2652 + $0x10] sm:$0xff]
      %v2656 = vld [vmem:[%s2652 + $0x18] sm:$0xff]
      %v2657 = vld [vmem:[%s2652 + $0x20] sm:$0x1]
      %v2658 = vld [vmem:[%s2652 + $0x28] sm:$0x1]
      %v2659 = vld [vmem:[%s2652 + $0x30] sm:$0x1]
      %v2660 = vld [vmem:[%s2652 + $0x38] sm:$0x1]
      %v2661 = vmul.f32 %v2653, %v2650
      %v2662 = vmul.f32 %v2654, %v2648
      %v2663 = vmul.f32 %v2655, %v2646
      %v2664 = vmul.f32 %v2656, %v2644
      %v2665 = vmul.f32 %v2657, %v2651
      %v2666 = vmul.f32 %v2658, %v2649
      %v2667 = vmul.f32 %v2659, %v2647
      %v2668 = vmul.f32 %v2660, %v2645
      %v2669 = vadd.f32 %v2619, %v2661
      %v2670 = vadd.f32 %v2620, %v2662
      %v2671 = vadd.f32 %v2621, %v2663
      %v2672 = vadd.f32 %v2622, %v2664
      %v2673 = vadd.f32 %v2623, %v2665
      %v2674 = vadd.f32 %v2624, %v2666
      %v2675 = vadd.f32 %v2625, %v2667
      %v2676 = vadd.f32 %v2626, %v2668
      %s2677 = scalar_lea.vmem %s7, 2304
      %v2678 = vld [vmem:[%s2677] sm:$0xff]
      %v2679 = vld [vmem:[%s2677 + $0x8] sm:$0xff]
      %v2680 = vld [vmem:[%s2677 + $0x10] sm:$0xff]
      %v2681 = vld [vmem:[%s2677 + $0x18] sm:$0xff]
      %v2682 = vld [vmem:[%s2677 + $0x20] sm:$0x1]
      %v2683 = vld [vmem:[%s2677 + $0x28] sm:$0x1]
      %v2684 = vld [vmem:[%s2677 + $0x30] sm:$0x1]
      %v2685 = vld [vmem:[%s2677 + $0x38] sm:$0x1]
      %v2686 = vmul.f32 %v2678, %v2275
      %v2687 = vmul.f32 %v2679, %v2273
      %v2688 = vmul.f32 %v2680, %v2271
      %v2689 = vmul.f32 %v2681, %v2269
      %v2690 = vmul.f32 %v2682, %v2276
      %v2691 = vmul.f32 %v2683, %v2274
      %v2692 = vmul.f32 %v2684, %v2272
      %v2693 = vmul.f32 %v2685, %v2270
      %v2694 = vadd.f32 %v2669, %v2686
      %v2695 = vadd.f32 %v2670, %v2687
      %v2696 = vadd.f32 %v2671, %v2688
      %v2697 = vadd.f32 %v2672, %v2689
      %v2698 = vadd.f32 %v2673, %v2690
      %v2699 = vadd.f32 %v2674, %v2691
      %v2700 = vadd.f32 %v2675, %v2692
      %v2701 = vadd.f32 %v2676, %v2693
      %s2702 = scalar_lea.vmem %s7, 2368
      %v2703 = vld [vmem:[%s2702] sm:$0xff]
      %v2704 = vld [vmem:[%s2702 + $0x8] sm:$0xff]
      %v2705 = vld [vmem:[%s2702 + $0x10] sm:$0xff]
      %v2706 = vld [vmem:[%s2702 + $0x18] sm:$0xff]
      %v2707 = vld [vmem:[%s2702 + $0x20] sm:$0x1]
      %v2708 = vld [vmem:[%s2702 + $0x28] sm:$0x1]
      %v2709 = vld [vmem:[%s2702 + $0x30] sm:$0x1]
      %v2710 = vld [vmem:[%s2702 + $0x38] sm:$0x1]
      %v2711 = vmul.f32 %v2703, %v2325
      %v2712 = vmul.f32 %v2704, %v2323
      %v2713 = vmul.f32 %v2705, %v2321
      %v2714 = vmul.f32 %v2706, %v2319
      %v2715 = vmul.f32 %v2707, %v2326
      %v2716 = vmul.f32 %v2708, %v2324
      %v2717 = vmul.f32 %v2709, %v2322
      %v2718 = vmul.f32 %v2710, %v2320
      %v2719 = vadd.f32 %v2694, %v2711
      %v2720 = vadd.f32 %v2695, %v2712
      %v2721 = vadd.f32 %v2696, %v2713
      %v2722 = vadd.f32 %v2697, %v2714
      %v2723 = vadd.f32 %v2698, %v2715
      %v2724 = vadd.f32 %v2699, %v2716
      %v2725 = vadd.f32 %v2700, %v2717
      %v2726 = vadd.f32 %v2701, %v2718
      %s2727 = scalar_lea.vmem %s7, 2432
      %v2728 = vld [vmem:[%s2727] sm:$0xff]
      %v2729 = vld [vmem:[%s2727 + $0x8] sm:$0xff]
      %v2730 = vld [vmem:[%s2727 + $0x10] sm:$0xff]
      %v2731 = vld [vmem:[%s2727 + $0x18] sm:$0xff]
      %v2732 = vld [vmem:[%s2727 + $0x20] sm:$0x1]
      %v2733 = vld [vmem:[%s2727 + $0x28] sm:$0x1]
      %v2734 = vld [vmem:[%s2727 + $0x30] sm:$0x1]
      %v2735 = vld [vmem:[%s2727 + $0x38] sm:$0x1]
      %v2736 = vmul.f32 %v2728, %v2375
      %v2737 = vmul.f32 %v2729, %v2373
      %v2738 = vmul.f32 %v2730, %v2371
      %v2739 = vmul.f32 %v2731, %v2369
      %v2740 = vmul.f32 %v2732, %v2376
      %v2741 = vmul.f32 %v2733, %v2374
      %v2742 = vmul.f32 %v2734, %v2372
      %v2743 = vmul.f32 %v2735, %v2370
      %v2744 = vadd.f32 %v2719, %v2736
      %v2745 = vadd.f32 %v2720, %v2737
      %v2746 = vadd.f32 %v2721, %v2738
      %v2747 = vadd.f32 %v2722, %v2739
      %v2748 = vadd.f32 %v2723, %v2740
      %v2749 = vadd.f32 %v2724, %v2741
      %v2750 = vadd.f32 %v2725, %v2742
      %v2751 = vadd.f32 %v2726, %v2743
      %s2752 = scalar_lea.vmem %s7, 2496
      %v2753 = vld [vmem:[%s2752] sm:$0xff]
      %v2754 = vld [vmem:[%s2752 + $0x8] sm:$0xff]
      %v2755 = vld [vmem:[%s2752 + $0x10] sm:$0xff]
      %v2756 = vld [vmem:[%s2752 + $0x18] sm:$0xff]
      %v2757 = vld [vmem:[%s2752 + $0x20] sm:$0x1]
      %v2758 = vld [vmem:[%s2752 + $0x28] sm:$0x1]
      %v2759 = vld [vmem:[%s2752 + $0x30] sm:$0x1]
      %v2760 = vld [vmem:[%s2752 + $0x38] sm:$0x1]
      %v2761 = vmul.f32 %v2753, %v2425
      %v2762 = vmul.f32 %v2754, %v2423
      %v2763 = vmul.f32 %v2755, %v2421
      %v2764 = vmul.f32 %v2756, %v2419
      %v2765 = vmul.f32 %v2757, %v2426
      %v2766 = vmul.f32 %v2758, %v2424
      %v2767 = vmul.f32 %v2759, %v2422
      %v2768 = vmul.f32 %v2760, %v2420
      %v2769 = vadd.f32 %v2744, %v2761
      %v2770 = vadd.f32 %v2745, %v2762
      %v2771 = vadd.f32 %v2746, %v2763
      %v2772 = vadd.f32 %v2747, %v2764
      %v2773 = vadd.f32 %v2748, %v2765
      %v2774 = vadd.f32 %v2749, %v2766
      %v2775 = vadd.f32 %v2750, %v2767
      %v2776 = vadd.f32 %v2751, %v2768
      %s2777 = scalar_lea.vmem %s7, 2560
      %v2778 = vld [vmem:[%s2777] sm:$0xff]
      %v2779 = vld [vmem:[%s2777 + $0x8] sm:$0xff]
      %v2780 = vld [vmem:[%s2777 + $0x10] sm:$0xff]
      %v2781 = vld [vmem:[%s2777 + $0x18] sm:$0xff]
      %v2782 = vld [vmem:[%s2777 + $0x20] sm:$0x1]
      %v2783 = vld [vmem:[%s2777 + $0x28] sm:$0x1]
      %v2784 = vld [vmem:[%s2777 + $0x30] sm:$0x1]
      %v2785 = vld [vmem:[%s2777 + $0x38] sm:$0x1]
      %v2786 = vmul.f32 %v2778, %v2211
      %v2787 = vmul.f32 %v2779, %v2212
      %v2788 = vmul.f32 %v2780, %v2213
      %v2789 = vmul.f32 %v2781, %v2214
      %v2790 = vmul.f32 %v2782, %v2215
      %v2791 = vmul.f32 %v2783, %v2216
      %v2792 = vmul.f32 %v2784, %v2217
      %v2793 = vmul.f32 %v2785, %v2218
      %v2794 = vadd.f32 %v2769, %v2786
      %v2795 = vadd.f32 %v2770, %v2787
      %v2796 = vadd.f32 %v2771, %v2788
      %v2797 = vadd.f32 %v2772, %v2789
      %v2798 = vadd.f32 %v2773, %v2790
      %v2799 = vadd.f32 %v2774, %v2791
      %v2800 = vadd.f32 %v2775, %v2792
      %v2801 = vadd.f32 %v2776, %v2793
      %s2802 = scalar_lea.vmem %s7, 2624
      %v2803 = vld [vmem:[%s2802] sm:$0xff]
      %v2804 = vld [vmem:[%s2802 + $0x8] sm:$0xff]
      %v2805 = vld [vmem:[%s2802 + $0x10] sm:$0xff]
      %v2806 = vld [vmem:[%s2802 + $0x18] sm:$0xff]
      %v2807 = vld [vmem:[%s2802 + $0x20] sm:$0x1]
      %v2808 = vld [vmem:[%s2802 + $0x28] sm:$0x1]
      %v2809 = vld [vmem:[%s2802 + $0x30] sm:$0x1]
      %v2810 = vld [vmem:[%s2802 + $0x38] sm:$0x1]
      %v2811 = vmul.f32 %v2803, %v2498
      %v2812 = vmul.f32 %v2804, %v2496
      %v2813 = vmul.f32 %v2805, %v2494
      %v2814 = vmul.f32 %v2806, %v2500
      %v2815 = vmul.f32 %v2807, %v2499
      %v2816 = vmul.f32 %v2808, %v2497
      %v2817 = vmul.f32 %v2809, %v2495
      %v2818 = vmul.f32 %v2810, %v2501
      %v2819 = vadd.f32 %v2794, %v2811
      %v2820 = vadd.f32 %v2795, %v2812
      %v2821 = vadd.f32 %v2796, %v2813
      %v2822 = vadd.f32 %v2797, %v2814
      %v2823 = vadd.f32 %v2798, %v2815
      %v2824 = vadd.f32 %v2799, %v2816
      %v2825 = vadd.f32 %v2800, %v2817
      %v2826 = vadd.f32 %v2801, %v2818
      %s2827 = scalar_lea.vmem %s7, 2688
      %v2828 = vld [vmem:[%s2827] sm:$0xff]
      %v2829 = vld [vmem:[%s2827 + $0x8] sm:$0xff]
      %v2830 = vld [vmem:[%s2827 + $0x10] sm:$0xff]
      %v2831 = vld [vmem:[%s2827 + $0x18] sm:$0xff]
      %v2832 = vld [vmem:[%s2827 + $0x20] sm:$0x1]
      %v2833 = vld [vmem:[%s2827 + $0x28] sm:$0x1]
      %v2834 = vld [vmem:[%s2827 + $0x30] sm:$0x1]
      %v2835 = vld [vmem:[%s2827 + $0x38] sm:$0x1]
      %v2836 = vmul.f32 %v2828, %v2548
      %v2837 = vmul.f32 %v2829, %v2546
      %v2838 = vmul.f32 %v2830, %v2544
      %v2839 = vmul.f32 %v2831, %v2550
      %v2840 = vmul.f32 %v2832, %v2549
      %v2841 = vmul.f32 %v2833, %v2547
      %v2842 = vmul.f32 %v2834, %v2545
      %v2843 = vmul.f32 %v2835, %v2551
      %v2844 = vadd.f32 %v2819, %v2836
      %v2845 = vadd.f32 %v2820, %v2837
      %v2846 = vadd.f32 %v2821, %v2838
      %v2847 = vadd.f32 %v2822, %v2839
      %v2848 = vadd.f32 %v2823, %v2840
      %v2849 = vadd.f32 %v2824, %v2841
      %v2850 = vadd.f32 %v2825, %v2842
      %v2851 = vadd.f32 %v2826, %v2843
      %s2852 = scalar_lea.vmem %s7, 2752
      %v2853 = vld [vmem:[%s2852] sm:$0xff]
      %v2854 = vld [vmem:[%s2852 + $0x8] sm:$0xff]
      %v2855 = vld [vmem:[%s2852 + $0x10] sm:$0xff]
      %v2856 = vld [vmem:[%s2852 + $0x18] sm:$0xff]
      %v2857 = vld [vmem:[%s2852 + $0x20] sm:$0x1]
      %v2858 = vld [vmem:[%s2852 + $0x28] sm:$0x1]
      %v2859 = vld [vmem:[%s2852 + $0x30] sm:$0x1]
      %v2860 = vld [vmem:[%s2852 + $0x38] sm:$0x1]
      %v2861 = vmul.f32 %v2853, %v2598
      %v2862 = vmul.f32 %v2854, %v2596
      %v2863 = vmul.f32 %v2855, %v2594
      %v2864 = vmul.f32 %v2856, %v2600
      %v2865 = vmul.f32 %v2857, %v2599
      %v2866 = vmul.f32 %v2858, %v2597
      %v2867 = vmul.f32 %v2859, %v2595
      %v2868 = vmul.f32 %v2860, %v2601
      %v2869 = vadd.f32 %v2844, %v2861
      %v2870 = vadd.f32 %v2845, %v2862
      %v2871 = vadd.f32 %v2846, %v2863
      %v2872 = vadd.f32 %v2847, %v2864
      %v2873 = vadd.f32 %v2848, %v2865
      %v2874 = vadd.f32 %v2849, %v2866
      %v2875 = vadd.f32 %v2850, %v2867
      %v2876 = vadd.f32 %v2851, %v2868
      %s2877 = scalar_lea.vmem %s7, 2816
      %v2878 = vld [vmem:[%s2877] sm:$0xff]
      %v2879 = vld [vmem:[%s2877 + $0x8] sm:$0xff]
      %v2880 = vld [vmem:[%s2877 + $0x10] sm:$0xff]
      %v2881 = vld [vmem:[%s2877 + $0x18] sm:$0xff]
      %v2882 = vld [vmem:[%s2877 + $0x20] sm:$0x1]
      %v2883 = vld [vmem:[%s2877 + $0x28] sm:$0x1]
      %v2884 = vld [vmem:[%s2877 + $0x30] sm:$0x1]
      %v2885 = vld [vmem:[%s2877 + $0x38] sm:$0x1]
      %v2886 = vmul.f32 %v2878, %v2648
      %v2887 = vmul.f32 %v2879, %v2646
      %v2888 = vmul.f32 %v2880, %v2644
      %v2889 = vmul.f32 %v2881, %v2650
      %v2890 = vmul.f32 %v2882, %v2649
      %v2891 = vmul.f32 %v2883, %v2647
      %v2892 = vmul.f32 %v2884, %v2645
      %v2893 = vmul.f32 %v2885, %v2651
      %v2894 = vadd.f32 %v2869, %v2886
      %v2895 = vadd.f32 %v2870, %v2887
      %v2896 = vadd.f32 %v2871, %v2888
      %v2897 = vadd.f32 %v2872, %v2889
      %v2898 = vadd.f32 %v2873, %v2890
      %v2899 = vadd.f32 %v2874, %v2891
      %v2900 = vadd.f32 %v2875, %v2892
      %v2901 = vadd.f32 %v2876, %v2893
      %s2902 = scalar_lea.vmem %s7, 2880
      %v2903 = vld [vmem:[%s2902] sm:$0xff]
      %v2904 = vld [vmem:[%s2902 + $0x8] sm:$0xff]
      %v2905 = vld [vmem:[%s2902 + $0x10] sm:$0xff]
      %v2906 = vld [vmem:[%s2902 + $0x18] sm:$0xff]
      %v2907 = vld [vmem:[%s2902 + $0x20] sm:$0x1]
      %v2908 = vld [vmem:[%s2902 + $0x28] sm:$0x1]
      %v2909 = vld [vmem:[%s2902 + $0x30] sm:$0x1]
      %v2910 = vld [vmem:[%s2902 + $0x38] sm:$0x1]
      %v2911 = vmul.f32 %v2903, %v2273
      %v2912 = vmul.f32 %v2904, %v2271
      %v2913 = vmul.f32 %v2905, %v2269
      %v2914 = vmul.f32 %v2906, %v2275
      %v2915 = vmul.f32 %v2907, %v2274
      %v2916 = vmul.f32 %v2908, %v2272
      %v2917 = vmul.f32 %v2909, %v2270
      %v2918 = vmul.f32 %v2910, %v2276
      %v2919 = vadd.f32 %v2894, %v2911
      %v2920 = vadd.f32 %v2895, %v2912
      %v2921 = vadd.f32 %v2896, %v2913
      %v2922 = vadd.f32 %v2897, %v2914
      %v2923 = vadd.f32 %v2898, %v2915
      %v2924 = vadd.f32 %v2899, %v2916
      %v2925 = vadd.f32 %v2900, %v2917
      %v2926 = vadd.f32 %v2901, %v2918
      %s2927 = scalar_lea.vmem %s7, 2944
      %v2928 = vld [vmem:[%s2927] sm:$0xff]
      %v2929 = vld [vmem:[%s2927 + $0x8] sm:$0xff]
      %v2930 = vld [vmem:[%s2927 + $0x10] sm:$0xff]
      %v2931 = vld [vmem:[%s2927 + $0x18] sm:$0xff]
      %v2932 = vld [vmem:[%s2927 + $0x20] sm:$0x1]
      %v2933 = vld [vmem:[%s2927 + $0x28] sm:$0x1]
      %v2934 = vld [vmem:[%s2927 + $0x30] sm:$0x1]
      %v2935 = vld [vmem:[%s2927 + $0x38] sm:$0x1]
      %v2936 = vmul.f32 %v2928, %v2323
      %v2937 = vmul.f32 %v2929, %v2321
      %v2938 = vmul.f32 %v2930, %v2319
      %v2939 = vmul.f32 %v2931, %v2325
      %v2940 = vmul.f32 %v2932, %v2324
      %v2941 = vmul.f32 %v2933, %v2322
      %v2942 = vmul.f32 %v2934, %v2320
      %v2943 = vmul.f32 %v2935, %v2326
      %v2944 = vadd.f32 %v2919, %v2936
      %v2945 = vadd.f32 %v2920, %v2937
      %v2946 = vadd.f32 %v2921, %v2938
      %v2947 = vadd.f32 %v2922, %v2939
      %v2948 = vadd.f32 %v2923, %v2940
      %v2949 = vadd.f32 %v2924, %v2941
      %v2950 = vadd.f32 %v2925, %v2942
      %v2951 = vadd.f32 %v2926, %v2943
      %s2952 = scalar_lea.vmem %s7, 3008
      %v2953 = vld [vmem:[%s2952] sm:$0xff]
      %v2954 = vld [vmem:[%s2952 + $0x8] sm:$0xff]
      %v2955 = vld [vmem:[%s2952 + $0x10] sm:$0xff]
      %v2956 = vld [vmem:[%s2952 + $0x18] sm:$0xff]
      %v2957 = vld [vmem:[%s2952 + $0x20] sm:$0x1]
      %v2958 = vld [vmem:[%s2952 + $0x28] sm:$0x1]
      %v2959 = vld [vmem:[%s2952 + $0x30] sm:$0x1]
      %v2960 = vld [vmem:[%s2952 + $0x38] sm:$0x1]
      %v2961 = vmul.f32 %v2953, %v2373
      %v2962 = vmul.f32 %v2954, %v2371
      %v2963 = vmul.f32 %v2955, %v2369
      %v2964 = vmul.f32 %v2956, %v2375
      %v2965 = vmul.f32 %v2957, %v2374
      %v2966 = vmul.f32 %v2958, %v2372
      %v2967 = vmul.f32 %v2959, %v2370
      %v2968 = vmul.f32 %v2960, %v2376
      %v2969 = vadd.f32 %v2944, %v2961
      %v2970 = vadd.f32 %v2945, %v2962
      %v2971 = vadd.f32 %v2946, %v2963
      %v2972 = vadd.f32 %v2947, %v2964
      %v2973 = vadd.f32 %v2948, %v2965
      %v2974 = vadd.f32 %v2949, %v2966
      %v2975 = vadd.f32 %v2950, %v2967
      %v2976 = vadd.f32 %v2951, %v2968
      %s2977 = scalar_lea.vmem %s7, 3072
      %v2978 = vld [vmem:[%s2977] sm:$0xff]
      %v2979 = vld [vmem:[%s2977 + $0x8] sm:$0xff]
      %v2980 = vld [vmem:[%s2977 + $0x10] sm:$0xff]
      %v2981 = vld [vmem:[%s2977 + $0x18] sm:$0xff]
      %v2982 = vld [vmem:[%s2977 + $0x20] sm:$0x1]
      %v2983 = vld [vmem:[%s2977 + $0x28] sm:$0x1]
      %v2984 = vld [vmem:[%s2977 + $0x30] sm:$0x1]
      %v2985 = vld [vmem:[%s2977 + $0x38] sm:$0x1]
      %v2986 = vmul.f32 %v2978, %v2423
      %v2987 = vmul.f32 %v2979, %v2421
      %v2988 = vmul.f32 %v2980, %v2419
      %v2989 = vmul.f32 %v2981, %v2425
      %v2990 = vmul.f32 %v2982, %v2424
      %v2991 = vmul.f32 %v2983, %v2422
      %v2992 = vmul.f32 %v2984, %v2420
      %v2993 = vmul.f32 %v2985, %v2426
      %v2994 = vadd.f32 %v2969, %v2986
      %v2995 = vadd.f32 %v2970, %v2987
      %v2996 = vadd.f32 %v2971, %v2988
      %v2997 = vadd.f32 %v2972, %v2989
      %v2998 = vadd.f32 %v2973, %v2990
      %v2999 = vadd.f32 %v2974, %v2991
      %v3000 = vadd.f32 %v2975, %v2992
      %v3001 = vadd.f32 %v2976, %v2993
      %s3002 = scalar_lea.vmem %s7, 3136
      %v3003 = vld [vmem:[%s3002] sm:$0xff]
      %v3004 = vld [vmem:[%s3002 + $0x8] sm:$0xff]
      %v3005 = vld [vmem:[%s3002 + $0x10] sm:$0xff]
      %v3006 = vld [vmem:[%s3002 + $0x18] sm:$0xff]
      %v3007 = vld [vmem:[%s3002 + $0x20] sm:$0x1]
      %v3008 = vld [vmem:[%s3002 + $0x28] sm:$0x1]
      %v3009 = vld [vmem:[%s3002 + $0x30] sm:$0x1]
      %v3010 = vld [vmem:[%s3002 + $0x38] sm:$0x1]
      %v3011 = vmul.f32 %v3003, %v2212
      %v3012 = vmul.f32 %v3004, %v2213
      %v3013 = vmul.f32 %v3005, %v2214
      %v3014 = vmul.f32 %v3006, %v2211
      %v3015 = vmul.f32 %v3007, %v2216
      %v3016 = vmul.f32 %v3008, %v2217
      %v3017 = vmul.f32 %v3009, %v2218
      %v3018 = vmul.f32 %v3010, %v2215
      %v3019 = vadd.f32 %v2994, %v3011
      %v3020 = vadd.f32 %v2995, %v3012
      %v3021 = vadd.f32 %v2996, %v3013
      %v3022 = vadd.f32 %v2997, %v3014
      %v3023 = vadd.f32 %v2998, %v3015
      %v3024 = vadd.f32 %v2999, %v3016
      %v3025 = vadd.f32 %v3000, %v3017
      %v3026 = vadd.f32 %v3001, %v3018
      %s3027 = scalar_lea.vmem %s7, 3200
      %v3028 = vld [vmem:[%s3027] sm:$0xff]
      %v3029 = vld [vmem:[%s3027 + $0x8] sm:$0xff]
      %v3030 = vld [vmem:[%s3027 + $0x10] sm:$0xff]
      %v3031 = vld [vmem:[%s3027 + $0x18] sm:$0xff]
      %v3032 = vld [vmem:[%s3027 + $0x20] sm:$0x1]
      %v3033 = vld [vmem:[%s3027 + $0x28] sm:$0x1]
      %v3034 = vld [vmem:[%s3027 + $0x30] sm:$0x1]
      %v3035 = vld [vmem:[%s3027 + $0x38] sm:$0x1]
      %v3036 = vmul.f32 %v3028, %v2496
      %v3037 = vmul.f32 %v3029, %v2494
      %v3038 = vmul.f32 %v3030, %v2500
      %v3039 = vmul.f32 %v3031, %v2498
      %v3040 = vmul.f32 %v3032, %v2497
      %v3041 = vmul.f32 %v3033, %v2495
      %v3042 = vmul.f32 %v3034, %v2501
      %v3043 = vmul.f32 %v3035, %v2499
      %v3044 = vadd.f32 %v3019, %v3036
      %v3045 = vadd.f32 %v3020, %v3037
      %v3046 = vadd.f32 %v3021, %v3038
      %v3047 = vadd.f32 %v3022, %v3039
      %v3048 = vadd.f32 %v3023, %v3040
      %v3049 = vadd.f32 %v3024, %v3041
      %v3050 = vadd.f32 %v3025, %v3042
      %v3051 = vadd.f32 %v3026, %v3043
      %s3052 = scalar_lea.vmem %s7, 3264
      %v3053 = vld [vmem:[%s3052] sm:$0xff]
      %v3054 = vld [vmem:[%s3052 + $0x8] sm:$0xff]
      %v3055 = vld [vmem:[%s3052 + $0x10] sm:$0xff]
      %v3056 = vld [vmem:[%s3052 + $0x18] sm:$0xff]
      %v3057 = vld [vmem:[%s3052 + $0x20] sm:$0x1]
      %v3058 = vld [vmem:[%s3052 + $0x28] sm:$0x1]
      %v3059 = vld [vmem:[%s3052 + $0x30] sm:$0x1]
      %v3060 = vld [vmem:[%s3052 + $0x38] sm:$0x1]
      %v3061 = vmul.f32 %v3053, %v2546
      %v3062 = vmul.f32 %v3054, %v2544
      %v3063 = vmul.f32 %v3055, %v2550
      %v3064 = vmul.f32 %v3056, %v2548
      %v3065 = vmul.f32 %v3057, %v2547
      %v3066 = vmul.f32 %v3058, %v2545
      %v3067 = vmul.f32 %v3059, %v2551
      %v3068 = vmul.f32 %v3060, %v2549
      %v3069 = vadd.f32 %v3044, %v3061
      %v3070 = vadd.f32 %v3045, %v3062
      %v3071 = vadd.f32 %v3046, %v3063
      %v3072 = vadd.f32 %v3047, %v3064
      %v3073 = vadd.f32 %v3048, %v3065
      %v3074 = vadd.f32 %v3049, %v3066
      %v3075 = vadd.f32 %v3050, %v3067
      %v3076 = vadd.f32 %v3051, %v3068
      %s3077 = scalar_lea.vmem %s7, 3328
      %v3078 = vld [vmem:[%s3077] sm:$0xff]
      %v3079 = vld [vmem:[%s3077 + $0x8] sm:$0xff]
      %v3080 = vld [vmem:[%s3077 + $0x10] sm:$0xff]
      %v3081 = vld [vmem:[%s3077 + $0x18] sm:$0xff]
      %v3082 = vld [vmem:[%s3077 + $0x20] sm:$0x1]
      %v3083 = vld [vmem:[%s3077 + $0x28] sm:$0x1]
      %v3084 = vld [vmem:[%s3077 + $0x30] sm:$0x1]
      %v3085 = vld [vmem:[%s3077 + $0x38] sm:$0x1]
      %v3086 = vmul.f32 %v3078, %v2596
      %v3087 = vmul.f32 %v3079, %v2594
      %v3088 = vmul.f32 %v3080, %v2600
      %v3089 = vmul.f32 %v3081, %v2598
      %v3090 = vmul.f32 %v3082, %v2597
      %v3091 = vmul.f32 %v3083, %v2595
      %v3092 = vmul.f32 %v3084, %v2601
      %v3093 = vmul.f32 %v3085, %v2599
      %v3094 = vadd.f32 %v3069, %v3086
      %v3095 = vadd.f32 %v3070, %v3087
      %v3096 = vadd.f32 %v3071, %v3088
      %v3097 = vadd.f32 %v3072, %v3089
      %v3098 = vadd.f32 %v3073, %v3090
      %v3099 = vadd.f32 %v3074, %v3091
      %v3100 = vadd.f32 %v3075, %v3092
      %v3101 = vadd.f32 %v3076, %v3093
      %s3102 = scalar_lea.vmem %s7, 3392
      %v3103 = vld [vmem:[%s3102] sm:$0xff]
      %v3104 = vld [vmem:[%s3102 + $0x8] sm:$0xff]
      %v3105 = vld [vmem:[%s3102 + $0x10] sm:$0xff]
      %v3106 = vld [vmem:[%s3102 + $0x18] sm:$0xff]
      %v3107 = vld [vmem:[%s3102 + $0x20] sm:$0x1]
      %v3108 = vld [vmem:[%s3102 + $0x28] sm:$0x1]
      %v3109 = vld [vmem:[%s3102 + $0x30] sm:$0x1]
      %v3110 = vld [vmem:[%s3102 + $0x38] sm:$0x1]
      %v3111 = vmul.f32 %v3103, %v2646
      %v3112 = vmul.f32 %v3104, %v2644
      %v3113 = vmul.f32 %v3105, %v2650
      %v3114 = vmul.f32 %v3106, %v2648
      %v3115 = vmul.f32 %v3107, %v2647
      %v3116 = vmul.f32 %v3108, %v2645
      %v3117 = vmul.f32 %v3109, %v2651
      %v3118 = vmul.f32 %v3110, %v2649
      %v3119 = vadd.f32 %v3094, %v3111
      %v3120 = vadd.f32 %v3095, %v3112
      %v3121 = vadd.f32 %v3096, %v3113
      %v3122 = vadd.f32 %v3097, %v3114
      %v3123 = vadd.f32 %v3098, %v3115
      %v3124 = vadd.f32 %v3099, %v3116
      %v3125 = vadd.f32 %v3100, %v3117
      %v3126 = vadd.f32 %v3101, %v3118
      %s3127 = scalar_lea.vmem %s6, 16
      %v3128 = vld [vmem:[%s3127] sm:$0xff]
      %v3129 = vld [vmem:[%s3127 + $0x8] sm:$0x1]
      %3131 = vset.pattern.permute.xlu0 0
      %3132 = vperm.xlu0 %3131, %v2250
      %v3133 = vpop.permute.xlu0 %3132
      %3136 = vset.pattern.permute.xlu0 0
      %3137 = vperm.xlu0 %3136, %v2251
      %v3138 = vpop.permute.xlu0 %3137
      %v3140 = vmul.f32 %v3133, %v3119
      %v3141 = vmul.f32 %v3133, %v3120
      %v3142 = vmul.f32 %v3133, %v3121
      %v3143 = vmul.f32 %v3133, %v3122
      %v3144 = vmul.f32 %v3138, %v3123
      %v3145 = vmul.f32 %v3138, %v3124
      %v3146 = vmul.f32 %v3138, %v3125
      %v3147 = vmul.f32 %v3138, %v3126
      %3149 = vset.pattern.permute.xlu0 0
      %3150 = vperm.xlu0 %3149, %v3128
      %v3151 = vpop.permute.xlu0 %3150
      %3154 = vset.pattern.permute.xlu0 0
      %3155 = vperm.xlu0 %3154, %v3129
      %v3156 = vpop.permute.xlu0 %3155
      %v3158 = vadd.f32 %v3151, %v3140
      %v3159 = vadd.f32 %v3151, %v3141
      %v3160 = vadd.f32 %v3151, %v3142
      %v3161 = vadd.f32 %v3151, %v3143
      %v3162 = vadd.f32 %v3156, %v3144
      %v3163 = vadd.f32 %v3156, %v3145
      %v3164 = vadd.f32 %v3156, %v3146
      %v3165 = vadd.f32 %v3156, %v3147
      %s3166 = scalar_lea.vmem %s5, 16
      %v3167 = vld [vmem:[%s3166] sm:$0xff]
      %v3168 = vld [vmem:[%s3166 + $0x8] sm:$0x1]
      %s3169 = scalar_lea.vmem %s8, 64
      %v3170 = vld [vmem:[%s3169] sm:$0xff]
      %v3171 = vld [vmem:[%s3169 + $0x8] sm:$0xff]
      %v3172 = vld [vmem:[%s3169 + $0x10] sm:$0xff]
      %v3173 = vld [vmem:[%s3169 + $0x18] sm:$0xff]
      %v3174 = vld [vmem:[%s3169 + $0x20] sm:$0x1]
      %v3175 = vld [vmem:[%s3169 + $0x28] sm:$0x1]
      %v3176 = vld [vmem:[%s3169 + $0x30] sm:$0x1]
      %v3177 = vld [vmem:[%s3169 + $0x38] sm:$0x1]
      %3179 = vset.pattern.permute.xlu0 0
      %3180 = vperm.xlu0 %3179, %v3167
      %v3181 = vpop.permute.xlu0 %3180
      %3184 = vset.pattern.permute.xlu0 0
      %3185 = vperm.xlu0 %3184, %v3168
      %v3186 = vpop.permute.xlu0 %3185
      %v3188 = vmul.f32 %v3181, %v3170
      %v3189 = vmul.f32 %v3181, %v3171
      %v3190 = vmul.f32 %v3181, %v3172
      %v3191 = vmul.f32 %v3181, %v3173
      %v3192 = vmul.f32 %v3186, %v3174
      %v3193 = vmul.f32 %v3186, %v3175
      %v3194 = vmul.f32 %v3186, %v3176
      %v3195 = vmul.f32 %v3186, %v3177
      %v3196 = vadd.f32 %v3158, %v3188
      %v3197 = vadd.f32 %v3159, %v3189
      %v3198 = vadd.f32 %v3160, %v3190
      %v3199 = vadd.f32 %v3161, %v3191
      %v3200 = vadd.f32 %v3162, %v3192
      %v3201 = vadd.f32 %v3163, %v3193
      %v3202 = vadd.f32 %v3164, %v3194
      %v3203 = vadd.f32 %v3165, %v3195
      %v3204 = vadd.f32 %v3196, %v3197
      %v3205 = vadd.f32 %v3204, %v3198
      %v3206 = vadd.f32 %v3205, %v3199
      %3207 = vadd.xlane.f32.xlu0 %v3206
      %v3208 = vpop.xlane.xlu0 %3207
      %v3209 = vsel %vm678, %v3200, 0.0
      %v3210 = vsel %vm678, %v3201, 0.0
      %v3211 = vadd.f32 %v3209, %v3210
      %v3212 = vsel %vm678, %v3202, 0.0
      %v3213 = vadd.f32 %v3211, %v3212
      %v3214 = vsel %vm678, %v3203, 0.0
      %v3215 = vadd.f32 %v3213, %v3214
      %3216 = vadd.xlane.f32.xlu0 %v3215
      %v3217 = vpop.xlane.xlu0 %3216
      %v3218 = vmul.f32 %v3208, %v688
      %v3219 = vmul.f32 %v3217, %v688
      %v3220 = vsub.f32 %v3196, %v3218
      %v3221 = vsub.f32 %v3197, %v3218
      %v3222 = vsub.f32 %v3198, %v3218
      %v3223 = vsub.f32 %v3199, %v3218
      %v3224 = vsub.f32 %v3200, %v3219
      %v3225 = vsub.f32 %v3201, %v3219
      %v3226 = vsub.f32 %v3202, %v3219
      %v3227 = vsub.f32 %v3203, %v3219
      %v3228 = vmul.f32 %v3220, %v3220
      %v3229 = vmul.f32 %v3221, %v3221
      %v3230 = vmul.f32 %v3222, %v3222
      %v3231 = vmul.f32 %v3223, %v3223
      %v3232 = vmul.f32 %v3224, %v3224
      %v3233 = vmul.f32 %v3225, %v3225
      %v3234 = vmul.f32 %v3226, %v3226
      %v3235 = vmul.f32 %v3227, %v3227
      %v3236 = vadd.f32 %v3228, %v3229
      %v3237 = vadd.f32 %v3236, %v3230
      %v3238 = vadd.f32 %v3237, %v3231
      %3239 = vadd.xlane.f32.xlu0 %v3238
      %v3240 = vpop.xlane.xlu0 %3239
      %v3241 = vsel %vm678, %v3232, 0.0
      %v3242 = vsel %vm678, %v3233, 0.0
      %v3243 = vadd.f32 %v3241, %v3242
      %v3244 = vsel %vm678, %v3234, 0.0
      %v3245 = vadd.f32 %v3243, %v3244
      %v3246 = vsel %vm678, %v3235, 0.0
      %v3247 = vadd.f32 %v3245, %v3246
      %3248 = vadd.xlane.f32.xlu0 %v3247
      %v3249 = vpop.xlane.xlu0 %3248
      %v3250 = vmul.f32 %v3240, %v688
      %v3251 = vmul.f32 %v3249, %v688
      %s3252 = scalar_lea.vmem %s9, 16
      %v3253 = vld [vmem:[%s3252] sm:$0xff]
      %v3254 = vld [vmem:[%s3252 + $0x8] sm:$0x1]
      %v3255 = vadd.f32 %v3250, 1e-06
      %v3256 = vadd.f32 %v3251, 1e-06
      %v3257 = vrsqrt.pop %v3255
      %v3258 = vrsqrt.pop %v3256
      %v3259 = vmul.f32 %v3253, %v3257
      %v3260 = vmul.f32 %v3254, %v3258
      %3262 = vset.pattern.permute.xlu0 0
      %3263 = vperm.xlu0 %3262, %v3259
      %v3264 = vpop.permute.xlu0 %3263
      %3267 = vset.pattern.permute.xlu0 0
      %3268 = vperm.xlu0 %3267, %v3260
      %v3269 = vpop.permute.xlu0 %3268
      %v3271 = vmul.f32 %v3220, %v3264
      %v3272 = vmul.f32 %v3221, %v3264
      %v3273 = vmul.f32 %v3222, %v3264
      %v3274 = vmul.f32 %v3223, %v3264
      %v3275 = vmul.f32 %v3224, %v3269
      %v3276 = vmul.f32 %v3225, %v3269
      %v3277 = vmul.f32 %v3226, %v3269
      %v3278 = vmul.f32 %v3227, %v3269
      %s3279 = scalar_lea.vmem %s10, 16
      %v3280 = vld [vmem:[%s3279] sm:$0xff]
      %v3281 = vld [vmem:[%s3279 + $0x8] sm:$0x1]
      %3283 = vset.pattern.permute.xlu0 0
      %3284 = vperm.xlu0 %3283, %v3280
      %v3285 = vpop.permute.xlu0 %3284
      %3288 = vset.pattern.permute.xlu0 0
      %3289 = vperm.xlu0 %3288, %v3281
      %v3290 = vpop.permute.xlu0 %3289
      %v3292 = vadd.f32 %v3271, %v3285
      %v3293 = vadd.f32 %v3272, %v3285
      %v3294 = vadd.f32 %v3273, %v3285
      %v3295 = vadd.f32 %v3274, %v3285
      %v3296 = vadd.f32 %v3275, %v3290
      %v3297 = vadd.f32 %v3276, %v3290
      %v3298 = vadd.f32 %v3277, %v3290
      %v3299 = vadd.f32 %v3278, %v3290
      %s3300 = scalar_lea.vmem %s11, 16
      %v3301 = vld [vmem:[%s3300] sm:$0xff]
      %v3302 = vld [vmem:[%s3300 + $0x8] sm:$0xff]
      %vm3303 = vcmask 72704
      %v3305 = vsel %vm3303, %v3301, 0
      %v3308 = vsel %vm3303, %v3302, 0
      %v3311 = vsel %vm678, %v3296, 0
      %v3314 = vsel %vm678, %v3297, 0
      %v3317 = vsel %vm678, %v3298, 0
      %v3320 = vsel %vm678, %v3299, 0
      %3322 = vmatprep.subr.mxu0 %v3293
      %3323 = vmatpush1.msra.mxu0 %v3292
      %3324 = vmatprep.subr.mxu0 %v3314
      %3325 = vmatpush1.msra.mxu0 %v3311
      %3326 = vmatprep.subr.mxu0 0.0
      %3327 = vmatpush1.msra.mxu0 0.0
      %3328 = vmatprep.subr.mxu0 0.0
      %3329 = vmatpush1.msra.mxu0 0.0
      %3330 = vmatprep.subr.mxu0 0.0
      %3331 = vmatpush1.msra.mxu0 0.0
      %3332 = vmatprep.subr.mxu0 0.0
      %3333 = vmatpush1.msra.mxu0 0.0
      %3334 = vmatprep.subr.mxu0 0.0
      %3335 = vmatpush1.msra.mxu0 0.0
      %3336 = vmatprep.subr.mxu0 0.0
      %3337 = vmatpush1.msra.mxu0 0.0
      %3338 = vmatprep.subr.mxu0 0.0
      %3339 = vmatpush1.msra.mxu0 0.0
      %3340 = vmatprep.subr.mxu0 0.0
      %3341 = vmatpush1.msra.mxu0 0.0
      %3342 = vmatprep.subr.mxu0 0.0
      %3343 = vmatpush1.msra.mxu0 0.0
      %3344 = vmatprep.subr.mxu0 0.0
      %3345 = vmatpush1.msra.mxu0 0.0
      %3346 = vmatprep.subr.mxu0 0.0
      %3347 = vmatpush1.msra.mxu0 0.0
      %3348 = vmatprep.subr.mxu0 0.0
      %3349 = vmatpush1.msra.mxu0 0.0
      %3350 = vmatprep.subr.mxu0 0.0
      %3351 = vmatpush1.msra.mxu0 0.0
      %3352 = vmatprep.subr.mxu0 0.0
      %3353 = vmatpush1.msra.mxu0 0.0
      %3354 = vmatprep.subr.mxu0 0.0
      %3355 = vmatpush1.msra.mxu0 0.0
      %3356 = vmatprep.subr.mxu0 0.0
      %3357 = vmatpush1.msra.mxu0 0.0
      %3358 = vmatprep.subr.mxu0 0.0
      %3359 = vmatpush1.msra.mxu0 0.0
      %3360 = vmatprep.subr.mxu0 0.0
      %3361 = vmatpush1.msra.mxu0 0.0
      %3362 = vmatprep.subr.mxu0 0.0
      %3363 = vmatpush1.msra.mxu0 0.0
      %3364 = vmatprep.subr.mxu0 0.0
      %3365 = vmatpush1.msra.mxu0 0.0
      %3366 = vmatprep.subr.mxu0 0.0
      %3367 = vmatpush1.msra.mxu0 0.0
      %3368 = vmatprep.subr.mxu0 0.0
      %3369 = vmatpush1.msra.mxu0 0.0
      %3370 = vmatprep.subr.mxu0 0.0
      %3371 = vmatpush1.msra.mxu0 0.0
      %3372 = vmatprep.subr.mxu0 0.0
      %3373 = vmatpush1.msra.mxu0 0.0
      %3374 = vmatprep.subr.mxu0 0.0
      %3375 = vmatpush1.msra.mxu0 0.0
      %3376 = vmatprep.subr.mxu0 0.0
      %3377 = vmatpush1.msra.mxu0 0.0
      %3378 = vmatprep.subr.mxu0 0.0
      %3379 = vmatpush1.msra.mxu0 0.0
      %3380 = vmatprep.subr.mxu0 0.0
      %3381 = vmatpush1.msra.mxu0 0.0
      %3382 = vmatprep.subr.mxu0 0.0
      %3383 = vmatpush1.msra.mxu0 0.0
      %3384 = vmatprep.subr.mxu0 0.0
      %3385 = vmatpush1.msra.mxu0 0.0
      %3386 = vmatprep.mubr.f32.mxu0 0.0
      %3387 = vmatmul.mubr.f32.gmra.mrb[0].mxu0 %v3305
      %v3388 = vpop.f32.mrb[0].mxu0
      %v3389 = vadd.f32 0.0, %v3388
      %v3390 = vpop.f32.mrb[0].mxu0
      %v3391 = vadd.f32 0.0, %v3390
      %3392 = vmatprep.mubr.f32.mxu0 0.0
      %3393 = vmatmul.mubr.f32.gmra.mrb[0].mxu0 %v3308
      %v3394 = vpop.f32.mrb[0].mxu0
      %v3395 = vadd.f32 0.0, %v3394
      %v3396 = vpop.f32.mrb[0].mxu0
      %v3397 = vadd.f32 0.0, %v3396
      %3398 = vdwg.mxu0
      %3399 = vmatprep.subr.mxu0 %v3295
      %3400 = vmatpush1.msra.mxu0 %v3294
      %3401 = vmatprep.subr.mxu0 %v3320
      %3402 = vmatpush1.msra.mxu0 %v3317
      %3403 = vmatprep.subr.mxu0 0.0
      %3404 = vmatpush1.msra.mxu0 0.0
      %3405 = vmatprep.subr.mxu0 0.0
      %3406 = vmatpush1.msra.mxu0 0.0
      %3407 = vmatprep.subr.mxu0 0.0
      %3408 = vmatpush1.msra.mxu0 0.0
      %3409 = vmatprep.subr.mxu0 0.0
      %3410 = vmatpush1.msra.mxu0 0.0
      %3411 = vmatprep.subr.mxu0 0.0
      %3412 = vmatpush1.msra.mxu0 0.0
      %3413 = vmatprep.subr.mxu0 0.0
      %3414 = vmatpush1.msra.mxu0 0.0
      %3415 = vmatprep.subr.mxu0 0.0
      %3416 = vmatpush1.msra.mxu0 0.0
      %3417 = vmatprep.subr.mxu0 0.0
      %3418 = vmatpush1.msra.mxu0 0.0
      %3419 = vmatprep.subr.mxu0 0.0
      %3420 = vmatpush1.msra.mxu0 0.0
      %3421 = vmatprep.subr.mxu0 0.0
      %3422 = vmatpush1.msra.mxu0 0.0
      %3423 = vmatprep.subr.mxu0 0.0
      %3424 = vmatpush1.msra.mxu0 0.0
      %3425 = vmatprep.subr.mxu0 0.0
      %3426 = vmatpush1.msra.mxu0 0.0
      %3427 = vmatprep.subr.mxu0 0.0
      %3428 = vmatpush1.msra.mxu0 0.0
      %3429 = vmatprep.subr.mxu0 0.0
      %3430 = vmatpush1.msra.mxu0 0.0
      %3431 = vmatprep.subr.mxu0 0.0
      %3432 = vmatpush1.msra.mxu0 0.0
      %3433 = vmatprep.subr.mxu0 0.0
      %3434 = vmatpush1.msra.mxu0 0.0
      %3435 = vmatprep.subr.mxu0 0.0
      %3436 = vmatpush1.msra.mxu0 0.0
      %3437 = vmatprep.subr.mxu0 0.0
      %3438 = vmatpush1.msra.mxu0 0.0
      %3439 = vmatprep.subr.mxu0 0.0
      %3440 = vmatpush1.msra.mxu0 0.0
      %3441 = vmatprep.subr.mxu0 0.0
      %3442 = vmatpush1.msra.mxu0 0.0
      %3443 = vmatprep.subr.mxu0 0.0
      %3444 = vmatpush1.msra.mxu0 0.0
      %3445 = vmatprep.subr.mxu0 0.0
      %3446 = vmatpush1.msra.mxu0 0.0
      %3447 = vmatprep.subr.mxu0 0.0
      %3448 = vmatpush1.msra.mxu0 0.0
      %3449 = vmatprep.subr.mxu0 0.0
      %3450 = vmatpush1.msra.mxu0 0.0
      %3451 = vmatprep.subr.mxu0 0.0
      %3452 = vmatpush1.msra.mxu0 0.0
      %3453 = vmatprep.subr.mxu0 0.0
      %3454 = vmatpush1.msra.mxu0 0.0
      %3455 = vmatprep.subr.mxu0 0.0
      %3456 = vmatpush1.msra.mxu0 0.0
      %3457 = vmatprep.subr.mxu0 0.0
      %3458 = vmatpush1.msra.mxu0 0.0
      %3459 = vmatprep.subr.mxu0 0.0
      %3460 = vmatpush1.msra.mxu0 0.0
      %3461 = vmatprep.subr.mxu0 0.0
      %3462 = vmatpush1.msra.mxu0 0.0
      %3463 = vmatprep.mubr.f32.mxu0 0.0
      %3464 = vmatmul.mubr.f32.gmra.mrb[0].mxu0 %v3305
      %v3465 = vpop.f32.mrb[0].mxu0
      %v3466 = vadd.f32 0.0, %v3465
      %v3467 = vpop.f32.mrb[0].mxu0
      %v3468 = vadd.f32 0.0, %v3467
      %3469 = vmatprep.mubr.f32.mxu0 0.0
      %3470 = vmatmul.mubr.f32.gmra.mrb[0].mxu0 %v3308
      %v3471 = vpop.f32.mrb[0].mxu0
      %v3472 = vadd.f32 0.0, %v3471
      %v3473 = vpop.f32.mrb[0].mxu0
      %v3474 = vadd.f32 0.0, %v3473
      %3475 = vdwg.mxu0
      %v3477 = vsel %vm3303, %v2000, 0
      %v3480 = vsel %vm3303, %v2001, 0
      %v3483 = vsel %vm678, %v1996, 0
      %v3486 = vsel %vm678, %v1997, 0
      %v3489 = vsel %vm678, %v1998, 0
      %v3492 = vsel %vm678, %v1999, 0
      %3494 = vmatprep.subr.mxu0 %v1993
      %3495 = vmatpush1.msra.mxu0 %v1992
      %3496 = vmatprep.subr.mxu0 %v3486
      %3497 = vmatpush1.msra.mxu0 %v3483
      %3498 = vmatprep.subr.mxu0 0.0
      %3499 = vmatpush1.msra.mxu0 0.0
      %3500 = vmatprep.subr.mxu0 0.0
      %3501 = vmatpush1.msra.mxu0 0.0
      %3502 = vmatprep.subr.mxu0 0.0
      %3503 = vmatpush1.msra.mxu0 0.0
      %3504 = vmatprep.subr.mxu0 0.0
      %3505 = vmatpush1.msra.mxu0 0.0
      %3506 = vmatprep.subr.mxu0 0.0
      %3507 = vmatpush1.msra.mxu0 0.0
      %3508 = vmatprep.subr.mxu0 0.0
      %3509 = vmatpush1.msra.mxu0 0.0
      %3510 = vmatprep.subr.mxu0 0.0
      %3511 = vmatpush1.msra.mxu0 0.0
      %3512 = vmatprep.subr.mxu0 0.0
      %3513 = vmatpush1.msra.mxu0 0.0
      %3514 = vmatprep.subr.mxu0 0.0
      %3515 = vmatpush1.msra.mxu0 0.0
      %3516 = vmatprep.subr.mxu0 0.0
      %3517 = vmatpush1.msra.mxu0 0.0
      %3518 = vmatprep.subr.mxu0 0.0
      %3519 = vmatpush1.msra.mxu0 0.0
      %3520 = vmatprep.subr.mxu0 0.0
      %3521 = vmatpush1.msra.mxu0 0.0
      %3522 = vmatprep.subr.mxu0 0.0
      %3523 = vmatpush1.msra.mxu0 0.0
      %3524 = vmatprep.subr.mxu0 0.0
      %3525 = vmatpush1.msra.mxu0 0.0
      %3526 = vmatprep.subr.mxu0 0.0
      %3527 = vmatpush1.msra.mxu0 0.0
      %3528 = vmatprep.subr.mxu0 0.0
      %3529 = vmatpush1.msra.mxu0 0.0
      %3530 = vmatprep.subr.mxu0 0.0
      %3531 = vmatpush1.msra.mxu0 0.0
      %3532 = vmatprep.subr.mxu0 0.0
      %3533 = vmatpush1.msra.mxu0 0.0
      %3534 = vmatprep.subr.mxu0 0.0
      %3535 = vmatpush1.msra.mxu0 0.0
      %3536 = vmatprep.subr.mxu0 0.0
      %3537 = vmatpush1.msra.mxu0 0.0
      %3538 = vmatprep.subr.mxu0 0.0
      %3539 = vmatpush1.msra.mxu0 0.0
      %3540 = vmatprep.subr.mxu0 0.0
      %3541 = vmatpush1.msra.mxu0 0.0
      %3542 = vmatprep.subr.mxu0 0.0
      %3543 = vmatpush1.msra.mxu0 0.0
      %3544 = vmatprep.subr.mxu0 0.0
      %3545 = vmatpush1.msra.mxu0 0.0
      %3546 = vmatprep.subr.mxu0 0.0
      %3547 = vmatpush1.msra.mxu0 0.0
      %3548 = vmatprep.subr.mxu0 0.0
      %3549 = vmatpush1.msra.mxu0 0.0
      %3550 = vmatprep.subr.mxu0 0.0
      %3551 = vmatpush1.msra.mxu0 0.0
      %3552 = vmatprep.subr.mxu0 0.0
      %3553 = vmatpush1.msra.mxu0 0.0
      %3554 = vmatprep.subr.mxu0 0.0
      %3555 = vmatpush1.msra.mxu0 0.0
      %3556 = vmatprep.subr.mxu0 0.0
      %3557 = vmatpush1.msra.mxu0 0.0
      %3558 = vmatprep.mubr.f32.mxu0 0.0
      %3559 = vmatmul.mubr.f32.gmra.mrb[0].mxu0 %v3477
      %v3560 = vpop.f32.mrb[0].mxu0
      %v3561 = vadd.f32 %v3389, %v3560
      %v3562 = vpop.f32.mrb[0].mxu0
      %v3563 = vadd.f32 %v3391, %v3562
      %3564 = vmatprep.mubr.f32.mxu0 0.0
      %3565 = vmatmul.mubr.f32.gmra.mrb[0].mxu0 %v3480
      %v3566 = vpop.f32.mrb[0].mxu0
      %v3567 = vadd.f32 %v3395, %v3566
      %v3568 = vpop.f32.mrb[0].mxu0
      %v3569 = vadd.f32 %v3397, %v3568
      %3570 = vdwg.mxu0
      %3571 = vmatprep.subr.mxu0 %v1995
      %3572 = vmatpush1.msra.mxu0 %v1994
      %3573 = vmatprep.subr.mxu0 %v3492
      %3574 = vmatpush1.msra.mxu0 %v3489
      %3575 = vmatprep.subr.mxu0 0.0
      %3576 = vmatpush1.msra.mxu0 0.0
      %3577 = vmatprep.subr.mxu0 0.0
      %3578 = vmatpush1.msra.mxu0 0.0
      %3579 = vmatprep.subr.mxu0 0.0
      %3580 = vmatpush1.msra.mxu0 0.0
      %3581 = vmatprep.subr.mxu0 0.0
      %3582 = vmatpush1.msra.mxu0 0.0
      %3583 = vmatprep.subr.mxu0 0.0
      %3584 = vmatpush1.msra.mxu0 0.0
      %3585 = vmatprep.subr.mxu0 0.0
      %3586 = vmatpush1.msra.mxu0 0.0
      %3587 = vmatprep.subr.mxu0 0.0
      %3588 = vmatpush1.msra.mxu0 0.0
      %3589 = vmatprep.subr.mxu0 0.0
      %3590 = vmatpush1.msra.mxu0 0.0
      %3591 = vmatprep.subr.mxu0 0.0
      %3592 = vmatpush1.msra.mxu0 0.0
      %3593 = vmatprep.subr.mxu0 0.0
      %3594 = vmatpush1.msra.mxu0 0.0
      %3595 = vmatprep.subr.mxu0 0.0
      %3596 = vmatpush1.msra.mxu0 0.0
      %3597 = vmatprep.subr.mxu0 0.0
      %3598 = vmatpush1.msra.mxu0 0.0
      %3599 = vmatprep.subr.mxu0 0.0
      %3600 = vmatpush1.msra.mxu0 0.0
      %3601 = vmatprep.subr.mxu0 0.0
      %3602 = vmatpush1.msra.mxu0 0.0
      %3603 = vmatprep.subr.mxu0 0.0
      %3604 = vmatpush1.msra.mxu0 0.0
      %3605 = vmatprep.subr.mxu0 0.0
      %3606 = vmatpush1.msra.mxu0 0.0
      %3607 = vmatprep.subr.mxu0 0.0
      %3608 = vmatpush1.msra.mxu0 0.0
      %3609 = vmatprep.subr.mxu0 0.0
      %3610 = vmatpush1.msra.mxu0 0.0
      %3611 = vmatprep.subr.mxu0 0.0
      %3612 = vmatpush1.msra.mxu0 0.0
      %3613 = vmatprep.subr.mxu0 0.0
      %3614 = vmatpush1.msra.mxu0 0.0
      %3615 = vmatprep.subr.mxu0 0.0
      %3616 = vmatpush1.msra.mxu0 0.0
      %3617 = vmatprep.subr.mxu0 0.0
      %3618 = vmatpush1.msra.mxu0 0.0
      %3619 = vmatprep.subr.mxu0 0.0
      %3620 = vmatpush1.msra.mxu0 0.0
      %3621 = vmatprep.subr.mxu0 0.0
      %3622 = vmatpush1.msra.mxu0 0.0
      %3623 = vmatprep.subr.mxu0 0.0
      %3624 = vmatpush1.msra.mxu0 0.0
      %3625 = vmatprep.subr.mxu0 0.0
      %3626 = vmatpush1.msra.mxu0 0.0
      %3627 = vmatprep.subr.mxu0 0.0
      %3628 = vmatpush1.msra.mxu0 0.0
      %3629 = vmatprep.subr.mxu0 0.0
      %3630 = vmatpush1.msra.mxu0 0.0
      %3631 = vmatprep.subr.mxu0 0.0
      %3632 = vmatpush1.msra.mxu0 0.0
      %3633 = vmatprep.subr.mxu0 0.0
      %3634 = vmatpush1.msra.mxu0 0.0
      %3635 = vmatprep.mubr.f32.mxu0 0.0
      %3636 = vmatmul.mubr.f32.gmra.mrb[0].mxu0 %v3477
      %v3637 = vpop.f32.mrb[0].mxu0
      %v3638 = vadd.f32 %v3466, %v3637
      %v3639 = vpop.f32.mrb[0].mxu0
      %v3640 = vadd.f32 %v3468, %v3639
      %3641 = vmatprep.mubr.f32.mxu0 0.0
      %3642 = vmatmul.mubr.f32.gmra.mrb[0].mxu0 %v3480
      %v3643 = vpop.f32.mrb[0].mxu0
      %v3644 = vadd.f32 %v3472, %v3643
      %v3645 = vpop.f32.mrb[0].mxu0
      %v3646 = vadd.f32 %v3474, %v3645
      %3647 = vdwg.mxu0
      %s3648 = scalar_lea.vmem %s2, 32
      %v3649 = vld [vmem:[%s3648] sm:$0xff]
      %v3650 = vld [vmem:[%s3648 + $0x8] sm:$0x1]
      %s3651 = scalar_lea.vmem %s3, 32
      %v3652 = vld [vmem:[%s3651] sm:$0xff]
      %v3653 = vld [vmem:[%s3651 + $0x8] sm:$0x1]
      %3655 = vset.pattern.permute.xlu0 0
      %3656 = vperm.xlu0 %3655, %v3652
      %v3657 = vpop.permute.xlu0 %3656
      %3660 = vset.pattern.permute.xlu0 0
      %3661 = vperm.xlu0 %3660, %v3653
      %v3662 = vpop.permute.xlu0 %3661
      %v3665 = vsel %vm483, %v3649, 0
      %v3668 = vsel %vm483, %v3650, 0
      %3670 = vmatprep.subr.mxu0 %v462
      %3671 = vmatpush1.msra.mxu0 %v461
      %3672 = vmatprep.subr.mxu0 %v495
      %3673 = vmatpush1.msra.mxu0 %v492
      %3674 = vmatprep.subr.mxu0 0.0
      %3675 = vmatpush1.msra.mxu0 0.0
      %3676 = vmatprep.subr.mxu0 0.0
      %3677 = vmatpush1.msra.mxu0 0.0
      %3678 = vmatprep.subr.mxu0 0.0
      %3679 = vmatpush1.msra.mxu0 0.0
      %3680 = vmatprep.subr.mxu0 0.0
      %3681 = vmatpush1.msra.mxu0 0.0
      %3682 = vmatprep.subr.mxu0 0.0
      %3683 = vmatpush1.msra.mxu0 0.0
      %3684 = vmatprep.subr.mxu0 0.0
      %3685 = vmatpush1.msra.mxu0 0.0
      %3686 = vmatprep.subr.mxu0 0.0
      %3687 = vmatpush1.msra.mxu0 0.0
      %3688 = vmatprep.subr.mxu0 0.0
      %3689 = vmatpush1.msra.mxu0 0.0
      %3690 = vmatprep.subr.mxu0 0.0
      %3691 = vmatpush1.msra.mxu0 0.0
      %3692 = vmatprep.subr.mxu0 0.0
      %3693 = vmatpush1.msra.mxu0 0.0
      %3694 = vmatprep.subr.mxu0 0.0
      %3695 = vmatpush1.msra.mxu0 0.0
      %3696 = vmatprep.subr.mxu0 0.0
      %3697 = vmatpush1.msra.mxu0 0.0
      %3698 = vmatprep.subr.mxu0 0.0
      %3699 = vmatpush1.msra.mxu0 0.0
      %3700 = vmatprep.subr.mxu0 0.0
      %3701 = vmatpush1.msra.mxu0 0.0
      %3702 = vmatprep.subr.mxu0 0.0
      %3703 = vmatpush1.msra.mxu0 0.0
      %3704 = vmatprep.subr.mxu0 0.0
      %3705 = vmatpush1.msra.mxu0 0.0
      %3706 = vmatprep.subr.mxu0 0.0
      %3707 = vmatpush1.msra.mxu0 0.0
      %3708 = vmatprep.subr.mxu0 0.0
      %3709 = vmatpush1.msra.mxu0 0.0
      %3710 = vmatprep.subr.mxu0 0.0
      %3711 = vmatpush1.msra.mxu0 0.0
      %3712 = vmatprep.subr.mxu0 0.0
      %3713 = vmatpush1.msra.mxu0 0.0
      %3714 = vmatprep.subr.mxu0 0.0
      %3715 = vmatpush1.msra.mxu0 0.0
      %3716 = vmatprep.subr.mxu0 0.0
      %3717 = vmatpush1.msra.mxu0 0.0
      %3718 = vmatprep.subr.mxu0 0.0
      %3719 = vmatpush1.msra.mxu0 0.0
      %3720 = vmatprep.subr.mxu0 0.0
      %3721 = vmatpush1.msra.mxu0 0.0
      %3722 = vmatprep.subr.mxu0 0.0
      %3723 = vmatpush1.msra.mxu0 0.0
      %3724 = vmatprep.subr.mxu0 0.0
      %3725 = vmatpush1.msra.mxu0 0.0
      %3726 = vmatprep.subr.mxu0 0.0
      %3727 = vmatpush1.msra.mxu0 0.0
      %3728 = vmatprep.subr.mxu0 0.0
      %3729 = vmatpush1.msra.mxu0 0.0
      %3730 = vmatprep.subr.mxu0 0.0
      %3731 = vmatpush1.msra.mxu0 0.0
      %3732 = vmatprep.subr.mxu0 0.0
      %3733 = vmatpush1.msra.mxu0 0.0
      %3734 = vmatprep.mubr.f32.mxu0 0.0
      %3735 = vmatmul.mubr.f32.gmra.mrb[0].mxu0 %v3665
      %v3736 = vpop.f32.mrb[0].mxu0
      %v3737 = vadd.f32 %v3657, %v3736
      %v3738 = vpop.f32.mrb[0].mxu0
      %v3739 = vadd.f32 %v3657, %v3738
      %3740 = vmatprep.mubr.f32.mxu0 0.0
      %3741 = vmatmul.mubr.f32.gmra.mrb[0].mxu0 %v3668
      %v3742 = vpop.f32.mrb[0].mxu0
      %v3743 = vadd.f32 %v3662, %v3742
      %v3744 = vpop.f32.mrb[0].mxu0
      %v3745 = vadd.f32 %v3662, %v3744
      %3746 = vdwg.mxu0
      %3747 = vmatprep.subr.mxu0 %v464
      %3748 = vmatpush1.msra.mxu0 %v463
      %3749 = vmatprep.subr.mxu0 %v501
      %3750 = vmatpush1.msra.mxu0 %v498
      %3751 = vmatprep.subr.mxu0 0.0
      %3752 = vmatpush1.msra.mxu0 0.0
      %3753 = vmatprep.subr.mxu0 0.0
      %3754 = vmatpush1.msra.mxu0 0.0
      %3755 = vmatprep.subr.mxu0 0.0
      %3756 = vmatpush1.msra.mxu0 0.0
      %3757 = vmatprep.subr.mxu0 0.0
      %3758 = vmatpush1.msra.mxu0 0.0
      %3759 = vmatprep.subr.mxu0 0.0
      %3760 = vmatpush1.msra.mxu0 0.0
      %3761 = vmatprep.subr.mxu0 0.0
      %3762 = vmatpush1.msra.mxu0 0.0
      %3763 = vmatprep.subr.mxu0 0.0
      %3764 = vmatpush1.msra.mxu0 0.0
      %3765 = vmatprep.subr.mxu0 0.0
      %3766 = vmatpush1.msra.mxu0 0.0
      %3767 = vmatprep.subr.mxu0 0.0
      %3768 = vmatpush1.msra.mxu0 0.0
      %3769 = vmatprep.subr.mxu0 0.0
      %3770 = vmatpush1.msra.mxu0 0.0
      %3771 = vmatprep.subr.mxu0 0.0
      %3772 = vmatpush1.msra.mxu0 0.0
      %3773 = vmatprep.subr.mxu0 0.0
      %3774 = vmatpush1.msra.mxu0 0.0
      %3775 = vmatprep.subr.mxu0 0.0
      %3776 = vmatpush1.msra.mxu0 0.0
      %3777 = vmatprep.subr.mxu0 0.0
      %3778 = vmatpush1.msra.mxu0 0.0
      %3779 = vmatprep.subr.mxu0 0.0
      %3780 = vmatpush1.msra.mxu0 0.0
      %3781 = vmatprep.subr.mxu0 0.0
      %3782 = vmatpush1.msra.mxu0 0.0
      %3783 = vmatprep.subr.mxu0 0.0
      %3784 = vmatpush1.msra.mxu0 0.0
      %3785 = vmatprep.subr.mxu0 0.0
      %3786 = vmatpush1.msra.mxu0 0.0
      %3787 = vmatprep.subr.mxu0 0.0
      %3788 = vmatpush1.msra.mxu0 0.0
      %3789 = vmatprep.subr.mxu0 0.0
      %3790 = vmatpush1.msra.mxu0 0.0
      %3791 = vmatprep.subr.mxu0 0.0
      %3792 = vmatpush1.msra.mxu0 0.0
      %3793 = vmatprep.subr.mxu0 0.0
      %3794 = vmatpush1.msra.mxu0 0.0
      %3795 = vmatprep.subr.mxu0 0.0
      %3796 = vmatpush1.msra.mxu0 0.0
      %3797 = vmatprep.subr.mxu0 0.0
      %3798 = vmatpush1.msra.mxu0 0.0
      %3799 = vmatprep.subr.mxu0 0.0
      %3800 = vmatpush1.msra.mxu0 0.0
      %3801 = vmatprep.subr.mxu0 0.0
      %3802 = vmatpush1.msra.mxu0 0.0
      %3803 = vmatprep.subr.mxu0 0.0
      %3804 = vmatpush1.msra.mxu0 0.0
      %3805 = vmatprep.subr.mxu0 0.0
      %3806 = vmatpush1.msra.mxu0 0.0
      %3807 = vmatprep.subr.mxu0 0.0
      %3808 = vmatpush1.msra.mxu0 0.0
      %3809 = vmatprep.subr.mxu0 0.0
      %3810 = vmatpush1.msra.mxu0 0.0
      %3811 = vmatprep.mubr.f32.mxu0 0.0
      %3812 = vmatmul.mubr.f32.gmra.mrb[0].mxu0 %v3665
      %v3813 = vpop.f32.mrb[0].mxu0
      %v3814 = vadd.f32 %v3657, %v3813
      %v3815 = vpop.f32.mrb[0].mxu0
      %v3816 = vadd.f32 %v3657, %v3815
      %3817 = vmatprep.mubr.f32.mxu0 0.0
      %3818 = vmatmul.mubr.f32.gmra.mrb[0].mxu0 %v3668
      %v3819 = vpop.f32.mrb[0].mxu0
      %v3820 = vadd.f32 %v3662, %v3819
      %v3821 = vpop.f32.mrb[0].mxu0
      %v3822 = vadd.f32 %v3662, %v3821
      %3823 = vdwg.mxu0
      %s3824 = scalar_lea.vmem %s455, 128
      %v3825 = vld [vmem:[%s3824] sm:$0xff]
      %v3826 = vld [vmem:[%s3824 + $0x8] sm:$0xff]
      %v3827 = vld [vmem:[%s3824 + $0x10] sm:$0xff]
      %v3828 = vld [vmem:[%s3824 + $0x18] sm:$0xff]
      %v3829 = vld [vmem:[%s3824 + $0x20] sm:$0x1]
      %v3830 = vld [vmem:[%s3824 + $0x28] sm:$0x1]
      %v3831 = vld [vmem:[%s3824 + $0x30] sm:$0x1]
      %v3832 = vld [vmem:[%s3824 + $0x38] sm:$0x1]
      %v3833 = vadd.f32 %v3737, %v3825
      %v3834 = vadd.f32 %v3739, %v3826
      %v3835 = vadd.f32 %v3814, %v3827
      %v3836 = vadd.f32 %v3816, %v3828
      %v3837 = vadd.f32 %v3743, %v3829
      %v3838 = vadd.f32 %v3745, %v3830
      %v3839 = vadd.f32 %v3820, %v3831
      %v3840 = vadd.f32 %v3822, %v3832
      %v3841 = vadd.f32 %v3833, %v3834
      %v3842 = vadd.f32 %v3841, %v3835
      %v3843 = vadd.f32 %v3842, %v3836
      %3844 = vadd.xlane.f32.xlu0 %v3843
      %v3845 = vpop.xlane.xlu0 %3844
      %v3846 = vsel %vm678, %v3837, 0.0
      %v3847 = vsel %vm678, %v3838, 0.0
      %v3848 = vadd.f32 %v3846, %v3847
      %v3849 = vsel %vm678, %v3839, 0.0
      %v3850 = vadd.f32 %v3848, %v3849
      %v3851 = vsel %vm678, %v3840, 0.0
      %v3852 = vadd.f32 %v3850, %v3851
      %3853 = vadd.xlane.f32.xlu0 %v3852
      %v3854 = vpop.xlane.xlu0 %3853
      %v3855 = vmul.f32 %v3845, %v688
      %v3856 = vmul.f32 %v3854, %v688
      %v3857 = vsub.f32 %v3833, %v3855
      %v3858 = vsub.f32 %v3834, %v3855
      %v3859 = vsub.f32 %v3835, %v3855
      %v3860 = vsub.f32 %v3836, %v3855
      %v3861 = vsub.f32 %v3837, %v3856
      %v3862 = vsub.f32 %v3838, %v3856
      %v3863 = vsub.f32 %v3839, %v3856
      %v3864 = vsub.f32 %v3840, %v3856
      %v3865 = vmul.f32 %v3857, %v3857
      %v3866 = vmul.f32 %v3858, %v3858
      %v3867 = vmul.f32 %v3859, %v3859
      %v3868 = vmul.f32 %v3860, %v3860
      %v3869 = vmul.f32 %v3861, %v3861
      %v3870 = vmul.f32 %v3862, %v3862
      %v3871 = vmul.f32 %v3863, %v3863
      %v3872 = vmul.f32 %v3864, %v3864
      %v3873 = vadd.f32 %v3865, %v3866
      %v3874 = vadd.f32 %v3873, %v3867
      %v3875 = vadd.f32 %v3874, %v3868
      %3876 = vadd.xlane.f32.xlu0 %v3875
      %v3877 = vpop.xlane.xlu0 %3876
      %v3878 = vsel %vm678, %v3869, 0.0
      %v3879 = vsel %vm678, %v3870, 0.0
      %v3880 = vadd.f32 %v3878, %v3879
      %v3881 = vsel %vm678, %v3871, 0.0
      %v3882 = vadd.f32 %v3880, %v3881
      %v3883 = vsel %vm678, %v3872, 0.0
      %v3884 = vadd.f32 %v3882, %v3883
      %3885 = vadd.xlane.f32.xlu0 %v3884
      %v3886 = vpop.xlane.xlu0 %3885
      %v3887 = vmul.f32 %v3877, %v688
      %v3888 = vmul.f32 %v3886, %v688
      %s3889 = scalar_lea.vmem %s4, 32
      %v3890 = vld [vmem:[%s3889] sm:$0xff]
      %v3891 = vld [vmem:[%s3889 + $0x8] sm:$0x1]
      %v3892 = vadd.f32 %v3887, 1e-06
      %v3893 = vadd.f32 %v3888, 1e-06
      %v3894 = vrsqrt.pop %v3892
      %v3895 = vrsqrt.pop %v3893
      %v3896 = vmul.f32 %v3890, %v3894
      %v3897 = vmul.f32 %v3891, %v3895
      %3898 = vrot.lane.b32.xlu0 %v3857, 109
      %v3899 = vpop.permute.xlu0 %3898
      %3900 = vrot.lane.b32.xlu0 %v3861, 109
      %v3901 = vpop.permute.xlu0 %3900
      %3902 = vrot.lane.b32.xlu0 %v3858, 109
      %v3903 = vpop.permute.xlu0 %3902
      %3904 = vrot.lane.b32.xlu0 %v3862, 109
      %v3905 = vpop.permute.xlu0 %3904
      %3906 = vrot.lane.b32.xlu0 %v3859, 109
      %v3907 = vpop.permute.xlu0 %3906
      %3908 = vrot.lane.b32.xlu0 %v3863, 109
      %v3909 = vpop.permute.xlu0 %3908
      %3910 = vrot.lane.b32.xlu0 %v3860, 109
      %v3911 = vpop.permute.xlu0 %3910
      %3912 = vrot.lane.b32.xlu0 %v3864, 109
      %v3913 = vpop.permute.xlu0 %3912
      %vm3914 = vcmp.lt.s32.totalorder %v748, 109
      %v3915 = vsel %vm3914, %v3907, %v3911
      %v3916 = vsel %vm3914, %v3909, %v3913
      %v3917 = vsel %vm3914, %v3903, %v3907
      %v3918 = vsel %vm3914, %v3905, %v3909
      %v3919 = vsel %vm3914, %v3899, %v3903
      %v3920 = vsel %vm3914, %v3901, %v3905
      %v3921 = vsel %vm3914, %v3911, %v3899
      %v3922 = vsel %vm3914, %v3913, %v3901
      %s3923 = scalar_lea.vmem %s7, 3456
      %v3924 = vld [vmem:[%s3923] sm:$0xff]
      %v3925 = vld [vmem:[%s3923 + $0x8] sm:$0xff]
      %v3926 = vld [vmem:[%s3923 + $0x10] sm:$0xff]
      %v3927 = vld [vmem:[%s3923 + $0x18] sm:$0xff]
      %v3928 = vld [vmem:[%s3923 + $0x20] sm:$0x1]
      %v3929 = vld [vmem:[%s3923 + $0x28] sm:$0x1]
      %v3930 = vld [vmem:[%s3923 + $0x30] sm:$0x1]
      %v3931 = vld [vmem:[%s3923 + $0x38] sm:$0x1]
      %v3932 = vmul.f32 %v3924, %v3917
      %v3933 = vmul.f32 %v3925, %v3915
      %v3934 = vmul.f32 %v3926, %v3921
      %v3935 = vmul.f32 %v3927, %v3919
      %v3936 = vmul.f32 %v3928, %v3918
      %v3937 = vmul.f32 %v3929, %v3916
      %v3938 = vmul.f32 %v3930, %v3922
      %v3939 = vmul.f32 %v3931, %v3920
      %v3940 = vadd.f32 %v3932, 0.0
      %v3941 = vadd.f32 %v3933, 0.0
      %v3942 = vadd.f32 %v3934, 0.0
      %v3943 = vadd.f32 %v3935, 0.0
      %v3944 = vadd.f32 %v3936, 0.0
      %v3945 = vadd.f32 %v3937, 0.0
      %v3946 = vadd.f32 %v3938, 0.0
      %v3947 = vadd.f32 %v3939, 0.0
      %3948 = vrot.lane.b32.xlu0 %v3857, 104
      %v3949 = vpop.permute.xlu0 %3948
      %3950 = vrot.lane.b32.xlu0 %v3861, 104
      %v3951 = vpop.permute.xlu0 %3950
      %3952 = vrot.lane.b32.xlu0 %v3858, 104
      %v3953 = vpop.permute.xlu0 %3952
      %3954 = vrot.lane.b32.xlu0 %v3862, 104
      %v3955 = vpop.permute.xlu0 %3954
      %3956 = vrot.lane.b32.xlu0 %v3859, 104
      %v3957 = vpop.permute.xlu0 %3956
      %3958 = vrot.lane.b32.xlu0 %v3863, 104
      %v3959 = vpop.permute.xlu0 %3958
      %3960 = vrot.lane.b32.xlu0 %v3860, 104
      %v3961 = vpop.permute.xlu0 %3960
      %3962 = vrot.lane.b32.xlu0 %v3864, 104
      %v3963 = vpop.permute.xlu0 %3962
      %vm3964 = vcmp.lt.s32.totalorder %v748, 104
      %v3965 = vsel %vm3964, %v3957, %v3961
      %v3966 = vsel %vm3964, %v3959, %v3963
      %v3967 = vsel %vm3964, %v3953, %v3957
      %v3968 = vsel %vm3964, %v3955, %v3959
      %v3969 = vsel %vm3964, %v3949, %v3953
      %v3970 = vsel %vm3964, %v3951, %v3955
      %v3971 = vsel %vm3964, %v3961, %v3949
      %v3972 = vsel %vm3964, %v3963, %v3951
      %s3973 = scalar_lea.vmem %s7, 3520
      %v3974 = vld [vmem:[%s3973] sm:$0xff]
      %v3975 = vld [vmem:[%s3973 + $0x8] sm:$0xff]
      %v3976 = vld [vmem:[%s3973 + $0x10] sm:$0xff]
      %v3977 = vld [vmem:[%s3973 + $0x18] sm:$0xff]
      %v3978 = vld [vmem:[%s3973 + $0x20] sm:$0x1]
      %v3979 = vld [vmem:[%s3973 + $0x28] sm:$0x1]
      %v3980 = vld [vmem:[%s3973 + $0x30] sm:$0x1]
      %v3981 = vld [vmem:[%s3973 + $0x38] sm:$0x1]
      %v3982 = vmul.f32 %v3974, %v3967
      %v3983 = vmul.f32 %v3975, %v3965
      %v3984 = vmul.f32 %v3976, %v3971
      %v3985 = vmul.f32 %v3977, %v3969
      %v3986 = vmul.f32 %v3978, %v3968
      %v3987 = vmul.f32 %v3979, %v3966
      %v3988 = vmul.f32 %v3980, %v3972
      %v3989 = vmul.f32 %v3981, %v3970
      %v3990 = vadd.f32 %v3940, %v3982
      %v3991 = vadd.f32 %v3941, %v3983
      %v3992 = vadd.f32 %v3942, %v3984
      %v3993 = vadd.f32 %v3943, %v3985
      %v3994 = vadd.f32 %v3944, %v3986
      %v3995 = vadd.f32 %v3945, %v3987
      %v3996 = vadd.f32 %v3946, %v3988
      %v3997 = vadd.f32 %v3947, %v3989
      %3998 = vrot.lane.b32.xlu0 %v3857, 99
      %v3999 = vpop.permute.xlu0 %3998
      %4000 = vrot.lane.b32.xlu0 %v3861, 99
      %v4001 = vpop.permute.xlu0 %4000
      %4002 = vrot.lane.b32.xlu0 %v3858, 99
      %v4003 = vpop.permute.xlu0 %4002
      %4004 = vrot.lane.b32.xlu0 %v3862, 99
      %v4005 = vpop.permute.xlu0 %4004
      %4006 = vrot.lane.b32.xlu0 %v3859, 99
      %v4007 = vpop.permute.xlu0 %4006
      %4008 = vrot.lane.b32.xlu0 %v3863, 99
      %v4009 = vpop.permute.xlu0 %4008
      %4010 = vrot.lane.b32.xlu0 %v3860, 99
      %v4011 = vpop.permute.xlu0 %4010
      %4012 = vrot.lane.b32.xlu0 %v3864, 99
      %v4013 = vpop.permute.xlu0 %4012
      %vm4014 = vcmp.lt.s32.totalorder %v748, 99
      %v4015 = vsel %vm4014, %v4007, %v4011
      %v4016 = vsel %vm4014, %v4009, %v4013
      %v4017 = vsel %vm4014, %v4003, %v4007
      %v4018 = vsel %vm4014, %v4005, %v4009
      %v4019 = vsel %vm4014, %v3999, %v4003
      %v4020 = vsel %vm4014, %v4001, %v4005
      %v4021 = vsel %vm4014, %v4011, %v3999
      %v4022 = vsel %vm4014, %v4013, %v4001
      %s4023 = scalar_lea.vmem %s7, 3584
      %v4024 = vld [vmem:[%s4023] sm:$0xff]
      %v4025 = vld [vmem:[%s4023 + $0x8] sm:$0xff]
      %v4026 = vld [vmem:[%s4023 + $0x10] sm:$0xff]
      %v4027 = vld [vmem:[%s4023 + $0x18] sm:$0xff]
      %v4028 = vld [vmem:[%s4023 + $0x20] sm:$0x1]
      %v4029 = vld [vmem:[%s4023 + $0x28] sm:$0x1]
      %v4030 = vld [vmem:[%s4023 + $0x30] sm:$0x1]
      %v4031 = vld [vmem:[%s4023 + $0x38] sm:$0x1]
      %v4032 = vmul.f32 %v4024, %v4017
      %v4033 = vmul.f32 %v4025, %v4015
      %v4034 = vmul.f32 %v4026, %v4021
      %v4035 = vmul.f32 %v4027, %v4019
      %v4036 = vmul.f32 %v4028, %v4018
      %v4037 = vmul.f32 %v4029, %v4016
      %v4038 = vmul.f32 %v4030, %v4022
      %v4039 = vmul.f32 %v4031, %v4020
      %v4040 = vadd.f32 %v3990, %v4032
      %v4041 = vadd.f32 %v3991, %v4033
      %v4042 = vadd.f32 %v3992, %v4034
      %v4043 = vadd.f32 %v3993, %v4035
      %v4044 = vadd.f32 %v3994, %v4036
      %v4045 = vadd.f32 %v3995, %v4037
      %v4046 = vadd.f32 %v3996, %v4038
      %v4047 = vadd.f32 %v3997, %v4039
      %4048 = vrot.lane.b32.xlu0 %v3857, 69
      %v4049 = vpop.permute.xlu0 %4048
      %4050 = vrot.lane.b32.xlu0 %v3861, 69
      %v4051 = vpop.permute.xlu0 %4050
      %4052 = vrot.lane.b32.xlu0 %v3858, 69
      %v4053 = vpop.permute.xlu0 %4052
      %4054 = vrot.lane.b32.xlu0 %v3862, 69
      %v4055 = vpop.permute.xlu0 %4054
      %4056 = vrot.lane.b32.xlu0 %v3859, 69
      %v4057 = vpop.permute.xlu0 %4056
      %4058 = vrot.lane.b32.xlu0 %v3863, 69
      %v4059 = vpop.permute.xlu0 %4058
      %4060 = vrot.lane.b32.xlu0 %v3860, 69
      %v4061 = vpop.permute.xlu0 %4060
      %4062 = vrot.lane.b32.xlu0 %v3864, 69
      %v4063 = vpop.permute.xlu0 %4062
      %vm4064 = vcmp.lt.s32.totalorder %v748, 69
      %v4065 = vsel %vm4064, %v4057, %v4061
      %v4066 = vsel %vm4064, %v4059, %v4063
      %v4067 = vsel %vm4064, %v4053, %v4057
      %v4068 = vsel %vm4064, %v4055, %v4059
      %v4069 = vsel %vm4064, %v4049, %v4053
      %v4070 = vsel %vm4064, %v4051, %v4055
      %v4071 = vsel %vm4064, %v4061, %v4049
      %v4072 = vsel %vm4064, %v4063, %v4051
      %s4073 = scalar_lea.vmem %s7, 3648
      %v4074 = vld [vmem:[%s4073] sm:$0xff]
      %v4075 = vld [vmem:[%s4073 + $0x8] sm:$0xff]
      %v4076 = vld [vmem:[%s4073 + $0x10] sm:$0xff]
      %v4077 = vld [vmem:[%s4073 + $0x18] sm:$0xff]
      %v4078 = vld [vmem:[%s4073 + $0x20] sm:$0x1]
      %v4079 = vld [vmem:[%s4073 + $0x28] sm:$0x1]
      %v4080 = vld [vmem:[%s4073 + $0x30] sm:$0x1]
      %v4081 = vld [vmem:[%s4073 + $0x38] sm:$0x1]
      %v4082 = vmul.f32 %v4074, %v4067
      %v4083 = vmul.f32 %v4075, %v4065
      %v4084 = vmul.f32 %v4076, %v4071
      %v4085 = vmul.f32 %v4077, %v4069
      %v4086 = vmul.f32 %v4078, %v4068
      %v4087 = vmul.f32 %v4079, %v4066
      %v4088 = vmul.f32 %v4080, %v4072
      %v4089 = vmul.f32 %v4081, %v4070
      %v4090 = vadd.f32 %v4040, %v4082
      %v4091 = vadd.f32 %v4041, %v4083
      %v4092 = vadd.f32 %v4042, %v4084
      %v4093 = vadd.f32 %v4043, %v4085
      %v4094 = vadd.f32 %v4044, %v4086
      %v4095 = vadd.f32 %v4045, %v4087
      %v4096 = vadd.f32 %v4046, %v4088
      %v4097 = vadd.f32 %v4047, %v4089
      %4098 = vrot.lane.b32.xlu0 %v3857, 64
      %v4099 = vpop.permute.xlu0 %4098
      %4100 = vrot.lane.b32.xlu0 %v3861, 64
      %v4101 = vpop.permute.xlu0 %4100
      %4102 = vrot.lane.b32.xlu0 %v3858, 64
      %v4103 = vpop.permute.xlu0 %4102
      %4104 = vrot.lane.b32.xlu0 %v3862, 64
      %v4105 = vpop.permute.xlu0 %4104
      %4106 = vrot.lane.b32.xlu0 %v3859, 64
      %v4107 = vpop.permute.xlu0 %4106
      %4108 = vrot.lane.b32.xlu0 %v3863, 64
      %v4109 = vpop.permute.xlu0 %4108
      %4110 = vrot.lane.b32.xlu0 %v3860, 64
      %v4111 = vpop.permute.xlu0 %4110
      %4112 = vrot.lane.b32.xlu0 %v3864, 64
      %v4113 = vpop.permute.xlu0 %4112
      %v4114 = vsel %vm948, %v4107, %v4111
      %v4115 = vsel %vm948, %v4109, %v4113
      %v4116 = vsel %vm948, %v4103, %v4107
      %v4117 = vsel %vm948, %v4105, %v4109
      %v4118 = vsel %vm948, %v4099, %v4103
      %v4119 = vsel %vm948, %v4101, %v4105
      %v4120 = vsel %vm948, %v4111, %v4099
      %v4121 = vsel %vm948, %v4113, %v4101
      %s4122 = scalar_lea.vmem %s7, 3712
      %v4123 = vld [vmem:[%s4122] sm:$0xff]
      %v4124 = vld [vmem:[%s4122 + $0x8] sm:$0xff]
      %v4125 = vld [vmem:[%s4122 + $0x10] sm:$0xff]
      %v4126 = vld [vmem:[%s4122 + $0x18] sm:$0xff]
      %v4127 = vld [vmem:[%s4122 + $0x20] sm:$0x1]
      %v4128 = vld [vmem:[%s4122 + $0x28] sm:$0x1]
      %v4129 = vld [vmem:[%s4122 + $0x30] sm:$0x1]
      %v4130 = vld [vmem:[%s4122 + $0x38] sm:$0x1]
      %v4131 = vmul.f32 %v4123, %v4116
      %v4132 = vmul.f32 %v4124, %v4114
      %v4133 = vmul.f32 %v4125, %v4120
      %v4134 = vmul.f32 %v4126, %v4118
      %v4135 = vmul.f32 %v4127, %v4117
      %v4136 = vmul.f32 %v4128, %v4115
      %v4137 = vmul.f32 %v4129, %v4121
      %v4138 = vmul.f32 %v4130, %v4119
      %v4139 = vadd.f32 %v4090, %v4131
      %v4140 = vadd.f32 %v4091, %v4132
      %v4141 = vadd.f32 %v4092, %v4133
      %v4142 = vadd.f32 %v4093, %v4134
      %v4143 = vadd.f32 %v4094, %v4135
      %v4144 = vadd.f32 %v4095, %v4136
      %v4145 = vadd.f32 %v4096, %v4137
      %v4146 = vadd.f32 %v4097, %v4138
      %4147 = vrot.lane.b32.xlu0 %v3857, 59
      %v4148 = vpop.permute.xlu0 %4147
      %4149 = vrot.lane.b32.xlu0 %v3861, 59
      %v4150 = vpop.permute.xlu0 %4149
      %4151 = vrot.lane.b32.xlu0 %v3858, 59
      %v4152 = vpop.permute.xlu0 %4151
      %4153 = vrot.lane.b32.xlu0 %v3862, 59
      %v4154 = vpop.permute.xlu0 %4153
      %4155 = vrot.lane.b32.xlu0 %v3859, 59
      %v4156 = vpop.permute.xlu0 %4155
      %4157 = vrot.lane.b32.xlu0 %v3863, 59
      %v4158 = vpop.permute.xlu0 %4157
      %4159 = vrot.lane.b32.xlu0 %v3860, 59
      %v4160 = vpop.permute.xlu0 %4159
      %4161 = vrot.lane.b32.xlu0 %v3864, 59
      %v4162 = vpop.permute.xlu0 %4161
      %vm4163 = vcmp.lt.s32.totalorder %v748, 59
      %v4164 = vsel %vm4163, %v4156, %v4160
      %v4165 = vsel %vm4163, %v4158, %v4162
      %v4166 = vsel %vm4163, %v4152, %v4156
      %v4167 = vsel %vm4163, %v4154, %v4158
      %v4168 = vsel %vm4163, %v4148, %v4152
      %v4169 = vsel %vm4163, %v4150, %v4154
      %v4170 = vsel %vm4163, %v4160, %v4148
      %v4171 = vsel %vm4163, %v4162, %v4150
      %s4172 = scalar_lea.vmem %s7, 3776
      %v4173 = vld [vmem:[%s4172] sm:$0xff]
      %v4174 = vld [vmem:[%s4172 + $0x8] sm:$0xff]
      %v4175 = vld [vmem:[%s4172 + $0x10] sm:$0xff]
      %v4176 = vld [vmem:[%s4172 + $0x18] sm:$0xff]
      %v4177 = vld [vmem:[%s4172 + $0x20] sm:$0x1]
      %v4178 = vld [vmem:[%s4172 + $0x28] sm:$0x1]
      %v4179 = vld [vmem:[%s4172 + $0x30] sm:$0x1]
      %v4180 = vld [vmem:[%s4172 + $0x38] sm:$0x1]
      %v4181 = vmul.f32 %v4173, %v4166
      %v4182 = vmul.f32 %v4174, %v4164
      %v4183 = vmul.f32 %v4175, %v4170
      %v4184 = vmul.f32 %v4176, %v4168
      %v4185 = vmul.f32 %v4177, %v4167
      %v4186 = vmul.f32 %v4178, %v4165
      %v4187 = vmul.f32 %v4179, %v4171
      %v4188 = vmul.f32 %v4180, %v4169
      %v4189 = vadd.f32 %v4139, %v4181
      %v4190 = vadd.f32 %v4140, %v4182
      %v4191 = vadd.f32 %v4141, %v4183
      %v4192 = vadd.f32 %v4142, %v4184
      %v4193 = vadd.f32 %v4143, %v4185
      %v4194 = vadd.f32 %v4144, %v4186
      %v4195 = vadd.f32 %v4145, %v4187
      %v4196 = vadd.f32 %v4146, %v4188
      %4197 = vrot.lane.b32.xlu0 %v3857, 29
      %v4198 = vpop.permute.xlu0 %4197
      %4199 = vrot.lane.b32.xlu0 %v3861, 29
      %v4200 = vpop.permute.xlu0 %4199
      %4201 = vrot.lane.b32.xlu0 %v3858, 29
      %v4202 = vpop.permute.xlu0 %4201
      %4203 = vrot.lane.b32.xlu0 %v3862, 29
      %v4204 = vpop.permute.xlu0 %4203
      %4205 = vrot.lane.b32.xlu0 %v3859, 29
      %v4206 = vpop.permute.xlu0 %4205
      %4207 = vrot.lane.b32.xlu0 %v3863, 29
      %v4208 = vpop.permute.xlu0 %4207
      %4209 = vrot.lane.b32.xlu0 %v3860, 29
      %v4210 = vpop.permute.xlu0 %4209
      %4211 = vrot.lane.b32.xlu0 %v3864, 29
      %v4212 = vpop.permute.xlu0 %4211
      %vm4213 = vcmp.lt.s32.totalorder %v748, 29
      %v4214 = vsel %vm4213, %v4206, %v4210
      %v4215 = vsel %vm4213, %v4208, %v4212
      %v4216 = vsel %vm4213, %v4202, %v4206
      %v4217 = vsel %vm4213, %v4204, %v4208
      %v4218 = vsel %vm4213, %v4198, %v4202
      %v4219 = vsel %vm4213, %v4200, %v4204
      %v4220 = vsel %vm4213, %v4210, %v4198
      %v4221 = vsel %vm4213, %v4212, %v4200
      %s4222 = scalar_lea.vmem %s7, 3840
      %v4223 = vld [vmem:[%s4222] sm:$0xff]
      %v4224 = vld [vmem:[%s4222 + $0x8] sm:$0xff]
      %v4225 = vld [vmem:[%s4222 + $0x10] sm:$0xff]
      %v4226 = vld [vmem:[%s4222 + $0x18] sm:$0xff]
      %v4227 = vld [vmem:[%s4222 + $0x20] sm:$0x1]
      %v4228 = vld [vmem:[%s4222 + $0x28] sm:$0x1]
      %v4229 = vld [vmem:[%s4222 + $0x30] sm:$0x1]
      %v4230 = vld [vmem:[%s4222 + $0x38] sm:$0x1]
      %v4231 = vmul.f32 %v4223, %v4216
      %v4232 = vmul.f32 %v4224, %v4214
      %v4233 = vmul.f32 %v4225, %v4220
      %v4234 = vmul.f32 %v4226, %v4218
      %v4235 = vmul.f32 %v4227, %v4217
      %v4236 = vmul.f32 %v4228, %v4215
      %v4237 = vmul.f32 %v4229, %v4221
      %v4238 = vmul.f32 %v4230, %v4219
      %v4239 = vadd.f32 %v4189, %v4231
      %v4240 = vadd.f32 %v4190, %v4232
      %v4241 = vadd.f32 %v4191, %v4233
      %v4242 = vadd.f32 %v4192, %v4234
      %v4243 = vadd.f32 %v4193, %v4235
      %v4244 = vadd.f32 %v4194, %v4236
      %v4245 = vadd.f32 %v4195, %v4237
      %v4246 = vadd.f32 %v4196, %v4238
      %4247 = vrot.lane.b32.xlu0 %v3857, 24
      %v4248 = vpop.permute.xlu0 %4247
      %4249 = vrot.lane.b32.xlu0 %v3861, 24
      %v4250 = vpop.permute.xlu0 %4249
      %4251 = vrot.lane.b32.xlu0 %v3858, 24
      %v4252 = vpop.permute.xlu0 %4251
      %4253 = vrot.lane.b32.xlu0 %v3862, 24
      %v4254 = vpop.permute.xlu0 %4253
      %4255 = vrot.lane.b32.xlu0 %v3859, 24
      %v4256 = vpop.permute.xlu0 %4255
      %4257 = vrot.lane.b32.xlu0 %v3863, 24
      %v4258 = vpop.permute.xlu0 %4257
      %4259 = vrot.lane.b32.xlu0 %v3860, 24
      %v4260 = vpop.permute.xlu0 %4259
      %4261 = vrot.lane.b32.xlu0 %v3864, 24
      %v4262 = vpop.permute.xlu0 %4261
      %vm4263 = vcmp.lt.s32.totalorder %v748, 24
      %v4264 = vsel %vm4263, %v4256, %v4260
      %v4265 = vsel %vm4263, %v4258, %v4262
      %v4266 = vsel %vm4263, %v4252, %v4256
      %v4267 = vsel %vm4263, %v4254, %v4258
      %v4268 = vsel %vm4263, %v4248, %v4252
      %v4269 = vsel %vm4263, %v4250, %v4254
      %v4270 = vsel %vm4263, %v4260, %v4248
      %v4271 = vsel %vm4263, %v4262, %v4250
      %s4272 = scalar_lea.vmem %s7, 3904
      %v4273 = vld [vmem:[%s4272] sm:$0xff]
      %v4274 = vld [vmem:[%s4272 + $0x8] sm:$0xff]
      %v4275 = vld [vmem:[%s4272 + $0x10] sm:$0xff]
      %v4276 = vld [vmem:[%s4272 + $0x18] sm:$0xff]
      %v4277 = vld [vmem:[%s4272 + $0x20] sm:$0x1]
      %v4278 = vld [vmem:[%s4272 + $0x28] sm:$0x1]
      %v4279 = vld [vmem:[%s4272 + $0x30] sm:$0x1]
      %v4280 = vld [vmem:[%s4272 + $0x38] sm:$0x1]
      %v4281 = vmul.f32 %v4273, %v4266
      %v4282 = vmul.f32 %v4274, %v4264
      %v4283 = vmul.f32 %v4275, %v4270
      %v4284 = vmul.f32 %v4276, %v4268
      %v4285 = vmul.f32 %v4277, %v4267
      %v4286 = vmul.f32 %v4278, %v4265
      %v4287 = vmul.f32 %v4279, %v4271
      %v4288 = vmul.f32 %v4280, %v4269
      %v4289 = vadd.f32 %v4239, %v4281
      %v4290 = vadd.f32 %v4240, %v4282
      %v4291 = vadd.f32 %v4241, %v4283
      %v4292 = vadd.f32 %v4242, %v4284
      %v4293 = vadd.f32 %v4243, %v4285
      %v4294 = vadd.f32 %v4244, %v4286
      %v4295 = vadd.f32 %v4245, %v4287
      %v4296 = vadd.f32 %v4246, %v4288
      %4297 = vrot.lane.b32.xlu0 %v3857, 19
      %v4298 = vpop.permute.xlu0 %4297
      %4299 = vrot.lane.b32.xlu0 %v3861, 19
      %v4300 = vpop.permute.xlu0 %4299
      %4301 = vrot.lane.b32.xlu0 %v3858, 19
      %v4302 = vpop.permute.xlu0 %4301
      %4303 = vrot.lane.b32.xlu0 %v3862, 19
      %v4304 = vpop.permute.xlu0 %4303
      %4305 = vrot.lane.b32.xlu0 %v3859, 19
      %v4306 = vpop.permute.xlu0 %4305
      %4307 = vrot.lane.b32.xlu0 %v3863, 19
      %v4308 = vpop.permute.xlu0 %4307
      %4309 = vrot.lane.b32.xlu0 %v3860, 19
      %v4310 = vpop.permute.xlu0 %4309
      %4311 = vrot.lane.b32.xlu0 %v3864, 19
      %v4312 = vpop.permute.xlu0 %4311
      %vm4313 = vcmp.lt.s32.totalorder %v748, 19
      %v4314 = vsel %vm4313, %v4306, %v4310
      %v4315 = vsel %vm4313, %v4308, %v4312
      %v4316 = vsel %vm4313, %v4302, %v4306
      %v4317 = vsel %vm4313, %v4304, %v4308
      %v4318 = vsel %vm4313, %v4298, %v4302
      %v4319 = vsel %vm4313, %v4300, %v4304
      %v4320 = vsel %vm4313, %v4310, %v4298
      %v4321 = vsel %vm4313, %v4312, %v4300
      %s4322 = scalar_lea.vmem %s7, 3968
      %v4323 = vld [vmem:[%s4322] sm:$0xff]
      %v4324 = vld [vmem:[%s4322 + $0x8] sm:$0xff]
      %v4325 = vld [vmem:[%s4322 + $0x10] sm:$0xff]
      %v4326 = vld [vmem:[%s4322 + $0x18] sm:$0xff]
      %v4327 = vld [vmem:[%s4322 + $0x20] sm:$0x1]
      %v4328 = vld [vmem:[%s4322 + $0x28] sm:$0x1]
      %v4329 = vld [vmem:[%s4322 + $0x30] sm:$0x1]
      %v4330 = vld [vmem:[%s4322 + $0x38] sm:$0x1]
      %v4331 = vmul.f32 %v4323, %v4316
      %v4332 = vmul.f32 %v4324, %v4314
      %v4333 = vmul.f32 %v4325, %v4320
      %v4334 = vmul.f32 %v4326, %v4318
      %v4335 = vmul.f32 %v4327, %v4317
      %v4336 = vmul.f32 %v4328, %v4315
      %v4337 = vmul.f32 %v4329, %v4321
      %v4338 = vmul.f32 %v4330, %v4319
      %v4339 = vadd.f32 %v4289, %v4331
      %v4340 = vadd.f32 %v4290, %v4332
      %v4341 = vadd.f32 %v4291, %v4333
      %v4342 = vadd.f32 %v4292, %v4334
      %v4343 = vadd.f32 %v4293, %v4335
      %v4344 = vadd.f32 %v4294, %v4336
      %v4345 = vadd.f32 %v4295, %v4337
      %v4346 = vadd.f32 %v4296, %v4338
      %4347 = vrot.lane.b32.xlu0 %v3857, 45
      %v4348 = vpop.permute.xlu0 %4347
      %4349 = vrot.lane.b32.xlu0 %v3861, 45
      %v4350 = vpop.permute.xlu0 %4349
      %4351 = vrot.lane.b32.xlu0 %v3858, 45
      %v4352 = vpop.permute.xlu0 %4351
      %4353 = vrot.lane.b32.xlu0 %v3862, 45
      %v4354 = vpop.permute.xlu0 %4353
      %4355 = vrot.lane.b32.xlu0 %v3859, 45
      %v4356 = vpop.permute.xlu0 %4355
      %4357 = vrot.lane.b32.xlu0 %v3863, 45
      %v4358 = vpop.permute.xlu0 %4357
      %4359 = vrot.lane.b32.xlu0 %v3860, 45
      %v4360 = vpop.permute.xlu0 %4359
      %4361 = vrot.lane.b32.xlu0 %v3864, 45
      %v4362 = vpop.permute.xlu0 %4361
      %vm4363 = vcmp.lt.s32.totalorder %v748, 45
      %v4364 = vsel %vm4363, %v4356, %v4360
      %v4365 = vsel %vm4363, %v4358, %v4362
      %v4366 = vsel %vm4363, %v4352, %v4356
      %v4367 = vsel %vm4363, %v4354, %v4358
      %v4368 = vsel %vm4363, %v4348, %v4352
      %v4369 = vsel %vm4363, %v4350, %v4354
      %v4370 = vsel %vm4363, %v4360, %v4348
      %v4371 = vsel %vm4363, %v4362, %v4350
      %s4372 = scalar_lea.vmem %s7, 4032
      %v4373 = vld [vmem:[%s4372] sm:$0xff]
      %v4374 = vld [vmem:[%s4372 + $0x8] sm:$0xff]
      %v4375 = vld [vmem:[%s4372 + $0x10] sm:$0xff]
      %v4376 = vld [vmem:[%s4372 + $0x18] sm:$0xff]
      %v4377 = vld [vmem:[%s4372 + $0x20] sm:$0x1]
      %v4378 = vld [vmem:[%s4372 + $0x28] sm:$0x1]
      %v4379 = vld [vmem:[%s4372 + $0x30] sm:$0x1]
      %v4380 = vld [vmem:[%s4372 + $0x38] sm:$0x1]
      %v4381 = vmul.f32 %v4373, %v4370
      %v4382 = vmul.f32 %v4374, %v4368
      %v4383 = vmul.f32 %v4375, %v4366
      %v4384 = vmul.f32 %v4376, %v4364
      %v4385 = vmul.f32 %v4377, %v4371
      %v4386 = vmul.f32 %v4378, %v4369
      %v4387 = vmul.f32 %v4379, %v4367
      %v4388 = vmul.f32 %v4380, %v4365
      %v4389 = vadd.f32 %v4339, %v4381
      %v4390 = vadd.f32 %v4340, %v4382
      %v4391 = vadd.f32 %v4341, %v4383
      %v4392 = vadd.f32 %v4342, %v4384
      %v4393 = vadd.f32 %v4343, %v4385
      %v4394 = vadd.f32 %v4344, %v4386
      %v4395 = vadd.f32 %v4345, %v4387
      %v4396 = vadd.f32 %v4346, %v4388
      %4397 = vrot.lane.b32.xlu0 %v3857, 40
      %v4398 = vpop.permute.xlu0 %4397
      %4399 = vrot.lane.b32.xlu0 %v3861, 40
      %v4400 = vpop.permute.xlu0 %4399
      %4401 = vrot.lane.b32.xlu0 %v3858, 40
      %v4402 = vpop.permute.xlu0 %4401
      %4403 = vrot.lane.b32.xlu0 %v3862, 40
      %v4404 = vpop.permute.xlu0 %4403
      %4405 = vrot.lane.b32.xlu0 %v3859, 40
      %v4406 = vpop.permute.xlu0 %4405
      %4407 = vrot.lane.b32.xlu0 %v3863, 40
      %v4408 = vpop.permute.xlu0 %4407
      %4409 = vrot.lane.b32.xlu0 %v3860, 40
      %v4410 = vpop.permute.xlu0 %4409
      %4411 = vrot.lane.b32.xlu0 %v3864, 40
      %v4412 = vpop.permute.xlu0 %4411
      %vm4413 = vcmp.lt.s32.totalorder %v748, 40
      %v4414 = vsel %vm4413, %v4406, %v4410
      %v4415 = vsel %vm4413, %v4408, %v4412
      %v4416 = vsel %vm4413, %v4402, %v4406
      %v4417 = vsel %vm4413, %v4404, %v4408
      %v4418 = vsel %vm4413, %v4398, %v4402
      %v4419 = vsel %vm4413, %v4400, %v4404
      %v4420 = vsel %vm4413, %v4410, %v4398
      %v4421 = vsel %vm4413, %v4412, %v4400
      %s4422 = scalar_lea.vmem %s7, 4096
      %v4423 = vld [vmem:[%s4422] sm:$0xff]
      %v4424 = vld [vmem:[%s4422 + $0x8] sm:$0xff]
      %v4425 = vld [vmem:[%s4422 + $0x10] sm:$0xff]
      %v4426 = vld [vmem:[%s4422 + $0x18] sm:$0xff]
      %v4427 = vld [vmem:[%s4422 + $0x20] sm:$0x1]
      %v4428 = vld [vmem:[%s4422 + $0x28] sm:$0x1]
      %v4429 = vld [vmem:[%s4422 + $0x30] sm:$0x1]
      %v4430 = vld [vmem:[%s4422 + $0x38] sm:$0x1]
      %v4431 = vmul.f32 %v4423, %v4420
      %v4432 = vmul.f32 %v4424, %v4418
      %v4433 = vmul.f32 %v4425, %v4416
      %v4434 = vmul.f32 %v4426, %v4414
      %v4435 = vmul.f32 %v4427, %v4421
      %v4436 = vmul.f32 %v4428, %v4419
      %v4437 = vmul.f32 %v4429, %v4417
      %v4438 = vmul.f32 %v4430, %v4415
      %v4439 = vadd.f32 %v4389, %v4431
      %v4440 = vadd.f32 %v4390, %v4432
      %v4441 = vadd.f32 %v4391, %v4433
      %v4442 = vadd.f32 %v4392, %v4434
      %v4443 = vadd.f32 %v4393, %v4435
      %v4444 = vadd.f32 %v4394, %v4436
      %v4445 = vadd.f32 %v4395, %v4437
      %v4446 = vadd.f32 %v4396, %v4438
      %4447 = vrot.lane.b32.xlu0 %v3857, 35
      %v4448 = vpop.permute.xlu0 %4447
      %4449 = vrot.lane.b32.xlu0 %v3861, 35
      %v4450 = vpop.permute.xlu0 %4449
      %4451 = vrot.lane.b32.xlu0 %v3858, 35
      %v4452 = vpop.permute.xlu0 %4451
      %4453 = vrot.lane.b32.xlu0 %v3862, 35
      %v4454 = vpop.permute.xlu0 %4453
      %4455 = vrot.lane.b32.xlu0 %v3859, 35
      %v4456 = vpop.permute.xlu0 %4455
      %4457 = vrot.lane.b32.xlu0 %v3863, 35
      %v4458 = vpop.permute.xlu0 %4457
      %4459 = vrot.lane.b32.xlu0 %v3860, 35
      %v4460 = vpop.permute.xlu0 %4459
      %4461 = vrot.lane.b32.xlu0 %v3864, 35
      %v4462 = vpop.permute.xlu0 %4461
      %vm4463 = vcmp.lt.s32.totalorder %v748, 35
      %v4464 = vsel %vm4463, %v4456, %v4460
      %v4465 = vsel %vm4463, %v4458, %v4462
      %v4466 = vsel %vm4463, %v4452, %v4456
      %v4467 = vsel %vm4463, %v4454, %v4458
      %v4468 = vsel %vm4463, %v4448, %v4452
      %v4469 = vsel %vm4463, %v4450, %v4454
      %v4470 = vsel %vm4463, %v4460, %v4448
      %v4471 = vsel %vm4463, %v4462, %v4450
      %s4472 = scalar_lea.vmem %s7, 4160
      %v4473 = vld [vmem:[%s4472] sm:$0xff]
      %v4474 = vld [vmem:[%s4472 + $0x8] sm:$0xff]
      %v4475 = vld [vmem:[%s4472 + $0x10] sm:$0xff]
      %v4476 = vld [vmem:[%s4472 + $0x18] sm:$0xff]
      %v4477 = vld [vmem:[%s4472 + $0x20] sm:$0x1]
      %v4478 = vld [vmem:[%s4472 + $0x28] sm:$0x1]
      %v4479 = vld [vmem:[%s4472 + $0x30] sm:$0x1]
      %v4480 = vld [vmem:[%s4472 + $0x38] sm:$0x1]
      %v4481 = vmul.f32 %v4473, %v4470
      %v4482 = vmul.f32 %v4474, %v4468
      %v4483 = vmul.f32 %v4475, %v4466
      %v4484 = vmul.f32 %v4476, %v4464
      %v4485 = vmul.f32 %v4477, %v4471
      %v4486 = vmul.f32 %v4478, %v4469
      %v4487 = vmul.f32 %v4479, %v4467
      %v4488 = vmul.f32 %v4480, %v4465
      %v4489 = vadd.f32 %v4439, %v4481
      %v4490 = vadd.f32 %v4440, %v4482
      %v4491 = vadd.f32 %v4441, %v4483
      %v4492 = vadd.f32 %v4442, %v4484
      %v4493 = vadd.f32 %v4443, %v4485
      %v4494 = vadd.f32 %v4444, %v4486
      %v4495 = vadd.f32 %v4445, %v4487
      %v4496 = vadd.f32 %v4446, %v4488
      %4497 = vrot.lane.b32.xlu0 %v3857, 5
      %v4498 = vpop.permute.xlu0 %4497
      %4499 = vrot.lane.b32.xlu0 %v3861, 5
      %v4500 = vpop.permute.xlu0 %4499
      %4501 = vrot.lane.b32.xlu0 %v3858, 5
      %v4502 = vpop.permute.xlu0 %4501
      %4503 = vrot.lane.b32.xlu0 %v3862, 5
      %v4504 = vpop.permute.xlu0 %4503
      %4505 = vrot.lane.b32.xlu0 %v3859, 5
      %v4506 = vpop.permute.xlu0 %4505
      %4507 = vrot.lane.b32.xlu0 %v3863, 5
      %v4508 = vpop.permute.xlu0 %4507
      %4509 = vrot.lane.b32.xlu0 %v3860, 5
      %v4510 = vpop.permute.xlu0 %4509
      %4511 = vrot.lane.b32.xlu0 %v3864, 5
      %v4512 = vpop.permute.xlu0 %4511
      %vm4513 = vcmp.lt.s32.totalorder %v748, 5
      %v4514 = vsel %vm4513, %v4506, %v4510
      %v4515 = vsel %vm4513, %v4508, %v4512
      %v4516 = vsel %vm4513, %v4502, %v4506
      %v4517 = vsel %vm4513, %v4504, %v4508
      %v4518 = vsel %vm4513, %v4498, %v4502
      %v4519 = vsel %vm4513, %v4500, %v4504
      %v4520 = vsel %vm4513, %v4510, %v4498
      %v4521 = vsel %vm4513, %v4512, %v4500
      %s4522 = scalar_lea.vmem %s7, 4224
      %v4523 = vld [vmem:[%s4522] sm:$0xff]
      %v4524 = vld [vmem:[%s4522 + $0x8] sm:$0xff]
      %v4525 = vld [vmem:[%s4522 + $0x10] sm:$0xff]
      %v4526 = vld [vmem:[%s4522 + $0x18] sm:$0xff]
      %v4527 = vld [vmem:[%s4522 + $0x20] sm:$0x1]
      %v4528 = vld [vmem:[%s4522 + $0x28] sm:$0x1]
      %v4529 = vld [vmem:[%s4522 + $0x30] sm:$0x1]
      %v4530 = vld [vmem:[%s4522 + $0x38] sm:$0x1]
      %v4531 = vmul.f32 %v4523, %v4520
      %v4532 = vmul.f32 %v4524, %v4518
      %v4533 = vmul.f32 %v4525, %v4516
      %v4534 = vmul.f32 %v4526, %v4514
      %v4535 = vmul.f32 %v4527, %v4521
      %v4536 = vmul.f32 %v4528, %v4519
      %v4537 = vmul.f32 %v4529, %v4517
      %v4538 = vmul.f32 %v4530, %v4515
      %v4539 = vadd.f32 %v4489, %v4531
      %v4540 = vadd.f32 %v4490, %v4532
      %v4541 = vadd.f32 %v4491, %v4533
      %v4542 = vadd.f32 %v4492, %v4534
      %v4543 = vadd.f32 %v4493, %v4535
      %v4544 = vadd.f32 %v4494, %v4536
      %v4545 = vadd.f32 %v4495, %v4537
      %v4546 = vadd.f32 %v4496, %v4538
      %s4547 = scalar_lea.vmem %s7, 4288
      %v4548 = vld [vmem:[%s4547] sm:$0xff]
      %v4549 = vld [vmem:[%s4547 + $0x8] sm:$0xff]
      %v4550 = vld [vmem:[%s4547 + $0x10] sm:$0xff]
      %v4551 = vld [vmem:[%s4547 + $0x18] sm:$0xff]
      %v4552 = vld [vmem:[%s4547 + $0x20] sm:$0x1]
      %v4553 = vld [vmem:[%s4547 + $0x28] sm:$0x1]
      %v4554 = vld [vmem:[%s4547 + $0x30] sm:$0x1]
      %v4555 = vld [vmem:[%s4547 + $0x38] sm:$0x1]
      %v4556 = vmul.f32 %v4548, %v3857
      %v4557 = vmul.f32 %v4549, %v3858
      %v4558 = vmul.f32 %v4550, %v3859
      %v4559 = vmul.f32 %v4551, %v3860
      %v4560 = vmul.f32 %v4552, %v3861
      %v4561 = vmul.f32 %v4553, %v3862
      %v4562 = vmul.f32 %v4554, %v3863
      %v4563 = vmul.f32 %v4555, %v3864
      %v4564 = vadd.f32 %v4539, %v4556
      %v4565 = vadd.f32 %v4540, %v4557
      %v4566 = vadd.f32 %v4541, %v4558
      %v4567 = vadd.f32 %v4542, %v4559
      %v4568 = vadd.f32 %v4543, %v4560
      %v4569 = vadd.f32 %v4544, %v4561
      %v4570 = vadd.f32 %v4545, %v4562
      %v4571 = vadd.f32 %v4546, %v4563
      %4572 = vrot.lane.b32.xlu0 %v3857, 123
      %v4573 = vpop.permute.xlu0 %4572
      %4574 = vrot.lane.b32.xlu0 %v3861, 123
      %v4575 = vpop.permute.xlu0 %4574
      %4576 = vrot.lane.b32.xlu0 %v3858, 123
      %v4577 = vpop.permute.xlu0 %4576
      %4578 = vrot.lane.b32.xlu0 %v3862, 123
      %v4579 = vpop.permute.xlu0 %4578
      %4580 = vrot.lane.b32.xlu0 %v3859, 123
      %v4581 = vpop.permute.xlu0 %4580
      %4582 = vrot.lane.b32.xlu0 %v3863, 123
      %v4583 = vpop.permute.xlu0 %4582
      %4584 = vrot.lane.b32.xlu0 %v3860, 123
      %v4585 = vpop.permute.xlu0 %4584
      %4586 = vrot.lane.b32.xlu0 %v3864, 123
      %v4587 = vpop.permute.xlu0 %4586
      %vm4588 = vcmp.lt.s32.totalorder %v748, 123
      %v4589 = vsel %vm4588, %v4581, %v4585
      %v4590 = vsel %vm4588, %v4583, %v4587
      %v4591 = vsel %vm4588, %v4577, %v4581
      %v4592 = vsel %vm4588, %v4579, %v4583
      %v4593 = vsel %vm4588, %v4573, %v4577
      %v4594 = vsel %vm4588, %v4575, %v4579
      %v4595 = vsel %vm4588, %v4585, %v4573
      %v4596 = vsel %vm4588, %v4587, %v4575
      %s4597 = scalar_lea.vmem %s7, 4352
      %v4598 = vld [vmem:[%s4597] sm:$0xff]
      %v4599 = vld [vmem:[%s4597 + $0x8] sm:$0xff]
      %v4600 = vld [vmem:[%s4597 + $0x10] sm:$0xff]
      %v4601 = vld [vmem:[%s4597 + $0x18] sm:$0xff]
      %v4602 = vld [vmem:[%s4597 + $0x20] sm:$0x1]
      %v4603 = vld [vmem:[%s4597 + $0x28] sm:$0x1]
      %v4604 = vld [vmem:[%s4597 + $0x30] sm:$0x1]
      %v4605 = vld [vmem:[%s4597 + $0x38] sm:$0x1]
      %v4606 = vmul.f32 %v4598, %v4593
      %v4607 = vmul.f32 %v4599, %v4591
      %v4608 = vmul.f32 %v4600, %v4589
      %v4609 = vmul.f32 %v4601, %v4595
      %v4610 = vmul.f32 %v4602, %v4594
      %v4611 = vmul.f32 %v4603, %v4592
      %v4612 = vmul.f32 %v4604, %v4590
      %v4613 = vmul.f32 %v4605, %v4596
      %v4614 = vadd.f32 %v4564, %v4606
      %v4615 = vadd.f32 %v4565, %v4607
      %v4616 = vadd.f32 %v4566, %v4608
      %v4617 = vadd.f32 %v4567, %v4609
      %v4618 = vadd.f32 %v4568, %v4610
      %v4619 = vadd.f32 %v4569, %v4611
      %v4620 = vadd.f32 %v4570, %v4612
      %v4621 = vadd.f32 %v4571, %v4613
      %4622 = vrot.lane.b32.xlu0 %v3857, 93
      %v4623 = vpop.permute.xlu0 %4622
      %4624 = vrot.lane.b32.xlu0 %v3861, 93
      %v4625 = vpop.permute.xlu0 %4624
      %4626 = vrot.lane.b32.xlu0 %v3858, 93
      %v4627 = vpop.permute.xlu0 %4626
      %4628 = vrot.lane.b32.xlu0 %v3862, 93
      %v4629 = vpop.permute.xlu0 %4628
      %4630 = vrot.lane.b32.xlu0 %v3859, 93
      %v4631 = vpop.permute.xlu0 %4630
      %4632 = vrot.lane.b32.xlu0 %v3863, 93
      %v4633 = vpop.permute.xlu0 %4632
      %4634 = vrot.lane.b32.xlu0 %v3860, 93
      %v4635 = vpop.permute.xlu0 %4634
      %4636 = vrot.lane.b32.xlu0 %v3864, 93
      %v4637 = vpop.permute.xlu0 %4636
      %vm4638 = vcmp.lt.s32.totalorder %v748, 93
      %v4639 = vsel %vm4638, %v4631, %v4635
      %v4640 = vsel %vm4638, %v4633, %v4637
      %v4641 = vsel %vm4638, %v4627, %v4631
      %v4642 = vsel %vm4638, %v4629, %v4633
      %v4643 = vsel %vm4638, %v4623, %v4627
      %v4644 = vsel %vm4638, %v4625, %v4629
      %v4645 = vsel %vm4638, %v4635, %v4623
      %v4646 = vsel %vm4638, %v4637, %v4625
      %s4647 = scalar_lea.vmem %s7, 4416
      %v4648 = vld [vmem:[%s4647] sm:$0xff]
      %v4649 = vld [vmem:[%s4647 + $0x8] sm:$0xff]
      %v4650 = vld [vmem:[%s4647 + $0x10] sm:$0xff]
      %v4651 = vld [vmem:[%s4647 + $0x18] sm:$0xff]
      %v4652 = vld [vmem:[%s4647 + $0x20] sm:$0x1]
      %v4653 = vld [vmem:[%s4647 + $0x28] sm:$0x1]
      %v4654 = vld [vmem:[%s4647 + $0x30] sm:$0x1]
      %v4655 = vld [vmem:[%s4647 + $0x38] sm:$0x1]
      %v4656 = vmul.f32 %v4648, %v4643
      %v4657 = vmul.f32 %v4649, %v4641
      %v4658 = vmul.f32 %v4650, %v4639
      %v4659 = vmul.f32 %v4651, %v4645
      %v4660 = vmul.f32 %v4652, %v4644
      %v4661 = vmul.f32 %v4653, %v4642
      %v4662 = vmul.f32 %v4654, %v4640
      %v4663 = vmul.f32 %v4655, %v4646
      %v4664 = vadd.f32 %v4614, %v4656
      %v4665 = vadd.f32 %v4615, %v4657
      %v4666 = vadd.f32 %v4616, %v4658
      %v4667 = vadd.f32 %v4617, %v4659
      %v4668 = vadd.f32 %v4618, %v4660
      %v4669 = vadd.f32 %v4619, %v4661
      %v4670 = vadd.f32 %v4620, %v4662
      %v4671 = vadd.f32 %v4621, %v4663
      %4672 = vrot.lane.b32.xlu0 %v3857, 88
      %v4673 = vpop.permute.xlu0 %4672
      %4674 = vrot.lane.b32.xlu0 %v3861, 88
      %v4675 = vpop.permute.xlu0 %4674
      %4676 = vrot.lane.b32.xlu0 %v3858, 88
      %v4677 = vpop.permute.xlu0 %4676
      %4678 = vrot.lane.b32.xlu0 %v3862, 88
      %v4679 = vpop.permute.xlu0 %4678
      %4680 = vrot.lane.b32.xlu0 %v3859, 88
      %v4681 = vpop.permute.xlu0 %4680
      %4682 = vrot.lane.b32.xlu0 %v3863, 88
      %v4683 = vpop.permute.xlu0 %4682
      %4684 = vrot.lane.b32.xlu0 %v3860, 88
      %v4685 = vpop.permute.xlu0 %4684
      %4686 = vrot.lane.b32.xlu0 %v3864, 88
      %v4687 = vpop.permute.xlu0 %4686
      %vm4688 = vcmp.lt.s32.totalorder %v748, 88
      %v4689 = vsel %vm4688, %v4681, %v4685
      %v4690 = vsel %vm4688, %v4683, %v4687
      %v4691 = vsel %vm4688, %v4677, %v4681
      %v4692 = vsel %vm4688, %v4679, %v4683
      %v4693 = vsel %vm4688, %v4673, %v4677
      %v4694 = vsel %vm4688, %v4675, %v4679
      %v4695 = vsel %vm4688, %v4685, %v4673
      %v4696 = vsel %vm4688, %v4687, %v4675
      %s4697 = scalar_lea.vmem %s7, 4480
      %v4698 = vld [vmem:[%s4697] sm:$0xff]
      %v4699 = vld [vmem:[%s4697 + $0x8] sm:$0xff]
      %v4700 = vld [vmem:[%s4697 + $0x10] sm:$0xff]
      %v4701 = vld [vmem:[%s4697 + $0x18] sm:$0xff]
      %v4702 = vld [vmem:[%s4697 + $0x20] sm:$0x1]
      %v4703 = vld [vmem:[%s4697 + $0x28] sm:$0x1]
      %v4704 = vld [vmem:[%s4697 + $0x30] sm:$0x1]
      %v4705 = vld [vmem:[%s4697 + $0x38] sm:$0x1]
      %v4706 = vmul.f32 %v4698, %v4693
      %v4707 = vmul.f32 %v4699, %v4691
      %v4708 = vmul.f32 %v4700, %v4689
      %v4709 = vmul.f32 %v4701, %v4695
      %v4710 = vmul.f32 %v4702, %v4694
      %v4711 = vmul.f32 %v4703, %v4692
      %v4712 = vmul.f32 %v4704, %v4690
      %v4713 = vmul.f32 %v4705, %v4696
      %v4714 = vadd.f32 %v4664, %v4706
      %v4715 = vadd.f32 %v4665, %v4707
      %v4716 = vadd.f32 %v4666, %v4708
      %v4717 = vadd.f32 %v4667, %v4709
      %v4718 = vadd.f32 %v4668, %v4710
      %v4719 = vadd.f32 %v4669, %v4711
      %v4720 = vadd.f32 %v4670, %v4712
      %v4721 = vadd.f32 %v4671, %v4713
      %4722 = vrot.lane.b32.xlu0 %v3857, 83
      %v4723 = vpop.permute.xlu0 %4722
      %4724 = vrot.lane.b32.xlu0 %v3861, 83
      %v4725 = vpop.permute.xlu0 %4724
      %4726 = vrot.lane.b32.xlu0 %v3858, 83
      %v4727 = vpop.permute.xlu0 %4726
      %4728 = vrot.lane.b32.xlu0 %v3862, 83
      %v4729 = vpop.permute.xlu0 %4728
      %4730 = vrot.lane.b32.xlu0 %v3859, 83
      %v4731 = vpop.permute.xlu0 %4730
      %4732 = vrot.lane.b32.xlu0 %v3863, 83
      %v4733 = vpop.permute.xlu0 %4732
      %4734 = vrot.lane.b32.xlu0 %v3860, 83
      %v4735 = vpop.permute.xlu0 %4734
      %4736 = vrot.lane.b32.xlu0 %v3864, 83
      %v4737 = vpop.permute.xlu0 %4736
      %vm4738 = vcmp.lt.s32.totalorder %v748, 83
      %v4739 = vsel %vm4738, %v4731, %v4735
      %v4740 = vsel %vm4738, %v4733, %v4737
      %v4741 = vsel %vm4738, %v4727, %v4731
      %v4742 = vsel %vm4738, %v4729, %v4733
      %v4743 = vsel %vm4738, %v4723, %v4727
      %v4744 = vsel %vm4738, %v4725, %v4729
      %v4745 = vsel %vm4738, %v4735, %v4723
      %v4746 = vsel %vm4738, %v4737, %v4725
      %s4747 = scalar_lea.vmem %s7, 4544
      %v4748 = vld [vmem:[%s4747] sm:$0xff]
      %v4749 = vld [vmem:[%s4747 + $0x8] sm:$0xff]
      %v4750 = vld [vmem:[%s4747 + $0x10] sm:$0xff]
      %v4751 = vld [vmem:[%s4747 + $0x18] sm:$0xff]
      %v4752 = vld [vmem:[%s4747 + $0x20] sm:$0x1]
      %v4753 = vld [vmem:[%s4747 + $0x28] sm:$0x1]
      %v4754 = vld [vmem:[%s4747 + $0x30] sm:$0x1]
      %v4755 = vld [vmem:[%s4747 + $0x38] sm:$0x1]
      %v4756 = vmul.f32 %v4748, %v4743
      %v4757 = vmul.f32 %v4749, %v4741
      %v4758 = vmul.f32 %v4750, %v4739
      %v4759 = vmul.f32 %v4751, %v4745
      %v4760 = vmul.f32 %v4752, %v4744
      %v4761 = vmul.f32 %v4753, %v4742
      %v4762 = vmul.f32 %v4754, %v4740
      %v4763 = vmul.f32 %v4755, %v4746
      %v4764 = vadd.f32 %v4714, %v4756
      %v4765 = vadd.f32 %v4715, %v4757
      %v4766 = vadd.f32 %v4716, %v4758
      %v4767 = vadd.f32 %v4717, %v4759
      %v4768 = vadd.f32 %v4718, %v4760
      %v4769 = vadd.f32 %v4719, %v4761
      %v4770 = vadd.f32 %v4720, %v4762
      %v4771 = vadd.f32 %v4721, %v4763
      %s4772 = scalar_lea.vmem %s7, 4608
      %v4773 = vld [vmem:[%s4772] sm:$0xff]
      %v4774 = vld [vmem:[%s4772 + $0x8] sm:$0xff]
      %v4775 = vld [vmem:[%s4772 + $0x10] sm:$0xff]
      %v4776 = vld [vmem:[%s4772 + $0x18] sm:$0xff]
      %v4777 = vld [vmem:[%s4772 + $0x20] sm:$0x1]
      %v4778 = vld [vmem:[%s4772 + $0x28] sm:$0x1]
      %v4779 = vld [vmem:[%s4772 + $0x30] sm:$0x1]
      %v4780 = vld [vmem:[%s4772 + $0x38] sm:$0x1]
      %v4781 = vmul.f32 %v4773, %v3915
      %v4782 = vmul.f32 %v4774, %v3921
      %v4783 = vmul.f32 %v4775, %v3919
      %v4784 = vmul.f32 %v4776, %v3917
      %v4785 = vmul.f32 %v4777, %v3916
      %v4786 = vmul.f32 %v4778, %v3922
      %v4787 = vmul.f32 %v4779, %v3920
      %v4788 = vmul.f32 %v4780, %v3918
      %v4789 = vadd.f32 %v4764, %v4781
      %v4790 = vadd.f32 %v4765, %v4782
      %v4791 = vadd.f32 %v4766, %v4783
      %v4792 = vadd.f32 %v4767, %v4784
      %v4793 = vadd.f32 %v4768, %v4785
      %v4794 = vadd.f32 %v4769, %v4786
      %v4795 = vadd.f32 %v4770, %v4787
      %v4796 = vadd.f32 %v4771, %v4788
      %s4797 = scalar_lea.vmem %s7, 4672
      %v4798 = vld [vmem:[%s4797] sm:$0xff]
      %v4799 = vld [vmem:[%s4797 + $0x8] sm:$0xff]
      %v4800 = vld [vmem:[%s4797 + $0x10] sm:$0xff]
      %v4801 = vld [vmem:[%s4797 + $0x18] sm:$0xff]
      %v4802 = vld [vmem:[%s4797 + $0x20] sm:$0x1]
      %v4803 = vld [vmem:[%s4797 + $0x28] sm:$0x1]
      %v4804 = vld [vmem:[%s4797 + $0x30] sm:$0x1]
      %v4805 = vld [vmem:[%s4797 + $0x38] sm:$0x1]
      %v4806 = vmul.f32 %v4798, %v3965
      %v4807 = vmul.f32 %v4799, %v3971
      %v4808 = vmul.f32 %v4800, %v3969
      %v4809 = vmul.f32 %v4801, %v3967
      %v4810 = vmul.f32 %v4802, %v3966
      %v4811 = vmul.f32 %v4803, %v3972
      %v4812 = vmul.f32 %v4804, %v3970
      %v4813 = vmul.f32 %v4805, %v3968
      %v4814 = vadd.f32 %v4789, %v4806
      %v4815 = vadd.f32 %v4790, %v4807
      %v4816 = vadd.f32 %v4791, %v4808
      %v4817 = vadd.f32 %v4792, %v4809
      %v4818 = vadd.f32 %v4793, %v4810
      %v4819 = vadd.f32 %v4794, %v4811
      %v4820 = vadd.f32 %v4795, %v4812
      %v4821 = vadd.f32 %v4796, %v4813
      %s4822 = scalar_lea.vmem %s7, 4736
      %v4823 = vld [vmem:[%s4822] sm:$0xff]
      %v4824 = vld [vmem:[%s4822 + $0x8] sm:$0xff]
      %v4825 = vld [vmem:[%s4822 + $0x10] sm:$0xff]
      %v4826 = vld [vmem:[%s4822 + $0x18] sm:$0xff]
      %v4827 = vld [vmem:[%s4822 + $0x20] sm:$0x1]
      %v4828 = vld [vmem:[%s4822 + $0x28] sm:$0x1]
      %v4829 = vld [vmem:[%s4822 + $0x30] sm:$0x1]
      %v4830 = vld [vmem:[%s4822 + $0x38] sm:$0x1]
      %v4831 = vmul.f32 %v4823, %v4015
      %v4832 = vmul.f32 %v4824, %v4021
      %v4833 = vmul.f32 %v4825, %v4019
      %v4834 = vmul.f32 %v4826, %v4017
      %v4835 = vmul.f32 %v4827, %v4016
      %v4836 = vmul.f32 %v4828, %v4022
      %v4837 = vmul.f32 %v4829, %v4020
      %v4838 = vmul.f32 %v4830, %v4018
      %v4839 = vadd.f32 %v4814, %v4831
      %v4840 = vadd.f32 %v4815, %v4832
      %v4841 = vadd.f32 %v4816, %v4833
      %v4842 = vadd.f32 %v4817, %v4834
      %v4843 = vadd.f32 %v4818, %v4835
      %v4844 = vadd.f32 %v4819, %v4836
      %v4845 = vadd.f32 %v4820, %v4837
      %v4846 = vadd.f32 %v4821, %v4838
      %s4847 = scalar_lea.vmem %s7, 4800
      %v4848 = vld [vmem:[%s4847] sm:$0xff]
      %v4849 = vld [vmem:[%s4847 + $0x8] sm:$0xff]
      %v4850 = vld [vmem:[%s4847 + $0x10] sm:$0xff]
      %v4851 = vld [vmem:[%s4847 + $0x18] sm:$0xff]
      %v4852 = vld [vmem:[%s4847 + $0x20] sm:$0x1]
      %v4853 = vld [vmem:[%s4847 + $0x28] sm:$0x1]
      %v4854 = vld [vmem:[%s4847 + $0x30] sm:$0x1]
      %v4855 = vld [vmem:[%s4847 + $0x38] sm:$0x1]
      %v4856 = vmul.f32 %v4848, %v4065
      %v4857 = vmul.f32 %v4849, %v4071
      %v4858 = vmul.f32 %v4850, %v4069
      %v4859 = vmul.f32 %v4851, %v4067
      %v4860 = vmul.f32 %v4852, %v4066
      %v4861 = vmul.f32 %v4853, %v4072
      %v4862 = vmul.f32 %v4854, %v4070
      %v4863 = vmul.f32 %v4855, %v4068
      %v4864 = vadd.f32 %v4839, %v4856
      %v4865 = vadd.f32 %v4840, %v4857
      %v4866 = vadd.f32 %v4841, %v4858
      %v4867 = vadd.f32 %v4842, %v4859
      %v4868 = vadd.f32 %v4843, %v4860
      %v4869 = vadd.f32 %v4844, %v4861
      %v4870 = vadd.f32 %v4845, %v4862
      %v4871 = vadd.f32 %v4846, %v4863
      %s4872 = scalar_lea.vmem %s7, 4864
      %v4873 = vld [vmem:[%s4872] sm:$0xff]
      %v4874 = vld [vmem:[%s4872 + $0x8] sm:$0xff]
      %v4875 = vld [vmem:[%s4872 + $0x10] sm:$0xff]
      %v4876 = vld [vmem:[%s4872 + $0x18] sm:$0xff]
      %v4877 = vld [vmem:[%s4872 + $0x20] sm:$0x1]
      %v4878 = vld [vmem:[%s4872 + $0x28] sm:$0x1]
      %v4879 = vld [vmem:[%s4872 + $0x30] sm:$0x1]
      %v4880 = vld [vmem:[%s4872 + $0x38] sm:$0x1]
      %v4881 = vmul.f32 %v4873, %v4114
      %v4882 = vmul.f32 %v4874, %v4120
      %v4883 = vmul.f32 %v4875, %v4118
      %v4884 = vmul.f32 %v4876, %v4116
      %v4885 = vmul.f32 %v4877, %v4115
      %v4886 = vmul.f32 %v4878, %v4121
      %v4887 = vmul.f32 %v4879, %v4119
      %v4888 = vmul.f32 %v4880, %v4117
      %v4889 = vadd.f32 %v4864, %v4881
      %v4890 = vadd.f32 %v4865, %v4882
      %v4891 = vadd.f32 %v4866, %v4883
      %v4892 = vadd.f32 %v4867, %v4884
      %v4893 = vadd.f32 %v4868, %v4885
      %v4894 = vadd.f32 %v4869, %v4886
      %v4895 = vadd.f32 %v4870, %v4887
      %v4896 = vadd.f32 %v4871, %v4888
      %s4897 = scalar_lea.vmem %s7, 4928
      %v4898 = vld [vmem:[%s4897] sm:$0xff]
      %v4899 = vld [vmem:[%s4897 + $0x8] sm:$0xff]
      %v4900 = vld [vmem:[%s4897 + $0x10] sm:$0xff]
      %v4901 = vld [vmem:[%s4897 + $0x18] sm:$0xff]
      %v4902 = vld [vmem:[%s4897 + $0x20] sm:$0x1]
      %v4903 = vld [vmem:[%s4897 + $0x28] sm:$0x1]
      %v4904 = vld [vmem:[%s4897 + $0x30] sm:$0x1]
      %v4905 = vld [vmem:[%s4897 + $0x38] sm:$0x1]
      %v4906 = vmul.f32 %v4898, %v4164
      %v4907 = vmul.f32 %v4899, %v4170
      %v4908 = vmul.f32 %v4900, %v4168
      %v4909 = vmul.f32 %v4901, %v4166
      %v4910 = vmul.f32 %v4902, %v4165
      %v4911 = vmul.f32 %v4903, %v4171
      %v4912 = vmul.f32 %v4904, %v4169
      %v4913 = vmul.f32 %v4905, %v4167
      %v4914 = vadd.f32 %v4889, %v4906
      %v4915 = vadd.f32 %v4890, %v4907
      %v4916 = vadd.f32 %v4891, %v4908
      %v4917 = vadd.f32 %v4892, %v4909
      %v4918 = vadd.f32 %v4893, %v4910
      %v4919 = vadd.f32 %v4894, %v4911
      %v4920 = vadd.f32 %v4895, %v4912
      %v4921 = vadd.f32 %v4896, %v4913
      %s4922 = scalar_lea.vmem %s7, 4992
      %v4923 = vld [vmem:[%s4922] sm:$0xff]
      %v4924 = vld [vmem:[%s4922 + $0x8] sm:$0xff]
      %v4925 = vld [vmem:[%s4922 + $0x10] sm:$0xff]
      %v4926 = vld [vmem:[%s4922 + $0x18] sm:$0xff]
      %v4927 = vld [vmem:[%s4922 + $0x20] sm:$0x1]
      %v4928 = vld [vmem:[%s4922 + $0x28] sm:$0x1]
      %v4929 = vld [vmem:[%s4922 + $0x30] sm:$0x1]
      %v4930 = vld [vmem:[%s4922 + $0x38] sm:$0x1]
      %v4931 = vmul.f32 %v4923, %v4214
      %v4932 = vmul.f32 %v4924, %v4220
      %v4933 = vmul.f32 %v4925, %v4218
      %v4934 = vmul.f32 %v4926, %v4216
      %v4935 = vmul.f32 %v4927, %v4215
      %v4936 = vmul.f32 %v4928, %v4221
      %v4937 = vmul.f32 %v4929, %v4219
      %v4938 = vmul.f32 %v4930, %v4217
      %v4939 = vadd.f32 %v4914, %v4931
      %v4940 = vadd.f32 %v4915, %v4932
      %v4941 = vadd.f32 %v4916, %v4933
      %v4942 = vadd.f32 %v4917, %v4934
      %v4943 = vadd.f32 %v4918, %v4935
      %v4944 = vadd.f32 %v4919, %v4936
      %v4945 = vadd.f32 %v4920, %v4937
      %v4946 = vadd.f32 %v4921, %v4938
      %s4947 = scalar_lea.vmem %s7, 5056
      %v4948 = vld [vmem:[%s4947] sm:$0xff]
      %v4949 = vld [vmem:[%s4947 + $0x8] sm:$0xff]
      %v4950 = vld [vmem:[%s4947 + $0x10] sm:$0xff]
      %v4951 = vld [vmem:[%s4947 + $0x18] sm:$0xff]
      %v4952 = vld [vmem:[%s4947 + $0x20] sm:$0x1]
      %v4953 = vld [vmem:[%s4947 + $0x28] sm:$0x1]
      %v4954 = vld [vmem:[%s4947 + $0x30] sm:$0x1]
      %v4955 = vld [vmem:[%s4947 + $0x38] sm:$0x1]
      %v4956 = vmul.f32 %v4948, %v4264
      %v4957 = vmul.f32 %v4949, %v4270
      %v4958 = vmul.f32 %v4950, %v4268
      %v4959 = vmul.f32 %v4951, %v4266
      %v4960 = vmul.f32 %v4952, %v4265
      %v4961 = vmul.f32 %v4953, %v4271
      %v4962 = vmul.f32 %v4954, %v4269
      %v4963 = vmul.f32 %v4955, %v4267
      %v4964 = vadd.f32 %v4939, %v4956
      %v4965 = vadd.f32 %v4940, %v4957
      %v4966 = vadd.f32 %v4941, %v4958
      %v4967 = vadd.f32 %v4942, %v4959
      %v4968 = vadd.f32 %v4943, %v4960
      %v4969 = vadd.f32 %v4944, %v4961
      %v4970 = vadd.f32 %v4945, %v4962
      %v4971 = vadd.f32 %v4946, %v4963
      %s4972 = scalar_lea.vmem %s7, 5120
      %v4973 = vld [vmem:[%s4972] sm:$0xff]
      %v4974 = vld [vmem:[%s4972 + $0x8] sm:$0xff]
      %v4975 = vld [vmem:[%s4972 + $0x10] sm:$0xff]
      %v4976 = vld [vmem:[%s4972 + $0x18] sm:$0xff]
      %v4977 = vld [vmem:[%s4972 + $0x20] sm:$0x1]
      %v4978 = vld [vmem:[%s4972 + $0x28] sm:$0x1]
      %v4979 = vld [vmem:[%s4972 + $0x30] sm:$0x1]
      %v4980 = vld [vmem:[%s4972 + $0x38] sm:$0x1]
      %v4981 = vmul.f32 %v4973, %v4314
      %v4982 = vmul.f32 %v4974, %v4320
      %v4983 = vmul.f32 %v4975, %v4318
      %v4984 = vmul.f32 %v4976, %v4316
      %v4985 = vmul.f32 %v4977, %v4315
      %v4986 = vmul.f32 %v4978, %v4321
      %v4987 = vmul.f32 %v4979, %v4319
      %v4988 = vmul.f32 %v4980, %v4317
      %v4989 = vadd.f32 %v4964, %v4981
      %v4990 = vadd.f32 %v4965, %v4982
      %v4991 = vadd.f32 %v4966, %v4983
      %v4992 = vadd.f32 %v4967, %v4984
      %v4993 = vadd.f32 %v4968, %v4985
      %v4994 = vadd.f32 %v4969, %v4986
      %v4995 = vadd.f32 %v4970, %v4987
      %v4996 = vadd.f32 %v4971, %v4988
      %s4997 = scalar_lea.vmem %s6, 32
      %v4998 = vld [vmem:[%s4997] sm:$0xff]
      %v4999 = vld [vmem:[%s4997 + $0x8] sm:$0x1]
      %5001 = vset.pattern.permute.xlu0 0
      %5002 = vperm.xlu0 %5001, %v3896
      %v5003 = vpop.permute.xlu0 %5002
      %5006 = vset.pattern.permute.xlu0 0
      %5007 = vperm.xlu0 %5006, %v3897
      %v5008 = vpop.permute.xlu0 %5007
      %v5010 = vmul.f32 %v5003, %v4989
      %v5011 = vmul.f32 %v5003, %v4990
      %v5012 = vmul.f32 %v5003, %v4991
      %v5013 = vmul.f32 %v5003, %v4992
      %v5014 = vmul.f32 %v5008, %v4993
      %v5015 = vmul.f32 %v5008, %v4994
      %v5016 = vmul.f32 %v5008, %v4995
      %v5017 = vmul.f32 %v5008, %v4996
      %5019 = vset.pattern.permute.xlu0 0
      %5020 = vperm.xlu0 %5019, %v4998
      %v5021 = vpop.permute.xlu0 %5020
      %5024 = vset.pattern.permute.xlu0 0
      %5025 = vperm.xlu0 %5024, %v4999
      %v5026 = vpop.permute.xlu0 %5025
      %v5028 = vadd.f32 %v5021, %v5010
      %v5029 = vadd.f32 %v5021, %v5011
      %v5030 = vadd.f32 %v5021, %v5012
      %v5031 = vadd.f32 %v5021, %v5013
      %v5032 = vadd.f32 %v5026, %v5014
      %v5033 = vadd.f32 %v5026, %v5015
      %v5034 = vadd.f32 %v5026, %v5016
      %v5035 = vadd.f32 %v5026, %v5017
      %s5036 = scalar_lea.vmem %s5, 32
      %v5037 = vld [vmem:[%s5036] sm:$0xff]
      %v5038 = vld [vmem:[%s5036 + $0x8] sm:$0x1]
      %s5039 = scalar_lea.vmem %s8, 128
      %v5040 = vld [vmem:[%s5039] sm:$0xff]
      %v5041 = vld [vmem:[%s5039 + $0x8] sm:$0xff]
      %v5042 = vld [vmem:[%s5039 + $0x10] sm:$0xff]
      %v5043 = vld [vmem:[%s5039 + $0x18] sm:$0xff]
      %v5044 = vld [vmem:[%s5039 + $0x20] sm:$0x1]
      %v5045 = vld [vmem:[%s5039 + $0x28] sm:$0x1]
      %v5046 = vld [vmem:[%s5039 + $0x30] sm:$0x1]
      %v5047 = vld [vmem:[%s5039 + $0x38] sm:$0x1]
      %5049 = vset.pattern.permute.xlu0 0
      %5050 = vperm.xlu0 %5049, %v5037
      %v5051 = vpop.permute.xlu0 %5050
      %5054 = vset.pattern.permute.xlu0 0
      %5055 = vperm.xlu0 %5054, %v5038
      %v5056 = vpop.permute.xlu0 %5055
      %v5058 = vmul.f32 %v5051, %v5040
      %v5059 = vmul.f32 %v5051, %v5041
      %v5060 = vmul.f32 %v5051, %v5042
      %v5061 = vmul.f32 %v5051, %v5043
      %v5062 = vmul.f32 %v5056, %v5044
      %v5063 = vmul.f32 %v5056, %v5045
      %v5064 = vmul.f32 %v5056, %v5046
      %v5065 = vmul.f32 %v5056, %v5047
      %v5066 = vadd.f32 %v5028, %v5058
      %v5067 = vadd.f32 %v5029, %v5059
      %v5068 = vadd.f32 %v5030, %v5060
      %v5069 = vadd.f32 %v5031, %v5061
      %v5070 = vadd.f32 %v5032, %v5062
      %v5071 = vadd.f32 %v5033, %v5063
      %v5072 = vadd.f32 %v5034, %v5064
      %v5073 = vadd.f32 %v5035, %v5065
      %v5074 = vadd.f32 %v5066, %v5067
      %v5075 = vadd.f32 %v5074, %v5068
      %v5076 = vadd.f32 %v5075, %v5069
      %5077 = vadd.xlane.f32.xlu0 %v5076
      %v5078 = vpop.xlane.xlu0 %5077
      %v5079 = vsel %vm678, %v5070, 0.0
      %v5080 = vsel %vm678, %v5071, 0.0
      %v5081 = vadd.f32 %v5079, %v5080
      %v5082 = vsel %vm678, %v5072, 0.0
      %v5083 = vadd.f32 %v5081, %v5082
      %v5084 = vsel %vm678, %v5073, 0.0
      %v5085 = vadd.f32 %v5083, %v5084
      %5086 = vadd.xlane.f32.xlu0 %v5085
      %v5087 = vpop.xlane.xlu0 %5086
      %v5088 = vmul.f32 %v5078, %v688
      %v5089 = vmul.f32 %v5087, %v688
      %v5090 = vsub.f32 %v5066, %v5088
      %v5091 = vsub.f32 %v5067, %v5088
      %v5092 = vsub.f32 %v5068, %v5088
      %v5093 = vsub.f32 %v5069, %v5088
      %v5094 = vsub.f32 %v5070, %v5089
      %v5095 = vsub.f32 %v5071, %v5089
      %v5096 = vsub.f32 %v5072, %v5089
      %v5097 = vsub.f32 %v5073, %v5089
      %v5098 = vmul.f32 %v5090, %v5090
      %v5099 = vmul.f32 %v5091, %v5091
      %v5100 = vmul.f32 %v5092, %v5092
      %v5101 = vmul.f32 %v5093, %v5093
      %v5102 = vmul.f32 %v5094, %v5094
      %v5103 = vmul.f32 %v5095, %v5095
      %v5104 = vmul.f32 %v5096, %v5096
      %v5105 = vmul.f32 %v5097, %v5097
      %v5106 = vadd.f32 %v5098, %v5099
      %v5107 = vadd.f32 %v5106, %v5100
      %v5108 = vadd.f32 %v5107, %v5101
      %5109 = vadd.xlane.f32.xlu0 %v5108
      %v5110 = vpop.xlane.xlu0 %5109
      %v5111 = vsel %vm678, %v5102, 0.0
      %v5112 = vsel %vm678, %v5103, 0.0
      %v5113 = vadd.f32 %v5111, %v5112
      %v5114 = vsel %vm678, %v5104, 0.0
      %v5115 = vadd.f32 %v5113, %v5114
      %v5116 = vsel %vm678, %v5105, 0.0
      %v5117 = vadd.f32 %v5115, %v5116
      %5118 = vadd.xlane.f32.xlu0 %v5117
      %v5119 = vpop.xlane.xlu0 %5118
      %v5120 = vmul.f32 %v5110, %v688
      %v5121 = vmul.f32 %v5119, %v688
      %s5122 = scalar_lea.vmem %s9, 32
      %v5123 = vld [vmem:[%s5122] sm:$0xff]
      %v5124 = vld [vmem:[%s5122 + $0x8] sm:$0x1]
      %v5125 = vadd.f32 %v5120, 1e-06
      %v5126 = vadd.f32 %v5121, 1e-06
      %v5127 = vrsqrt.pop %v5125
      %v5128 = vrsqrt.pop %v5126
      %v5129 = vmul.f32 %v5123, %v5127
      %v5130 = vmul.f32 %v5124, %v5128
      %5132 = vset.pattern.permute.xlu0 0
      %5133 = vperm.xlu0 %5132, %v5129
      %v5134 = vpop.permute.xlu0 %5133
      %5137 = vset.pattern.permute.xlu0 0
      %5138 = vperm.xlu0 %5137, %v5130
      %v5139 = vpop.permute.xlu0 %5138
      %v5141 = vmul.f32 %v5090, %v5134
      %v5142 = vmul.f32 %v5091, %v5134
      %v5143 = vmul.f32 %v5092, %v5134
      %v5144 = vmul.f32 %v5093, %v5134
      %v5145 = vmul.f32 %v5094, %v5139
      %v5146 = vmul.f32 %v5095, %v5139
      %v5147 = vmul.f32 %v5096, %v5139
      %v5148 = vmul.f32 %v5097, %v5139
      %s5149 = scalar_lea.vmem %s10, 32
      %v5150 = vld [vmem:[%s5149] sm:$0xff]
      %v5151 = vld [vmem:[%s5149 + $0x8] sm:$0x1]
      %5153 = vset.pattern.permute.xlu0 0
      %5154 = vperm.xlu0 %5153, %v5150
      %v5155 = vpop.permute.xlu0 %5154
      %5158 = vset.pattern.permute.xlu0 0
      %5159 = vperm.xlu0 %5158, %v5151
      %v5160 = vpop.permute.xlu0 %5159
      %v5162 = vadd.f32 %v5141, %v5155
      %v5163 = vadd.f32 %v5142, %v5155
      %v5164 = vadd.f32 %v5143, %v5155
      %v5165 = vadd.f32 %v5144, %v5155
      %v5166 = vadd.f32 %v5145, %v5160
      %v5167 = vadd.f32 %v5146, %v5160
      %v5168 = vadd.f32 %v5147, %v5160
      %v5169 = vadd.f32 %v5148, %v5160
      %s5170 = scalar_lea.vmem %s11, 32
      %v5171 = vld [vmem:[%s5170] sm:$0xff]
      %v5172 = vld [vmem:[%s5170 + $0x8] sm:$0xff]
      %v5174 = vsel %vm3303, %v5171, 0
      %v5177 = vsel %vm3303, %v5172, 0
      %v5180 = vsel %vm678, %v5166, 0
      %v5183 = vsel %vm678, %v5167, 0
      %v5186 = vsel %vm678, %v5168, 0
      %v5189 = vsel %vm678, %v5169, 0
      %5191 = vmatprep.subr.mxu0 %v5163
      %5192 = vmatpush1.msra.mxu0 %v5162
      %5193 = vmatprep.subr.mxu0 %v5183
      %5194 = vmatpush1.msra.mxu0 %v5180
      %5195 = vmatprep.subr.mxu0 0.0
      %5196 = vmatpush1.msra.mxu0 0.0
      %5197 = vmatprep.subr.mxu0 0.0
      %5198 = vmatpush1.msra.mxu0 0.0
      %5199 = vmatprep.subr.mxu0 0.0
      %5200 = vmatpush1.msra.mxu0 0.0
      %5201 = vmatprep.subr.mxu0 0.0
      %5202 = vmatpush1.msra.mxu0 0.0
      %5203 = vmatprep.subr.mxu0 0.0
      %5204 = vmatpush1.msra.mxu0 0.0
      %5205 = vmatprep.subr.mxu0 0.0
      %5206 = vmatpush1.msra.mxu0 0.0
      %5207 = vmatprep.subr.mxu0 0.0
      %5208 = vmatpush1.msra.mxu0 0.0
      %5209 = vmatprep.subr.mxu0 0.0
      %5210 = vmatpush1.msra.mxu0 0.0
      %5211 = vmatprep.subr.mxu0 0.0
      %5212 = vmatpush1.msra.mxu0 0.0
      %5213 = vmatprep.subr.mxu0 0.0
      %5214 = vmatpush1.msra.mxu0 0.0
      %5215 = vmatprep.subr.mxu0 0.0
      %5216 = vmatpush1.msra.mxu0 0.0
      %5217 = vmatprep.subr.mxu0 0.0
      %5218 = vmatpush1.msra.mxu0 0.0
      %5219 = vmatprep.subr.mxu0 0.0
      %5220 = vmatpush1.msra.mxu0 0.0
      %5221 = vmatprep.subr.mxu0 0.0
      %5222 = vmatpush1.msra.mxu0 0.0
      %5223 = vmatprep.subr.mxu0 0.0
      %5224 = vmatpush1.msra.mxu0 0.0
      %5225 = vmatprep.subr.mxu0 0.0
      %5226 = vmatpush1.msra.mxu0 0.0
      %5227 = vmatprep.subr.mxu0 0.0
      %5228 = vmatpush1.msra.mxu0 0.0
      %5229 = vmatprep.subr.mxu0 0.0
      %5230 = vmatpush1.msra.mxu0 0.0
      %5231 = vmatprep.subr.mxu0 0.0
      %5232 = vmatpush1.msra.mxu0 0.0
      %5233 = vmatprep.subr.mxu0 0.0
      %5234 = vmatpush1.msra.mxu0 0.0
      %5235 = vmatprep.subr.mxu0 0.0
      %5236 = vmatpush1.msra.mxu0 0.0
      %5237 = vmatprep.subr.mxu0 0.0
      %5238 = vmatpush1.msra.mxu0 0.0
      %5239 = vmatprep.subr.mxu0 0.0
      %5240 = vmatpush1.msra.mxu0 0.0
      %5241 = vmatprep.subr.mxu0 0.0
      %5242 = vmatpush1.msra.mxu0 0.0
      %5243 = vmatprep.subr.mxu0 0.0
      %5244 = vmatpush1.msra.mxu0 0.0
      %5245 = vmatprep.subr.mxu0 0.0
      %5246 = vmatpush1.msra.mxu0 0.0
      %5247 = vmatprep.subr.mxu0 0.0
      %5248 = vmatpush1.msra.mxu0 0.0
      %5249 = vmatprep.subr.mxu0 0.0
      %5250 = vmatpush1.msra.mxu0 0.0
      %5251 = vmatprep.subr.mxu0 0.0
      %5252 = vmatpush1.msra.mxu0 0.0
      %5253 = vmatprep.subr.mxu0 0.0
      %5254 = vmatpush1.msra.mxu0 0.0
      %5255 = vmatprep.mubr.f32.mxu0 0.0
      %5256 = vmatmul.mubr.f32.gmra.mrb[0].mxu0 %v5174
      %v5257 = vpop.f32.mrb[0].mxu0
      %v5258 = vadd.f32 0.0, %v5257
      %v5259 = vpop.f32.mrb[0].mxu0
      %v5260 = vadd.f32 0.0, %v5259
      %5261 = vmatprep.mubr.f32.mxu0 0.0
      %5262 = vmatmul.mubr.f32.gmra.mrb[0].mxu0 %v5177
      %v5263 = vpop.f32.mrb[0].mxu0
      %v5264 = vadd.f32 0.0, %v5263
      %v5265 = vpop.f32.mrb[0].mxu0
      %v5266 = vadd.f32 0.0, %v5265
      %5267 = vdwg.mxu0
      %5268 = vmatprep.subr.mxu0 %v5165
      %5269 = vmatpush1.msra.mxu0 %v5164
      %5270 = vmatprep.subr.mxu0 %v5189
      %5271 = vmatpush1.msra.mxu0 %v5186
      %5272 = vmatprep.subr.mxu0 0.0
      %5273 = vmatpush1.msra.mxu0 0.0
      %5274 = vmatprep.subr.mxu0 0.0
      %5275 = vmatpush1.msra.mxu0 0.0
      %5276 = vmatprep.subr.mxu0 0.0
      %5277 = vmatpush1.msra.mxu0 0.0
      %5278 = vmatprep.subr.mxu0 0.0
      %5279 = vmatpush1.msra.mxu0 0.0
      %5280 = vmatprep.subr.mxu0 0.0
      %5281 = vmatpush1.msra.mxu0 0.0
      %5282 = vmatprep.subr.mxu0 0.0
      %5283 = vmatpush1.msra.mxu0 0.0
      %5284 = vmatprep.subr.mxu0 0.0
      %5285 = vmatpush1.msra.mxu0 0.0
      %5286 = vmatprep.subr.mxu0 0.0
      %5287 = vmatpush1.msra.mxu0 0.0
      %5288 = vmatprep.subr.mxu0 0.0
      %5289 = vmatpush1.msra.mxu0 0.0
      %5290 = vmatprep.subr.mxu0 0.0
      %5291 = vmatpush1.msra.mxu0 0.0
      %5292 = vmatprep.subr.mxu0 0.0
      %5293 = vmatpush1.msra.mxu0 0.0
      %5294 = vmatprep.subr.mxu0 0.0
      %5295 = vmatpush1.msra.mxu0 0.0
      %5296 = vmatprep.subr.mxu0 0.0
      %5297 = vmatpush1.msra.mxu0 0.0
      %5298 = vmatprep.subr.mxu0 0.0
      %5299 = vmatpush1.msra.mxu0 0.0
      %5300 = vmatprep.subr.mxu0 0.0
      %5301 = vmatpush1.msra.mxu0 0.0
      %5302 = vmatprep.subr.mxu0 0.0
      %5303 = vmatpush1.msra.mxu0 0.0
      %5304 = vmatprep.subr.mxu0 0.0
      %5305 = vmatpush1.msra.mxu0 0.0
      %5306 = vmatprep.subr.mxu0 0.0
      %5307 = vmatpush1.msra.mxu0 0.0
      %5308 = vmatprep.subr.mxu0 0.0
      %5309 = vmatpush1.msra.mxu0 0.0
      %5310 = vmatprep.subr.mxu0 0.0
      %5311 = vmatpush1.msra.mxu0 0.0
      %5312 = vmatprep.subr.mxu0 0.0
      %5313 = vmatpush1.msra.mxu0 0.0
      %5314 = vmatprep.subr.mxu0 0.0
      %5315 = vmatpush1.msra.mxu0 0.0
      %5316 = vmatprep.subr.mxu0 0.0
      %5317 = vmatpush1.msra.mxu0 0.0
      %5318 = vmatprep.subr.mxu0 0.0
      %5319 = vmatpush1.msra.mxu0 0.0
      %5320 = vmatprep.subr.mxu0 0.0
      %5321 = vmatpush1.msra.mxu0 0.0
      %5322 = vmatprep.subr.mxu0 0.0
      %5323 = vmatpush1.msra.mxu0 0.0
      %5324 = vmatprep.subr.mxu0 0.0
      %5325 = vmatpush1.msra.mxu0 0.0
      %5326 = vmatprep.subr.mxu0 0.0
      %5327 = vmatpush1.msra.mxu0 0.0
      %5328 = vmatprep.subr.mxu0 0.0
      %5329 = vmatpush1.msra.mxu0 0.0
      %5330 = vmatprep.subr.mxu0 0.0
      %5331 = vmatpush1.msra.mxu0 0.0
      %5332 = vmatprep.mubr.f32.mxu0 0.0
      %5333 = vmatmul.mubr.f32.gmra.mrb[0].mxu0 %v5174
      %v5334 = vpop.f32.mrb[0].mxu0
      %v5335 = vadd.f32 0.0, %v5334
      %v5336 = vpop.f32.mrb[0].mxu0
      %v5337 = vadd.f32 0.0, %v5336
      %5338 = vmatprep.mubr.f32.mxu0 0.0
      %5339 = vmatmul.mubr.f32.gmra.mrb[0].mxu0 %v5177
      %v5340 = vpop.f32.mrb[0].mxu0
      %v5341 = vadd.f32 0.0, %v5340
      %v5342 = vpop.f32.mrb[0].mxu0
      %v5343 = vadd.f32 0.0, %v5342
      %5344 = vdwg.mxu0
      %v5345 = vadd.f32 %v3561, %v5258
      %v5346 = vadd.f32 %v3563, %v5260
      %v5347 = vadd.f32 %v3638, %v5335
      %v5348 = vadd.f32 %v3640, %v5337
      %v5349 = vadd.f32 %v3567, %v5264
      %v5350 = vadd.f32 %v3569, %v5266
      %v5351 = vadd.f32 %v3644, %v5341
      %v5352 = vadd.f32 %v3646, %v5343
      %s5353 = scalar_lea.vmem %s2, 48
      %v5354 = vld [vmem:[%s5353] sm:$0xff]
      %v5355 = vld [vmem:[%s5353 + $0x8] sm:$0x1]
      %s5356 = scalar_lea.vmem %s3, 48
      %v5357 = vld [vmem:[%s5356] sm:$0xff]
      %v5358 = vld [vmem:[%s5356 + $0x8] sm:$0x1]
      %5360 = vset.pattern.permute.xlu0 0
      %5361 = vperm.xlu0 %5360, %v5357
      %v5362 = vpop.permute.xlu0 %5361
      %5365 = vset.pattern.permute.xlu0 0
      %5366 = vperm.xlu0 %5365, %v5358
      %v5367 = vpop.permute.xlu0 %5366
      %v5370 = vsel %vm483, %v5354, 0
      %v5373 = vsel %vm483, %v5355, 0
      %5375 = vmatprep.subr.mxu0 %v462
      %5376 = vmatpush1.msra.mxu0 %v461
      %5377 = vmatprep.subr.mxu0 %v495
      %5378 = vmatpush1.msra.mxu0 %v492
      %5379 = vmatprep.subr.mxu0 0.0
      %5380 = vmatpush1.msra.mxu0 0.0
      %5381 = vmatprep.subr.mxu0 0.0
      %5382 = vmatpush1.msra.mxu0 0.0
      %5383 = vmatprep.subr.mxu0 0.0
      %5384 = vmatpush1.msra.mxu0 0.0
      %5385 = vmatprep.subr.mxu0 0.0
      %5386 = vmatpush1.msra.mxu0 0.0
      %5387 = vmatprep.subr.mxu0 0.0
      %5388 = vmatpush1.msra.mxu0 0.0
      %5389 = vmatprep.subr.mxu0 0.0
      %5390 = vmatpush1.msra.mxu0 0.0
      %5391 = vmatprep.subr.mxu0 0.0
      %5392 = vmatpush1.msra.mxu0 0.0
      %5393 = vmatprep.subr.mxu0 0.0
      %5394 = vmatpush1.msra.mxu0 0.0
      %5395 = vmatprep.subr.mxu0 0.0
      %5396 = vmatpush1.msra.mxu0 0.0
      %5397 = vmatprep.subr.mxu0 0.0
      %5398 = vmatpush1.msra.mxu0 0.0
      %5399 = vmatprep.subr.mxu0 0.0
      %5400 = vmatpush1.msra.mxu0 0.0
      %5401 = vmatprep.subr.mxu0 0.0
      %5402 = vmatpush1.msra.mxu0 0.0
      %5403 = vmatprep.subr.mxu0 0.0
      %5404 = vmatpush1.msra.mxu0 0.0
      %5405 = vmatprep.subr.mxu0 0.0
      %5406 = vmatpush1.msra.mxu0 0.0
      %5407 = vmatprep.subr.mxu0 0.0
      %5408 = vmatpush1.msra.mxu0 0.0
      %5409 = vmatprep.subr.mxu0 0.0
      %5410 = vmatpush1.msra.mxu0 0.0
      %5411 = vmatprep.subr.mxu0 0.0
      %5412 = vmatpush1.msra.mxu0 0.0
      %5413 = vmatprep.subr.mxu0 0.0
      %5414 = vmatpush1.msra.mxu0 0.0
      %5415 = vmatprep.subr.mxu0 0.0
      %5416 = vmatpush1.msra.mxu0 0.0
      %5417 = vmatprep.subr.mxu0 0.0
      %5418 = vmatpush1.msra.mxu0 0.0
      %5419 = vmatprep.subr.mxu0 0.0
      %5420 = vmatpush1.msra.mxu0 0.0
      %5421 = vmatprep.subr.mxu0 0.0
      %5422 = vmatpush1.msra.mxu0 0.0
      %5423 = vmatprep.subr.mxu0 0.0
      %5424 = vmatpush1.msra.mxu0 0.0
      %5425 = vmatprep.subr.mxu0 0.0
      %5426 = vmatpush1.msra.mxu0 0.0
      %5427 = vmatprep.subr.mxu0 0.0
      %5428 = vmatpush1.msra.mxu0 0.0
      %5429 = vmatprep.subr.mxu0 0.0
      %5430 = vmatpush1.msra.mxu0 0.0
      %5431 = vmatprep.subr.mxu0 0.0
      %5432 = vmatpush1.msra.mxu0 0.0
      %5433 = vmatprep.subr.mxu0 0.0
      %5434 = vmatpush1.msra.mxu0 0.0
      %5435 = vmatprep.subr.mxu0 0.0
      %5436 = vmatpush1.msra.mxu0 0.0
      %5437 = vmatprep.subr.mxu0 0.0
      %5438 = vmatpush1.msra.mxu0 0.0
      %5439 = vmatprep.mubr.f32.mxu0 0.0
      %5440 = vmatmul.mubr.f32.gmra.mrb[0].mxu0 %v5370
      %v5441 = vpop.f32.mrb[0].mxu0
      %v5442 = vadd.f32 %v5362, %v5441
      %v5443 = vpop.f32.mrb[0].mxu0
      %v5444 = vadd.f32 %v5362, %v5443
      %5445 = vmatprep.mubr.f32.mxu0 0.0
      %5446 = vmatmul.mubr.f32.gmra.mrb[0].mxu0 %v5373
      %v5447 = vpop.f32.mrb[0].mxu0
      %v5448 = vadd.f32 %v5367, %v5447
      %v5449 = vpop.f32.mrb[0].mxu0
      %v5450 = vadd.f32 %v5367, %v5449
      %5451 = vdwg.mxu0
      %5452 = vmatprep.subr.mxu0 %v464
      %5453 = vmatpush1.msra.mxu0 %v463
      %5454 = vmatprep.subr.mxu0 %v501
      %5455 = vmatpush1.msra.mxu0 %v498
      %5456 = vmatprep.subr.mxu0 0.0
      %5457 = vmatpush1.msra.mxu0 0.0
      %5458 = vmatprep.subr.mxu0 0.0
      %5459 = vmatpush1.msra.mxu0 0.0
      %5460 = vmatprep.subr.mxu0 0.0
      %5461 = vmatpush1.msra.mxu0 0.0
      %5462 = vmatprep.subr.mxu0 0.0
      %5463 = vmatpush1.msra.mxu0 0.0
      %5464 = vmatprep.subr.mxu0 0.0
      %5465 = vmatpush1.msra.mxu0 0.0
      %5466 = vmatprep.subr.mxu0 0.0
      %5467 = vmatpush1.msra.mxu0 0.0
      %5468 = vmatprep.subr.mxu0 0.0
      %5469 = vmatpush1.msra.mxu0 0.0
      %5470 = vmatprep.subr.mxu0 0.0
      %5471 = vmatpush1.msra.mxu0 0.0
      %5472 = vmatprep.subr.mxu0 0.0
      %5473 = vmatpush1.msra.mxu0 0.0
      %5474 = vmatprep.subr.mxu0 0.0
      %5475 = vmatpush1.msra.mxu0 0.0
      %5476 = vmatprep.subr.mxu0 0.0
      %5477 = vmatpush1.msra.mxu0 0.0
      %5478 = vmatprep.subr.mxu0 0.0
      %5479 = vmatpush1.msra.mxu0 0.0
      %5480 = vmatprep.subr.mxu0 0.0
      %5481 = vmatpush1.msra.mxu0 0.0
      %5482 = vmatprep.subr.mxu0 0.0
      %5483 = vmatpush1.msra.mxu0 0.0
      %5484 = vmatprep.subr.mxu0 0.0
      %5485 = vmatpush1.msra.mxu0 0.0
      %5486 = vmatprep.subr.mxu0 0.0
      %5487 = vmatpush1.msra.mxu0 0.0
      %5488 = vmatprep.subr.mxu0 0.0
      %5489 = vmatpush1.msra.mxu0 0.0
      %5490 = vmatprep.subr.mxu0 0.0
      %5491 = vmatpush1.msra.mxu0 0.0
      %5492 = vmatprep.subr.mxu0 0.0
      %5493 = vmatpush1.msra.mxu0 0.0
      %5494 = vmatprep.subr.mxu0 0.0
      %5495 = vmatpush1.msra.mxu0 0.0
      %5496 = vmatprep.subr.mxu0 0.0
      %5497 = vmatpush1.msra.mxu0 0.0
      %5498 = vmatprep.subr.mxu0 0.0
      %5499 = vmatpush1.msra.mxu0 0.0
      %5500 = vmatprep.subr.mxu0 0.0
      %5501 = vmatpush1.msra.mxu0 0.0
      %5502 = vmatprep.subr.mxu0 0.0
      %5503 = vmatpush1.msra.mxu0 0.0
      %5504 = vmatprep.subr.mxu0 0.0
      %5505 = vmatpush1.msra.mxu0 0.0
      %5506 = vmatprep.subr.mxu0 0.0
      %5507 = vmatpush1.msra.mxu0 0.0
      %5508 = vmatprep.subr.mxu0 0.0
      %5509 = vmatpush1.msra.mxu0 0.0
      %5510 = vmatprep.subr.mxu0 0.0
      %5511 = vmatpush1.msra.mxu0 0.0
      %5512 = vmatprep.subr.mxu0 0.0
      %5513 = vmatpush1.msra.mxu0 0.0
      %5514 = vmatprep.subr.mxu0 0.0
      %5515 = vmatpush1.msra.mxu0 0.0
      %5516 = vmatprep.mubr.f32.mxu0 0.0
      %5517 = vmatmul.mubr.f32.gmra.mrb[0].mxu0 %v5370
      %v5518 = vpop.f32.mrb[0].mxu0
      %v5519 = vadd.f32 %v5362, %v5518
      %v5520 = vpop.f32.mrb[0].mxu0
      %v5521 = vadd.f32 %v5362, %v5520
      %5522 = vmatprep.mubr.f32.mxu0 0.0
      %5523 = vmatmul.mubr.f32.gmra.mrb[0].mxu0 %v5373
      %v5524 = vpop.f32.mrb[0].mxu0
      %v5525 = vadd.f32 %v5367, %v5524
      %v5526 = vpop.f32.mrb[0].mxu0
      %v5527 = vadd.f32 %v5367, %v5526
      %5528 = vdwg.mxu0
      %s5529 = scalar_lea.vmem %s455, 192
      %v5530 = vld [vmem:[%s5529] sm:$0xff]
      %v5531 = vld [vmem:[%s5529 + $0x8] sm:$0xff]
      %v5532 = vld [vmem:[%s5529 + $0x10] sm:$0xff]
      %v5533 = vld [vmem:[%s5529 + $0x18] sm:$0xff]
      %v5534 = vld [vmem:[%s5529 + $0x20] sm:$0x1]
      %v5535 = vld [vmem:[%s5529 + $0x28] sm:$0x1]
      %v5536 = vld [vmem:[%s5529 + $0x30] sm:$0x1]
      %v5537 = vld [vmem:[%s5529 + $0x38] sm:$0x1]
      %v5538 = vadd.f32 %v5442, %v5530
      %v5539 = vadd.f32 %v5444, %v5531
      %v5540 = vadd.f32 %v5519, %v5532
      %v5541 = vadd.f32 %v5521, %v5533
      %v5542 = vadd.f32 %v5448, %v5534
      %v5543 = vadd.f32 %v5450, %v5535
      %v5544 = vadd.f32 %v5525, %v5536
      %v5545 = vadd.f32 %v5527, %v5537
      %v5546 = vadd.f32 %v5538, %v5539
      %v5547 = vadd.f32 %v5546, %v5540
      %v5548 = vadd.f32 %v5547, %v5541
      %5549 = vadd.xlane.f32.xlu0 %v5548
      %v5550 = vpop.xlane.xlu0 %5549
      %v5551 = vsel %vm678, %v5542, 0.0
      %v5552 = vsel %vm678, %v5543, 0.0
      %v5553 = vadd.f32 %v5551, %v5552
      %v5554 = vsel %vm678, %v5544, 0.0
      %v5555 = vadd.f32 %v5553, %v5554
      %v5556 = vsel %vm678, %v5545, 0.0
      %v5557 = vadd.f32 %v5555, %v5556
      %5558 = vadd.xlane.f32.xlu0 %v5557
      %v5559 = vpop.xlane.xlu0 %5558
      %v5560 = vmul.f32 %v5550, %v688
      %v5561 = vmul.f32 %v5559, %v688
      %v5562 = vsub.f32 %v5538, %v5560
      %v5563 = vsub.f32 %v5539, %v5560
      %v5564 = vsub.f32 %v5540, %v5560
      %v5565 = vsub.f32 %v5541, %v5560
      %v5566 = vsub.f32 %v5542, %v5561
      %v5567 = vsub.f32 %v5543, %v5561
      %v5568 = vsub.f32 %v5544, %v5561
      %v5569 = vsub.f32 %v5545, %v5561
      %v5570 = vmul.f32 %v5562, %v5562
      %v5571 = vmul.f32 %v5563, %v5563
      %v5572 = vmul.f32 %v5564, %v5564
      %v5573 = vmul.f32 %v5565, %v5565
      %v5574 = vmul.f32 %v5566, %v5566
      %v5575 = vmul.f32 %v5567, %v5567
      %v5576 = vmul.f32 %v5568, %v5568
      %v5577 = vmul.f32 %v5569, %v5569
      %v5578 = vadd.f32 %v5570, %v5571
      %v5579 = vadd.f32 %v5578, %v5572
      %v5580 = vadd.f32 %v5579, %v5573
      %5581 = vadd.xlane.f32.xlu0 %v5580
      %v5582 = vpop.xlane.xlu0 %5581
      %v5583 = vsel %vm678, %v5574, 0.0
      %v5584 = vsel %vm678, %v5575, 0.0
      %v5585 = vadd.f32 %v5583, %v5584
      %v5586 = vsel %vm678, %v5576, 0.0
      %v5587 = vadd.f32 %v5585, %v5586
      %v5588 = vsel %vm678, %v5577, 0.0
      %v5589 = vadd.f32 %v5587, %v5588
      %5590 = vadd.xlane.f32.xlu0 %v5589
      %v5591 = vpop.xlane.xlu0 %5590
      %v5592 = vmul.f32 %v5582, %v688
      %v5593 = vmul.f32 %v5591, %v688
      %s5594 = scalar_lea.vmem %s4, 48
      %v5595 = vld [vmem:[%s5594] sm:$0xff]
      %v5596 = vld [vmem:[%s5594 + $0x8] sm:$0x1]
      %v5597 = vadd.f32 %v5592, 1e-06
      %v5598 = vadd.f32 %v5593, 1e-06
      %v5599 = vrsqrt.pop %v5597
      %v5600 = vrsqrt.pop %v5598
      %v5601 = vmul.f32 %v5595, %v5599
      %v5602 = vmul.f32 %v5596, %v5600
      %5603 = vrot.lane.b32.xlu0 %v5562, 127
      %v5604 = vpop.permute.xlu0 %5603
      %5605 = vrot.lane.b32.xlu0 %v5566, 127
      %v5606 = vpop.permute.xlu0 %5605
      %5607 = vrot.lane.b32.xlu0 %v5563, 127
      %v5608 = vpop.permute.xlu0 %5607
      %5609 = vrot.lane.b32.xlu0 %v5567, 127
      %v5610 = vpop.permute.xlu0 %5609
      %5611 = vrot.lane.b32.xlu0 %v5564, 127
      %v5612 = vpop.permute.xlu0 %5611
      %5613 = vrot.lane.b32.xlu0 %v5568, 127
      %v5614 = vpop.permute.xlu0 %5613
      %5615 = vrot.lane.b32.xlu0 %v5565, 127
      %v5616 = vpop.permute.xlu0 %5615
      %5617 = vrot.lane.b32.xlu0 %v5569, 127
      %v5618 = vpop.permute.xlu0 %5617
      %v5619 = vsel %vm1423, %v5612, %v5616
      %v5620 = vsel %vm1423, %v5614, %v5618
      %v5621 = vsel %vm1423, %v5608, %v5612
      %v5622 = vsel %vm1423, %v5610, %v5614
      %v5623 = vsel %vm1423, %v5604, %v5608
      %v5624 = vsel %vm1423, %v5606, %v5610
      %v5625 = vsel %vm1423, %v5616, %v5604
      %v5626 = vsel %vm1423, %v5618, %v5606
      %s5627 = scalar_lea.vmem %s7, 5184
      %v5628 = vld [vmem:[%s5627] sm:$0xff]
      %v5629 = vld [vmem:[%s5627 + $0x8] sm:$0xff]
      %v5630 = vld [vmem:[%s5627 + $0x10] sm:$0xff]
      %v5631 = vld [vmem:[%s5627 + $0x18] sm:$0xff]
      %v5632 = vld [vmem:[%s5627 + $0x20] sm:$0x1]
      %v5633 = vld [vmem:[%s5627 + $0x28] sm:$0x1]
      %v5634 = vld [vmem:[%s5627 + $0x30] sm:$0x1]
      %v5635 = vld [vmem:[%s5627 + $0x38] sm:$0x1]
      %v5636 = vmul.f32 %v5628, %v5623
      %v5637 = vmul.f32 %v5629, %v5621
      %v5638 = vmul.f32 %v5630, %v5619
      %v5639 = vmul.f32 %v5631, %v5625
      %v5640 = vmul.f32 %v5632, %v5624
      %v5641 = vmul.f32 %v5633, %v5622
      %v5642 = vmul.f32 %v5634, %v5620
      %v5643 = vmul.f32 %v5635, %v5626
      %v5644 = vadd.f32 %v5636, 0.0
      %v5645 = vadd.f32 %v5637, 0.0
      %v5646 = vadd.f32 %v5638, 0.0
      %v5647 = vadd.f32 %v5639, 0.0
      %v5648 = vadd.f32 %v5640, 0.0
      %v5649 = vadd.f32 %v5641, 0.0
      %v5650 = vadd.f32 %v5642, 0.0
      %v5651 = vadd.f32 %v5643, 0.0
      %5652 = vrot.lane.b32.xlu0 %v5562, 120
      %v5653 = vpop.permute.xlu0 %5652
      %5654 = vrot.lane.b32.xlu0 %v5566, 120
      %v5655 = vpop.permute.xlu0 %5654
      %5656 = vrot.lane.b32.xlu0 %v5563, 120
      %v5657 = vpop.permute.xlu0 %5656
      %5658 = vrot.lane.b32.xlu0 %v5567, 120
      %v5659 = vpop.permute.xlu0 %5658
      %5660 = vrot.lane.b32.xlu0 %v5564, 120
      %v5661 = vpop.permute.xlu0 %5660
      %5662 = vrot.lane.b32.xlu0 %v5568, 120
      %v5663 = vpop.permute.xlu0 %5662
      %5664 = vrot.lane.b32.xlu0 %v5565, 120
      %v5665 = vpop.permute.xlu0 %5664
      %5666 = vrot.lane.b32.xlu0 %v5569, 120
      %v5667 = vpop.permute.xlu0 %5666
      %v5668 = vsel %vm1523, %v5661, %v5665
      %v5669 = vsel %vm1523, %v5663, %v5667
      %v5670 = vsel %vm1523, %v5657, %v5661
      %v5671 = vsel %vm1523, %v5659, %v5663
      %v5672 = vsel %vm1523, %v5653, %v5657
      %v5673 = vsel %vm1523, %v5655, %v5659
      %v5674 = vsel %vm1523, %v5665, %v5653
      %v5675 = vsel %vm1523, %v5667, %v5655
      %s5676 = scalar_lea.vmem %s7, 5248
      %v5677 = vld [vmem:[%s5676] sm:$0xff]
      %v5678 = vld [vmem:[%s5676 + $0x8] sm:$0xff]
      %v5679 = vld [vmem:[%s5676 + $0x10] sm:$0xff]
      %v5680 = vld [vmem:[%s5676 + $0x18] sm:$0xff]
      %v5681 = vld [vmem:[%s5676 + $0x20] sm:$0x1]
      %v5682 = vld [vmem:[%s5676 + $0x28] sm:$0x1]
      %v5683 = vld [vmem:[%s5676 + $0x30] sm:$0x1]
      %v5684 = vld [vmem:[%s5676 + $0x38] sm:$0x1]
      %v5685 = vmul.f32 %v5677, %v5672
      %v5686 = vmul.f32 %v5678, %v5670
      %v5687 = vmul.f32 %v5679, %v5668
      %v5688 = vmul.f32 %v5680, %v5674
      %v5689 = vmul.f32 %v5681, %v5673
      %v5690 = vmul.f32 %v5682, %v5671
      %v5691 = vmul.f32 %v5683, %v5669
      %v5692 = vmul.f32 %v5684, %v5675
      %v5693 = vadd.f32 %v5644, %v5685
      %v5694 = vadd.f32 %v5645, %v5686
      %v5695 = vadd.f32 %v5646, %v5687
      %v5696 = vadd.f32 %v5647, %v5688
      %v5697 = vadd.f32 %v5648, %v5689
      %v5698 = vadd.f32 %v5649, %v5690
      %v5699 = vadd.f32 %v5650, %v5691
      %v5700 = vadd.f32 %v5651, %v5692
      %5701 = vrot.lane.b32.xlu0 %v5562, 113
      %v5702 = vpop.permute.xlu0 %5701
      %5703 = vrot.lane.b32.xlu0 %v5566, 113
      %v5704 = vpop.permute.xlu0 %5703
      %5705 = vrot.lane.b32.xlu0 %v5563, 113
      %v5706 = vpop.permute.xlu0 %5705
      %5707 = vrot.lane.b32.xlu0 %v5567, 113
      %v5708 = vpop.permute.xlu0 %5707
      %5709 = vrot.lane.b32.xlu0 %v5564, 113
      %v5710 = vpop.permute.xlu0 %5709
      %5711 = vrot.lane.b32.xlu0 %v5568, 113
      %v5712 = vpop.permute.xlu0 %5711
      %5713 = vrot.lane.b32.xlu0 %v5565, 113
      %v5714 = vpop.permute.xlu0 %5713
      %5715 = vrot.lane.b32.xlu0 %v5569, 113
      %v5716 = vpop.permute.xlu0 %5715
      %vm5717 = vcmp.lt.s32.totalorder %v748, 113
      %v5718 = vsel %vm5717, %v5710, %v5714
      %v5719 = vsel %vm5717, %v5712, %v5716
      %v5720 = vsel %vm5717, %v5706, %v5710
      %v5721 = vsel %vm5717, %v5708, %v5712
      %v5722 = vsel %vm5717, %v5702, %v5706
      %v5723 = vsel %vm5717, %v5704, %v5708
      %v5724 = vsel %vm5717, %v5714, %v5702
      %v5725 = vsel %vm5717, %v5716, %v5704
      %s5726 = scalar_lea.vmem %s7, 5312
      %v5727 = vld [vmem:[%s5726] sm:$0xff]
      %v5728 = vld [vmem:[%s5726 + $0x8] sm:$0xff]
      %v5729 = vld [vmem:[%s5726 + $0x10] sm:$0xff]
      %v5730 = vld [vmem:[%s5726 + $0x18] sm:$0xff]
      %v5731 = vld [vmem:[%s5726 + $0x20] sm:$0x1]
      %v5732 = vld [vmem:[%s5726 + $0x28] sm:$0x1]
      %v5733 = vld [vmem:[%s5726 + $0x30] sm:$0x1]
      %v5734 = vld [vmem:[%s5726 + $0x38] sm:$0x1]
      %v5735 = vmul.f32 %v5727, %v5722
      %v5736 = vmul.f32 %v5728, %v5720
      %v5737 = vmul.f32 %v5729, %v5718
      %v5738 = vmul.f32 %v5730, %v5724
      %v5739 = vmul.f32 %v5731, %v5723
      %v5740 = vmul.f32 %v5732, %v5721
      %v5741 = vmul.f32 %v5733, %v5719
      %v5742 = vmul.f32 %v5734, %v5725
      %v5743 = vadd.f32 %v5693, %v5735
      %v5744 = vadd.f32 %v5694, %v5736
      %v5745 = vadd.f32 %v5695, %v5737
      %v5746 = vadd.f32 %v5696, %v5738
      %v5747 = vadd.f32 %v5697, %v5739
      %v5748 = vadd.f32 %v5698, %v5740
      %v5749 = vadd.f32 %v5699, %v5741
      %v5750 = vadd.f32 %v5700, %v5742
      %5751 = vrot.lane.b32.xlu0 %v5562, 71
      %v5752 = vpop.permute.xlu0 %5751
      %5753 = vrot.lane.b32.xlu0 %v5566, 71
      %v5754 = vpop.permute.xlu0 %5753
      %5755 = vrot.lane.b32.xlu0 %v5563, 71
      %v5756 = vpop.permute.xlu0 %5755
      %5757 = vrot.lane.b32.xlu0 %v5567, 71
      %v5758 = vpop.permute.xlu0 %5757
      %5759 = vrot.lane.b32.xlu0 %v5564, 71
      %v5760 = vpop.permute.xlu0 %5759
      %5761 = vrot.lane.b32.xlu0 %v5568, 71
      %v5762 = vpop.permute.xlu0 %5761
      %5763 = vrot.lane.b32.xlu0 %v5565, 71
      %v5764 = vpop.permute.xlu0 %5763
      %5765 = vrot.lane.b32.xlu0 %v5569, 71
      %v5766 = vpop.permute.xlu0 %5765
      %v5767 = vsel %vm848, %v5760, %v5764
      %v5768 = vsel %vm848, %v5762, %v5766
      %v5769 = vsel %vm848, %v5756, %v5760
      %v5770 = vsel %vm848, %v5758, %v5762
      %v5771 = vsel %vm848, %v5752, %v5756
      %v5772 = vsel %vm848, %v5754, %v5758
      %v5773 = vsel %vm848, %v5764, %v5752
      %v5774 = vsel %vm848, %v5766, %v5754
      %s5775 = scalar_lea.vmem %s7, 5376
      %v5776 = vld [vmem:[%s5775] sm:$0xff]
      %v5777 = vld [vmem:[%s5775 + $0x8] sm:$0xff]
      %v5778 = vld [vmem:[%s5775 + $0x10] sm:$0xff]
      %v5779 = vld [vmem:[%s5775 + $0x18] sm:$0xff]
      %v5780 = vld [vmem:[%s5775 + $0x20] sm:$0x1]
      %v5781 = vld [vmem:[%s5775 + $0x28] sm:$0x1]
      %v5782 = vld [vmem:[%s5775 + $0x30] sm:$0x1]
      %v5783 = vld [vmem:[%s5775 + $0x38] sm:$0x1]
      %v5784 = vmul.f32 %v5776, %v5771
      %v5785 = vmul.f32 %v5777, %v5769
      %v5786 = vmul.f32 %v5778, %v5767
      %v5787 = vmul.f32 %v5779, %v5773
      %v5788 = vmul.f32 %v5780, %v5772
      %v5789 = vmul.f32 %v5781, %v5770
      %v5790 = vmul.f32 %v5782, %v5768
      %v5791 = vmul.f32 %v5783, %v5774
      %v5792 = vadd.f32 %v5743, %v5784
      %v5793 = vadd.f32 %v5744, %v5785
      %v5794 = vadd.f32 %v5745, %v5786
      %v5795 = vadd.f32 %v5746, %v5787
      %v5796 = vadd.f32 %v5747, %v5788
      %v5797 = vadd.f32 %v5748, %v5789
      %v5798 = vadd.f32 %v5749, %v5790
      %v5799 = vadd.f32 %v5750, %v5791
      %5800 = vrot.lane.b32.xlu0 %v5562, 64
      %v5801 = vpop.permute.xlu0 %5800
      %5802 = vrot.lane.b32.xlu0 %v5566, 64
      %v5803 = vpop.permute.xlu0 %5802
      %5804 = vrot.lane.b32.xlu0 %v5563, 64
      %v5805 = vpop.permute.xlu0 %5804
      %5806 = vrot.lane.b32.xlu0 %v5567, 64
      %v5807 = vpop.permute.xlu0 %5806
      %5808 = vrot.lane.b32.xlu0 %v5564, 64
      %v5809 = vpop.permute.xlu0 %5808
      %5810 = vrot.lane.b32.xlu0 %v5568, 64
      %v5811 = vpop.permute.xlu0 %5810
      %5812 = vrot.lane.b32.xlu0 %v5565, 64
      %v5813 = vpop.permute.xlu0 %5812
      %5814 = vrot.lane.b32.xlu0 %v5569, 64
      %v5815 = vpop.permute.xlu0 %5814
      %v5816 = vsel %vm948, %v5809, %v5813
      %v5817 = vsel %vm948, %v5811, %v5815
      %v5818 = vsel %vm948, %v5805, %v5809
      %v5819 = vsel %vm948, %v5807, %v5811
      %v5820 = vsel %vm948, %v5801, %v5805
      %v5821 = vsel %vm948, %v5803, %v5807
      %v5822 = vsel %vm948, %v5813, %v5801
      %v5823 = vsel %vm948, %v5815, %v5803
      %s5824 = scalar_lea.vmem %s7, 5440
      %v5825 = vld [vmem:[%s5824] sm:$0xff]
      %v5826 = vld [vmem:[%s5824 + $0x8] sm:$0xff]
      %v5827 = vld [vmem:[%s5824 + $0x10] sm:$0xff]
      %v5828 = vld [vmem:[%s5824 + $0x18] sm:$0xff]
      %v5829 = vld [vmem:[%s5824 + $0x20] sm:$0x1]
      %v5830 = vld [vmem:[%s5824 + $0x28] sm:$0x1]
      %v5831 = vld [vmem:[%s5824 + $0x30] sm:$0x1]
      %v5832 = vld [vmem:[%s5824 + $0x38] sm:$0x1]
      %v5833 = vmul.f32 %v5825, %v5820
      %v5834 = vmul.f32 %v5826, %v5818
      %v5835 = vmul.f32 %v5827, %v5816
      %v5836 = vmul.f32 %v5828, %v5822
      %v5837 = vmul.f32 %v5829, %v5821
      %v5838 = vmul.f32 %v5830, %v5819
      %v5839 = vmul.f32 %v5831, %v5817
      %v5840 = vmul.f32 %v5832, %v5823
      %v5841 = vadd.f32 %v5792, %v5833
      %v5842 = vadd.f32 %v5793, %v5834
      %v5843 = vadd.f32 %v5794, %v5835
      %v5844 = vadd.f32 %v5795, %v5836
      %v5845 = vadd.f32 %v5796, %v5837
      %v5846 = vadd.f32 %v5797, %v5838
      %v5847 = vadd.f32 %v5798, %v5839
      %v5848 = vadd.f32 %v5799, %v5840
      %5849 = vrot.lane.b32.xlu0 %v5562, 57
      %v5850 = vpop.permute.xlu0 %5849
      %5851 = vrot.lane.b32.xlu0 %v5566, 57
      %v5852 = vpop.permute.xlu0 %5851
      %5853 = vrot.lane.b32.xlu0 %v5563, 57
      %v5854 = vpop.permute.xlu0 %5853
      %5855 = vrot.lane.b32.xlu0 %v5567, 57
      %v5856 = vpop.permute.xlu0 %5855
      %5857 = vrot.lane.b32.xlu0 %v5564, 57
      %v5858 = vpop.permute.xlu0 %5857
      %5859 = vrot.lane.b32.xlu0 %v5568, 57
      %v5860 = vpop.permute.xlu0 %5859
      %5861 = vrot.lane.b32.xlu0 %v5565, 57
      %v5862 = vpop.permute.xlu0 %5861
      %5863 = vrot.lane.b32.xlu0 %v5569, 57
      %v5864 = vpop.permute.xlu0 %5863
      %v5865 = vsel %vm1048, %v5858, %v5862
      %v5866 = vsel %vm1048, %v5860, %v5864
      %v5867 = vsel %vm1048, %v5854, %v5858
      %v5868 = vsel %vm1048, %v5856, %v5860
      %v5869 = vsel %vm1048, %v5850, %v5854
      %v5870 = vsel %vm1048, %v5852, %v5856
      %v5871 = vsel %vm1048, %v5862, %v5850
      %v5872 = vsel %vm1048, %v5864, %v5852
      %s5873 = scalar_lea.vmem %s7, 5504
      %v5874 = vld [vmem:[%s5873] sm:$0xff]
      %v5875 = vld [vmem:[%s5873 + $0x8] sm:$0xff]
      %v5876 = vld [vmem:[%s5873 + $0x10] sm:$0xff]
      %v5877 = vld [vmem:[%s5873 + $0x18] sm:$0xff]
      %v5878 = vld [vmem:[%s5873 + $0x20] sm:$0x1]
      %v5879 = vld [vmem:[%s5873 + $0x28] sm:$0x1]
      %v5880 = vld [vmem:[%s5873 + $0x30] sm:$0x1]
      %v5881 = vld [vmem:[%s5873 + $0x38] sm:$0x1]
      %v5882 = vmul.f32 %v5874, %v5869
      %v5883 = vmul.f32 %v5875, %v5867
      %v5884 = vmul.f32 %v5876, %v5865
      %v5885 = vmul.f32 %v5877, %v5871
      %v5886 = vmul.f32 %v5878, %v5870
      %v5887 = vmul.f32 %v5879, %v5868
      %v5888 = vmul.f32 %v5880, %v5866
      %v5889 = vmul.f32 %v5881, %v5872
      %v5890 = vadd.f32 %v5841, %v5882
      %v5891 = vadd.f32 %v5842, %v5883
      %v5892 = vadd.f32 %v5843, %v5884
      %v5893 = vadd.f32 %v5844, %v5885
      %v5894 = vadd.f32 %v5845, %v5886
      %v5895 = vadd.f32 %v5846, %v5887
      %v5896 = vadd.f32 %v5847, %v5888
      %v5897 = vadd.f32 %v5848, %v5889
      %5898 = vrot.lane.b32.xlu0 %v5562, 15
      %v5899 = vpop.permute.xlu0 %5898
      %5900 = vrot.lane.b32.xlu0 %v5566, 15
      %v5901 = vpop.permute.xlu0 %5900
      %5902 = vrot.lane.b32.xlu0 %v5563, 15
      %v5903 = vpop.permute.xlu0 %5902
      %5904 = vrot.lane.b32.xlu0 %v5567, 15
      %v5905 = vpop.permute.xlu0 %5904
      %5906 = vrot.lane.b32.xlu0 %v5564, 15
      %v5907 = vpop.permute.xlu0 %5906
      %5908 = vrot.lane.b32.xlu0 %v5568, 15
      %v5909 = vpop.permute.xlu0 %5908
      %5910 = vrot.lane.b32.xlu0 %v5565, 15
      %v5911 = vpop.permute.xlu0 %5910
      %5912 = vrot.lane.b32.xlu0 %v5569, 15
      %v5913 = vpop.permute.xlu0 %5912
      %vm5914 = vcmp.lt.s32.totalorder %v748, 15
      %v5915 = vsel %vm5914, %v5907, %v5911
      %v5916 = vsel %vm5914, %v5909, %v5913
      %v5917 = vsel %vm5914, %v5903, %v5907
      %v5918 = vsel %vm5914, %v5905, %v5909
      %v5919 = vsel %vm5914, %v5899, %v5903
      %v5920 = vsel %vm5914, %v5901, %v5905
      %v5921 = vsel %vm5914, %v5911, %v5899
      %v5922 = vsel %vm5914, %v5913, %v5901
      %s5923 = scalar_lea.vmem %s7, 5568
      %v5924 = vld [vmem:[%s5923] sm:$0xff]
      %v5925 = vld [vmem:[%s5923 + $0x8] sm:$0xff]
      %v5926 = vld [vmem:[%s5923 + $0x10] sm:$0xff]
      %v5927 = vld [vmem:[%s5923 + $0x18] sm:$0xff]
      %v5928 = vld [vmem:[%s5923 + $0x20] sm:$0x1]
      %v5929 = vld [vmem:[%s5923 + $0x28] sm:$0x1]
      %v5930 = vld [vmem:[%s5923 + $0x30] sm:$0x1]
      %v5931 = vld [vmem:[%s5923 + $0x38] sm:$0x1]
      %v5932 = vmul.f32 %v5924, %v5919
      %v5933 = vmul.f32 %v5925, %v5917
      %v5934 = vmul.f32 %v5926, %v5915
      %v5935 = vmul.f32 %v5927, %v5921
      %v5936 = vmul.f32 %v5928, %v5920
      %v5937 = vmul.f32 %v5929, %v5918
      %v5938 = vmul.f32 %v5930, %v5916
      %v5939 = vmul.f32 %v5931, %v5922
      %v5940 = vadd.f32 %v5890, %v5932
      %v5941 = vadd.f32 %v5891, %v5933
      %v5942 = vadd.f32 %v5892, %v5934
      %v5943 = vadd.f32 %v5893, %v5935
      %v5944 = vadd.f32 %v5894, %v5936
      %v5945 = vadd.f32 %v5895, %v5937
      %v5946 = vadd.f32 %v5896, %v5938
      %v5947 = vadd.f32 %v5897, %v5939
      %5948 = vrot.lane.b32.xlu0 %v5562, 8
      %v5949 = vpop.permute.xlu0 %5948
      %5950 = vrot.lane.b32.xlu0 %v5566, 8
      %v5951 = vpop.permute.xlu0 %5950
      %5952 = vrot.lane.b32.xlu0 %v5563, 8
      %v5953 = vpop.permute.xlu0 %5952
      %5954 = vrot.lane.b32.xlu0 %v5567, 8
      %v5955 = vpop.permute.xlu0 %5954
      %5956 = vrot.lane.b32.xlu0 %v5564, 8
      %v5957 = vpop.permute.xlu0 %5956
      %5958 = vrot.lane.b32.xlu0 %v5568, 8
      %v5959 = vpop.permute.xlu0 %5958
      %5960 = vrot.lane.b32.xlu0 %v5565, 8
      %v5961 = vpop.permute.xlu0 %5960
      %5962 = vrot.lane.b32.xlu0 %v5569, 8
      %v5963 = vpop.permute.xlu0 %5962
      %v5964 = vsel %vm1248, %v5957, %v5961
      %v5965 = vsel %vm1248, %v5959, %v5963
      %v5966 = vsel %vm1248, %v5953, %v5957
      %v5967 = vsel %vm1248, %v5955, %v5959
      %v5968 = vsel %vm1248, %v5949, %v5953
      %v5969 = vsel %vm1248, %v5951, %v5955
      %v5970 = vsel %vm1248, %v5961, %v5949
      %v5971 = vsel %vm1248, %v5963, %v5951
      %s5972 = scalar_lea.vmem %s7, 5632
      %v5973 = vld [vmem:[%s5972] sm:$0xff]
      %v5974 = vld [vmem:[%s5972 + $0x8] sm:$0xff]
      %v5975 = vld [vmem:[%s5972 + $0x10] sm:$0xff]
      %v5976 = vld [vmem:[%s5972 + $0x18] sm:$0xff]
      %v5977 = vld [vmem:[%s5972 + $0x20] sm:$0x1]
      %v5978 = vld [vmem:[%s5972 + $0x28] sm:$0x1]
      %v5979 = vld [vmem:[%s5972 + $0x30] sm:$0x1]
      %v5980 = vld [vmem:[%s5972 + $0x38] sm:$0x1]
      %v5981 = vmul.f32 %v5973, %v5968
      %v5982 = vmul.f32 %v5974, %v5966
      %v5983 = vmul.f32 %v5975, %v5964
      %v5984 = vmul.f32 %v5976, %v5970
      %v5985 = vmul.f32 %v5977, %v5969
      %v5986 = vmul.f32 %v5978, %v5967
      %v5987 = vmul.f32 %v5979, %v5965
      %v5988 = vmul.f32 %v5980, %v5971
      %v5989 = vadd.f32 %v5940, %v5981
      %v5990 = vadd.f32 %v5941, %v5982
      %v5991 = vadd.f32 %v5942, %v5983
      %v5992 = vadd.f32 %v5943, %v5984
      %v5993 = vadd.f32 %v5944, %v5985
      %v5994 = vadd.f32 %v5945, %v5986
      %v5995 = vadd.f32 %v5946, %v5987
      %v5996 = vadd.f32 %v5947, %v5988
      %5997 = vrot.lane.b32.xlu0 %v5562, 1
      %v5998 = vpop.permute.xlu0 %5997
      %5999 = vrot.lane.b32.xlu0 %v5566, 1
      %v6000 = vpop.permute.xlu0 %5999
      %6001 = vrot.lane.b32.xlu0 %v5563, 1
      %v6002 = vpop.permute.xlu0 %6001
      %6003 = vrot.lane.b32.xlu0 %v5567, 1
      %v6004 = vpop.permute.xlu0 %6003
      %6005 = vrot.lane.b32.xlu0 %v5564, 1
      %v6006 = vpop.permute.xlu0 %6005
      %6007 = vrot.lane.b32.xlu0 %v5568, 1
      %v6008 = vpop.permute.xlu0 %6007
      %6009 = vrot.lane.b32.xlu0 %v5565, 1
      %v6010 = vpop.permute.xlu0 %6009
      %6011 = vrot.lane.b32.xlu0 %v5569, 1
      %v6012 = vpop.permute.xlu0 %6011
      %v6013 = vsel %vm1348, %v6006, %v6010
      %v6014 = vsel %vm1348, %v6008, %v6012
      %v6015 = vsel %vm1348, %v6002, %v6006
      %v6016 = vsel %vm1348, %v6004, %v6008
      %v6017 = vsel %vm1348, %v5998, %v6002
      %v6018 = vsel %vm1348, %v6000, %v6004
      %v6019 = vsel %vm1348, %v6010, %v5998
      %v6020 = vsel %vm1348, %v6012, %v6000
      %s6021 = scalar_lea.vmem %s7, 5696
      %v6022 = vld [vmem:[%s6021] sm:$0xff]
      %v6023 = vld [vmem:[%s6021 + $0x8] sm:$0xff]
      %v6024 = vld [vmem:[%s6021 + $0x10] sm:$0xff]
      %v6025 = vld [vmem:[%s6021 + $0x18] sm:$0xff]
      %v6026 = vld [vmem:[%s6021 + $0x20] sm:$0x1]
      %v6027 = vld [vmem:[%s6021 + $0x28] sm:$0x1]
      %v6028 = vld [vmem:[%s6021 + $0x30] sm:$0x1]
      %v6029 = vld [vmem:[%s6021 + $0x38] sm:$0x1]
      %v6030 = vmul.f32 %v6022, %v6017
      %v6031 = vmul.f32 %v6023, %v6015
      %v6032 = vmul.f32 %v6024, %v6013
      %v6033 = vmul.f32 %v6025, %v6019
      %v6034 = vmul.f32 %v6026, %v6018
      %v6035 = vmul.f32 %v6027, %v6016
      %v6036 = vmul.f32 %v6028, %v6014
      %v6037 = vmul.f32 %v6029, %v6020
      %v6038 = vadd.f32 %v5989, %v6030
      %v6039 = vadd.f32 %v5990, %v6031
      %v6040 = vadd.f32 %v5991, %v6032
      %v6041 = vadd.f32 %v5992, %v6033
      %v6042 = vadd.f32 %v5993, %v6034
      %v6043 = vadd.f32 %v5994, %v6035
      %v6044 = vadd.f32 %v5995, %v6036
      %v6045 = vadd.f32 %v5996, %v6037
      %6046 = vrot.lane.b32.xlu0 %v5562, 63
      %v6047 = vpop.permute.xlu0 %6046
      %6048 = vrot.lane.b32.xlu0 %v5566, 63
      %v6049 = vpop.permute.xlu0 %6048
      %6050 = vrot.lane.b32.xlu0 %v5563, 63
      %v6051 = vpop.permute.xlu0 %6050
      %6052 = vrot.lane.b32.xlu0 %v5567, 63
      %v6053 = vpop.permute.xlu0 %6052
      %6054 = vrot.lane.b32.xlu0 %v5564, 63
      %v6055 = vpop.permute.xlu0 %6054
      %6056 = vrot.lane.b32.xlu0 %v5568, 63
      %v6057 = vpop.permute.xlu0 %6056
      %6058 = vrot.lane.b32.xlu0 %v5565, 63
      %v6059 = vpop.permute.xlu0 %6058
      %6060 = vrot.lane.b32.xlu0 %v5569, 63
      %v6061 = vpop.permute.xlu0 %6060
      %v6062 = vsel %vm998, %v6055, %v6059
      %v6063 = vsel %vm998, %v6057, %v6061
      %v6064 = vsel %vm998, %v6051, %v6055
      %v6065 = vsel %vm998, %v6053, %v6057
      %v6066 = vsel %vm998, %v6047, %v6051
      %v6067 = vsel %vm998, %v6049, %v6053
      %v6068 = vsel %vm998, %v6059, %v6047
      %v6069 = vsel %vm998, %v6061, %v6049
      %s6070 = scalar_lea.vmem %s7, 5760
      %v6071 = vld [vmem:[%s6070] sm:$0xff]
      %v6072 = vld [vmem:[%s6070 + $0x8] sm:$0xff]
      %v6073 = vld [vmem:[%s6070 + $0x10] sm:$0xff]
      %v6074 = vld [vmem:[%s6070 + $0x18] sm:$0xff]
      %v6075 = vld [vmem:[%s6070 + $0x20] sm:$0x1]
      %v6076 = vld [vmem:[%s6070 + $0x28] sm:$0x1]
      %v6077 = vld [vmem:[%s6070 + $0x30] sm:$0x1]
      %v6078 = vld [vmem:[%s6070 + $0x38] sm:$0x1]
      %v6079 = vmul.f32 %v6071, %v6068
      %v6080 = vmul.f32 %v6072, %v6066
      %v6081 = vmul.f32 %v6073, %v6064
      %v6082 = vmul.f32 %v6074, %v6062
      %v6083 = vmul.f32 %v6075, %v6069
      %v6084 = vmul.f32 %v6076, %v6067
      %v6085 = vmul.f32 %v6077, %v6065
      %v6086 = vmul.f32 %v6078, %v6063
      %v6087 = vadd.f32 %v6038, %v6079
      %v6088 = vadd.f32 %v6039, %v6080
      %v6089 = vadd.f32 %v6040, %v6081
      %v6090 = vadd.f32 %v6041, %v6082
      %v6091 = vadd.f32 %v6042, %v6083
      %v6092 = vadd.f32 %v6043, %v6084
      %v6093 = vadd.f32 %v6044, %v6085
      %v6094 = vadd.f32 %v6045, %v6086
      %6095 = vrot.lane.b32.xlu0 %v5562, 56
      %v6096 = vpop.permute.xlu0 %6095
      %6097 = vrot.lane.b32.xlu0 %v5566, 56
      %v6098 = vpop.permute.xlu0 %6097
      %6099 = vrot.lane.b32.xlu0 %v5563, 56
      %v6100 = vpop.permute.xlu0 %6099
      %6101 = vrot.lane.b32.xlu0 %v5567, 56
      %v6102 = vpop.permute.xlu0 %6101
      %6103 = vrot.lane.b32.xlu0 %v5564, 56
      %v6104 = vpop.permute.xlu0 %6103
      %6105 = vrot.lane.b32.xlu0 %v5568, 56
      %v6106 = vpop.permute.xlu0 %6105
      %6107 = vrot.lane.b32.xlu0 %v5565, 56
      %v6108 = vpop.permute.xlu0 %6107
      %6109 = vrot.lane.b32.xlu0 %v5569, 56
      %v6110 = vpop.permute.xlu0 %6109
      %v6111 = vsel %vm1098, %v6104, %v6108
      %v6112 = vsel %vm1098, %v6106, %v6110
      %v6113 = vsel %vm1098, %v6100, %v6104
      %v6114 = vsel %vm1098, %v6102, %v6106
      %v6115 = vsel %vm1098, %v6096, %v6100
      %v6116 = vsel %vm1098, %v6098, %v6102
      %v6117 = vsel %vm1098, %v6108, %v6096
      %v6118 = vsel %vm1098, %v6110, %v6098
      %s6119 = scalar_lea.vmem %s7, 5824
      %v6120 = vld [vmem:[%s6119] sm:$0xff]
      %v6121 = vld [vmem:[%s6119 + $0x8] sm:$0xff]
      %v6122 = vld [vmem:[%s6119 + $0x10] sm:$0xff]
      %v6123 = vld [vmem:[%s6119 + $0x18] sm:$0xff]
      %v6124 = vld [vmem:[%s6119 + $0x20] sm:$0x1]
      %v6125 = vld [vmem:[%s6119 + $0x28] sm:$0x1]
      %v6126 = vld [vmem:[%s6119 + $0x30] sm:$0x1]
      %v6127 = vld [vmem:[%s6119 + $0x38] sm:$0x1]
      %v6128 = vmul.f32 %v6120, %v6117
      %v6129 = vmul.f32 %v6121, %v6115
      %v6130 = vmul.f32 %v6122, %v6113
      %v6131 = vmul.f32 %v6123, %v6111
      %v6132 = vmul.f32 %v6124, %v6118
      %v6133 = vmul.f32 %v6125, %v6116
      %v6134 = vmul.f32 %v6126, %v6114
      %v6135 = vmul.f32 %v6127, %v6112
      %v6136 = vadd.f32 %v6087, %v6128
      %v6137 = vadd.f32 %v6088, %v6129
      %v6138 = vadd.f32 %v6089, %v6130
      %v6139 = vadd.f32 %v6090, %v6131
      %v6140 = vadd.f32 %v6091, %v6132
      %v6141 = vadd.f32 %v6092, %v6133
      %v6142 = vadd.f32 %v6093, %v6134
      %v6143 = vadd.f32 %v6094, %v6135
      %6144 = vrot.lane.b32.xlu0 %v5562, 49
      %v6145 = vpop.permute.xlu0 %6144
      %6146 = vrot.lane.b32.xlu0 %v5566, 49
      %v6147 = vpop.permute.xlu0 %6146
      %6148 = vrot.lane.b32.xlu0 %v5563, 49
      %v6149 = vpop.permute.xlu0 %6148
      %6150 = vrot.lane.b32.xlu0 %v5567, 49
      %v6151 = vpop.permute.xlu0 %6150
      %6152 = vrot.lane.b32.xlu0 %v5564, 49
      %v6153 = vpop.permute.xlu0 %6152
      %6154 = vrot.lane.b32.xlu0 %v5568, 49
      %v6155 = vpop.permute.xlu0 %6154
      %6156 = vrot.lane.b32.xlu0 %v5565, 49
      %v6157 = vpop.permute.xlu0 %6156
      %6158 = vrot.lane.b32.xlu0 %v5569, 49
      %v6159 = vpop.permute.xlu0 %6158
      %vm6160 = vcmp.lt.s32.totalorder %v748, 49
      %v6161 = vsel %vm6160, %v6153, %v6157
      %v6162 = vsel %vm6160, %v6155, %v6159
      %v6163 = vsel %vm6160, %v6149, %v6153
      %v6164 = vsel %vm6160, %v6151, %v6155
      %v6165 = vsel %vm6160, %v6145, %v6149
      %v6166 = vsel %vm6160, %v6147, %v6151
      %v6167 = vsel %vm6160, %v6157, %v6145
      %v6168 = vsel %vm6160, %v6159, %v6147
      %s6169 = scalar_lea.vmem %s7, 5888
      %v6170 = vld [vmem:[%s6169] sm:$0xff]
      %v6171 = vld [vmem:[%s6169 + $0x8] sm:$0xff]
      %v6172 = vld [vmem:[%s6169 + $0x10] sm:$0xff]
      %v6173 = vld [vmem:[%s6169 + $0x18] sm:$0xff]
      %v6174 = vld [vmem:[%s6169 + $0x20] sm:$0x1]
      %v6175 = vld [vmem:[%s6169 + $0x28] sm:$0x1]
      %v6176 = vld [vmem:[%s6169 + $0x30] sm:$0x1]
      %v6177 = vld [vmem:[%s6169 + $0x38] sm:$0x1]
      %v6178 = vmul.f32 %v6170, %v6167
      %v6179 = vmul.f32 %v6171, %v6165
      %v6180 = vmul.f32 %v6172, %v6163
      %v6181 = vmul.f32 %v6173, %v6161
      %v6182 = vmul.f32 %v6174, %v6168
      %v6183 = vmul.f32 %v6175, %v6166
      %v6184 = vmul.f32 %v6176, %v6164
      %v6185 = vmul.f32 %v6177, %v6162
      %v6186 = vadd.f32 %v6136, %v6178
      %v6187 = vadd.f32 %v6137, %v6179
      %v6188 = vadd.f32 %v6138, %v6180
      %v6189 = vadd.f32 %v6139, %v6181
      %v6190 = vadd.f32 %v6140, %v6182
      %v6191 = vadd.f32 %v6141, %v6183
      %v6192 = vadd.f32 %v6142, %v6184
      %v6193 = vadd.f32 %v6143, %v6185
      %6194 = vrot.lane.b32.xlu0 %v5562, 7
      %v6195 = vpop.permute.xlu0 %6194
      %6196 = vrot.lane.b32.xlu0 %v5566, 7
      %v6197 = vpop.permute.xlu0 %6196
      %6198 = vrot.lane.b32.xlu0 %v5563, 7
      %v6199 = vpop.permute.xlu0 %6198
      %6200 = vrot.lane.b32.xlu0 %v5567, 7
      %v6201 = vpop.permute.xlu0 %6200
      %6202 = vrot.lane.b32.xlu0 %v5564, 7
      %v6203 = vpop.permute.xlu0 %6202
      %6204 = vrot.lane.b32.xlu0 %v5568, 7
      %v6205 = vpop.permute.xlu0 %6204
      %6206 = vrot.lane.b32.xlu0 %v5565, 7
      %v6207 = vpop.permute.xlu0 %6206
      %6208 = vrot.lane.b32.xlu0 %v5569, 7
      %v6209 = vpop.permute.xlu0 %6208
      %v6210 = vsel %vm1298, %v6203, %v6207
      %v6211 = vsel %vm1298, %v6205, %v6209
      %v6212 = vsel %vm1298, %v6199, %v6203
      %v6213 = vsel %vm1298, %v6201, %v6205
      %v6214 = vsel %vm1298, %v6195, %v6199
      %v6215 = vsel %vm1298, %v6197, %v6201
      %v6216 = vsel %vm1298, %v6207, %v6195
      %v6217 = vsel %vm1298, %v6209, %v6197
      %s6218 = scalar_lea.vmem %s7, 5952
      %v6219 = vld [vmem:[%s6218] sm:$0xff]
      %v6220 = vld [vmem:[%s6218 + $0x8] sm:$0xff]
      %v6221 = vld [vmem:[%s6218 + $0x10] sm:$0xff]
      %v6222 = vld [vmem:[%s6218 + $0x18] sm:$0xff]
      %v6223 = vld [vmem:[%s6218 + $0x20] sm:$0x1]
      %v6224 = vld [vmem:[%s6218 + $0x28] sm:$0x1]
      %v6225 = vld [vmem:[%s6218 + $0x30] sm:$0x1]
      %v6226 = vld [vmem:[%s6218 + $0x38] sm:$0x1]
      %v6227 = vmul.f32 %v6219, %v6216
      %v6228 = vmul.f32 %v6220, %v6214
      %v6229 = vmul.f32 %v6221, %v6212
      %v6230 = vmul.f32 %v6222, %v6210
      %v6231 = vmul.f32 %v6223, %v6217
      %v6232 = vmul.f32 %v6224, %v6215
      %v6233 = vmul.f32 %v6225, %v6213
      %v6234 = vmul.f32 %v6226, %v6211
      %v6235 = vadd.f32 %v6186, %v6227
      %v6236 = vadd.f32 %v6187, %v6228
      %v6237 = vadd.f32 %v6188, %v6229
      %v6238 = vadd.f32 %v6189, %v6230
      %v6239 = vadd.f32 %v6190, %v6231
      %v6240 = vadd.f32 %v6191, %v6232
      %v6241 = vadd.f32 %v6192, %v6233
      %v6242 = vadd.f32 %v6193, %v6234
      %s6243 = scalar_lea.vmem %s7, 6016
      %v6244 = vld [vmem:[%s6243] sm:$0xff]
      %v6245 = vld [vmem:[%s6243 + $0x8] sm:$0xff]
      %v6246 = vld [vmem:[%s6243 + $0x10] sm:$0xff]
      %v6247 = vld [vmem:[%s6243 + $0x18] sm:$0xff]
      %v6248 = vld [vmem:[%s6243 + $0x20] sm:$0x1]
      %v6249 = vld [vmem:[%s6243 + $0x28] sm:$0x1]
      %v6250 = vld [vmem:[%s6243 + $0x30] sm:$0x1]
      %v6251 = vld [vmem:[%s6243 + $0x38] sm:$0x1]
      %v6252 = vmul.f32 %v6244, %v5562
      %v6253 = vmul.f32 %v6245, %v5563
      %v6254 = vmul.f32 %v6246, %v5564
      %v6255 = vmul.f32 %v6247, %v5565
      %v6256 = vmul.f32 %v6248, %v5566
      %v6257 = vmul.f32 %v6249, %v5567
      %v6258 = vmul.f32 %v6250, %v5568
      %v6259 = vmul.f32 %v6251, %v5569
      %v6260 = vadd.f32 %v6235, %v6252
      %v6261 = vadd.f32 %v6236, %v6253
      %v6262 = vadd.f32 %v6237, %v6254
      %v6263 = vadd.f32 %v6238, %v6255
      %v6264 = vadd.f32 %v6239, %v6256
      %v6265 = vadd.f32 %v6240, %v6257
      %v6266 = vadd.f32 %v6241, %v6258
      %v6267 = vadd.f32 %v6242, %v6259
      %6268 = vrot.lane.b32.xlu0 %v5562, 121
      %v6269 = vpop.permute.xlu0 %6268
      %6270 = vrot.lane.b32.xlu0 %v5566, 121
      %v6271 = vpop.permute.xlu0 %6270
      %6272 = vrot.lane.b32.xlu0 %v5563, 121
      %v6273 = vpop.permute.xlu0 %6272
      %6274 = vrot.lane.b32.xlu0 %v5567, 121
      %v6275 = vpop.permute.xlu0 %6274
      %6276 = vrot.lane.b32.xlu0 %v5564, 121
      %v6277 = vpop.permute.xlu0 %6276
      %6278 = vrot.lane.b32.xlu0 %v5568, 121
      %v6279 = vpop.permute.xlu0 %6278
      %6280 = vrot.lane.b32.xlu0 %v5565, 121
      %v6281 = vpop.permute.xlu0 %6280
      %6282 = vrot.lane.b32.xlu0 %v5569, 121
      %v6283 = vpop.permute.xlu0 %6282
      %v6284 = vsel %vm1473, %v6277, %v6281
      %v6285 = vsel %vm1473, %v6279, %v6283
      %v6286 = vsel %vm1473, %v6273, %v6277
      %v6287 = vsel %vm1473, %v6275, %v6279
      %v6288 = vsel %vm1473, %v6269, %v6273
      %v6289 = vsel %vm1473, %v6271, %v6275
      %v6290 = vsel %vm1473, %v6281, %v6269
      %v6291 = vsel %vm1473, %v6283, %v6271
      %s6292 = scalar_lea.vmem %s7, 6080
      %v6293 = vld [vmem:[%s6292] sm:$0xff]
      %v6294 = vld [vmem:[%s6292 + $0x8] sm:$0xff]
      %v6295 = vld [vmem:[%s6292 + $0x10] sm:$0xff]
      %v6296 = vld [vmem:[%s6292 + $0x18] sm:$0xff]
      %v6297 = vld [vmem:[%s6292 + $0x20] sm:$0x1]
      %v6298 = vld [vmem:[%s6292 + $0x28] sm:$0x1]
      %v6299 = vld [vmem:[%s6292 + $0x30] sm:$0x1]
      %v6300 = vld [vmem:[%s6292 + $0x38] sm:$0x1]
      %v6301 = vmul.f32 %v6293, %v6288
      %v6302 = vmul.f32 %v6294, %v6286
      %v6303 = vmul.f32 %v6295, %v6284
      %v6304 = vmul.f32 %v6296, %v6290
      %v6305 = vmul.f32 %v6297, %v6289
      %v6306 = vmul.f32 %v6298, %v6287
      %v6307 = vmul.f32 %v6299, %v6285
      %v6308 = vmul.f32 %v6300, %v6291
      %v6309 = vadd.f32 %v6260, %v6301
      %v6310 = vadd.f32 %v6261, %v6302
      %v6311 = vadd.f32 %v6262, %v6303
      %v6312 = vadd.f32 %v6263, %v6304
      %v6313 = vadd.f32 %v6264, %v6305
      %v6314 = vadd.f32 %v6265, %v6306
      %v6315 = vadd.f32 %v6266, %v6307
      %v6316 = vadd.f32 %v6267, %v6308
      %6317 = vrot.lane.b32.xlu0 %v5562, 79
      %v6318 = vpop.permute.xlu0 %6317
      %6319 = vrot.lane.b32.xlu0 %v5566, 79
      %v6320 = vpop.permute.xlu0 %6319
      %6321 = vrot.lane.b32.xlu0 %v5563, 79
      %v6322 = vpop.permute.xlu0 %6321
      %6323 = vrot.lane.b32.xlu0 %v5567, 79
      %v6324 = vpop.permute.xlu0 %6323
      %6325 = vrot.lane.b32.xlu0 %v5564, 79
      %v6326 = vpop.permute.xlu0 %6325
      %6327 = vrot.lane.b32.xlu0 %v5568, 79
      %v6328 = vpop.permute.xlu0 %6327
      %6329 = vrot.lane.b32.xlu0 %v5565, 79
      %v6330 = vpop.permute.xlu0 %6329
      %6331 = vrot.lane.b32.xlu0 %v5569, 79
      %v6332 = vpop.permute.xlu0 %6331
      %vm6333 = vcmp.lt.s32.totalorder %v748, 79
      %v6334 = vsel %vm6333, %v6326, %v6330
      %v6335 = vsel %vm6333, %v6328, %v6332
      %v6336 = vsel %vm6333, %v6322, %v6326
      %v6337 = vsel %vm6333, %v6324, %v6328
      %v6338 = vsel %vm6333, %v6318, %v6322
      %v6339 = vsel %vm6333, %v6320, %v6324
      %v6340 = vsel %vm6333, %v6330, %v6318
      %v6341 = vsel %vm6333, %v6332, %v6320
      %s6342 = scalar_lea.vmem %s7, 6144
      %v6343 = vld [vmem:[%s6342] sm:$0xff]
      %v6344 = vld [vmem:[%s6342 + $0x8] sm:$0xff]
      %v6345 = vld [vmem:[%s6342 + $0x10] sm:$0xff]
      %v6346 = vld [vmem:[%s6342 + $0x18] sm:$0xff]
      %v6347 = vld [vmem:[%s6342 + $0x20] sm:$0x1]
      %v6348 = vld [vmem:[%s6342 + $0x28] sm:$0x1]
      %v6349 = vld [vmem:[%s6342 + $0x30] sm:$0x1]
      %v6350 = vld [vmem:[%s6342 + $0x38] sm:$0x1]
      %v6351 = vmul.f32 %v6343, %v6338
      %v6352 = vmul.f32 %v6344, %v6336
      %v6353 = vmul.f32 %v6345, %v6334
      %v6354 = vmul.f32 %v6346, %v6340
      %v6355 = vmul.f32 %v6347, %v6339
      %v6356 = vmul.f32 %v6348, %v6337
      %v6357 = vmul.f32 %v6349, %v6335
      %v6358 = vmul.f32 %v6350, %v6341
      %v6359 = vadd.f32 %v6309, %v6351
      %v6360 = vadd.f32 %v6310, %v6352
      %v6361 = vadd.f32 %v6311, %v6353
      %v6362 = vadd.f32 %v6312, %v6354
      %v6363 = vadd.f32 %v6313, %v6355
      %v6364 = vadd.f32 %v6314, %v6356
      %v6365 = vadd.f32 %v6315, %v6357
      %v6366 = vadd.f32 %v6316, %v6358
      %6367 = vrot.lane.b32.xlu0 %v5562, 72
      %v6368 = vpop.permute.xlu0 %6367
      %6369 = vrot.lane.b32.xlu0 %v5566, 72
      %v6370 = vpop.permute.xlu0 %6369
      %6371 = vrot.lane.b32.xlu0 %v5563, 72
      %v6372 = vpop.permute.xlu0 %6371
      %6373 = vrot.lane.b32.xlu0 %v5567, 72
      %v6374 = vpop.permute.xlu0 %6373
      %6375 = vrot.lane.b32.xlu0 %v5564, 72
      %v6376 = vpop.permute.xlu0 %6375
      %6377 = vrot.lane.b32.xlu0 %v5568, 72
      %v6378 = vpop.permute.xlu0 %6377
      %6379 = vrot.lane.b32.xlu0 %v5565, 72
      %v6380 = vpop.permute.xlu0 %6379
      %6381 = vrot.lane.b32.xlu0 %v5569, 72
      %v6382 = vpop.permute.xlu0 %6381
      %v6383 = vsel %vm798, %v6376, %v6380
      %v6384 = vsel %vm798, %v6378, %v6382
      %v6385 = vsel %vm798, %v6372, %v6376
      %v6386 = vsel %vm798, %v6374, %v6378
      %v6387 = vsel %vm798, %v6368, %v6372
      %v6388 = vsel %vm798, %v6370, %v6374
      %v6389 = vsel %vm798, %v6380, %v6368
      %v6390 = vsel %vm798, %v6382, %v6370
      %s6391 = scalar_lea.vmem %s7, 6208
      %v6392 = vld [vmem:[%s6391] sm:$0xff]
      %v6393 = vld [vmem:[%s6391 + $0x8] sm:$0xff]
      %v6394 = vld [vmem:[%s6391 + $0x10] sm:$0xff]
      %v6395 = vld [vmem:[%s6391 + $0x18] sm:$0xff]
      %v6396 = vld [vmem:[%s6391 + $0x20] sm:$0x1]
      %v6397 = vld [vmem:[%s6391 + $0x28] sm:$0x1]
      %v6398 = vld [vmem:[%s6391 + $0x30] sm:$0x1]
      %v6399 = vld [vmem:[%s6391 + $0x38] sm:$0x1]
      %v6400 = vmul.f32 %v6392, %v6387
      %v6401 = vmul.f32 %v6393, %v6385
      %v6402 = vmul.f32 %v6394, %v6383
      %v6403 = vmul.f32 %v6395, %v6389
      %v6404 = vmul.f32 %v6396, %v6388
      %v6405 = vmul.f32 %v6397, %v6386
      %v6406 = vmul.f32 %v6398, %v6384
      %v6407 = vmul.f32 %v6399, %v6390
      %v6408 = vadd.f32 %v6359, %v6400
      %v6409 = vadd.f32 %v6360, %v6401
      %v6410 = vadd.f32 %v6361, %v6402
      %v6411 = vadd.f32 %v6362, %v6403
      %v6412 = vadd.f32 %v6363, %v6404
      %v6413 = vadd.f32 %v6364, %v6405
      %v6414 = vadd.f32 %v6365, %v6406
      %v6415 = vadd.f32 %v6366, %v6407
      %6416 = vrot.lane.b32.xlu0 %v5562, 65
      %v6417 = vpop.permute.xlu0 %6416
      %6418 = vrot.lane.b32.xlu0 %v5566, 65
      %v6419 = vpop.permute.xlu0 %6418
      %6420 = vrot.lane.b32.xlu0 %v5563, 65
      %v6421 = vpop.permute.xlu0 %6420
      %6422 = vrot.lane.b32.xlu0 %v5567, 65
      %v6423 = vpop.permute.xlu0 %6422
      %6424 = vrot.lane.b32.xlu0 %v5564, 65
      %v6425 = vpop.permute.xlu0 %6424
      %6426 = vrot.lane.b32.xlu0 %v5568, 65
      %v6427 = vpop.permute.xlu0 %6426
      %6428 = vrot.lane.b32.xlu0 %v5565, 65
      %v6429 = vpop.permute.xlu0 %6428
      %6430 = vrot.lane.b32.xlu0 %v5569, 65
      %v6431 = vpop.permute.xlu0 %6430
      %v6432 = vsel %vm898, %v6425, %v6429
      %v6433 = vsel %vm898, %v6427, %v6431
      %v6434 = vsel %vm898, %v6421, %v6425
      %v6435 = vsel %vm898, %v6423, %v6427
      %v6436 = vsel %vm898, %v6417, %v6421
      %v6437 = vsel %vm898, %v6419, %v6423
      %v6438 = vsel %vm898, %v6429, %v6417
      %v6439 = vsel %vm898, %v6431, %v6419
      %s6440 = scalar_lea.vmem %s7, 6272
      %v6441 = vld [vmem:[%s6440] sm:$0xff]
      %v6442 = vld [vmem:[%s6440 + $0x8] sm:$0xff]
      %v6443 = vld [vmem:[%s6440 + $0x10] sm:$0xff]
      %v6444 = vld [vmem:[%s6440 + $0x18] sm:$0xff]
      %v6445 = vld [vmem:[%s6440 + $0x20] sm:$0x1]
      %v6446 = vld [vmem:[%s6440 + $0x28] sm:$0x1]
      %v6447 = vld [vmem:[%s6440 + $0x30] sm:$0x1]
      %v6448 = vld [vmem:[%s6440 + $0x38] sm:$0x1]
      %v6449 = vmul.f32 %v6441, %v6436
      %v6450 = vmul.f32 %v6442, %v6434
      %v6451 = vmul.f32 %v6443, %v6432
      %v6452 = vmul.f32 %v6444, %v6438
      %v6453 = vmul.f32 %v6445, %v6437
      %v6454 = vmul.f32 %v6446, %v6435
      %v6455 = vmul.f32 %v6447, %v6433
      %v6456 = vmul.f32 %v6448, %v6439
      %v6457 = vadd.f32 %v6408, %v6449
      %v6458 = vadd.f32 %v6409, %v6450
      %v6459 = vadd.f32 %v6410, %v6451
      %v6460 = vadd.f32 %v6411, %v6452
      %v6461 = vadd.f32 %v6412, %v6453
      %v6462 = vadd.f32 %v6413, %v6454
      %v6463 = vadd.f32 %v6414, %v6455
      %v6464 = vadd.f32 %v6415, %v6456
      %s6465 = scalar_lea.vmem %s7, 6336
      %v6466 = vld [vmem:[%s6465] sm:$0xff]
      %v6467 = vld [vmem:[%s6465 + $0x8] sm:$0xff]
      %v6468 = vld [vmem:[%s6465 + $0x10] sm:$0xff]
      %v6469 = vld [vmem:[%s6465 + $0x18] sm:$0xff]
      %v6470 = vld [vmem:[%s6465 + $0x20] sm:$0x1]
      %v6471 = vld [vmem:[%s6465 + $0x28] sm:$0x1]
      %v6472 = vld [vmem:[%s6465 + $0x30] sm:$0x1]
      %v6473 = vld [vmem:[%s6465 + $0x38] sm:$0x1]
      %v6474 = vmul.f32 %v6466, %v5625
      %v6475 = vmul.f32 %v6467, %v5623
      %v6476 = vmul.f32 %v6468, %v5621
      %v6477 = vmul.f32 %v6469, %v5619
      %v6478 = vmul.f32 %v6470, %v5626
      %v6479 = vmul.f32 %v6471, %v5624
      %v6480 = vmul.f32 %v6472, %v5622
      %v6481 = vmul.f32 %v6473, %v5620
      %v6482 = vadd.f32 %v6457, %v6474
      %v6483 = vadd.f32 %v6458, %v6475
      %v6484 = vadd.f32 %v6459, %v6476
      %v6485 = vadd.f32 %v6460, %v6477
      %v6486 = vadd.f32 %v6461, %v6478
      %v6487 = vadd.f32 %v6462, %v6479
      %v6488 = vadd.f32 %v6463, %v6480
      %v6489 = vadd.f32 %v6464, %v6481
      %s6490 = scalar_lea.vmem %s7, 6400
      %v6491 = vld [vmem:[%s6490] sm:$0xff]
      %v6492 = vld [vmem:[%s6490 + $0x8] sm:$0xff]
      %v6493 = vld [vmem:[%s6490 + $0x10] sm:$0xff]
      %v6494 = vld [vmem:[%s6490 + $0x18] sm:$0xff]
      %v6495 = vld [vmem:[%s6490 + $0x20] sm:$0x1]
      %v6496 = vld [vmem:[%s6490 + $0x28] sm:$0x1]
      %v6497 = vld [vmem:[%s6490 + $0x30] sm:$0x1]
      %v6498 = vld [vmem:[%s6490 + $0x38] sm:$0x1]
      %v6499 = vmul.f32 %v6491, %v5674
      %v6500 = vmul.f32 %v6492, %v5672
      %v6501 = vmul.f32 %v6493, %v5670
      %v6502 = vmul.f32 %v6494, %v5668
      %v6503 = vmul.f32 %v6495, %v5675
      %v6504 = vmul.f32 %v6496, %v5673
      %v6505 = vmul.f32 %v6497, %v5671
      %v6506 = vmul.f32 %v6498, %v5669
      %v6507 = vadd.f32 %v6482, %v6499
      %v6508 = vadd.f32 %v6483, %v6500
      %v6509 = vadd.f32 %v6484, %v6501
      %v6510 = vadd.f32 %v6485, %v6502
      %v6511 = vadd.f32 %v6486, %v6503
      %v6512 = vadd.f32 %v6487, %v6504
      %v6513 = vadd.f32 %v6488, %v6505
      %v6514 = vadd.f32 %v6489, %v6506
      %s6515 = scalar_lea.vmem %s7, 6464
      %v6516 = vld [vmem:[%s6515] sm:$0xff]
      %v6517 = vld [vmem:[%s6515 + $0x8] sm:$0xff]
      %v6518 = vld [vmem:[%s6515 + $0x10] sm:$0xff]
      %v6519 = vld [vmem:[%s6515 + $0x18] sm:$0xff]
      %v6520 = vld [vmem:[%s6515 + $0x20] sm:$0x1]
      %v6521 = vld [vmem:[%s6515 + $0x28] sm:$0x1]
      %v6522 = vld [vmem:[%s6515 + $0x30] sm:$0x1]
      %v6523 = vld [vmem:[%s6515 + $0x38] sm:$0x1]
      %v6524 = vmul.f32 %v6516, %v5724
      %v6525 = vmul.f32 %v6517, %v5722
      %v6526 = vmul.f32 %v6518, %v5720
      %v6527 = vmul.f32 %v6519, %v5718
      %v6528 = vmul.f32 %v6520, %v5725
      %v6529 = vmul.f32 %v6521, %v5723
      %v6530 = vmul.f32 %v6522, %v5721
      %v6531 = vmul.f32 %v6523, %v5719
      %v6532 = vadd.f32 %v6507, %v6524
      %v6533 = vadd.f32 %v6508, %v6525
      %v6534 = vadd.f32 %v6509, %v6526
      %v6535 = vadd.f32 %v6510, %v6527
      %v6536 = vadd.f32 %v6511, %v6528
      %v6537 = vadd.f32 %v6512, %v6529
      %v6538 = vadd.f32 %v6513, %v6530
      %v6539 = vadd.f32 %v6514, %v6531
      %s6540 = scalar_lea.vmem %s7, 6528
      %v6541 = vld [vmem:[%s6540] sm:$0xff]
      %v6542 = vld [vmem:[%s6540 + $0x8] sm:$0xff]
      %v6543 = vld [vmem:[%s6540 + $0x10] sm:$0xff]
      %v6544 = vld [vmem:[%s6540 + $0x18] sm:$0xff]
      %v6545 = vld [vmem:[%s6540 + $0x20] sm:$0x1]
      %v6546 = vld [vmem:[%s6540 + $0x28] sm:$0x1]
      %v6547 = vld [vmem:[%s6540 + $0x30] sm:$0x1]
      %v6548 = vld [vmem:[%s6540 + $0x38] sm:$0x1]
      %v6549 = vmul.f32 %v6541, %v5773
      %v6550 = vmul.f32 %v6542, %v5771
      %v6551 = vmul.f32 %v6543, %v5769
      %v6552 = vmul.f32 %v6544, %v5767
      %v6553 = vmul.f32 %v6545, %v5774
      %v6554 = vmul.f32 %v6546, %v5772
      %v6555 = vmul.f32 %v6547, %v5770
      %v6556 = vmul.f32 %v6548, %v5768
      %v6557 = vadd.f32 %v6532, %v6549
      %v6558 = vadd.f32 %v6533, %v6550
      %v6559 = vadd.f32 %v6534, %v6551
      %v6560 = vadd.f32 %v6535, %v6552
      %v6561 = vadd.f32 %v6536, %v6553
      %v6562 = vadd.f32 %v6537, %v6554
      %v6563 = vadd.f32 %v6538, %v6555
      %v6564 = vadd.f32 %v6539, %v6556
      %s6565 = scalar_lea.vmem %s7, 6592
      %v6566 = vld [vmem:[%s6565] sm:$0xff]
      %v6567 = vld [vmem:[%s6565 + $0x8] sm:$0xff]
      %v6568 = vld [vmem:[%s6565 + $0x10] sm:$0xff]
      %v6569 = vld [vmem:[%s6565 + $0x18] sm:$0xff]
      %v6570 = vld [vmem:[%s6565 + $0x20] sm:$0x1]
      %v6571 = vld [vmem:[%s6565 + $0x28] sm:$0x1]
      %v6572 = vld [vmem:[%s6565 + $0x30] sm:$0x1]
      %v6573 = vld [vmem:[%s6565 + $0x38] sm:$0x1]
      %v6574 = vmul.f32 %v6566, %v5822
      %v6575 = vmul.f32 %v6567, %v5820
      %v6576 = vmul.f32 %v6568, %v5818
      %v6577 = vmul.f32 %v6569, %v5816
      %v6578 = vmul.f32 %v6570, %v5823
      %v6579 = vmul.f32 %v6571, %v5821
      %v6580 = vmul.f32 %v6572, %v5819
      %v6581 = vmul.f32 %v6573, %v5817
      %v6582 = vadd.f32 %v6557, %v6574
      %v6583 = vadd.f32 %v6558, %v6575
      %v6584 = vadd.f32 %v6559, %v6576
      %v6585 = vadd.f32 %v6560, %v6577
      %v6586 = vadd.f32 %v6561, %v6578
      %v6587 = vadd.f32 %v6562, %v6579
      %v6588 = vadd.f32 %v6563, %v6580
      %v6589 = vadd.f32 %v6564, %v6581
      %s6590 = scalar_lea.vmem %s7, 6656
      %v6591 = vld [vmem:[%s6590] sm:$0xff]
      %v6592 = vld [vmem:[%s6590 + $0x8] sm:$0xff]
      %v6593 = vld [vmem:[%s6590 + $0x10] sm:$0xff]
      %v6594 = vld [vmem:[%s6590 + $0x18] sm:$0xff]
      %v6595 = vld [vmem:[%s6590 + $0x20] sm:$0x1]
      %v6596 = vld [vmem:[%s6590 + $0x28] sm:$0x1]
      %v6597 = vld [vmem:[%s6590 + $0x30] sm:$0x1]
      %v6598 = vld [vmem:[%s6590 + $0x38] sm:$0x1]
      %v6599 = vmul.f32 %v6591, %v5871
      %v6600 = vmul.f32 %v6592, %v5869
      %v6601 = vmul.f32 %v6593, %v5867
      %v6602 = vmul.f32 %v6594, %v5865
      %v6603 = vmul.f32 %v6595, %v5872
      %v6604 = vmul.f32 %v6596, %v5870
      %v6605 = vmul.f32 %v6597, %v5868
      %v6606 = vmul.f32 %v6598, %v5866
      %v6607 = vadd.f32 %v6582, %v6599
      %v6608 = vadd.f32 %v6583, %v6600
      %v6609 = vadd.f32 %v6584, %v6601
      %v6610 = vadd.f32 %v6585, %v6602
      %v6611 = vadd.f32 %v6586, %v6603
      %v6612 = vadd.f32 %v6587, %v6604
      %v6613 = vadd.f32 %v6588, %v6605
      %v6614 = vadd.f32 %v6589, %v6606
      %s6615 = scalar_lea.vmem %s7, 6720
      %v6616 = vld [vmem:[%s6615] sm:$0xff]
      %v6617 = vld [vmem:[%s6615 + $0x8] sm:$0xff]
      %v6618 = vld [vmem:[%s6615 + $0x10] sm:$0xff]
      %v6619 = vld [vmem:[%s6615 + $0x18] sm:$0xff]
      %v6620 = vld [vmem:[%s6615 + $0x20] sm:$0x1]
      %v6621 = vld [vmem:[%s6615 + $0x28] sm:$0x1]
      %v6622 = vld [vmem:[%s6615 + $0x30] sm:$0x1]
      %v6623 = vld [vmem:[%s6615 + $0x38] sm:$0x1]
      %v6624 = vmul.f32 %v6616, %v5921
      %v6625 = vmul.f32 %v6617, %v5919
      %v6626 = vmul.f32 %v6618, %v5917
      %v6627 = vmul.f32 %v6619, %v5915
      %v6628 = vmul.f32 %v6620, %v5922
      %v6629 = vmul.f32 %v6621, %v5920
      %v6630 = vmul.f32 %v6622, %v5918
      %v6631 = vmul.f32 %v6623, %v5916
      %v6632 = vadd.f32 %v6607, %v6624
      %v6633 = vadd.f32 %v6608, %v6625
      %v6634 = vadd.f32 %v6609, %v6626
      %v6635 = vadd.f32 %v6610, %v6627
      %v6636 = vadd.f32 %v6611, %v6628
      %v6637 = vadd.f32 %v6612, %v6629
      %v6638 = vadd.f32 %v6613, %v6630
      %v6639 = vadd.f32 %v6614, %v6631
      %s6640 = scalar_lea.vmem %s7, 6784
      %v6641 = vld [vmem:[%s6640] sm:$0xff]
      %v6642 = vld [vmem:[%s6640 + $0x8] sm:$0xff]
      %v6643 = vld [vmem:[%s6640 + $0x10] sm:$0xff]
      %v6644 = vld [vmem:[%s6640 + $0x18] sm:$0xff]
      %v6645 = vld [vmem:[%s6640 + $0x20] sm:$0x1]
      %v6646 = vld [vmem:[%s6640 + $0x28] sm:$0x1]
      %v6647 = vld [vmem:[%s6640 + $0x30] sm:$0x1]
      %v6648 = vld [vmem:[%s6640 + $0x38] sm:$0x1]
      %v6649 = vmul.f32 %v6641, %v5970
      %v6650 = vmul.f32 %v6642, %v5968
      %v6651 = vmul.f32 %v6643, %v5966
      %v6652 = vmul.f32 %v6644, %v5964
      %v6653 = vmul.f32 %v6645, %v5971
      %v6654 = vmul.f32 %v6646, %v5969
      %v6655 = vmul.f32 %v6647, %v5967
      %v6656 = vmul.f32 %v6648, %v5965
      %v6657 = vadd.f32 %v6632, %v6649
      %v6658 = vadd.f32 %v6633, %v6650
      %v6659 = vadd.f32 %v6634, %v6651
      %v6660 = vadd.f32 %v6635, %v6652
      %v6661 = vadd.f32 %v6636, %v6653
      %v6662 = vadd.f32 %v6637, %v6654
      %v6663 = vadd.f32 %v6638, %v6655
      %v6664 = vadd.f32 %v6639, %v6656
      %s6665 = scalar_lea.vmem %s7, 6848
      %v6666 = vld [vmem:[%s6665] sm:$0xff]
      %v6667 = vld [vmem:[%s6665 + $0x8] sm:$0xff]
      %v6668 = vld [vmem:[%s6665 + $0x10] sm:$0xff]
      %v6669 = vld [vmem:[%s6665 + $0x18] sm:$0xff]
      %v6670 = vld [vmem:[%s6665 + $0x20] sm:$0x1]
      %v6671 = vld [vmem:[%s6665 + $0x28] sm:$0x1]
      %v6672 = vld [vmem:[%s6665 + $0x30] sm:$0x1]
      %v6673 = vld [vmem:[%s6665 + $0x38] sm:$0x1]
      %v6674 = vmul.f32 %v6666, %v6019
      %v6675 = vmul.f32 %v6667, %v6017
      %v6676 = vmul.f32 %v6668, %v6015
      %v6677 = vmul.f32 %v6669, %v6013
      %v6678 = vmul.f32 %v6670, %v6020
      %v6679 = vmul.f32 %v6671, %v6018
      %v6680 = vmul.f32 %v6672, %v6016
      %v6681 = vmul.f32 %v6673, %v6014
      %v6682 = vadd.f32 %v6657, %v6674
      %v6683 = vadd.f32 %v6658, %v6675
      %v6684 = vadd.f32 %v6659, %v6676
      %v6685 = vadd.f32 %v6660, %v6677
      %v6686 = vadd.f32 %v6661, %v6678
      %v6687 = vadd.f32 %v6662, %v6679
      %v6688 = vadd.f32 %v6663, %v6680
      %v6689 = vadd.f32 %v6664, %v6681
      %s6690 = scalar_lea.vmem %s6, 48
      %v6691 = vld [vmem:[%s6690] sm:$0xff]
      %v6692 = vld [vmem:[%s6690 + $0x8] sm:$0x1]
      %6694 = vset.pattern.permute.xlu0 0
      %6695 = vperm.xlu0 %6694, %v5601
      %v6696 = vpop.permute.xlu0 %6695
      %6699 = vset.pattern.permute.xlu0 0
      %6700 = vperm.xlu0 %6699, %v5602
      %v6701 = vpop.permute.xlu0 %6700
      %v6703 = vmul.f32 %v6696, %v6682
      %v6704 = vmul.f32 %v6696, %v6683
      %v6705 = vmul.f32 %v6696, %v6684
      %v6706 = vmul.f32 %v6696, %v6685
      %v6707 = vmul.f32 %v6701, %v6686
      %v6708 = vmul.f32 %v6701, %v6687
      %v6709 = vmul.f32 %v6701, %v6688
      %v6710 = vmul.f32 %v6701, %v6689
      %6712 = vset.pattern.permute.xlu0 0
      %6713 = vperm.xlu0 %6712, %v6691
      %v6714 = vpop.permute.xlu0 %6713
      %6717 = vset.pattern.permute.xlu0 0
      %6718 = vperm.xlu0 %6717, %v6692
      %v6719 = vpop.permute.xlu0 %6718
      %v6721 = vadd.f32 %v6714, %v6703
      %v6722 = vadd.f32 %v6714, %v6704
      %v6723 = vadd.f32 %v6714, %v6705
      %v6724 = vadd.f32 %v6714, %v6706
      %v6725 = vadd.f32 %v6719, %v6707
      %v6726 = vadd.f32 %v6719, %v6708
      %v6727 = vadd.f32 %v6719, %v6709
      %v6728 = vadd.f32 %v6719, %v6710
      %s6729 = scalar_lea.vmem %s5, 48
      %v6730 = vld [vmem:[%s6729] sm:$0xff]
      %v6731 = vld [vmem:[%s6729 + $0x8] sm:$0x1]
      %s6732 = scalar_lea.vmem %s8, 192
      %v6733 = vld [vmem:[%s6732] sm:$0xff]
      %v6734 = vld [vmem:[%s6732 + $0x8] sm:$0xff]
      %v6735 = vld [vmem:[%s6732 + $0x10] sm:$0xff]
      %v6736 = vld [vmem:[%s6732 + $0x18] sm:$0xff]
      %v6737 = vld [vmem:[%s6732 + $0x20] sm:$0x1]
      %v6738 = vld [vmem:[%s6732 + $0x28] sm:$0x1]
      %v6739 = vld [vmem:[%s6732 + $0x30] sm:$0x1]
      %v6740 = vld [vmem:[%s6732 + $0x38] sm:$0x1]
      %6742 = vset.pattern.permute.xlu0 0
      %6743 = vperm.xlu0 %6742, %v6730
      %v6744 = vpop.permute.xlu0 %6743
      %6747 = vset.pattern.permute.xlu0 0
      %6748 = vperm.xlu0 %6747, %v6731
      %v6749 = vpop.permute.xlu0 %6748
      %v6751 = vmul.f32 %v6744, %v6733
      %v6752 = vmul.f32 %v6744, %v6734
      %v6753 = vmul.f32 %v6744, %v6735
      %v6754 = vmul.f32 %v6744, %v6736
      %v6755 = vmul.f32 %v6749, %v6737
      %v6756 = vmul.f32 %v6749, %v6738
      %v6757 = vmul.f32 %v6749, %v6739
      %v6758 = vmul.f32 %v6749, %v6740
      %v6759 = vadd.f32 %v6721, %v6751
      %v6760 = vadd.f32 %v6722, %v6752
      %v6761 = vadd.f32 %v6723, %v6753
      %v6762 = vadd.f32 %v6724, %v6754
      %v6763 = vadd.f32 %v6725, %v6755
      %v6764 = vadd.f32 %v6726, %v6756
      %v6765 = vadd.f32 %v6727, %v6757
      %v6766 = vadd.f32 %v6728, %v6758
      %v6767 = vadd.f32 %v6759, %v6760
      %v6768 = vadd.f32 %v6767, %v6761
      %v6769 = vadd.f32 %v6768, %v6762
      %6770 = vadd.xlane.f32.xlu0 %v6769
      %v6771 = vpop.xlane.xlu0 %6770
      %v6772 = vsel %vm678, %v6763, 0.0
      %v6773 = vsel %vm678, %v6764, 0.0
      %v6774 = vadd.f32 %v6772, %v6773
      %v6775 = vsel %vm678, %v6765, 0.0
      %v6776 = vadd.f32 %v6774, %v6775
      %v6777 = vsel %vm678, %v6766, 0.0
      %v6778 = vadd.f32 %v6776, %v6777
      %6779 = vadd.xlane.f32.xlu0 %v6778
      %v6780 = vpop.xlane.xlu0 %6779
      %v6781 = vmul.f32 %v6771, %v688
      %v6782 = vmul.f32 %v6780, %v688
      %v6783 = vsub.f32 %v6759, %v6781
      %v6784 = vsub.f32 %v6760, %v6781
      %v6785 = vsub.f32 %v6761, %v6781
      %v6786 = vsub.f32 %v6762, %v6781
      %v6787 = vsub.f32 %v6763, %v6782
      %v6788 = vsub.f32 %v6764, %v6782
      %v6789 = vsub.f32 %v6765, %v6782
      %v6790 = vsub.f32 %v6766, %v6782
      %v6791 = vmul.f32 %v6783, %v6783
      %v6792 = vmul.f32 %v6784, %v6784
      %v6793 = vmul.f32 %v6785, %v6785
      %v6794 = vmul.f32 %v6786, %v6786
      %v6795 = vmul.f32 %v6787, %v6787
      %v6796 = vmul.f32 %v6788, %v6788
      %v6797 = vmul.f32 %v6789, %v6789
      %v6798 = vmul.f32 %v6790, %v6790
      %v6799 = vadd.f32 %v6791, %v6792
      %v6800 = vadd.f32 %v6799, %v6793
      %v6801 = vadd.f32 %v6800, %v6794
      %6802 = vadd.xlane.f32.xlu0 %v6801
      %v6803 = vpop.xlane.xlu0 %6802
      %v6804 = vsel %vm678, %v6795, 0.0
      %v6805 = vsel %vm678, %v6796, 0.0
      %v6806 = vadd.f32 %v6804, %v6805
      %v6807 = vsel %vm678, %v6797, 0.0
      %v6808 = vadd.f32 %v6806, %v6807
      %v6809 = vsel %vm678, %v6798, 0.0
      %v6810 = vadd.f32 %v6808, %v6809
      %6811 = vadd.xlane.f32.xlu0 %v6810
      %v6812 = vpop.xlane.xlu0 %6811
      %v6813 = vmul.f32 %v6803, %v688
      %v6814 = vmul.f32 %v6812, %v688
      %s6815 = scalar_lea.vmem %s9, 48
      %v6816 = vld [vmem:[%s6815] sm:$0xff]
      %v6817 = vld [vmem:[%s6815 + $0x8] sm:$0x1]
      %v6818 = vadd.f32 %v6813, 1e-06
      %v6819 = vadd.f32 %v6814, 1e-06
      %v6820 = vrsqrt.pop %v6818
      %v6821 = vrsqrt.pop %v6819
      %v6822 = vmul.f32 %v6816, %v6820
      %v6823 = vmul.f32 %v6817, %v6821
      %6825 = vset.pattern.permute.xlu0 0
      %6826 = vperm.xlu0 %6825, %v6822
      %v6827 = vpop.permute.xlu0 %6826
      %6830 = vset.pattern.permute.xlu0 0
      %6831 = vperm.xlu0 %6830, %v6823
      %v6832 = vpop.permute.xlu0 %6831
      %v6834 = vmul.f32 %v6783, %v6827
      %v6835 = vmul.f32 %v6784, %v6827
      %v6836 = vmul.f32 %v6785, %v6827
      %v6837 = vmul.f32 %v6786, %v6827
      %v6838 = vmul.f32 %v6787, %v6832
      %v6839 = vmul.f32 %v6788, %v6832
      %v6840 = vmul.f32 %v6789, %v6832
      %v6841 = vmul.f32 %v6790, %v6832
      %s6842 = scalar_lea.vmem %s10, 48
      %v6843 = vld [vmem:[%s6842] sm:$0xff]
      %v6844 = vld [vmem:[%s6842 + $0x8] sm:$0x1]
      %6846 = vset.pattern.permute.xlu0 0
      %6847 = vperm.xlu0 %6846, %v6843
      %v6848 = vpop.permute.xlu0 %6847
      %6851 = vset.pattern.permute.xlu0 0
      %6852 = vperm.xlu0 %6851, %v6844
      %v6853 = vpop.permute.xlu0 %6852
      %v6855 = vadd.f32 %v6834, %v6848
      %v6856 = vadd.f32 %v6835, %v6848
      %v6857 = vadd.f32 %v6836, %v6848
      %v6858 = vadd.f32 %v6837, %v6848
      %v6859 = vadd.f32 %v6838, %v6853
      %v6860 = vadd.f32 %v6839, %v6853
      %v6861 = vadd.f32 %v6840, %v6853
      %v6862 = vadd.f32 %v6841, %v6853
      %s6863 = scalar_lea.vmem %s11, 48
      %v6864 = vld [vmem:[%s6863] sm:$0xff]
      %v6865 = vld [vmem:[%s6863 + $0x8] sm:$0xff]
      %v6867 = vsel %vm3303, %v6864, 0
      %v6870 = vsel %vm3303, %v6865, 0
      %v6873 = vsel %vm678, %v6859, 0
      %v6876 = vsel %vm678, %v6860, 0
      %v6879 = vsel %vm678, %v6861, 0
      %v6882 = vsel %vm678, %v6862, 0
      %6884 = vmatprep.subr.mxu0 %v6856
      %6885 = vmatpush1.msra.mxu0 %v6855
      %6886 = vmatprep.subr.mxu0 %v6876
      %6887 = vmatpush1.msra.mxu0 %v6873
      %6888 = vmatprep.subr.mxu0 0.0
      %6889 = vmatpush1.msra.mxu0 0.0
      %6890 = vmatprep.subr.mxu0 0.0
      %6891 = vmatpush1.msra.mxu0 0.0
      %6892 = vmatprep.subr.mxu0 0.0
      %6893 = vmatpush1.msra.mxu0 0.0
      %6894 = vmatprep.subr.mxu0 0.0
      %6895 = vmatpush1.msra.mxu0 0.0
      %6896 = vmatprep.subr.mxu0 0.0
      %6897 = vmatpush1.msra.mxu0 0.0
      %6898 = vmatprep.subr.mxu0 0.0
      %6899 = vmatpush1.msra.mxu0 0.0
      %6900 = vmatprep.subr.mxu0 0.0
      %6901 = vmatpush1.msra.mxu0 0.0
      %6902 = vmatprep.subr.mxu0 0.0
      %6903 = vmatpush1.msra.mxu0 0.0
      %6904 = vmatprep.subr.mxu0 0.0
      %6905 = vmatpush1.msra.mxu0 0.0
      %6906 = vmatprep.subr.mxu0 0.0
      %6907 = vmatpush1.msra.mxu0 0.0
      %6908 = vmatprep.subr.mxu0 0.0
      %6909 = vmatpush1.msra.mxu0 0.0
      %6910 = vmatprep.subr.mxu0 0.0
      %6911 = vmatpush1.msra.mxu0 0.0
      %6912 = vmatprep.subr.mxu0 0.0
      %6913 = vmatpush1.msra.mxu0 0.0
      %6914 = vmatprep.subr.mxu0 0.0
      %6915 = vmatpush1.msra.mxu0 0.0
      %6916 = vmatprep.subr.mxu0 0.0
      %6917 = vmatpush1.msra.mxu0 0.0
      %6918 = vmatprep.subr.mxu0 0.0
      %6919 = vmatpush1.msra.mxu0 0.0
      %6920 = vmatprep.subr.mxu0 0.0
      %6921 = vmatpush1.msra.mxu0 0.0
      %6922 = vmatprep.subr.mxu0 0.0
      %6923 = vmatpush1.msra.mxu0 0.0
      %6924 = vmatprep.subr.mxu0 0.0
      %6925 = vmatpush1.msra.mxu0 0.0
      %6926 = vmatprep.subr.mxu0 0.0
      %6927 = vmatpush1.msra.mxu0 0.0
      %6928 = vmatprep.subr.mxu0 0.0
      %6929 = vmatpush1.msra.mxu0 0.0
      %6930 = vmatprep.subr.mxu0 0.0
      %6931 = vmatpush1.msra.mxu0 0.0
      %6932 = vmatprep.subr.mxu0 0.0
      %6933 = vmatpush1.msra.mxu0 0.0
      %6934 = vmatprep.subr.mxu0 0.0
      %6935 = vmatpush1.msra.mxu0 0.0
      %6936 = vmatprep.subr.mxu0 0.0
      %6937 = vmatpush1.msra.mxu0 0.0
      %6938 = vmatprep.subr.mxu0 0.0
      %6939 = vmatpush1.msra.mxu0 0.0
      %6940 = vmatprep.subr.mxu0 0.0
      %6941 = vmatpush1.msra.mxu0 0.0
      %6942 = vmatprep.subr.mxu0 0.0
      %6943 = vmatpush1.msra.mxu0 0.0
      %6944 = vmatprep.subr.mxu0 0.0
      %6945 = vmatpush1.msra.mxu0 0.0
      %6946 = vmatprep.subr.mxu0 0.0
      %6947 = vmatpush1.msra.mxu0 0.0
      %6948 = vmatprep.mubr.f32.mxu0 0.0
      %6949 = vmatmul.mubr.f32.gmra.mrb[0].mxu0 %v6867
      %v6950 = vpop.f32.mrb[0].mxu0
      %v6951 = vadd.f32 0.0, %v6950
      %v6952 = vpop.f32.mrb[0].mxu0
      %v6953 = vadd.f32 0.0, %v6952
      %6954 = vmatprep.mubr.f32.mxu0 0.0
      %6955 = vmatmul.mubr.f32.gmra.mrb[0].mxu0 %v6870
      %v6956 = vpop.f32.mrb[0].mxu0
      %v6957 = vadd.f32 0.0, %v6956
      %v6958 = vpop.f32.mrb[0].mxu0
      %v6959 = vadd.f32 0.0, %v6958
      %6960 = vdwg.mxu0
      %6961 = vmatprep.subr.mxu0 %v6858
      %6962 = vmatpush1.msra.mxu0 %v6857
      %6963 = vmatprep.subr.mxu0 %v6882
      %6964 = vmatpush1.msra.mxu0 %v6879
      %6965 = vmatprep.subr.mxu0 0.0
      %6966 = vmatpush1.msra.mxu0 0.0
      %6967 = vmatprep.subr.mxu0 0.0
      %6968 = vmatpush1.msra.mxu0 0.0
      %6969 = vmatprep.subr.mxu0 0.0
      %6970 = vmatpush1.msra.mxu0 0.0
      %6971 = vmatprep.subr.mxu0 0.0
      %6972 = vmatpush1.msra.mxu0 0.0
      %6973 = vmatprep.subr.mxu0 0.0
      %6974 = vmatpush1.msra.mxu0 0.0
      %6975 = vmatprep.subr.mxu0 0.0
      %6976 = vmatpush1.msra.mxu0 0.0
      %6977 = vmatprep.subr.mxu0 0.0
      %6978 = vmatpush1.msra.mxu0 0.0
      %6979 = vmatprep.subr.mxu0 0.0
      %6980 = vmatpush1.msra.mxu0 0.0
      %6981 = vmatprep.subr.mxu0 0.0
      %6982 = vmatpush1.msra.mxu0 0.0
      %6983 = vmatprep.subr.mxu0 0.0
      %6984 = vmatpush1.msra.mxu0 0.0
      %6985 = vmatprep.subr.mxu0 0.0
      %6986 = vmatpush1.msra.mxu0 0.0
      %6987 = vmatprep.subr.mxu0 0.0
      %6988 = vmatpush1.msra.mxu0 0.0
      %6989 = vmatprep.subr.mxu0 0.0
      %6990 = vmatpush1.msra.mxu0 0.0
      %6991 = vmatprep.subr.mxu0 0.0
      %6992 = vmatpush1.msra.mxu0 0.0
      %6993 = vmatprep.subr.mxu0 0.0
      %6994 = vmatpush1.msra.mxu0 0.0
      %6995 = vmatprep.subr.mxu0 0.0
      %6996 = vmatpush1.msra.mxu0 0.0
      %6997 = vmatprep.subr.mxu0 0.0
      %6998 = vmatpush1.msra.mxu0 0.0
      %6999 = vmatprep.subr.mxu0 0.0
      %7000 = vmatpush1.msra.mxu0 0.0
      %7001 = vmatprep.subr.mxu0 0.0
      %7002 = vmatpush1.msra.mxu0 0.0
      %7003 = vmatprep.subr.mxu0 0.0
      %7004 = vmatpush1.msra.mxu0 0.0
      %7005 = vmatprep.subr.mxu0 0.0
      %7006 = vmatpush1.msra.mxu0 0.0
      %7007 = vmatprep.subr.mxu0 0.0
      %7008 = vmatpush1.msra.mxu0 0.0
      %7009 = vmatprep.subr.mxu0 0.0
      %7010 = vmatpush1.msra.mxu0 0.0
      %7011 = vmatprep.subr.mxu0 0.0
      %7012 = vmatpush1.msra.mxu0 0.0
      %7013 = vmatprep.subr.mxu0 0.0
      %7014 = vmatpush1.msra.mxu0 0.0
      %7015 = vmatprep.subr.mxu0 0.0
      %7016 = vmatpush1.msra.mxu0 0.0
      %7017 = vmatprep.subr.mxu0 0.0
      %7018 = vmatpush1.msra.mxu0 0.0
      %7019 = vmatprep.subr.mxu0 0.0
      %7020 = vmatpush1.msra.mxu0 0.0
      %7021 = vmatprep.subr.mxu0 0.0
      %7022 = vmatpush1.msra.mxu0 0.0
      %7023 = vmatprep.subr.mxu0 0.0
      %7024 = vmatpush1.msra.mxu0 0.0
      %7025 = vmatprep.mubr.f32.mxu0 0.0
      %7026 = vmatmul.mubr.f32.gmra.mrb[0].mxu0 %v6867
      %v7027 = vpop.f32.mrb[0].mxu0
      %v7028 = vadd.f32 0.0, %v7027
      %v7029 = vpop.f32.mrb[0].mxu0
      %v7030 = vadd.f32 0.0, %v7029
      %7031 = vmatprep.mubr.f32.mxu0 0.0
      %7032 = vmatmul.mubr.f32.gmra.mrb[0].mxu0 %v6870
      %v7033 = vpop.f32.mrb[0].mxu0
      %v7034 = vadd.f32 0.0, %v7033
      %v7035 = vpop.f32.mrb[0].mxu0
      %v7036 = vadd.f32 0.0, %v7035
      %7037 = vdwg.mxu0
      %v7038 = vadd.f32 %v5345, %v6951
      %v7039 = vadd.f32 %v5346, %v6953
      %v7040 = vadd.f32 %v5347, %v7028
      %v7041 = vadd.f32 %v5348, %v7030
      %v7042 = vadd.f32 %v5349, %v6957
      %v7043 = vadd.f32 %v5350, %v6959
      %v7044 = vadd.f32 %v5351, %v7034
      %v7045 = vadd.f32 %v5352, %v7036
      %v7046 = vld [vmem:[%s12] sm:$0xff]
      %v7047 = vld [vmem:[%s12 + $0x8] sm:$0xff]
      %7049 = vset.pattern.permute.xlu0 0
      %7050 = vperm.xlu0 %7049, %v7046
      %v7051 = vpop.permute.xlu0 %7050
      %7054 = vset.pattern.permute.xlu0 0
      %7055 = vperm.xlu0 %7054, %v7047
      %v7056 = vpop.permute.xlu0 %7055
      %v7058 = vadd.f32 %v7038, %v7051
      %v7059 = vadd.f32 %v7039, %v7051
      %v7060 = vadd.f32 %v7040, %v7051
      %v7061 = vadd.f32 %v7041, %v7051
      %v7062 = vadd.f32 %v7042, %v7056
      %v7063 = vadd.f32 %v7043, %v7056
      %v7064 = vadd.f32 %v7044, %v7056
      %v7065 = vadd.f32 %v7045, %v7056
      %7066 = vst [vmem:[%s460] sm:$0xff] %v7058
      %7067 = vst [vmem:[%s460 + $0x8] sm:$0xff] %v7059
      %7068 = vst [vmem:[%s460 + $0x10] sm:$0xff] %v7060
      %7069 = vst [vmem:[%s460 + $0x18] sm:$0xff] %v7061
      %7070 = vst [vmem:[%s460 + $0x20] sm:$0xff] %v7062
      %7071 = vst [vmem:[%s460 + $0x28] sm:$0xff] %v7063
      %7072 = vst [vmem:[%s460 + $0x30] sm:$0xff] %v7064
      %7073 = vst [vmem:[%s460 + $0x38] sm:$0xff] %v7065
      %p7074 = scmp.lt.s32.totalorder %s24, 1
      %s7075 = scalar_select %p7074, %s24, 1
      %s7076 = smul.addr %s7075, 8
      %s7077 = smul.addr %s7076, 8
      %s7078 = scalar_lea.vmem %s13, %s7077
      // Predicated region
      $region73: #{gab3d_forward.1} parent=71 // pred_check
        %p7079 = pneg %p325
      $region74: #{gab3d_forward.1} parent=71 // pred_check_branch
        %7081 = sbr.rel (%p7079) target = $region76
      $region75: #{gab3d_forward.1} parent=71 // pred_region
        _
      $region76: #{gab3d_forward.1} parent=71 // pred_fallthru
        _
    $region72: #{gab3d_forward.1} parent=5 // pred_fallthru
      _
    %p7082 = scmp.le.s32.totalorder 2, %s19
    // Predicated region
    $region77: #{gab3d_forward.1} parent=5 // pred_check
      %p7083 = pneg %p7082
    $region78: #{gab3d_forward.1} parent=5 // pred_check_branch
      %7085 = sbr.rel (%p7083) target = $region80
    $region79: #{gab3d_forward.1} parent=5 // pred_region
      %s7086 = ssub.s32 %s19, 2
      // Predicated region
      $region81: #{gab3d_forward.1} parent=79 // pred_check
        %p7087 = pneg %p331
      $region82: #{gab3d_forward.1} parent=79 // pred_check_branch
        %7089 = sbr.rel (%p7087) target = $region84
      $region83: #{gab3d_forward.1} parent=79 // pred_region
        %p7090 = scmp.lt.s32.totalorder %s25, 1
        %s7091 = scalar_select %p7090, %s25, 1
        %s7092 = smul.addr %s7091, 8
        %s7093 = smul.addr %s7092, 8
        %s7094 = scalar_lea.vmem %s13, %s7093
      $region84: #{gab3d_forward.1} parent=79 // pred_fallthru
        _
    $region80: #{gab3d_forward.1} parent=5 // pred_fallthru
      _
  $region6: #{gab3d_forward.1} parent=0 // loop_footer
    %s23 = sadd.s32 1, %s19
  $region7: #{gab3d_forward.1} parent=0 // loop_footer_branch
    %18 = sbr.rel target = $region3
  $region8: #{gab3d_forward.1} parent=0 // loop_exit
    _

</llo_original>
